<compile_context>
chip_gen: v5e
topology: v5e:2x2
jax: 0.10.0
libtpu: 0.0.40
codegen_flags: <defaults>
</compile_context>

<pallas_src>
import math

import jax
import jax.numpy as jnp
from jax import lax
from jax.experimental import pallas as pl
from jax.experimental.pallas import tpu as pltpu


M_GRID = 2048  # 32 x 64 plane meshgrid, fixed by the module


def build_plane_grid(m_x=32, m_y=64):
    """itertools.product(linspace(-0.3,0.3,32), linspace(-0.6,0.6,64)) -> (2048, 2)."""
    gx = jnp.linspace(-0.3, 0.3, m_x)
    gy = jnp.linspace(-0.6, 0.6, m_y)
    xs = jnp.repeat(gx, m_y)
    ys = jnp.tile(gy, m_x)
    return jnp.stack([xs, ys], axis=-1).astype(jnp.float32)


# ----------------------------------------------------------------------------
# Fused Pallas kernel: both folding stages, channel-first (F, tile_m) tiles.
# ----------------------------------------------------------------------------
def folding_decoder(grid_proj, fb1, fb2, kw, *, tile_m=1024):
    """grid_proj : (F, m)    batch-invariant projection of the 2-D grid (layer-0 of folding1)
       fb1, fb2  : (B, F, 1) per-batch codeword bias columns (hoisted layer-0 codeword GEMMs)
       kw        : dict of channel-first (Cout, Cin) weights / (Cout, 1) bias columns
       Returns (fold1_cf, fold2_cf), each (B, 3, m) float32 (channel-first, lane-dense)."""
    F, m = grid_proj.shape
    B = fb1.shape[0]
    assert m % tile_m == 0 and tile_m % 128 == 0, "tile_m must divide m and be lane-aligned"

    use_mxu = F >= 128            # a K/N < 128 contraction wastes >98% of an MXU pass
    mm_dt = kw["w11"].dtype       # bf16 (MXU path) or f32 (VPU path)
    wbytes = mm_dt.itemsize

    def dense(w, h, cd):
        """Channel-first 1x1 conv: (Cout, Cin) @ (Cin, tile_m)."""
        if use_mxu:
            return jnp.dot(w.astype(cd), h.astype(cd), preferred_element_type=jnp.float32)
        # Small F: unrolled VPU FMAs instead of a padded MXU pass.
        out = w[:, 0:1] * h[0:1, :]
        for k in range(1, w.shape[1]):
            out = out + w[:, k:k + 1] * h[k:k + 1, :]
        return out

    def kernel(gp_ref, fb1_ref, fb2_ref,
               w11_ref, b11_ref, w12_ref, b12_ref, w2p_ref,
               w21_ref, b21_ref, w22_ref, b22_ref,
               f1_ref, f2_ref):
        # ---------------- folding1 ----------------
        # layer 0: hoisted codeword bias + precomputed grid projection -> VPU add + ReLU.
        h = jnp.maximum(gp_ref[...] + fb1_ref[0], 0.0)                     # (F, tile_m) f32
        # layer 1: the big (F, F) matmul (bf16 in, f32 accumulate when F >= 128).
        h = jnp.maximum(dense(w11_ref[...], h, mm_dt) + b11_ref[...], 0.0)
        # layer 2: (3, F) head in f32; result is channel-first -> lane-dense store.
        fold1 = dense(w12_ref[...], h, jnp.float32) + b12_ref[...]         # (3, tile_m) f32
        f1_ref[0] = fold1.astype(f1_ref.dtype)

        # ---------------- folding2 ----------------
        # layer 0: K=3 contraction as three broadcast VPU FMAs (no padded MXU pass).
        w2p = w2p_ref[...]                                                 # (F, 3)
        pre = fb2_ref[0]                                                   # (F, 1)
        for k in range(3):
            pre = pre + w2p[:, k:k + 1] * fold1[k:k + 1, :]                # -> (F, tile_m)
        h = jnp.maximum(pre, 0.0)
        h = jnp.maximum(dense(w21_ref[...], h, mm_dt) + b21_ref[...], 0.0)
        fold2 = dense(w22_ref[...], h, jnp.float32) + b22_ref[...]         # (3, tile_m)
        f2_ref[0] = fold2.astype(f2_ref.dtype)

    # Explicit VMEM budget: streamed grid_proj (double-buffered) + worst-case
    # double-buffered (F, F) weights + generous activation headroom; capped at 56 MiB
    # so it stays inside v7x's 64 MiB / TC (v5e/v6e have 128 MiB physical).
    est = (2 * F * tile_m * 4            # grid_proj blocks
           + 2 * 2 * F * F * wbytes      # w11 / w21
           + 8 * F * tile_m * 4          # live (F, tile_m) intermediates
           + (4 << 20))
    vmem_limit = int(min(max(est, 32 << 20), 56 << 20))

    const = lambda b, n: (0, 0)

    def build(weight_mode):
        def wspec(shape):
            if weight_mode is None:
                return pl.BlockSpec(shape, const)
            return pl.BlockSpec(shape, const, pipeline_mode=weight_mode)

        in_specs = [
            pl.BlockSpec((F, tile_m), lambda b, n: (0, n)),      # grid_proj (batch-invariant)
            pl.BlockSpec((1, F, 1), lambda b, n: (b, 0, 0)),     # fb1 (per batch)
            pl.BlockSpec((1, F, 1), lambda b, n: (b, 0, 0)),     # fb2 (per batch)
            wspec((F, F)), wspec((F, 1)),                        # w11, b11
            wspec((3, F)), wspec((3, 1)),                        # w12, b12
            wspec((F, 3)),                                       # w2p (fold1 part of fold2_0)
            wspec((F, F)), wspec((F, 1)),                        # w21, b21
            wspec((3, F)), wspec((3, 1)),                        # w22, b22
        ]
        out_specs = (
            pl.BlockSpec((1, 3, tile_m), lambda b, n: (b, 0, n)),   # fold1 (channel-first)
            pl.BlockSpec((1, 3, tile_m), lambda b, n: (b, 0, n)),   # fold2 (channel-first)
        )
        return pl.pallas_call(
            kernel,
            out_shape=(jax.ShapeDtypeStruct((B, 3, m), jnp.float32),
                       jax.ShapeDtypeStruct((B, 3, m), jnp.float32)),
            grid=(B, m // tile_m),
            in_specs=in_specs,
            out_specs=out_specs,
            compiler_params=pltpu.CompilerParams(
                dimension_semantics=("parallel", "parallel"),
                vmem_limit_bytes=vmem_limit),
        )

    args = (grid_proj, fb1, fb2,
            kw["w11"], kw["b11"], kw["w12"], kw["b12"], kw["w2p"],
            kw["w21"], kw["b21"], kw["w22"], kw["b22"])

    buffered = getattr(pl, "Buffered", None)
    if buffered is not None:
        try:
            # Grid-invariant weights/biases -> single VMEM buffer (their block index never
            # changes, so double-buffering only wastes VMEM).
            return build(buffered(1))(*args)
        except Exception:
            pass  # pipeline_mode not honored by this JAX/Mosaic version -> default buffers
    return build(None)(*args)


# ----------------------------------------------------------------------------
# Wrapper matching FoldingNetDecoder.forward (shape='plane')
# ----------------------------------------------------------------------------
def foldingnet_decoder_forward(params, x, *, tile_m=1024, use_bf16=True):
    """params: dict of (weight, bias) with PyTorch Conv1d layout weight = (Cout, Cin)
               (i.e. torch_conv.weight[:, :, 0]).  cat order is (codeword, grid/fold1).
       x: (B, 1, feat_dims) codeword.
       Returns (folding2, folding1), each (B, 2048, 3) float32 (same as the PyTorch module)."""
    B, _, F = x.shape
    grid2d = build_plane_grid()                              # (m, 2), m = 2048
    feat = x[:, 0, :].astype(jnp.float32)                    # (B, F)
    hp = lax.Precision.HIGHEST

    (w10, b10) = params["fold1_0"]                           # (F, F+2), (F,)
    (w11, b11) = params["fold1_1"]                           # (F, F)
    (w12, b12) = params["fold1_2"]                           # (3, F)
    (w20, b20) = params["fold2_0"]                           # (F, F+3)
    (w21, b21) = params["fold2_1"]
    (w22, b22) = params["fold2_2"]

    w1_feat, w1_grid = w10[:, :F], w10[:, F:]                # (F, F), (F, 2)
    w2_feat, w2_fold = w20[:, :F], w20[:, F:]                # (F, F), (F, 3)

    # Hoisted tiny XLA GEMMs: batch-invariant grid projection + per-batch codeword biases.
    grid_proj = jnp.dot(w1_grid, grid2d.T, precision=hp)                        # (F, m)
    fb1 = (jnp.dot(feat, w1_feat.T, precision=hp) + b10[None, :])[..., None]    # (B, F, 1)
    fb2 = (jnp.dot(feat, w2_feat.T, precision=hp) + b20[None, :])[..., None]    # (B, F, 1)

    mxu_dt = jnp.bfloat16 if (use_bf16 and F >= 128) else jnp.float32
    kw = dict(
        w11=w11.astype(mxu_dt), b11=b11[:, None],
        w12=w12, b12=b12[:, None],                           # (3, F) head stays f32
        w2p=w2_fold,                                         # (F, 3)
        w21=w21.astype(mxu_dt), b21=b21[:, None],
        w22=w22, b22=b22[:, None],
    )
    f1_cf, f2_cf = folding_decoder(grid_proj, fb1, fb2, kw, tile_m=tile_m)
    fold1 = jnp.transpose(f1_cf, (0, 2, 1))                  # (B, m, 3)
    fold2 = jnp.transpose(f2_cf, (0, 2, 1))
    return fold2, fold1


# ----------------------------------------------------------------------------
# Pure-JAX reference (channel-first, mirrors the PyTorch forward exactly)
# ----------------------------------------------------------------------------
def reference_forward(params, x):
    B, _, F = x.shape
    grid2d = build_plane_grid()
    m = grid2d.shape[0]
    hp = lax.Precision.HIGHEST
    feat = jnp.broadcast_to(x.transpose(0, 2, 1), (B, F, m))          # (B, F, m)
    pts = jnp.broadcast_to(grid2d.T[None], (B, 2, m)).astype(jnp.float32)

    def seq(prefix, inp):
        (w0, b0) = params[prefix + "_0"]
        (w1, b1) = params[prefix + "_1"]
        (w2, b2) = params[prefix + "_2"]
        h = jax.nn.relu(jnp.einsum("oi,bim->bom", w0, inp, precision=hp) + b0[None, :, None])
        h = jax.nn.relu(jnp.einsum("oi,bim->bom", w1, h, precision=hp) + b1[None, :, None])
        return jnp.einsum("oi,bim->bom", w2, h, precision=hp) + b2[None, :, None]

    f1 = seq("fold1", jnp.concatenate([feat, pts], axis=1))
    f2 = seq("fold2", jnp.concatenate([feat, f1], axis=1))
    return f2.transpose(0, 2, 1), f1.transpose(0, 2, 1)


# ----------------------------------------------------------------------------
# Parameter init (PyTorch Conv1d-style uniform init, (Cout, Cin) layout)
# ----------------------------------------------------------------------------
def init_affine(key, cin, cout):
    kw_, kb = jax.random.split(key)
    bound = 1.0 / math.sqrt(cin)
    w = jax.random.uniform(kw_, (cout, cin), jnp.float32, -bound, bound)
    b = jax.random.uniform(kb, (cout,), jnp.float32, -bound, bound)
    return w, b


def init_decoder_params(key, feat_dims):
    keys = jax.random.split(key, 6)
    return {
        "fold1_0": init_affine(keys[0], feat_dims + 2, feat_dims),
        "fold1_1": init_affine(keys[1], feat_dims, feat_dims),
        "fold1_2": init_affine(keys[2], feat_dims, 3),
        "fold2_0": init_affine(keys[3], feat_dims + 3, feat_dims),
        "fold2_1": init_affine(keys[4], feat_dims, feat_dims),
        "fold2_2": init_affine(keys[5], feat_dims, 3),
    }


# ----------------------------------------------------------------------------
if __name__ == "__main__":
    root = jax.random.PRNGKey(0)
    k_x1, k_p1, k_x2, k_p2 = jax.random.split(root, 4)

    # Small-F case (F < 128): the (F, F) layers run as VPU FMAs (no degenerate MXU work).
    B, F = 2, 16
    x = jax.random.normal(k_x1, (B, 1, F), jnp.float32)
    params = init_decoder_params(k_p1, F)
    fold2, fold1 = foldingnet_decoder_forward(params, x)
    fold2, fold1 = jax.block_until_ready((fold2, fold1))
    assert fold2.shape == (B, M_GRID, 3) and fold1.shape == (B, M_GRID, 3)
    ref2, ref1 = reference_forward(params, x)
    assert jnp.allclose(fold1, ref1, atol=1e-3, rtol=1e-3)
    assert jnp.allclose(fold2, ref2, atol=1e-3, rtol=1e-3)

    # Larger-F case (F >= 128): exercises the bf16 MXU path and the 2-way m split
    # (keeps both v7x TensorCores busy even at batch 1).
    B2, F2 = 1, 256
    x2 = jax.random.normal(k_x2, (B2, 1, F2), jnp.float32)
    params2 = init_decoder_params(k_p2, F2)
    fold2b, fold1b = foldingnet_decoder_forward(params2, x2)
    fold2b, fold1b = jax.block_until_ready((fold2b, fold1b))
    ref2b, ref1b = reference_forward(params2, x2)
    assert jnp.allclose(fold1b, ref1b, atol=3e-2, rtol=3e-2)
    assert jnp.allclose(fold2b, ref2b, atol=3e-2, rtol=3e-2)

    print("KERNEL_OK")
</pallas_src>

<mosaic_0001>
module attributes {stable_mosaic.version = 11 : i64} {
  func.func @kernel(%arg0: i32, %arg1: i32, %arg2: memref<16x1024xf32, #tpu.memory_space<vmem>>, %arg3: memref<1x16x1xf32, #tpu.memory_space<vmem>>, %arg4: memref<1x16x1xf32, #tpu.memory_space<vmem>>, %arg5: memref<16x16xf32, #tpu.memory_space<vmem>>, %arg6: memref<16x1xf32, #tpu.memory_space<vmem>>, %arg7: memref<3x16xf32, #tpu.memory_space<vmem>>, %arg8: memref<3x1xf32, #tpu.memory_space<vmem>>, %arg9: memref<16x3xf32, #tpu.memory_space<vmem>>, %arg10: memref<16x16xf32, #tpu.memory_space<vmem>>, %arg11: memref<16x1xf32, #tpu.memory_space<vmem>>, %arg12: memref<3x16xf32, #tpu.memory_space<vmem>>, %arg13: memref<3x1xf32, #tpu.memory_space<vmem>>, %arg14: memref<1x3x1024xf32, #tpu.memory_space<vmem>>, %arg15: memref<1x3x1024xf32, #tpu.memory_space<vmem>>) attributes {dimension_semantics = [#tpu.dimension_semantics<parallel>, #tpu.dimension_semantics<parallel>], iteration_bounds = array<i64: 2, 2>, scalar_prefetch = 0 : i64, scratch_operands = 0 : i64, tpu.core_type = #tpu.core_type<tc>, window_params = [{transform_indices = @transform_0, window_bounds = array<i64: 16, 1024>}, {transform_indices = @transform_1, window_bounds = array<i64: 1, 16, 1>}, {transform_indices = @transform_2, window_bounds = array<i64: 1, 16, 1>}, {pipeline_mode = #tpu.pipeline_mode<synchronous>, transform_indices = @transform_3, window_bounds = array<i64: 16, 16>}, {pipeline_mode = #tpu.pipeline_mode<synchronous>, transform_indices = @transform_4, window_bounds = array<i64: 16, 1>}, {pipeline_mode = #tpu.pipeline_mode<synchronous>, transform_indices = @transform_5, window_bounds = array<i64: 3, 16>}, {pipeline_mode = #tpu.pipeline_mode<synchronous>, transform_indices = @transform_6, window_bounds = array<i64: 3, 1>}, {pipeline_mode = #tpu.pipeline_mode<synchronous>, transform_indices = @transform_7, window_bounds = array<i64: 16, 3>}, {pipeline_mode = #tpu.pipeline_mode<synchronous>, transform_indices = @transform_8, window_bounds = array<i64: 16, 16>}, {pipeline_mode = #tpu.pipeline_mode<synchronous>, transform_indices = @transform_9, window_bounds = array<i64: 16, 1>}, {pipeline_mode = #tpu.pipeline_mode<synchronous>, transform_indices = @transform_10, window_bounds = array<i64: 3, 16>}, {pipeline_mode = #tpu.pipeline_mode<synchronous>, transform_indices = @transform_11, window_bounds = array<i64: 3, 1>}, {transform_indices = @transform_12, window_bounds = array<i64: 1, 3, 1024>}, {transform_indices = @transform_13, window_bounds = array<i64: 1, 3, 1024>}]} {
    %c0 = arith.constant 0 : index
    %c0_0 = arith.constant 0 : index
    %0 = vector.load %arg2[%c0, %c0_0] : memref<16x1024xf32, #tpu.memory_space<vmem>>, vector<16x1024xf32>
    %c0_1 = arith.constant 0 : index
    %c0_2 = arith.constant 0 : index
    %c0_3 = arith.constant 0 : index
    %1 = vector.load %arg3[%c0_1, %c0_2, %c0_3] : memref<1x16x1xf32, #tpu.memory_space<vmem>>, vector<1x16x1xf32>
    %2 = vector.shape_cast %1 : vector<1x16x1xf32> to vector<16x1xf32>
    %3 = vector.broadcast %2 : vector<16x1xf32> to vector<16x1024xf32>
    %4 = arith.addf %0, %3 : vector<16x1024xf32>
    %cst = arith.constant 0.000000e+00 : f32
    %5 = vector.broadcast %cst : f32 to vector<16x1024xf32>
    %6 = arith.maximumf %4, %5 : vector<16x1024xf32>
    %c0_4 = arith.constant 0 : index
    %c0_5 = arith.constant 0 : index
    %7 = vector.load %arg5[%c0_4, %c0_5] : memref<16x16xf32, #tpu.memory_space<vmem>>, vector<16x16xf32>
    %8 = vector.extract_strided_slice %7 {offsets = [0, 0], sizes = [16, 1], strides = [1, 1]} : vector<16x16xf32> to vector<16x1xf32>
    %9 = vector.extract_strided_slice %6 {offsets = [0, 0], sizes = [1, 1024], strides = [1, 1]} : vector<16x1024xf32> to vector<1x1024xf32>
    %10 = vector.broadcast %8 : vector<16x1xf32> to vector<16x1024xf32>
    %11 = vector.broadcast %9 : vector<1x1024xf32> to vector<16x1024xf32>
    %12 = arith.mulf %10, %11 : vector<16x1024xf32>
    %13 = vector.extract_strided_slice %7 {offsets = [0, 1], sizes = [16, 1], strides = [1, 1]} : vector<16x16xf32> to vector<16x1xf32>
    %14 = vector.extract_strided_slice %6 {offsets = [1, 0], sizes = [1, 1024], strides = [1, 1]} : vector<16x1024xf32> to vector<1x1024xf32>
    %15 = vector.broadcast %13 : vector<16x1xf32> to vector<16x1024xf32>
    %16 = vector.broadcast %14 : vector<1x1024xf32> to vector<16x1024xf32>
    %17 = arith.mulf %15, %16 : vector<16x1024xf32>
    %18 = arith.addf %12, %17 : vector<16x1024xf32>
    %19 = vector.extract_strided_slice %7 {offsets = [0, 2], sizes = [16, 1], strides = [1, 1]} : vector<16x16xf32> to vector<16x1xf32>
    %20 = vector.extract_strided_slice %6 {offsets = [2, 0], sizes = [1, 1024], strides = [1, 1]} : vector<16x1024xf32> to vector<1x1024xf32>
    %21 = vector.broadcast %19 : vector<16x1xf32> to vector<16x1024xf32>
    %22 = vector.broadcast %20 : vector<1x1024xf32> to vector<16x1024xf32>
    %23 = arith.mulf %21, %22 : vector<16x1024xf32>
    %24 = arith.addf %18, %23 : vector<16x1024xf32>
    %25 = vector.extract_strided_slice %7 {offsets = [0, 3], sizes = [16, 1], strides = [1, 1]} : vector<16x16xf32> to vector<16x1xf32>
    %26 = vector.extract_strided_slice %6 {offsets = [3, 0], sizes = [1, 1024], strides = [1, 1]} : vector<16x1024xf32> to vector<1x1024xf32>
    %27 = vector.broadcast %25 : vector<16x1xf32> to vector<16x1024xf32>
    %28 = vector.broadcast %26 : vector<1x1024xf32> to vector<16x1024xf32>
    %29 = arith.mulf %27, %28 : vector<16x1024xf32>
    %30 = arith.addf %24, %29 : vector<16x1024xf32>
    %31 = vector.extract_strided_slice %7 {offsets = [0, 4], sizes = [16, 1], strides = [1, 1]} : vector<16x16xf32> to vector<16x1xf32>
    %32 = vector.extract_strided_slice %6 {offsets = [4, 0], sizes = [1, 1024], strides = [1, 1]} : vector<16x1024xf32> to vector<1x1024xf32>
    %33 = vector.broadcast %31 : vector<16x1xf32> to vector<16x1024xf32>
    %34 = vector.broadcast %32 : vector<1x1024xf32> to vector<16x1024xf32>
    %35 = arith.mulf %33, %34 : vector<16x1024xf32>
    %36 = arith.addf %30, %35 : vector<16x1024xf32>
    %37 = vector.extract_strided_slice %7 {offsets = [0, 5], sizes = [16, 1], strides = [1, 1]} : vector<16x16xf32> to vector<16x1xf32>
    %38 = vector.extract_strided_slice %6 {offsets = [5, 0], sizes = [1, 1024], strides = [1, 1]} : vector<16x1024xf32> to vector<1x1024xf32>
    %39 = vector.broadcast %37 : vector<16x1xf32> to vector<16x1024xf32>
    %40 = vector.broadcast %38 : vector<1x1024xf32> to vector<16x1024xf32>
    %41 = arith.mulf %39, %40 : vector<16x1024xf32>
    %42 = arith.addf %36, %41 : vector<16x1024xf32>
    %43 = vector.extract_strided_slice %7 {offsets = [0, 6], sizes = [16, 1], strides = [1, 1]} : vector<16x16xf32> to vector<16x1xf32>
    %44 = vector.extract_strided_slice %6 {offsets = [6, 0], sizes = [1, 1024], strides = [1, 1]} : vector<16x1024xf32> to vector<1x1024xf32>
    %45 = vector.broadcast %43 : vector<16x1xf32> to vector<16x1024xf32>
    %46 = vector.broadcast %44 : vector<1x1024xf32> to vector<16x1024xf32>
    %47 = arith.mulf %45, %46 : vector<16x1024xf32>
    %48 = arith.addf %42, %47 : vector<16x1024xf32>
    %49 = vector.extract_strided_slice %7 {offsets = [0, 7], sizes = [16, 1], strides = [1, 1]} : vector<16x16xf32> to vector<16x1xf32>
    %50 = vector.extract_strided_slice %6 {offsets = [7, 0], sizes = [1, 1024], strides = [1, 1]} : vector<16x1024xf32> to vector<1x1024xf32>
    %51 = vector.broadcast %49 : vector<16x1xf32> to vector<16x1024xf32>
    %52 = vector.broadcast %50 : vector<1x1024xf32> to vector<16x1024xf32>
    %53 = arith.mulf %51, %52 : vector<16x1024xf32>
    %54 = arith.addf %48, %53 : vector<16x1024xf32>
    %55 = vector.extract_strided_slice %7 {offsets = [0, 8], sizes = [16, 1], strides = [1, 1]} : vector<16x16xf32> to vector<16x1xf32>
    %56 = vector.extract_strided_slice %6 {offsets = [8, 0], sizes = [1, 1024], strides = [1, 1]} : vector<16x1024xf32> to vector<1x1024xf32>
    %57 = vector.broadcast %55 : vector<16x1xf32> to vector<16x1024xf32>
    %58 = vector.broadcast %56 : vector<1x1024xf32> to vector<16x1024xf32>
    %59 = arith.mulf %57, %58 : vector<16x1024xf32>
    %60 = arith.addf %54, %59 : vector<16x1024xf32>
    %61 = vector.extract_strided_slice %7 {offsets = [0, 9], sizes = [16, 1], strides = [1, 1]} : vector<16x16xf32> to vector<16x1xf32>
    %62 = vector.extract_strided_slice %6 {offsets = [9, 0], sizes = [1, 1024], strides = [1, 1]} : vector<16x1024xf32> to vector<1x1024xf32>
    %63 = vector.broadcast %61 : vector<16x1xf32> to vector<16x1024xf32>
    %64 = vector.broadcast %62 : vector<1x1024xf32> to vector<16x1024xf32>
    %65 = arith.mulf %63, %64 : vector<16x1024xf32>
    %66 = arith.addf %60, %65 : vector<16x1024xf32>
    %67 = vector.extract_strided_slice %7 {offsets = [0, 10], sizes = [16, 1], strides = [1, 1]} : vector<16x16xf32> to vector<16x1xf32>
    %68 = vector.extract_strided_slice %6 {offsets = [10, 0], sizes = [1, 1024], strides = [1, 1]} : vector<16x1024xf32> to vector<1x1024xf32>
    %69 = vector.broadcast %67 : vector<16x1xf32> to vector<16x1024xf32>
    %70 = vector.broadcast %68 : vector<1x1024xf32> to vector<16x1024xf32>
    %71 = arith.mulf %69, %70 : vector<16x1024xf32>
    %72 = arith.addf %66, %71 : vector<16x1024xf32>
    %73 = vector.extract_strided_slice %7 {offsets = [0, 11], sizes = [16, 1], strides = [1, 1]} : vector<16x16xf32> to vector<16x1xf32>
    %74 = vector.extract_strided_slice %6 {offsets = [11, 0], sizes = [1, 1024], strides = [1, 1]} : vector<16x1024xf32> to vector<1x1024xf32>
    %75 = vector.broadcast %73 : vector<16x1xf32> to vector<16x1024xf32>
    %76 = vector.broadcast %74 : vector<1x1024xf32> to vector<16x1024xf32>
    %77 = arith.mulf %75, %76 : vector<16x1024xf32>
    %78 = arith.addf %72, %77 : vector<16x1024xf32>
    %79 = vector.extract_strided_slice %7 {offsets = [0, 12], sizes = [16, 1], strides = [1, 1]} : vector<16x16xf32> to vector<16x1xf32>
    %80 = vector.extract_strided_slice %6 {offsets = [12, 0], sizes = [1, 1024], strides = [1, 1]} : vector<16x1024xf32> to vector<1x1024xf32>
    %81 = vector.broadcast %79 : vector<16x1xf32> to vector<16x1024xf32>
    %82 = vector.broadcast %80 : vector<1x1024xf32> to vector<16x1024xf32>
    %83 = arith.mulf %81, %82 : vector<16x1024xf32>
    %84 = arith.addf %78, %83 : vector<16x1024xf32>
    %85 = vector.extract_strided_slice %7 {offsets = [0, 13], sizes = [16, 1], strides = [1, 1]} : vector<16x16xf32> to vector<16x1xf32>
    %86 = vector.extract_strided_slice %6 {offsets = [13, 0], sizes = [1, 1024], strides = [1, 1]} : vector<16x1024xf32> to vector<1x1024xf32>
    %87 = vector.broadcast %85 : vector<16x1xf32> to vector<16x1024xf32>
    %88 = vector.broadcast %86 : vector<1x1024xf32> to vector<16x1024xf32>
    %89 = arith.mulf %87, %88 : vector<16x1024xf32>
    %90 = arith.addf %84, %89 : vector<16x1024xf32>
    %91 = vector.extract_strided_slice %7 {offsets = [0, 14], sizes = [16, 1], strides = [1, 1]} : vector<16x16xf32> to vector<16x1xf32>
    %92 = vector.extract_strided_slice %6 {offsets = [14, 0], sizes = [1, 1024], strides = [1, 1]} : vector<16x1024xf32> to vector<1x1024xf32>
    %93 = vector.broadcast %91 : vector<16x1xf32> to vector<16x1024xf32>
    %94 = vector.broadcast %92 : vector<1x1024xf32> to vector<16x1024xf32>
    %95 = arith.mulf %93, %94 : vector<16x1024xf32>
    %96 = arith.addf %90, %95 : vector<16x1024xf32>
    %97 = vector.extract_strided_slice %7 {offsets = [0, 15], sizes = [16, 1], strides = [1, 1]} : vector<16x16xf32> to vector<16x1xf32>
    %98 = vector.extract_strided_slice %6 {offsets = [15, 0], sizes = [1, 1024], strides = [1, 1]} : vector<16x1024xf32> to vector<1x1024xf32>
    %99 = vector.broadcast %97 : vector<16x1xf32> to vector<16x1024xf32>
    %100 = vector.broadcast %98 : vector<1x1024xf32> to vector<16x1024xf32>
    %101 = arith.mulf %99, %100 : vector<16x1024xf32>
    %102 = arith.addf %96, %101 : vector<16x1024xf32>
    %c0_6 = arith.constant 0 : index
    %c0_7 = arith.constant 0 : index
    %103 = vector.load %arg6[%c0_6, %c0_7] : memref<16x1xf32, #tpu.memory_space<vmem>>, vector<16x1xf32>
    %104 = vector.broadcast %103 : vector<16x1xf32> to vector<16x1024xf32>
    %105 = arith.addf %102, %104 : vector<16x1024xf32>
    %cst_8 = arith.constant 0.000000e+00 : f32
    %106 = vector.broadcast %cst_8 : f32 to vector<16x1024xf32>
    %107 = arith.maximumf %105, %106 : vector<16x1024xf32>
    %c0_9 = arith.constant 0 : index
    %c0_10 = arith.constant 0 : index
    %108 = vector.load %arg7[%c0_9, %c0_10] : memref<3x16xf32, #tpu.memory_space<vmem>>, vector<3x16xf32>
    %109 = vector.extract_strided_slice %108 {offsets = [0, 0], sizes = [3, 1], strides = [1, 1]} : vector<3x16xf32> to vector<3x1xf32>
    %110 = vector.extract_strided_slice %107 {offsets = [0, 0], sizes = [1, 1024], strides = [1, 1]} : vector<16x1024xf32> to vector<1x1024xf32>
    %111 = vector.broadcast %109 : vector<3x1xf32> to vector<3x1024xf32>
    %112 = vector.broadcast %110 : vector<1x1024xf32> to vector<3x1024xf32>
    %113 = arith.mulf %111, %112 : vector<3x1024xf32>
    %114 = vector.extract_strided_slice %108 {offsets = [0, 1], sizes = [3, 1], strides = [1, 1]} : vector<3x16xf32> to vector<3x1xf32>
    %115 = vector.extract_strided_slice %107 {offsets = [1, 0], sizes = [1, 1024], strides = [1, 1]} : vector<16x1024xf32> to vector<1x1024xf32>
    %116 = vector.broadcast %114 : vector<3x1xf32> to vector<3x1024xf32>
    %117 = vector.broadcast %115 : vector<1x1024xf32> to vector<3x1024xf32>
    %118 = arith.mulf %116, %117 : vector<3x1024xf32>
    %119 = arith.addf %113, %118 : vector<3x1024xf32>
    %120 = vector.extract_strided_slice %108 {offsets = [0, 2], sizes = [3, 1], strides = [1, 1]} : vector<3x16xf32> to vector<3x1xf32>
    %121 = vector.extract_strided_slice %107 {offsets = [2, 0], sizes = [1, 1024], strides = [1, 1]} : vector<16x1024xf32> to vector<1x1024xf32>
    %122 = vector.broadcast %120 : vector<3x1xf32> to vector<3x1024xf32>
    %123 = vector.broadcast %121 : vector<1x1024xf32> to vector<3x1024xf32>
    %124 = arith.mulf %122, %123 : vector<3x1024xf32>
    %125 = arith.addf %119, %124 : vector<3x1024xf32>
    %126 = vector.extract_strided_slice %108 {offsets = [0, 3], sizes = [3, 1], strides = [1, 1]} : vector<3x16xf32> to vector<3x1xf32>
    %127 = vector.extract_strided_slice %107 {offsets = [3, 0], sizes = [1, 1024], strides = [1, 1]} : vector<16x1024xf32> to vector<1x1024xf32>
    %128 = vector.broadcast %126 : vector<3x1xf32> to vector<3x1024xf32>
    %129 = vector.broadcast %127 : vector<1x1024xf32> to vector<3x1024xf32>
    %130 = arith.mulf %128, %129 : vector<3x1024xf32>
    %131 = arith.addf %125, %130 : vector<3x1024xf32>
    %132 = vector.extract_strided_slice %108 {offsets = [0, 4], sizes = [3, 1], strides = [1, 1]} : vector<3x16xf32> to vector<3x1xf32>
    %133 = vector.extract_strided_slice %107 {offsets = [4, 0], sizes = [1, 1024], strides = [1, 1]} : vector<16x1024xf32> to vector<1x1024xf32>
    %134 = vector.broadcast %132 : vector<3x1xf32> to vector<3x1024xf32>
    %135 = vector.broadcast %133 : vector<1x1024xf32> to vector<3x1024xf32>
    %136 = arith.mulf %134, %135 : vector<3x1024xf32>
    %137 = arith.addf %131, %136 : vector<3x1024xf32>
    %138 = vector.extract_strided_slice %108 {offsets = [0, 5], sizes = [3, 1], strides = [1, 1]} : vector<3x16xf32> to vector<3x1xf32>
    %139 = vector.extract_strided_slice %107 {offsets = [5, 0], sizes = [1, 1024], strides = [1, 1]} : vector<16x1024xf32> to vector<1x1024xf32>
    %140 = vector.broadcast %138 : vector<3x1xf32> to vector<3x1024xf32>
    %141 = vector.broadcast %139 : vector<1x1024xf32> to vector<3x1024xf32>
    %142 = arith.mulf %140, %141 : vector<3x1024xf32>
    %143 = arith.addf %137, %142 : vector<3x1024xf32>
    %144 = vector.extract_strided_slice %108 {offsets = [0, 6], sizes = [3, 1], strides = [1, 1]} : vector<3x16xf32> to vector<3x1xf32>
    %145 = vector.extract_strided_slice %107 {offsets = [6, 0], sizes = [1, 1024], strides = [1, 1]} : vector<16x1024xf32> to vector<1x1024xf32>
    %146 = vector.broadcast %144 : vector<3x1xf32> to vector<3x1024xf32>
    %147 = vector.broadcast %145 : vector<1x1024xf32> to vector<3x1024xf32>
    %148 = arith.mulf %146, %147 : vector<3x1024xf32>
    %149 = arith.addf %143, %148 : vector<3x1024xf32>
    %150 = vector.extract_strided_slice %108 {offsets = [0, 7], sizes = [3, 1], strides = [1, 1]} : vector<3x16xf32> to vector<3x1xf32>
    %151 = vector.extract_strided_slice %107 {offsets = [7, 0], sizes = [1, 1024], strides = [1, 1]} : vector<16x1024xf32> to vector<1x1024xf32>
    %152 = vector.broadcast %150 : vector<3x1xf32> to vector<3x1024xf32>
    %153 = vector.broadcast %151 : vector<1x1024xf32> to vector<3x1024xf32>
    %154 = arith.mulf %152, %153 : vector<3x1024xf32>
    %155 = arith.addf %149, %154 : vector<3x1024xf32>
    %156 = vector.extract_strided_slice %108 {offsets = [0, 8], sizes = [3, 1], strides = [1, 1]} : vector<3x16xf32> to vector<3x1xf32>
    %157 = vector.extract_strided_slice %107 {offsets = [8, 0], sizes = [1, 1024], strides = [1, 1]} : vector<16x1024xf32> to vector<1x1024xf32>
    %158 = vector.broadcast %156 : vector<3x1xf32> to vector<3x1024xf32>
    %159 = vector.broadcast %157 : vector<1x1024xf32> to vector<3x1024xf32>
    %160 = arith.mulf %158, %159 : vector<3x1024xf32>
    %161 = arith.addf %155, %160 : vector<3x1024xf32>
    %162 = vector.extract_strided_slice %108 {offsets = [0, 9], sizes = [3, 1], strides = [1, 1]} : vector<3x16xf32> to vector<3x1xf32>
    %163 = vector.extract_strided_slice %107 {offsets = [9, 0], sizes = [1, 1024], strides = [1, 1]} : vector<16x1024xf32> to vector<1x1024xf32>
    %164 = vector.broadcast %162 : vector<3x1xf32> to vector<3x1024xf32>
    %165 = vector.broadcast %163 : vector<1x1024xf32> to vector<3x1024xf32>
    %166 = arith.mulf %164, %165 : vector<3x1024xf32>
    %167 = arith.addf %161, %166 : vector<3x1024xf32>
    %168 = vector.extract_strided_slice %108 {offsets = [0, 10], sizes = [3, 1], strides = [1, 1]} : vector<3x16xf32> to vector<3x1xf32>
    %169 = vector.extract_strided_slice %107 {offsets = [10, 0], sizes = [1, 1024], strides = [1, 1]} : vector<16x1024xf32> to vector<1x1024xf32>
    %170 = vector.broadcast %168 : vector<3x1xf32> to vector<3x1024xf32>
    %171 = vector.broadcast %169 : vector<1x1024xf32> to vector<3x1024xf32>
    %172 = arith.mulf %170, %171 : vector<3x1024xf32>
    %173 = arith.addf %167, %172 : vector<3x1024xf32>
    %174 = vector.extract_strided_slice %108 {offsets = [0, 11], sizes = [3, 1], strides = [1, 1]} : vector<3x16xf32> to vector<3x1xf32>
    %175 = vector.extract_strided_slice %107 {offsets = [11, 0], sizes = [1, 1024], strides = [1, 1]} : vector<16x1024xf32> to vector<1x1024xf32>
    %176 = vector.broadcast %174 : vector<3x1xf32> to vector<3x1024xf32>
    %177 = vector.broadcast %175 : vector<1x1024xf32> to vector<3x1024xf32>
    %178 = arith.mulf %176, %177 : vector<3x1024xf32>
    %179 = arith.addf %173, %178 : vector<3x1024xf32>
    %180 = vector.extract_strided_slice %108 {offsets = [0, 12], sizes = [3, 1], strides = [1, 1]} : vector<3x16xf32> to vector<3x1xf32>
    %181 = vector.extract_strided_slice %107 {offsets = [12, 0], sizes = [1, 1024], strides = [1, 1]} : vector<16x1024xf32> to vector<1x1024xf32>
    %182 = vector.broadcast %180 : vector<3x1xf32> to vector<3x1024xf32>
    %183 = vector.broadcast %181 : vector<1x1024xf32> to vector<3x1024xf32>
    %184 = arith.mulf %182, %183 : vector<3x1024xf32>
    %185 = arith.addf %179, %184 : vector<3x1024xf32>
    %186 = vector.extract_strided_slice %108 {offsets = [0, 13], sizes = [3, 1], strides = [1, 1]} : vector<3x16xf32> to vector<3x1xf32>
    %187 = vector.extract_strided_slice %107 {offsets = [13, 0], sizes = [1, 1024], strides = [1, 1]} : vector<16x1024xf32> to vector<1x1024xf32>
    %188 = vector.broadcast %186 : vector<3x1xf32> to vector<3x1024xf32>
    %189 = vector.broadcast %187 : vector<1x1024xf32> to vector<3x1024xf32>
    %190 = arith.mulf %188, %189 : vector<3x1024xf32>
    %191 = arith.addf %185, %190 : vector<3x1024xf32>
    %192 = vector.extract_strided_slice %108 {offsets = [0, 14], sizes = [3, 1], strides = [1, 1]} : vector<3x16xf32> to vector<3x1xf32>
    %193 = vector.extract_strided_slice %107 {offsets = [14, 0], sizes = [1, 1024], strides = [1, 1]} : vector<16x1024xf32> to vector<1x1024xf32>
    %194 = vector.broadcast %192 : vector<3x1xf32> to vector<3x1024xf32>
    %195 = vector.broadcast %193 : vector<1x1024xf32> to vector<3x1024xf32>
    %196 = arith.mulf %194, %195 : vector<3x1024xf32>
    %197 = arith.addf %191, %196 : vector<3x1024xf32>
    %198 = vector.extract_strided_slice %108 {offsets = [0, 15], sizes = [3, 1], strides = [1, 1]} : vector<3x16xf32> to vector<3x1xf32>
    %199 = vector.extract_strided_slice %107 {offsets = [15, 0], sizes = [1, 1024], strides = [1, 1]} : vector<16x1024xf32> to vector<1x1024xf32>
    %200 = vector.broadcast %198 : vector<3x1xf32> to vector<3x1024xf32>
    %201 = vector.broadcast %199 : vector<1x1024xf32> to vector<3x1024xf32>
    %202 = arith.mulf %200, %201 : vector<3x1024xf32>
    %203 = arith.addf %197, %202 : vector<3x1024xf32>
    %c0_11 = arith.constant 0 : index
    %c0_12 = arith.constant 0 : index
    %204 = vector.load %arg8[%c0_11, %c0_12] : memref<3x1xf32, #tpu.memory_space<vmem>>, vector<3x1xf32>
    %205 = vector.broadcast %204 : vector<3x1xf32> to vector<3x1024xf32>
    %206 = arith.addf %203, %205 : vector<3x1024xf32>
    %c0_13 = arith.constant 0 : index
    %c0_14 = arith.constant 0 : index
    %c0_15 = arith.constant 0 : index
    %207 = vector.load %arg14[%c0_13, %c0_14, %c0_15] : memref<1x3x1024xf32, #tpu.memory_space<vmem>>, vector<1x3x1024xf32>
    %208 = vector.shape_cast %207 : vector<1x3x1024xf32> to vector<3x1024xf32>
    %209 = vector.shape_cast %206 : vector<3x1024xf32> to vector<1x3x1024xf32>
    tpu.vector_store %arg14[%c0_13, %c0_14, %c0_15], %209 {strides = array<i32>} : memref<1x3x1024xf32, #tpu.memory_space<vmem>>, vector<1x3x1024xf32>,
    %c0_16 = arith.constant 0 : index
    %c0_17 = arith.constant 0 : index
    %210 = vector.load %arg9[%c0_16, %c0_17] : memref<16x3xf32, #tpu.memory_space<vmem>>, vector<16x3xf32>
    %c0_18 = arith.constant 0 : index
    %c0_19 = arith.constant 0 : index
    %c0_20 = arith.constant 0 : index
    %211 = vector.load %arg4[%c0_18, %c0_19, %c0_20] : memref<1x16x1xf32, #tpu.memory_space<vmem>>, vector<1x16x1xf32>
    %212 = vector.shape_cast %211 : vector<1x16x1xf32> to vector<16x1xf32>
    %213 = vector.extract_strided_slice %210 {offsets = [0, 0], sizes = [16, 1], strides = [1, 1]} : vector<16x3xf32> to vector<16x1xf32>
    %214 = vector.extract_strided_slice %206 {offsets = [0, 0], sizes = [1, 1024], strides = [1, 1]} : vector<3x1024xf32> to vector<1x1024xf32>
    %215 = vector.broadcast %213 : vector<16x1xf32> to vector<16x1024xf32>
    %216 = vector.broadcast %214 : vector<1x1024xf32> to vector<16x1024xf32>
    %217 = arith.mulf %215, %216 : vector<16x1024xf32>
    %218 = vector.broadcast %212 : vector<16x1xf32> to vector<16x1024xf32>
    %219 = arith.addf %218, %217 : vector<16x1024xf32>
    %220 = vector.extract_strided_slice %210 {offsets = [0, 1], sizes = [16, 1], strides = [1, 1]} : vector<16x3xf32> to vector<16x1xf32>
    %221 = vector.extract_strided_slice %206 {offsets = [1, 0], sizes = [1, 1024], strides = [1, 1]} : vector<3x1024xf32> to vector<1x1024xf32>
    %222 = vector.broadcast %220 : vector<16x1xf32> to vector<16x1024xf32>
    %223 = vector.broadcast %221 : vector<1x1024xf32> to vector<16x1024xf32>
    %224 = arith.mulf %222, %223 : vector<16x1024xf32>
    %225 = arith.addf %219, %224 : vector<16x1024xf32>
    %226 = vector.extract_strided_slice %210 {offsets = [0, 2], sizes = [16, 1], strides = [1, 1]} : vector<16x3xf32> to vector<16x1xf32>
    %227 = vector.extract_strided_slice %206 {offsets = [2, 0], sizes = [1, 1024], strides = [1, 1]} : vector<3x1024xf32> to vector<1x1024xf32>
    %228 = vector.broadcast %226 : vector<16x1xf32> to vector<16x1024xf32>
    %229 = vector.broadcast %227 : vector<1x1024xf32> to vector<16x1024xf32>
    %230 = arith.mulf %228, %229 : vector<16x1024xf32>
    %231 = arith.addf %225, %230 : vector<16x1024xf32>
    %cst_21 = arith.constant 0.000000e+00 : f32
    %232 = vector.broadcast %cst_21 : f32 to vector<16x1024xf32>
    %233 = arith.maximumf %231, %232 : vector<16x1024xf32>
    %c0_22 = arith.constant 0 : index
    %c0_23 = arith.constant 0 : index
    %234 = vector.load %arg10[%c0_22, %c0_23] : memref<16x16xf32, #tpu.memory_space<vmem>>, vector<16x16xf32>
    %235 = vector.extract_strided_slice %234 {offsets = [0, 0], sizes = [16, 1], strides = [1, 1]} : vector<16x16xf32> to vector<16x1xf32>
    %236 = vector.extract_strided_slice %233 {offsets = [0, 0], sizes = [1, 1024], strides = [1, 1]} : vector<16x1024xf32> to vector<1x1024xf32>
    %237 = vector.broadcast %235 : vector<16x1xf32> to vector<16x1024xf32>
    %238 = vector.broadcast %236 : vector<1x1024xf32> to vector<16x1024xf32>
    %239 = arith.mulf %237, %238 : vector<16x1024xf32>
    %240 = vector.extract_strided_slice %234 {offsets = [0, 1], sizes = [16, 1], strides = [1, 1]} : vector<16x16xf32> to vector<16x1xf32>
    %241 = vector.extract_strided_slice %233 {offsets = [1, 0], sizes = [1, 1024], strides = [1, 1]} : vector<16x1024xf32> to vector<1x1024xf32>
    %242 = vector.broadcast %240 : vector<16x1xf32> to vector<16x1024xf32>
    %243 = vector.broadcast %241 : vector<1x1024xf32> to vector<16x1024xf32>
    %244 = arith.mulf %242, %243 : vector<16x1024xf32>
    %245 = arith.addf %239, %244 : vector<16x1024xf32>
    %246 = vector.extract_strided_slice %234 {offsets = [0, 2], sizes = [16, 1], strides = [1, 1]} : vector<16x16xf32> to vector<16x1xf32>
    %247 = vector.extract_strided_slice %233 {offsets = [2, 0], sizes = [1, 1024], strides = [1, 1]} : vector<16x1024xf32> to vector<1x1024xf32>
    %248 = vector.broadcast %246 : vector<16x1xf32> to vector<16x1024xf32>
    %249 = vector.broadcast %247 : vector<1x1024xf32> to vector<16x1024xf32>
    %250 = arith.mulf %248, %249 : vector<16x1024xf32>
    %251 = arith.addf %245, %250 : vector<16x1024xf32>
    %252 = vector.extract_strided_slice %234 {offsets = [0, 3], sizes = [16, 1], strides = [1, 1]} : vector<16x16xf32> to vector<16x1xf32>
    %253 = vector.extract_strided_slice %233 {offsets = [3, 0], sizes = [1, 1024], strides = [1, 1]} : vector<16x1024xf32> to vector<1x1024xf32>
    %254 = vector.broadcast %252 : vector<16x1xf32> to vector<16x1024xf32>
    %255 = vector.broadcast %253 : vector<1x1024xf32> to vector<16x1024xf32>
    %256 = arith.mulf %254, %255 : vector<16x1024xf32>
    %257 = arith.addf %251, %256 : vector<16x1024xf32>
    %258 = vector.extract_strided_slice %234 {offsets = [0, 4], sizes = [16, 1], strides = [1, 1]} : vector<16x16xf32> to vector<16x1xf32>
    %259 = vector.extract_strided_slice %233 {offsets = [4, 0], sizes = [1, 1024], strides = [1, 1]} : vector<16x1024xf32> to vector<1x1024xf32>
    %260 = vector.broadcast %258 : vector<16x1xf32> to vector<16x1024xf32>
    %261 = vector.broadcast %259 : vector<1x1024xf32> to vector<16x1024xf32>
    %262 = arith.mulf %260, %261 : vector<16x1024xf32>
    %263 = arith.addf %257, %262 : vector<16x1024xf32>
    %264 = vector.extract_strided_slice %234 {offsets = [0, 5], sizes = [16, 1], strides = [1, 1]} : vector<16x16xf32> to vector<16x1xf32>
    %265 = vector.extract_strided_slice %233 {offsets = [5, 0], sizes = [1, 1024], strides = [1, 1]} : vector<16x1024xf32> to vector<1x1024xf32>
    %266 = vector.broadcast %264 : vector<16x1xf32> to vector<16x1024xf32>
    %267 = vector.broadcast %265 : vector<1x1024xf32> to vector<16x1024xf32>
    %268 = arith.mulf %266, %267 : vector<16x1024xf32>
    %269 = arith.addf %263, %268 : vector<16x1024xf32>
    %270 = vector.extract_strided_slice %234 {offsets = [0, 6], sizes = [16, 1], strides = [1, 1]} : vector<16x16xf32> to vector<16x1xf32>
    %271 = vector.extract_strided_slice %233 {offsets = [6, 0], sizes = [1, 1024], strides = [1, 1]} : vector<16x1024xf32> to vector<1x1024xf32>
    %272 = vector.broadcast %270 : vector<16x1xf32> to vector<16x1024xf32>
    %273 = vector.broadcast %271 : vector<1x1024xf32> to vector<16x1024xf32>
    %274 = arith.mulf %272, %273 : vector<16x1024xf32>
    %275 = arith.addf %269, %274 : vector<16x1024xf32>
    %276 = vector.extract_strided_slice %234 {offsets = [0, 7], sizes = [16, 1], strides = [1, 1]} : vector<16x16xf32> to vector<16x1xf32>
    %277 = vector.extract_strided_slice %233 {offsets = [7, 0], sizes = [1, 1024], strides = [1, 1]} : vector<16x1024xf32> to vector<1x1024xf32>
    %278 = vector.broadcast %276 : vector<16x1xf32> to vector<16x1024xf32>
    %279 = vector.broadcast %277 : vector<1x1024xf32> to vector<16x1024xf32>
    %280 = arith.mulf %278, %279 : vector<16x1024xf32>
    %281 = arith.addf %275, %280 : vector<16x1024xf32>
    %282 = vector.extract_strided_slice %234 {offsets = [0, 8], sizes = [16, 1], strides = [1, 1]} : vector<16x16xf32> to vector<16x1xf32>
    %283 = vector.extract_strided_slice %233 {offsets = [8, 0], sizes = [1, 1024], strides = [1, 1]} : vector<16x1024xf32> to vector<1x1024xf32>
    %284 = vector.broadcast %282 : vector<16x1xf32> to vector<16x1024xf32>
    %285 = vector.broadcast %283 : vector<1x1024xf32> to vector<16x1024xf32>
    %286 = arith.mulf %284, %285 : vector<16x1024xf32>
    %287 = arith.addf %281, %286 : vector<16x1024xf32>
    %288 = vector.extract_strided_slice %234 {offsets = [0, 9], sizes = [16, 1], strides = [1, 1]} : vector<16x16xf32> to vector<16x1xf32>
    %289 = vector.extract_strided_slice %233 {offsets = [9, 0], sizes = [1, 1024], strides = [1, 1]} : vector<16x1024xf32> to vector<1x1024xf32>
    %290 = vector.broadcast %288 : vector<16x1xf32> to vector<16x1024xf32>
    %291 = vector.broadcast %289 : vector<1x1024xf32> to vector<16x1024xf32>
    %292 = arith.mulf %290, %291 : vector<16x1024xf32>
    %293 = arith.addf %287, %292 : vector<16x1024xf32>
    %294 = vector.extract_strided_slice %234 {offsets = [0, 10], sizes = [16, 1], strides = [1, 1]} : vector<16x16xf32> to vector<16x1xf32>
    %295 = vector.extract_strided_slice %233 {offsets = [10, 0], sizes = [1, 1024], strides = [1, 1]} : vector<16x1024xf32> to vector<1x1024xf32>
    %296 = vector.broadcast %294 : vector<16x1xf32> to vector<16x1024xf32>
    %297 = vector.broadcast %295 : vector<1x1024xf32> to vector<16x1024xf32>
    %298 = arith.mulf %296, %297 : vector<16x1024xf32>
    %299 = arith.addf %293, %298 : vector<16x1024xf32>
    %300 = vector.extract_strided_slice %234 {offsets = [0, 11], sizes = [16, 1], strides = [1, 1]} : vector<16x16xf32> to vector<16x1xf32>
    %301 = vector.extract_strided_slice %233 {offsets = [11, 0], sizes = [1, 1024], strides = [1, 1]} : vector<16x1024xf32> to vector<1x1024xf32>
    %302 = vector.broadcast %300 : vector<16x1xf32> to vector<16x1024xf32>
    %303 = vector.broadcast %301 : vector<1x1024xf32> to vector<16x1024xf32>
    %304 = arith.mulf %302, %303 : vector<16x1024xf32>
    %305 = arith.addf %299, %304 : vector<16x1024xf32>
    %306 = vector.extract_strided_slice %234 {offsets = [0, 12], sizes = [16, 1], strides = [1, 1]} : vector<16x16xf32> to vector<16x1xf32>
    %307 = vector.extract_strided_slice %233 {offsets = [12, 0], sizes = [1, 1024], strides = [1, 1]} : vector<16x1024xf32> to vector<1x1024xf32>
    %308 = vector.broadcast %306 : vector<16x1xf32> to vector<16x1024xf32>
    %309 = vector.broadcast %307 : vector<1x1024xf32> to vector<16x1024xf32>
    %310 = arith.mulf %308, %309 : vector<16x1024xf32>
    %311 = arith.addf %305, %310 : vector<16x1024xf32>
    %312 = vector.extract_strided_slice %234 {offsets = [0, 13], sizes = [16, 1], strides = [1, 1]} : vector<16x16xf32> to vector<16x1xf32>
    %313 = vector.extract_strided_slice %233 {offsets = [13, 0], sizes = [1, 1024], strides = [1, 1]} : vector<16x1024xf32> to vector<1x1024xf32>
    %314 = vector.broadcast %312 : vector<16x1xf32> to vector<16x1024xf32>
    %315 = vector.broadcast %313 : vector<1x1024xf32> to vector<16x1024xf32>
    %316 = arith.mulf %314, %315 : vector<16x1024xf32>
    %317 = arith.addf %311, %316 : vector<16x1024xf32>
    %318 = vector.extract_strided_slice %234 {offsets = [0, 14], sizes = [16, 1], strides = [1, 1]} : vector<16x16xf32> to vector<16x1xf32>
    %319 = vector.extract_strided_slice %233 {offsets = [14, 0], sizes = [1, 1024], strides = [1, 1]} : vector<16x1024xf32> to vector<1x1024xf32>
    %320 = vector.broadcast %318 : vector<16x1xf32> to vector<16x1024xf32>
    %321 = vector.broadcast %319 : vector<1x1024xf32> to vector<16x1024xf32>
    %322 = arith.mulf %320, %321 : vector<16x1024xf32>
    %323 = arith.addf %317, %322 : vector<16x1024xf32>
    %324 = vector.extract_strided_slice %234 {offsets = [0, 15], sizes = [16, 1], strides = [1, 1]} : vector<16x16xf32> to vector<16x1xf32>
    %325 = vector.extract_strided_slice %233 {offsets = [15, 0], sizes = [1, 1024], strides = [1, 1]} : vector<16x1024xf32> to vector<1x1024xf32>
    %326 = vector.broadcast %324 : vector<16x1xf32> to vector<16x1024xf32>
    %327 = vector.broadcast %325 : vector<1x1024xf32> to vector<16x1024xf32>
    %328 = arith.mulf %326, %327 : vector<16x1024xf32>
    %329 = arith.addf %323, %328 : vector<16x1024xf32>
    %c0_24 = arith.constant 0 : index
    %c0_25 = arith.constant 0 : index
    %330 = vector.load %arg11[%c0_24, %c0_25] : memref<16x1xf32, #tpu.memory_space<vmem>>, vector<16x1xf32>
    %331 = vector.broadcast %330 : vector<16x1xf32> to vector<16x1024xf32>
    %332 = arith.addf %329, %331 : vector<16x1024xf32>
    %cst_26 = arith.constant 0.000000e+00 : f32
    %333 = vector.broadcast %cst_26 : f32 to vector<16x1024xf32>
    %334 = arith.maximumf %332, %333 : vector<16x1024xf32>
    %c0_27 = arith.constant 0 : index
    %c0_28 = arith.constant 0 : index
    %335 = vector.load %arg12[%c0_27, %c0_28] : memref<3x16xf32, #tpu.memory_space<vmem>>, vector<3x16xf32>
    %336 = vector.extract_strided_slice %335 {offsets = [0, 0], sizes = [3, 1], strides = [1, 1]} : vector<3x16xf32> to vector<3x1xf32>
    %337 = vector.extract_strided_slice %334 {offsets = [0, 0], sizes = [1, 1024], strides = [1, 1]} : vector<16x1024xf32> to vector<1x1024xf32>
    %338 = vector.broadcast %336 : vector<3x1xf32> to vector<3x1024xf32>
    %339 = vector.broadcast %337 : vector<1x1024xf32> to vector<3x1024xf32>
    %340 = arith.mulf %338, %339 : vector<3x1024xf32>
    %341 = vector.extract_strided_slice %335 {offsets = [0, 1], sizes = [3, 1], strides = [1, 1]} : vector<3x16xf32> to vector<3x1xf32>
    %342 = vector.extract_strided_slice %334 {offsets = [1, 0], sizes = [1, 1024], strides = [1, 1]} : vector<16x1024xf32> to vector<1x1024xf32>
    %343 = vector.broadcast %341 : vector<3x1xf32> to vector<3x1024xf32>
    %344 = vector.broadcast %342 : vector<1x1024xf32> to vector<3x1024xf32>
    %345 = arith.mulf %343, %344 : vector<3x1024xf32>
    %346 = arith.addf %340, %345 : vector<3x1024xf32>
    %347 = vector.extract_strided_slice %335 {offsets = [0, 2], sizes = [3, 1], strides = [1, 1]} : vector<3x16xf32> to vector<3x1xf32>
    %348 = vector.extract_strided_slice %334 {offsets = [2, 0], sizes = [1, 1024], strides = [1, 1]} : vector<16x1024xf32> to vector<1x1024xf32>
    %349 = vector.broadcast %347 : vector<3x1xf32> to vector<3x1024xf32>
    %350 = vector.broadcast %348 : vector<1x1024xf32> to vector<3x1024xf32>
    %351 = arith.mulf %349, %350 : vector<3x1024xf32>
    %352 = arith.addf %346, %351 : vector<3x1024xf32>
    %353 = vector.extract_strided_slice %335 {offsets = [0, 3], sizes = [3, 1], strides = [1, 1]} : vector<3x16xf32> to vector<3x1xf32>
    %354 = vector.extract_strided_slice %334 {offsets = [3, 0], sizes = [1, 1024], strides = [1, 1]} : vector<16x1024xf32> to vector<1x1024xf32>
    %355 = vector.broadcast %353 : vector<3x1xf32> to vector<3x1024xf32>
    %356 = vector.broadcast %354 : vector<1x1024xf32> to vector<3x1024xf32>
    %357 = arith.mulf %355, %356 : vector<3x1024xf32>
    %358 = arith.addf %352, %357 : vector<3x1024xf32>
    %359 = vector.extract_strided_slice %335 {offsets = [0, 4], sizes = [3, 1], strides = [1, 1]} : vector<3x16xf32> to vector<3x1xf32>
    %360 = vector.extract_strided_slice %334 {offsets = [4, 0], sizes = [1, 1024], strides = [1, 1]} : vector<16x1024xf32> to vector<1x1024xf32>
    %361 = vector.broadcast %359 : vector<3x1xf32> to vector<3x1024xf32>
    %362 = vector.broadcast %360 : vector<1x1024xf32> to vector<3x1024xf32>
    %363 = arith.mulf %361, %362 : vector<3x1024xf32>
    %364 = arith.addf %358, %363 : vector<3x1024xf32>
    %365 = vector.extract_strided_slice %335 {offsets = [0, 5], sizes = [3, 1], strides = [1, 1]} : vector<3x16xf32> to vector<3x1xf32>
    %366 = vector.extract_strided_slice %334 {offsets = [5, 0], sizes = [1, 1024], strides = [1, 1]} : vector<16x1024xf32> to vector<1x1024xf32>
    %367 = vector.broadcast %365 : vector<3x1xf32> to vector<3x1024xf32>
    %368 = vector.broadcast %366 : vector<1x1024xf32> to vector<3x1024xf32>
    %369 = arith.mulf %367, %368 : vector<3x1024xf32>
    %370 = arith.addf %364, %369 : vector<3x1024xf32>
    %371 = vector.extract_strided_slice %335 {offsets = [0, 6], sizes = [3, 1], strides = [1, 1]} : vector<3x16xf32> to vector<3x1xf32>
    %372 = vector.extract_strided_slice %334 {offsets = [6, 0], sizes = [1, 1024], strides = [1, 1]} : vector<16x1024xf32> to vector<1x1024xf32>
    %373 = vector.broadcast %371 : vector<3x1xf32> to vector<3x1024xf32>
    %374 = vector.broadcast %372 : vector<1x1024xf32> to vector<3x1024xf32>
    %375 = arith.mulf %373, %374 : vector<3x1024xf32>
    %376 = arith.addf %370, %375 : vector<3x1024xf32>
    %377 = vector.extract_strided_slice %335 {offsets = [0, 7], sizes = [3, 1], strides = [1, 1]} : vector<3x16xf32> to vector<3x1xf32>
    %378 = vector.extract_strided_slice %334 {offsets = [7, 0], sizes = [1, 1024], strides = [1, 1]} : vector<16x1024xf32> to vector<1x1024xf32>
    %379 = vector.broadcast %377 : vector<3x1xf32> to vector<3x1024xf32>
    %380 = vector.broadcast %378 : vector<1x1024xf32> to vector<3x1024xf32>
    %381 = arith.mulf %379, %380 : vector<3x1024xf32>
    %382 = arith.addf %376, %381 : vector<3x1024xf32>
    %383 = vector.extract_strided_slice %335 {offsets = [0, 8], sizes = [3, 1], strides = [1, 1]} : vector<3x16xf32> to vector<3x1xf32>
    %384 = vector.extract_strided_slice %334 {offsets = [8, 0], sizes = [1, 1024], strides = [1, 1]} : vector<16x1024xf32> to vector<1x1024xf32>
    %385 = vector.broadcast %383 : vector<3x1xf32> to vector<3x1024xf32>
    %386 = vector.broadcast %384 : vector<1x1024xf32> to vector<3x1024xf32>
    %387 = arith.mulf %385, %386 : vector<3x1024xf32>
    %388 = arith.addf %382, %387 : vector<3x1024xf32>
    %389 = vector.extract_strided_slice %335 {offsets = [0, 9], sizes = [3, 1], strides = [1, 1]} : vector<3x16xf32> to vector<3x1xf32>
    %390 = vector.extract_strided_slice %334 {offsets = [9, 0], sizes = [1, 1024], strides = [1, 1]} : vector<16x1024xf32> to vector<1x1024xf32>
    %391 = vector.broadcast %389 : vector<3x1xf32> to vector<3x1024xf32>
    %392 = vector.broadcast %390 : vector<1x1024xf32> to vector<3x1024xf32>
    %393 = arith.mulf %391, %392 : vector<3x1024xf32>
    %394 = arith.addf %388, %393 : vector<3x1024xf32>
    %395 = vector.extract_strided_slice %335 {offsets = [0, 10], sizes = [3, 1], strides = [1, 1]} : vector<3x16xf32> to vector<3x1xf32>
    %396 = vector.extract_strided_slice %334 {offsets = [10, 0], sizes = [1, 1024], strides = [1, 1]} : vector<16x1024xf32> to vector<1x1024xf32>
    %397 = vector.broadcast %395 : vector<3x1xf32> to vector<3x1024xf32>
    %398 = vector.broadcast %396 : vector<1x1024xf32> to vector<3x1024xf32>
    %399 = arith.mulf %397, %398 : vector<3x1024xf32>
    %400 = arith.addf %394, %399 : vector<3x1024xf32>
    %401 = vector.extract_strided_slice %335 {offsets = [0, 11], sizes = [3, 1], strides = [1, 1]} : vector<3x16xf32> to vector<3x1xf32>
    %402 = vector.extract_strided_slice %334 {offsets = [11, 0], sizes = [1, 1024], strides = [1, 1]} : vector<16x1024xf32> to vector<1x1024xf32>
    %403 = vector.broadcast %401 : vector<3x1xf32> to vector<3x1024xf32>
    %404 = vector.broadcast %402 : vector<1x1024xf32> to vector<3x1024xf32>
    %405 = arith.mulf %403, %404 : vector<3x1024xf32>
    %406 = arith.addf %400, %405 : vector<3x1024xf32>
    %407 = vector.extract_strided_slice %335 {offsets = [0, 12], sizes = [3, 1], strides = [1, 1]} : vector<3x16xf32> to vector<3x1xf32>
    %408 = vector.extract_strided_slice %334 {offsets = [12, 0], sizes = [1, 1024], strides = [1, 1]} : vector<16x1024xf32> to vector<1x1024xf32>
    %409 = vector.broadcast %407 : vector<3x1xf32> to vector<3x1024xf32>
    %410 = vector.broadcast %408 : vector<1x1024xf32> to vector<3x1024xf32>
    %411 = arith.mulf %409, %410 : vector<3x1024xf32>
    %412 = arith.addf %406, %411 : vector<3x1024xf32>
    %413 = vector.extract_strided_slice %335 {offsets = [0, 13], sizes = [3, 1], strides = [1, 1]} : vector<3x16xf32> to vector<3x1xf32>
    %414 = vector.extract_strided_slice %334 {offsets = [13, 0], sizes = [1, 1024], strides = [1, 1]} : vector<16x1024xf32> to vector<1x1024xf32>
    %415 = vector.broadcast %413 : vector<3x1xf32> to vector<3x1024xf32>
    %416 = vector.broadcast %414 : vector<1x1024xf32> to vector<3x1024xf32>
    %417 = arith.mulf %415, %416 : vector<3x1024xf32>
    %418 = arith.addf %412, %417 : vector<3x1024xf32>
    %419 = vector.extract_strided_slice %335 {offsets = [0, 14], sizes = [3, 1], strides = [1, 1]} : vector<3x16xf32> to vector<3x1xf32>
    %420 = vector.extract_strided_slice %334 {offsets = [14, 0], sizes = [1, 1024], strides = [1, 1]} : vector<16x1024xf32> to vector<1x1024xf32>
    %421 = vector.broadcast %419 : vector<3x1xf32> to vector<3x1024xf32>
    %422 = vector.broadcast %420 : vector<1x1024xf32> to vector<3x1024xf32>
    %423 = arith.mulf %421, %422 : vector<3x1024xf32>
    %424 = arith.addf %418, %423 : vector<3x1024xf32>
    %425 = vector.extract_strided_slice %335 {offsets = [0, 15], sizes = [3, 1], strides = [1, 1]} : vector<3x16xf32> to vector<3x1xf32>
    %426 = vector.extract_strided_slice %334 {offsets = [15, 0], sizes = [1, 1024], strides = [1, 1]} : vector<16x1024xf32> to vector<1x1024xf32>
    %427 = vector.broadcast %425 : vector<3x1xf32> to vector<3x1024xf32>
    %428 = vector.broadcast %426 : vector<1x1024xf32> to vector<3x1024xf32>
    %429 = arith.mulf %427, %428 : vector<3x1024xf32>
    %430 = arith.addf %424, %429 : vector<3x1024xf32>
    %c0_29 = arith.constant 0 : index
    %c0_30 = arith.constant 0 : index
    %431 = vector.load %arg13[%c0_29, %c0_30] : memref<3x1xf32, #tpu.memory_space<vmem>>, vector<3x1xf32>
    %432 = vector.broadcast %431 : vector<3x1xf32> to vector<3x1024xf32>
    %433 = arith.addf %430, %432 : vector<3x1024xf32>
    %c0_31 = arith.constant 0 : index
    %c0_32 = arith.constant 0 : index
    %c0_33 = arith.constant 0 : index
    %434 = vector.load %arg15[%c0_31, %c0_32, %c0_33] : memref<1x3x1024xf32, #tpu.memory_space<vmem>>, vector<1x3x1024xf32>
    %435 = vector.shape_cast %434 : vector<1x3x1024xf32> to vector<3x1024xf32>
    %436 = vector.shape_cast %433 : vector<3x1024xf32> to vector<1x3x1024xf32>
    tpu.vector_store %arg15[%c0_31, %c0_32, %c0_33], %436 {strides = array<i32>} : memref<1x3x1024xf32, #tpu.memory_space<vmem>>, vector<1x3x1024xf32>,
    return
  }
  func.func @transform_0(%arg0: i32, %arg1: i32) -> (i32, i32) {
    %c0_i32 = arith.constant 0 : i32
    %c0_i32_0 = arith.constant 0 : i32
    return %c0_i32, %arg1 : i32, i32
  }
  func.func @transform_1(%arg0: i32, %arg1: i32) -> (i32, i32, i32) {
    %c0_i32 = arith.constant 0 : i32
    %c0_i32_0 = arith.constant 0 : i32
    %c0_i32_1 = arith.constant 0 : i32
    return %arg0, %c0_i32, %c0_i32_0 : i32, i32, i32
  }
  func.func @transform_2(%arg0: i32, %arg1: i32) -> (i32, i32, i32) {
    %c0_i32 = arith.constant 0 : i32
    %c0_i32_0 = arith.constant 0 : i32
    %c0_i32_1 = arith.constant 0 : i32
    return %arg0, %c0_i32, %c0_i32_0 : i32, i32, i32
  }
  func.func @transform_3(%arg0: i32, %arg1: i32) -> (i32, i32) {
    %c0_i32 = arith.constant 0 : i32
    %c0_i32_0 = arith.constant 0 : i32
    %c0_i32_1 = arith.constant 0 : i32
    return %c0_i32, %c0_i32_0 : i32, i32
  }
  func.func @transform_4(%arg0: i32, %arg1: i32) -> (i32, i32) {
    %c0_i32 = arith.constant 0 : i32
    %c0_i32_0 = arith.constant 0 : i32
    %c0_i32_1 = arith.constant 0 : i32
    return %c0_i32, %c0_i32_0 : i32, i32
  }
  func.func @transform_5(%arg0: i32, %arg1: i32) -> (i32, i32) {
    %c0_i32 = arith.constant 0 : i32
    %c0_i32_0 = arith.constant 0 : i32
    %c0_i32_1 = arith.constant 0 : i32
    return %c0_i32, %c0_i32_0 : i32, i32
  }
  func.func @transform_6(%arg0: i32, %arg1: i32) -> (i32, i32) {
    %c0_i32 = arith.constant 0 : i32
    %c0_i32_0 = arith.constant 0 : i32
    %c0_i32_1 = arith.constant 0 : i32
    return %c0_i32, %c0_i32_0 : i32, i32
  }
  func.func @transform_7(%arg0: i32, %arg1: i32) -> (i32, i32) {
    %c0_i32 = arith.constant 0 : i32
    %c0_i32_0 = arith.constant 0 : i32
    %c0_i32_1 = arith.constant 0 : i32
    return %c0_i32, %c0_i32_0 : i32, i32
  }
  func.func @transform_8(%arg0: i32, %arg1: i32) -> (i32, i32) {
    %c0_i32 = arith.constant 0 : i32
    %c0_i32_0 = arith.constant 0 : i32
    %c0_i32_1 = arith.constant 0 : i32
    return %c0_i32, %c0_i32_0 : i32, i32
  }
  func.func @transform_9(%arg0: i32, %arg1: i32) -> (i32, i32) {
    %c0_i32 = arith.constant 0 : i32
    %c0_i32_0 = arith.constant 0 : i32
    %c0_i32_1 = arith.constant 0 : i32
    return %c0_i32, %c0_i32_0 : i32, i32
  }
  func.func @transform_10(%arg0: i32, %arg1: i32) -> (i32, i32) {
    %c0_i32 = arith.constant 0 : i32
    %c0_i32_0 = arith.constant 0 : i32
    %c0_i32_1 = arith.constant 0 : i32
    return %c0_i32, %c0_i32_0 : i32, i32
  }
  func.func @transform_11(%arg0: i32, %arg1: i32) -> (i32, i32) {
    %c0_i32 = arith.constant 0 : i32
    %c0_i32_0 = arith.constant 0 : i32
    %c0_i32_1 = arith.constant 0 : i32
    return %c0_i32, %c0_i32_0 : i32, i32
  }
  func.func @transform_12(%arg0: i32, %arg1: i32) -> (i32, i32, i32) {
    %c0_i32 = arith.constant 0 : i32
    %c0_i32_0 = arith.constant 0 : i32
    return %arg0, %c0_i32, %arg1 : i32, i32, i32
  }
  func.func @transform_13(%arg0: i32, %arg1: i32) -> (i32, i32, i32) {
    %c0_i32 = arith.constant 0 : i32
    %c0_i32_0 = arith.constant 0 : i32
    return %arg0, %c0_i32, %arg1 : i32, i32, i32
  }
}

module attributes {stable_mosaic.version = 11 : i64} {
  func.func @kernel(%arg0: i32, %arg1: i32, %arg2: memref<16x1024xf32, #tpu.memory_space<vmem>>, %arg3: memref<1x16x1xf32, #tpu.memory_space<vmem>>, %arg4: memref<1x16x1xf32, #tpu.memory_space<vmem>>, %arg5: memref<16x16xf32, #tpu.memory_space<vmem>>, %arg6: memref<16x1xf32, #tpu.memory_space<vmem>>, %arg7: memref<3x16xf32, #tpu.memory_space<vmem>>, %arg8: memref<3x1xf32, #tpu.memory_space<vmem>>, %arg9: memref<16x3xf32, #tpu.memory_space<vmem>>, %arg10: memref<16x16xf32, #tpu.memory_space<vmem>>, %arg11: memref<16x1xf32, #tpu.memory_space<vmem>>, %arg12: memref<3x16xf32, #tpu.memory_space<vmem>>, %arg13: memref<3x1xf32, #tpu.memory_space<vmem>>, %arg14: memref<1x3x1024xf32, #tpu.memory_space<vmem>>, %arg15: memref<1x3x1024xf32, #tpu.memory_space<vmem>>) attributes {dimension_semantics = [#tpu.dimension_semantics<parallel>, #tpu.dimension_semantics<parallel>], iteration_bounds = array<i64: 2, 2>, scalar_prefetch = 0 : i64, scratch_operands = 0 : i64, tpu.core_type = #tpu.core_type<tc>, window_params = [{transform_indices = @transform_0, window_bounds = array<i64: 16, 1024>}, {transform_indices = @transform_1, window_bounds = array<i64: 1, 16, 1>}, {transform_indices = @transform_2, window_bounds = array<i64: 1, 16, 1>}, {pipeline_mode = #tpu.pipeline_mode<synchronous>, transform_indices = @transform_3, window_bounds = array<i64: 16, 16>}, {pipeline_mode = #tpu.pipeline_mode<synchronous>, transform_indices = @transform_4, window_bounds = array<i64: 16, 1>}, {pipeline_mode = #tpu.pipeline_mode<synchronous>, transform_indices = @transform_5, window_bounds = array<i64: 3, 16>}, {pipeline_mode = #tpu.pipeline_mode<synchronous>, transform_indices = @transform_6, window_bounds = array<i64: 3, 1>}, {pipeline_mode = #tpu.pipeline_mode<synchronous>, transform_indices = @transform_7, window_bounds = array<i64: 16, 3>}, {pipeline_mode = #tpu.pipeline_mode<synchronous>, transform_indices = @transform_8, window_bounds = array<i64: 16, 16>}, {pipeline_mode = #tpu.pipeline_mode<synchronous>, transform_indices = @transform_9, window_bounds = array<i64: 16, 1>}, {pipeline_mode = #tpu.pipeline_mode<synchronous>, transform_indices = @transform_10, window_bounds = array<i64: 3, 16>}, {pipeline_mode = #tpu.pipeline_mode<synchronous>, transform_indices = @transform_11, window_bounds = array<i64: 3, 1>}, {transform_indices = @transform_12, window_bounds = array<i64: 1, 3, 1024>}, {transform_indices = @transform_13, window_bounds = array<i64: 1, 3, 1024>}]} {
    %c0 = arith.constant 0 : index
    %c0_0 = arith.constant 0 : index
    %0 = vector.load %arg2[%c0, %c0_0] : memref<16x1024xf32, #tpu.memory_space<vmem>>, vector<16x1024xf32>
    %c0_1 = arith.constant 0 : index
    %c0_2 = arith.constant 0 : index
    %c0_3 = arith.constant 0 : index
    %1 = vector.load %arg3[%c0_1, %c0_2, %c0_3] : memref<1x16x1xf32, #tpu.memory_space<vmem>>, vector<1x16x1xf32>
    %2 = vector.shape_cast %1 : vector<1x16x1xf32> to vector<16x1xf32>
    %3 = vector.broadcast %2 : vector<16x1xf32> to vector<16x1024xf32>
    %4 = arith.addf %0, %3 : vector<16x1024xf32>
    %cst = arith.constant 0.000000e+00 : f32
    %5 = vector.broadcast %cst : f32 to vector<16x1024xf32>
    %6 = arith.maximumf %4, %5 : vector<16x1024xf32>
    %c0_4 = arith.constant 0 : index
    %c0_5 = arith.constant 0 : index
    %7 = vector.load %arg5[%c0_4, %c0_5] : memref<16x16xf32, #tpu.memory_space<vmem>>, vector<16x16xf32>
    %8 = vector.extract_strided_slice %7 {offsets = [0, 0], sizes = [16, 1], strides = [1, 1]} : vector<16x16xf32> to vector<16x1xf32>
    %9 = vector.extract_strided_slice %6 {offsets = [0, 0], sizes = [1, 1024], strides = [1, 1]} : vector<16x1024xf32> to vector<1x1024xf32>
    %10 = vector.broadcast %8 : vector<16x1xf32> to vector<16x1024xf32>
    %11 = vector.broadcast %9 : vector<1x1024xf32> to vector<16x1024xf32>
    %12 = arith.mulf %10, %11 : vector<16x1024xf32>
    %13 = vector.extract_strided_slice %7 {offsets = [0, 1], sizes = [16, 1], strides = [1, 1]} : vector<16x16xf32> to vector<16x1xf32>
    %14 = vector.extract_strided_slice %6 {offsets = [1, 0], sizes = [1, 1024], strides = [1, 1]} : vector<16x1024xf32> to vector<1x1024xf32>
    %15 = vector.broadcast %13 : vector<16x1xf32> to vector<16x1024xf32>
    %16 = vector.broadcast %14 : vector<1x1024xf32> to vector<16x1024xf32>
    %17 = arith.mulf %15, %16 : vector<16x1024xf32>
    %18 = arith.addf %12, %17 : vector<16x1024xf32>
    %19 = vector.extract_strided_slice %7 {offsets = [0, 2], sizes = [16, 1], strides = [1, 1]} : vector<16x16xf32> to vector<16x1xf32>
    %20 = vector.extract_strided_slice %6 {offsets = [2, 0], sizes = [1, 1024], strides = [1, 1]} : vector<16x1024xf32> to vector<1x1024xf32>
    %21 = vector.broadcast %19 : vector<16x1xf32> to vector<16x1024xf32>
    %22 = vector.broadcast %20 : vector<1x1024xf32> to vector<16x1024xf32>
    %23 = arith.mulf %21, %22 : vector<16x1024xf32>
    %24 = arith.addf %18, %23 : vector<16x1024xf32>
    %25 = vector.extract_strided_slice %7 {offsets = [0, 3], sizes = [16, 1], strides = [1, 1]} : vector<16x16xf32> to vector<16x1xf32>
    %26 = vector.extract_strided_slice %6 {offsets = [3, 0], sizes = [1, 1024], strides = [1, 1]} : vector<16x1024xf32> to vector<1x1024xf32>
    %27 = vector.broadcast %25 : vector<16x1xf32> to vector<16x1024xf32>
    %28 = vector.broadcast %26 : vector<1x1024xf32> to vector<16x1024xf32>
    %29 = arith.mulf %27, %28 : vector<16x1024xf32>
    %30 = arith.addf %24, %29 : vector<16x1024xf32>
    %31 = vector.extract_strided_slice %7 {offsets = [0, 4], sizes = [16, 1], strides = [1, 1]} : vector<16x16xf32> to vector<16x1xf32>
    %32 = vector.extract_strided_slice %6 {offsets = [4, 0], sizes = [1, 1024], strides = [1, 1]} : vector<16x1024xf32> to vector<1x1024xf32>
    %33 = vector.broadcast %31 : vector<16x1xf32> to vector<16x1024xf32>
    %34 = vector.broadcast %32 : vector<1x1024xf32> to vector<16x1024xf32>
    %35 = arith.mulf %33, %34 : vector<16x1024xf32>
    %36 = arith.addf %30, %35 : vector<16x1024xf32>
    %37 = vector.extract_strided_slice %7 {offsets = [0, 5], sizes = [16, 1], strides = [1, 1]} : vector<16x16xf32> to vector<16x1xf32>
    %38 = vector.extract_strided_slice %6 {offsets = [5, 0], sizes = [1, 1024], strides = [1, 1]} : vector<16x1024xf32> to vector<1x1024xf32>
    %39 = vector.broadcast %37 : vector<16x1xf32> to vector<16x1024xf32>
    %40 = vector.broadcast %38 : vector<1x1024xf32> to vector<16x1024xf32>
    %41 = arith.mulf %39, %40 : vector<16x1024xf32>
    %42 = arith.addf %36, %41 : vector<16x1024xf32>
    %43 = vector.extract_strided_slice %7 {offsets = [0, 6], sizes = [16, 1], strides = [1, 1]} : vector<16x16xf32> to vector<16x1xf32>
    %44 = vector.extract_strided_slice %6 {offsets = [6, 0], sizes = [1, 1024], strides = [1, 1]} : vector<16x1024xf32> to vector<1x1024xf32>
    %45 = vector.broadcast %43 : vector<16x1xf32> to vector<16x1024xf32>
    %46 = vector.broadcast %44 : vector<1x1024xf32> to vector<16x1024xf32>
    %47 = arith.mulf %45, %46 : vector<16x1024xf32>
    %48 = arith.addf %42, %47 : vector<16x1024xf32>
    %49 = vector.extract_strided_slice %7 {offsets = [0, 7], sizes = [16, 1], strides = [1, 1]} : vector<16x16xf32> to vector<16x1xf32>
    %50 = vector.extract_strided_slice %6 {offsets = [7, 0], sizes = [1, 1024], strides = [1, 1]} : vector<16x1024xf32> to vector<1x1024xf32>
    %51 = vector.broadcast %49 : vector<16x1xf32> to vector<16x1024xf32>
    %52 = vector.broadcast %50 : vector<1x1024xf32> to vector<16x1024xf32>
    %53 = arith.mulf %51, %52 : vector<16x1024xf32>
    %54 = arith.addf %48, %53 : vector<16x1024xf32>
    %55 = vector.extract_strided_slice %7 {offsets = [0, 8], sizes = [16, 1], strides = [1, 1]} : vector<16x16xf32> to vector<16x1xf32>
    %56 = vector.extract_strided_slice %6 {offsets = [8, 0], sizes = [1, 1024], strides = [1, 1]} : vector<16x1024xf32> to vector<1x1024xf32>
    %57 = vector.broadcast %55 : vector<16x1xf32> to vector<16x1024xf32>
    %58 = vector.broadcast %56 : vector<1x1024xf32> to vector<16x1024xf32>
    %59 = arith.mulf %57, %58 : vector<16x1024xf32>
    %60 = arith.addf %54, %59 : vector<16x1024xf32>
    %61 = vector.extract_strided_slice %7 {offsets = [0, 9], sizes = [16, 1], strides = [1, 1]} : vector<16x16xf32> to vector<16x1xf32>
    %62 = vector.extract_strided_slice %6 {offsets = [9, 0], sizes = [1, 1024], strides = [1, 1]} : vector<16x1024xf32> to vector<1x1024xf32>
    %63 = vector.broadcast %61 : vector<16x1xf32> to vector<16x1024xf32>
    %64 = vector.broadcast %62 : vector<1x1024xf32> to vector<16x1024xf32>
    %65 = arith.mulf %63, %64 : vector<16x1024xf32>
    %66 = arith.addf %60, %65 : vector<16x1024xf32>
    %67 = vector.extract_strided_slice %7 {offsets = [0, 10], sizes = [16, 1], strides = [1, 1]} : vector<16x16xf32> to vector<16x1xf32>
    %68 = vector.extract_strided_slice %6 {offsets = [10, 0], sizes = [1, 1024], strides = [1, 1]} : vector<16x1024xf32> to vector<1x1024xf32>
    %69 = vector.broadcast %67 : vector<16x1xf32> to vector<16x1024xf32>
    %70 = vector.broadcast %68 : vector<1x1024xf32> to vector<16x1024xf32>
    %71 = arith.mulf %69, %70 : vector<16x1024xf32>
    %72 = arith.addf %66, %71 : vector<16x1024xf32>
    %73 = vector.extract_strided_slice %7 {offsets = [0, 11], sizes = [16, 1], strides = [1, 1]} : vector<16x16xf32> to vector<16x1xf32>
    %74 = vector.extract_strided_slice %6 {offsets = [11, 0], sizes = [1, 1024], strides = [1, 1]} : vector<16x1024xf32> to vector<1x1024xf32>
    %75 = vector.broadcast %73 : vector<16x1xf32> to vector<16x1024xf32>
    %76 = vector.broadcast %74 : vector<1x1024xf32> to vector<16x1024xf32>
    %77 = arith.mulf %75, %76 : vector<16x1024xf32>
    %78 = arith.addf %72, %77 : vector<16x1024xf32>
    %79 = vector.extract_strided_slice %7 {offsets = [0, 12], sizes = [16, 1], strides = [1, 1]} : vector<16x16xf32> to vector<16x1xf32>
    %80 = vector.extract_strided_slice %6 {offsets = [12, 0], sizes = [1, 1024], strides = [1, 1]} : vector<16x1024xf32> to vector<1x1024xf32>
    %81 = vector.broadcast %79 : vector<16x1xf32> to vector<16x1024xf32>
    %82 = vector.broadcast %80 : vector<1x1024xf32> to vector<16x1024xf32>
    %83 = arith.mulf %81, %82 : vector<16x1024xf32>
    %84 = arith.addf %78, %83 : vector<16x1024xf32>
    %85 = vector.extract_strided_slice %7 {offsets = [0, 13], sizes = [16, 1], strides = [1, 1]} : vector<16x16xf32> to vector<16x1xf32>
    %86 = vector.extract_strided_slice %6 {offsets = [13, 0], sizes = [1, 1024], strides = [1, 1]} : vector<16x1024xf32> to vector<1x1024xf32>
    %87 = vector.broadcast %85 : vector<16x1xf32> to vector<16x1024xf32>
    %88 = vector.broadcast %86 : vector<1x1024xf32> to vector<16x1024xf32>
    %89 = arith.mulf %87, %88 : vector<16x1024xf32>
    %90 = arith.addf %84, %89 : vector<16x1024xf32>
    %91 = vector.extract_strided_slice %7 {offsets = [0, 14], sizes = [16, 1], strides = [1, 1]} : vector<16x16xf32> to vector<16x1xf32>
    %92 = vector.extract_strided_slice %6 {offsets = [14, 0], sizes = [1, 1024], strides = [1, 1]} : vector<16x1024xf32> to vector<1x1024xf32>
    %93 = vector.broadcast %91 : vector<16x1xf32> to vector<16x1024xf32>
    %94 = vector.broadcast %92 : vector<1x1024xf32> to vector<16x1024xf32>
    %95 = arith.mulf %93, %94 : vector<16x1024xf32>
    %96 = arith.addf %90, %95 : vector<16x1024xf32>
    %97 = vector.extract_strided_slice %7 {offsets = [0, 15], sizes = [16, 1], strides = [1, 1]} : vector<16x16xf32> to vector<16x1xf32>
    %98 = vector.extract_strided_slice %6 {offsets = [15, 0], sizes = [1, 1024], strides = [1, 1]} : vector<16x1024xf32> to vector<1x1024xf32>
    %99 = vector.broadcast %97 : vector<16x1xf32> to vector<16x1024xf32>
    %100 = vector.broadcast %98 : vector<1x1024xf32> to vector<16x1024xf32>
    %101 = arith.mulf %99, %100 : vector<16x1024xf32>
    %102 = arith.addf %96, %101 : vector<16x1024xf32>
    %c0_6 = arith.constant 0 : index
    %c0_7 = arith.constant 0 : index
    %103 = vector.load %arg6[%c0_6, %c0_7] : memref<16x1xf32, #tpu.memory_space<vmem>>, vector<16x1xf32>
    %104 = vector.broadcast %103 : vector<16x1xf32> to vector<16x1024xf32>
    %105 = arith.addf %102, %104 : vector<16x1024xf32>
    %cst_8 = arith.constant 0.000000e+00 : f32
    %106 = vector.broadcast %cst_8 : f32 to vector<16x1024xf32>
    %107 = arith.maximumf %105, %106 : vector<16x1024xf32>
    %c0_9 = arith.constant 0 : index
    %c0_10 = arith.constant 0 : index
    %108 = vector.load %arg7[%c0_9, %c0_10] : memref<3x16xf32, #tpu.memory_space<vmem>>, vector<3x16xf32>
    %109 = vector.extract_strided_slice %108 {offsets = [0, 0], sizes = [3, 1], strides = [1, 1]} : vector<3x16xf32> to vector<3x1xf32>
    %110 = vector.extract_strided_slice %107 {offsets = [0, 0], sizes = [1, 1024], strides = [1, 1]} : vector<16x1024xf32> to vector<1x1024xf32>
    %111 = vector.broadcast %109 : vector<3x1xf32> to vector<3x1024xf32>
    %112 = vector.broadcast %110 : vector<1x1024xf32> to vector<3x1024xf32>
    %113 = arith.mulf %111, %112 : vector<3x1024xf32>
    %114 = vector.extract_strided_slice %108 {offsets = [0, 1], sizes = [3, 1], strides = [1, 1]} : vector<3x16xf32> to vector<3x1xf32>
    %115 = vector.extract_strided_slice %107 {offsets = [1, 0], sizes = [1, 1024], strides = [1, 1]} : vector<16x1024xf32> to vector<1x1024xf32>
    %116 = vector.broadcast %114 : vector<3x1xf32> to vector<3x1024xf32>
    %117 = vector.broadcast %115 : vector<1x1024xf32> to vector<3x1024xf32>
    %118 = arith.mulf %116, %117 : vector<3x1024xf32>
    %119 = arith.addf %113, %118 : vector<3x1024xf32>
    %120 = vector.extract_strided_slice %108 {offsets = [0, 2], sizes = [3, 1], strides = [1, 1]} : vector<3x16xf32> to vector<3x1xf32>
    %121 = vector.extract_strided_slice %107 {offsets = [2, 0], sizes = [1, 1024], strides = [1, 1]} : vector<16x1024xf32> to vector<1x1024xf32>
    %122 = vector.broadcast %120 : vector<3x1xf32> to vector<3x1024xf32>
    %123 = vector.broadcast %121 : vector<1x1024xf32> to vector<3x1024xf32>
    %124 = arith.mulf %122, %123 : vector<3x1024xf32>
    %125 = arith.addf %119, %124 : vector<3x1024xf32>
    %126 = vector.extract_strided_slice %108 {offsets = [0, 3], sizes = [3, 1], strides = [1, 1]} : vector<3x16xf32> to vector<3x1xf32>
    %127 = vector.extract_strided_slice %107 {offsets = [3, 0], sizes = [1, 1024], strides = [1, 1]} : vector<16x1024xf32> to vector<1x1024xf32>
    %128 = vector.broadcast %126 : vector<3x1xf32> to vector<3x1024xf32>
    %129 = vector.broadcast %127 : vector<1x1024xf32> to vector<3x1024xf32>
    %130 = arith.mulf %128, %129 : vector<3x1024xf32>
    %131 = arith.addf %125, %130 : vector<3x1024xf32>
    %132 = vector.extract_strided_slice %108 {offsets = [0, 4], sizes = [3, 1], strides = [1, 1]} : vector<3x16xf32> to vector<3x1xf32>
    %133 = vector.extract_strided_slice %107 {offsets = [4, 0], sizes = [1, 1024], strides = [1, 1]} : vector<16x1024xf32> to vector<1x1024xf32>
    %134 = vector.broadcast %132 : vector<3x1xf32> to vector<3x1024xf32>
    %135 = vector.broadcast %133 : vector<1x1024xf32> to vector<3x1024xf32>
    %136 = arith.mulf %134, %135 : vector<3x1024xf32>
    %137 = arith.addf %131, %136 : vector<3x1024xf32>
    %138 = vector.extract_strided_slice %108 {offsets = [0, 5], sizes = [3, 1], strides = [1, 1]} : vector<3x16xf32> to vector<3x1xf32>
    %139 = vector.extract_strided_slice %107 {offsets = [5, 0], sizes = [1, 1024], strides = [1, 1]} : vector<16x1024xf32> to vector<1x1024xf32>
    %140 = vector.broadcast %138 : vector<3x1xf32> to vector<3x1024xf32>
    %141 = vector.broadcast %139 : vector<1x1024xf32> to vector<3x1024xf32>
    %142 = arith.mulf %140, %141 : vector<3x1024xf32>
    %143 = arith.addf %137, %142 : vector<3x1024xf32>
    %144 = vector.extract_strided_slice %108 {offsets = [0, 6], sizes = [3, 1], strides = [1, 1]} : vector<3x16xf32> to vector<3x1xf32>
    %145 = vector.extract_strided_slice %107 {offsets = [6, 0], sizes = [1, 1024], strides = [1, 1]} : vector<16x1024xf32> to vector<1x1024xf32>
    %146 = vector.broadcast %144 : vector<3x1xf32> to vector<3x1024xf32>
    %147 = vector.broadcast %145 : vector<1x1024xf32> to vector<3x1024xf32>
    %148 = arith.mulf %146, %147 : vector<3x1024xf32>
    %149 = arith.addf %143, %148 : vector<3x1024xf32>
    %150 = vector.extract_strided_slice %108 {offsets = [0, 7], sizes = [3, 1], strides = [1, 1]} : vector<3x16xf32> to vector<3x1xf32>
    %151 = vector.extract_strided_slice %107 {offsets = [7, 0], sizes = [1, 1024], strides = [1, 1]} : vector<16x1024xf32> to vector<1x1024xf32>
    %152 = vector.broadcast %150 : vector<3x1xf32> to vector<3x1024xf32>
    %153 = vector.broadcast %151 : vector<1x1024xf32> to vector<3x1024xf32>
    %154 = arith.mulf %152, %153 : vector<3x1024xf32>
    %155 = arith.addf %149, %154 : vector<3x1024xf32>
    %156 = vector.extract_strided_slice %108 {offsets = [0, 8], sizes = [3, 1], strides = [1, 1]} : vector<3x16xf32> to vector<3x1xf32>
    %157 = vector.extract_strided_slice %107 {offsets = [8, 0], sizes = [1, 1024], strides = [1, 1]} : vector<16x1024xf32> to vector<1x1024xf32>
    %158 = vector.broadcast %156 : vector<3x1xf32> to vector<3x1024xf32>
    %159 = vector.broadcast %157 : vector<1x1024xf32> to vector<3x1024xf32>
    %160 = arith.mulf %158, %159 : vector<3x1024xf32>
    %161 = arith.addf %155, %160 : vector<3x1024xf32>
    %162 = vector.extract_strided_slice %108 {offsets = [0, 9], sizes = [3, 1], strides = [1, 1]} : vector<3x16xf32> to vector<3x1xf32>
    %163 = vector.extract_strided_slice %107 {offsets = [9, 0], sizes = [1, 1024], strides = [1, 1]} : vector<16x1024xf32> to vector<1x1024xf32>
    %164 = vector.broadcast %162 : vector<3x1xf32> to vector<3x1024xf32>
    %165 = vector.broadcast %163 : vector<1x1024xf32> to vector<3x1024xf32>
    %166 = arith.mulf %164, %165 : vector<3x1024xf32>
    %167 = arith.addf %161, %166 : vector<3x1024xf32>
    %168 = vector.extract_strided_slice %108 {offsets = [0, 10], sizes = [3, 1], strides = [1, 1]} : vector<3x16xf32> to vector<3x1xf32>
    %169 = vector.extract_strided_slice %107 {offsets = [10, 0], sizes = [1, 1024], strides = [1, 1]} : vector<16x1024xf32> to vector<1x1024xf32>
    %170 = vector.broadcast %168 : vector<3x1xf32> to vector<3x1024xf32>
    %171 = vector.broadcast %169 : vector<1x1024xf32> to vector<3x1024xf32>
    %172 = arith.mulf %170, %171 : vector<3x1024xf32>
    %173 = arith.addf %167, %172 : vector<3x1024xf32>
    %174 = vector.extract_strided_slice %108 {offsets = [0, 11], sizes = [3, 1], strides = [1, 1]} : vector<3x16xf32> to vector<3x1xf32>
    %175 = vector.extract_strided_slice %107 {offsets = [11, 0], sizes = [1, 1024], strides = [1, 1]} : vector<16x1024xf32> to vector<1x1024xf32>
    %176 = vector.broadcast %174 : vector<3x1xf32> to vector<3x1024xf32>
    %177 = vector.broadcast %175 : vector<1x1024xf32> to vector<3x1024xf32>
    %178 = arith.mulf %176, %177 : vector<3x1024xf32>
    %179 = arith.addf %173, %178 : vector<3x1024xf32>
    %180 = vector.extract_strided_slice %108 {offsets = [0, 12], sizes = [3, 1], strides = [1, 1]} : vector<3x16xf32> to vector<3x1xf32>
    %181 = vector.extract_strided_slice %107 {offsets = [12, 0], sizes = [1, 1024], strides = [1, 1]} : vector<16x1024xf32> to vector<1x1024xf32>
    %182 = vector.broadcast %180 : vector<3x1xf32> to vector<3x1024xf32>
    %183 = vector.broadcast %181 : vector<1x1024xf32> to vector<3x1024xf32>
    %184 = arith.mulf %182, %183 : vector<3x1024xf32>
    %185 = arith.addf %179, %184 : vector<3x1024xf32>
    %186 = vector.extract_strided_slice %108 {offsets = [0, 13], sizes = [3, 1], strides = [1, 1]} : vector<3x16xf32> to vector<3x1xf32>
    %187 = vector.extract_strided_slice %107 {offsets = [13, 0], sizes = [1, 1024], strides = [1, 1]} : vector<16x1024xf32> to vector<1x1024xf32>
    %188 = vector.broadcast %186 : vector<3x1xf32> to vector<3x1024xf32>
    %189 = vector.broadcast %187 : vector<1x1024xf32> to vector<3x1024xf32>
    %190 = arith.mulf %188, %189 : vector<3x1024xf32>
    %191 = arith.addf %185, %190 : vector<3x1024xf32>
    %192 = vector.extract_strided_slice %108 {offsets = [0, 14], sizes = [3, 1], strides = [1, 1]} : vector<3x16xf32> to vector<3x1xf32>
    %193 = vector.extract_strided_slice %107 {offsets = [14, 0], sizes = [1, 1024], strides = [1, 1]} : vector<16x1024xf32> to vector<1x1024xf32>
    %194 = vector.broadcast %192 : vector<3x1xf32> to vector<3x1024xf32>
    %195 = vector.broadcast %193 : vector<1x1024xf32> to vector<3x1024xf32>
    %196 = arith.mulf %194, %195 : vector<3x1024xf32>
    %197 = arith.addf %191, %196 : vector<3x1024xf32>
    %198 = vector.extract_strided_slice %108 {offsets = [0, 15], sizes = [3, 1], strides = [1, 1]} : vector<3x16xf32> to vector<3x1xf32>
    %199 = vector.extract_strided_slice %107 {offsets = [15, 0], sizes = [1, 1024], strides = [1, 1]} : vector<16x1024xf32> to vector<1x1024xf32>
    %200 = vector.broadcast %198 : vector<3x1xf32> to vector<3x1024xf32>
    %201 = vector.broadcast %199 : vector<1x1024xf32> to vector<3x1024xf32>
    %202 = arith.mulf %200, %201 : vector<3x1024xf32>
    %203 = arith.addf %197, %202 : vector<3x1024xf32>
    %c0_11 = arith.constant 0 : index
    %c0_12 = arith.constant 0 : index
    %204 = vector.load %arg8[%c0_11, %c0_12] : memref<3x1xf32, #tpu.memory_space<vmem>>, vector<3x1xf32>
    %205 = vector.broadcast %204 : vector<3x1xf32> to vector<3x1024xf32>
    %206 = arith.addf %203, %205 : vector<3x1024xf32>
    %c0_13 = arith.constant 0 : index
    %c0_14 = arith.constant 0 : index
    %c0_15 = arith.constant 0 : index
    %207 = vector.load %arg14[%c0_13, %c0_14, %c0_15] : memref<1x3x1024xf32, #tpu.memory_space<vmem>>, vector<1x3x1024xf32>
    %208 = vector.shape_cast %207 : vector<1x3x1024xf32> to vector<3x1024xf32>
    %209 = vector.shape_cast %206 : vector<3x1024xf32> to vector<1x3x1024xf32>
    tpu.vector_store %arg14[%c0_13, %c0_14, %c0_15], %209 {strides = array<i32>} : memref<1x3x1024xf32, #tpu.memory_space<vmem>>, vector<1x3x1024xf32>,
    %c0_16 = arith.constant 0 : index
    %c0_17 = arith.constant 0 : index
    %210 = vector.load %arg9[%c0_16, %c0_17] : memref<16x3xf32, #tpu.memory_space<vmem>>, vector<16x3xf32>
    %c0_18 = arith.constant 0 : index
    %c0_19 = arith.constant 0 : index
    %c0_20 = arith.constant 0 : index
    %211 = vector.load %arg4[%c0_18, %c0_19, %c0_20] : memref<1x16x1xf32, #tpu.memory_space<vmem>>, vector<1x16x1xf32>
    %212 = vector.shape_cast %211 : vector<1x16x1xf32> to vector<16x1xf32>
    %213 = vector.extract_strided_slice %210 {offsets = [0, 0], sizes = [16, 1], strides = [1, 1]} : vector<16x3xf32> to vector<16x1xf32>
    %214 = vector.extract_strided_slice %206 {offsets = [0, 0], sizes = [1, 1024], strides = [1, 1]} : vector<3x1024xf32> to vector<1x1024xf32>
    %215 = vector.broadcast %213 : vector<16x1xf32> to vector<16x1024xf32>
    %216 = vector.broadcast %214 : vector<1x1024xf32> to vector<16x1024xf32>
    %217 = arith.mulf %215, %216 : vector<16x1024xf32>
    %218 = vector.broadcast %212 : vector<16x1xf32> to vector<16x1024xf32>
    %219 = arith.addf %218, %217 : vector<16x1024xf32>
    %220 = vector.extract_strided_slice %210 {offsets = [0, 1], sizes = [16, 1], strides = [1, 1]} : vector<16x3xf32> to vector<16x1xf32>
    %221 = vector.extract_strided_slice %206 {offsets = [1, 0], sizes = [1, 1024], strides = [1, 1]} : vector<3x1024xf32> to vector<1x1024xf32>
    %222 = vector.broadcast %220 : vector<16x1xf32> to vector<16x1024xf32>
    %223 = vector.broadcast %221 : vector<1x1024xf32> to vector<16x1024xf32>
    %224 = arith.mulf %222, %223 : vector<16x1024xf32>
    %225 = arith.addf %219, %224 : vector<16x1024xf32>
    %226 = vector.extract_strided_slice %210 {offsets = [0, 2], sizes = [16, 1], strides = [1, 1]} : vector<16x3xf32> to vector<16x1xf32>
    %227 = vector.extract_strided_slice %206 {offsets = [2, 0], sizes = [1, 1024], strides = [1, 1]} : vector<3x1024xf32> to vector<1x1024xf32>
    %228 = vector.broadcast %226 : vector<16x1xf32> to vector<16x1024xf32>
    %229 = vector.broadcast %227 : vector<1x1024xf32> to vector<16x1024xf32>
    %230 = arith.mulf %228, %229 : vector<16x1024xf32>
    %231 = arith.addf %225, %230 : vector<16x1024xf32>
    %cst_21 = arith.constant 0.000000e+00 : f32
    %232 = vector.broadcast %cst_21 : f32 to vector<16x1024xf32>
    %233 = arith.maximumf %231, %232 : vector<16x1024xf32>
    %c0_22 = arith.constant 0 : index
    %c0_23 = arith.constant 0 : index
    %234 = vector.load %arg10[%c0_22, %c0_23] : memref<16x16xf32, #tpu.memory_space<vmem>>, vector<16x16xf32>
    %235 = vector.extract_strided_slice %234 {offsets = [0, 0], sizes = [16, 1], strides = [1, 1]} : vector<16x16xf32> to vector<16x1xf32>
    %236 = vector.extract_strided_slice %233 {offsets = [0, 0], sizes = [1, 1024], strides = [1, 1]} : vector<16x1024xf32> to vector<1x1024xf32>
    %237 = vector.broadcast %235 : vector<16x1xf32> to vector<16x1024xf32>
    %238 = vector.broadcast %236 : vector<1x1024xf32> to vector<16x1024xf32>
    %239 = arith.mulf %237, %238 : vector<16x1024xf32>
    %240 = vector.extract_strided_slice %234 {offsets = [0, 1], sizes = [16, 1], strides = [1, 1]} : vector<16x16xf32> to vector<16x1xf32>
    %241 = vector.extract_strided_slice %233 {offsets = [1, 0], sizes = [1, 1024], strides = [1, 1]} : vector<16x1024xf32> to vector<1x1024xf32>
    %242 = vector.broadcast %240 : vector<16x1xf32> to vector<16x1024xf32>
    %243 = vector.broadcast %241 : vector<1x1024xf32> to vector<16x1024xf32>
    %244 = arith.mulf %242, %243 : vector<16x1024xf32>
    %245 = arith.addf %239, %244 : vector<16x1024xf32>
    %246 = vector.extract_strided_slice %234 {offsets = [0, 2], sizes = [16, 1], strides = [1, 1]} : vector<16x16xf32> to vector<16x1xf32>
    %247 = vector.extract_strided_slice %233 {offsets = [2, 0], sizes = [1, 1024], strides = [1, 1]} : vector<16x1024xf32> to vector<1x1024xf32>
    %248 = vector.broadcast %246 : vector<16x1xf32> to vector<16x1024xf32>
    %249 = vector.broadcast %247 : vector<1x1024xf32> to vector<16x1024xf32>
    %250 = arith.mulf %248, %249 : vector<16x1024xf32>
    %251 = arith.addf %245, %250 : vector<16x1024xf32>
    %252 = vector.extract_strided_slice %234 {offsets = [0, 3], sizes = [16, 1], strides = [1, 1]} : vector<16x16xf32> to vector<16x1xf32>
    %253 = vector.extract_strided_slice %233 {offsets = [3, 0], sizes = [1, 1024], strides = [1, 1]} : vector<16x1024xf32> to vector<1x1024xf32>
    %254 = vector.broadcast %252 : vector<16x1xf32> to vector<16x1024xf32>
    %255 = vector.broadcast %253 : vector<1x1024xf32> to vector<16x1024xf32>
    %256 = arith.mulf %254, %255 : vector<16x1024xf32>
    %257 = arith.addf %251, %256 : vector<16x1024xf32>
    %258 = vector.extract_strided_slice %234 {offsets = [0, 4], sizes = [16, 1], strides = [1, 1]} : vector<16x16xf32> to vector<16x1xf32>
    %259 = vector.extract_strided_slice %233 {offsets = [4, 0], sizes = [1, 1024], strides = [1, 1]} : vector<16x1024xf32> to vector<1x1024xf32>
    %260 = vector.broadcast %258 : vector<16x1xf32> to vector<16x1024xf32>
    %261 = vector.broadcast %259 : vector<1x1024xf32> to vector<16x1024xf32>
    %262 = arith.mulf %260, %261 : vector<16x1024xf32>
    %263 = arith.addf %257, %262 : vector<16x1024xf32>
    %264 = vector.extract_strided_slice %234 {offsets = [0, 5], sizes = [16, 1], strides = [1, 1]} : vector<16x16xf32> to vector<16x1xf32>
    %265 = vector.extract_strided_slice %233 {offsets = [5, 0], sizes = [1, 1024], strides = [1, 1]} : vector<16x1024xf32> to vector<1x1024xf32>
    %266 = vector.broadcast %264 : vector<16x1xf32> to vector<16x1024xf32>
    %267 = vector.broadcast %265 : vector<1x1024xf32> to vector<16x1024xf32>
    %268 = arith.mulf %266, %267 : vector<16x1024xf32>
    %269 = arith.addf %263, %268 : vector<16x1024xf32>
    %270 = vector.extract_strided_slice %234 {offsets = [0, 6], sizes = [16, 1], strides = [1, 1]} : vector<16x16xf32> to vector<16x1xf32>
    %271 = vector.extract_strided_slice %233 {offsets = [6, 0], sizes = [1, 1024], strides = [1, 1]} : vector<16x1024xf32> to vector<1x1024xf32>
    %272 = vector.broadcast %270 : vector<16x1xf32> to vector<16x1024xf32>
    %273 = vector.broadcast %271 : vector<1x1024xf32> to vector<16x1024xf32>
    %274 = arith.mulf %272, %273 : vector<16x1024xf32>
    %275 = arith.addf %269, %274 : vector<16x1024xf32>
    %276 = vector.extract_strided_slice %234 {offsets = [0, 7], sizes = [16, 1], strides = [1, 1]} : vector<16x16xf32> to vector<16x1xf32>
    %277 = vector.extract_strided_slice %233 {offsets = [7, 0], sizes = [1, 1024], strides = [1, 1]} : vector<16x1024xf32> to vector<1x1024xf32>
    %278 = vector.broadcast %276 : vector<16x1xf32> to vector<16x1024xf32>
    %279 = vector.broadcast %277 : vector<1x1024xf32> to vector<16x1024xf32>
    %280 = arith.mulf %278, %279 : vector<16x1024xf32>
    %281 = arith.addf %275, %280 : vector<16x1024xf32>
    %282 = vector.extract_strided_slice %234 {offsets = [0, 8], sizes = [16, 1], strides = [1, 1]} : vector<16x16xf32> to vector<16x1xf32>
    %283 = vector.extract_strided_slice %233 {offsets = [8, 0], sizes = [1, 1024], strides = [1, 1]} : vector<16x1024xf32> to vector<1x1024xf32>
    %284 = vector.broadcast %282 : vector<16x1xf32> to vector<16x1024xf32>
    %285 = vector.broadcast %283 : vector<1x1024xf32> to vector<16x1024xf32>
    %286 = arith.mulf %284, %285 : vector<16x1024xf32>
    %287 = arith.addf %281, %286 : vector<16x1024xf32>
    %288 = vector.extract_strided_slice %234 {offsets = [0, 9], sizes = [16, 1], strides = [1, 1]} : vector<16x16xf32> to vector<16x1xf32>
    %289 = vector.extract_strided_slice %233 {offsets = [9, 0], sizes = [1, 1024], strides = [1, 1]} : vector<16x1024xf32> to vector<1x1024xf32>
    %290 = vector.broadcast %288 : vector<16x1xf32> to vector<16x1024xf32>
    %291 = vector.broadcast %289 : vector<1x1024xf32> to vector<16x1024xf32>
    %292 = arith.mulf %290, %291 : vector<16x1024xf32>
    %293 = arith.addf %287, %292 : vector<16x1024xf32>
    %294 = vector.extract_strided_slice %234 {offsets = [0, 10], sizes = [16, 1], strides = [1, 1]} : vector<16x16xf32> to vector<16x1xf32>
    %295 = vector.extract_strided_slice %233 {offsets = [10, 0], sizes = [1, 1024], strides = [1, 1]} : vector<16x1024xf32> to vector<1x1024xf32>
    %296 = vector.broadcast %294 : vector<16x1xf32> to vector<16x1024xf32>
    %297 = vector.broadcast %295 : vector<1x1024xf32> to vector<16x1024xf32>
    %298 = arith.mulf %296, %297 : vector<16x1024xf32>
    %299 = arith.addf %293, %298 : vector<16x1024xf32>
    %300 = vector.extract_strided_slice %234 {offsets = [0, 11], sizes = [16, 1], strides = [1, 1]} : vector<16x16xf32> to vector<16x1xf32>
    %301 = vector.extract_strided_slice %233 {offsets = [11, 0], sizes = [1, 1024], strides = [1, 1]} : vector<16x1024xf32> to vector<1x1024xf32>
    %302 = vector.broadcast %300 : vector<16x1xf32> to vector<16x1024xf32>
    %303 = vector.broadcast %301 : vector<1x1024xf32> to vector<16x1024xf32>
    %304 = arith.mulf %302, %303 : vector<16x1024xf32>
    %305 = arith.addf %299, %304 : vector<16x1024xf32>
    %306 = vector.extract_strided_slice %234 {offsets = [0, 12], sizes = [16, 1], strides = [1, 1]} : vector<16x16xf32> to vector<16x1xf32>
    %307 = vector.extract_strided_slice %233 {offsets = [12, 0], sizes = [1, 1024], strides = [1, 1]} : vector<16x1024xf32> to vector<1x1024xf32>
    %308 = vector.broadcast %306 : vector<16x1xf32> to vector<16x1024xf32>
    %309 = vector.broadcast %307 : vector<1x1024xf32> to vector<16x1024xf32>
    %310 = arith.mulf %308, %309 : vector<16x1024xf32>
    %311 = arith.addf %305, %310 : vector<16x1024xf32>
    %312 = vector.extract_strided_slice %234 {offsets = [0, 13], sizes = [16, 1], strides = [1, 1]} : vector<16x16xf32> to vector<16x1xf32>
    %313 = vector.extract_strided_slice %233 {offsets = [13, 0], sizes = [1, 1024], strides = [1, 1]} : vector<16x1024xf32> to vector<1x1024xf32>
    %314 = vector.broadcast %312 : vector<16x1xf32> to vector<16x1024xf32>
    %315 = vector.broadcast %313 : vector<1x1024xf32> to vector<16x1024xf32>
    %316 = arith.mulf %314, %315 : vector<16x1024xf32>
    %317 = arith.addf %311, %316 : vector<16x1024xf32>
    %318 = vector.extract_strided_slice %234 {offsets = [0, 14], sizes = [16, 1], strides = [1, 1]} : vector<16x16xf32> to vector<16x1xf32>
    %319 = vector.extract_strided_slice %233 {offsets = [14, 0], sizes = [1, 1024], strides = [1, 1]} : vector<16x1024xf32> to vector<1x1024xf32>
    %320 = vector.broadcast %318 : vector<16x1xf32> to vector<16x1024xf32>
    %321 = vector.broadcast %319 : vector<1x1024xf32> to vector<16x1024xf32>
    %322 = arith.mulf %320, %321 : vector<16x1024xf32>
    %323 = arith.addf %317, %322 : vector<16x1024xf32>
    %324 = vector.extract_strided_slice %234 {offsets = [0, 15], sizes = [16, 1], strides = [1, 1]} : vector<16x16xf32> to vector<16x1xf32>
    %325 = vector.extract_strided_slice %233 {offsets = [15, 0], sizes = [1, 1024], strides = [1, 1]} : vector<16x1024xf32> to vector<1x1024xf32>
    %326 = vector.broadcast %324 : vector<16x1xf32> to vector<16x1024xf32>
    %327 = vector.broadcast %325 : vector<1x1024xf32> to vector<16x1024xf32>
    %328 = arith.mulf %326, %327 : vector<16x1024xf32>
    %329 = arith.addf %323, %328 : vector<16x1024xf32>
    %c0_24 = arith.constant 0 : index
    %c0_25 = arith.constant 0 : index
    %330 = vector.load %arg11[%c0_24, %c0_25] : memref<16x1xf32, #tpu.memory_space<vmem>>, vector<16x1xf32>
    %331 = vector.broadcast %330 : vector<16x1xf32> to vector<16x1024xf32>
    %332 = arith.addf %329, %331 : vector<16x1024xf32>
    %cst_26 = arith.constant 0.000000e+00 : f32
    %333 = vector.broadcast %cst_26 : f32 to vector<16x1024xf32>
    %334 = arith.maximumf %332, %333 : vector<16x1024xf32>
    %c0_27 = arith.constant 0 : index
    %c0_28 = arith.constant 0 : index
    %335 = vector.load %arg12[%c0_27, %c0_28] : memref<3x16xf32, #tpu.memory_space<vmem>>, vector<3x16xf32>
    %336 = vector.extract_strided_slice %335 {offsets = [0, 0], sizes = [3, 1], strides = [1, 1]} : vector<3x16xf32> to vector<3x1xf32>
    %337 = vector.extract_strided_slice %334 {offsets = [0, 0], sizes = [1, 1024], strides = [1, 1]} : vector<16x1024xf32> to vector<1x1024xf32>
    %338 = vector.broadcast %336 : vector<3x1xf32> to vector<3x1024xf32>
    %339 = vector.broadcast %337 : vector<1x1024xf32> to vector<3x1024xf32>
    %340 = arith.mulf %338, %339 : vector<3x1024xf32>
    %341 = vector.extract_strided_slice %335 {offsets = [0, 1], sizes = [3, 1], strides = [1, 1]} : vector<3x16xf32> to vector<3x1xf32>
    %342 = vector.extract_strided_slice %334 {offsets = [1, 0], sizes = [1, 1024], strides = [1, 1]} : vector<16x1024xf32> to vector<1x1024xf32>
    %343 = vector.broadcast %341 : vector<3x1xf32> to vector<3x1024xf32>
    %344 = vector.broadcast %342 : vector<1x1024xf32> to vector<3x1024xf32>
    %345 = arith.mulf %343, %344 : vector<3x1024xf32>
    %346 = arith.addf %340, %345 : vector<3x1024xf32>
    %347 = vector.extract_strided_slice %335 {offsets = [0, 2], sizes = [3, 1], strides = [1, 1]} : vector<3x16xf32> to vector<3x1xf32>
    %348 = vector.extract_strided_slice %334 {offsets = [2, 0], sizes = [1, 1024], strides = [1, 1]} : vector<16x1024xf32> to vector<1x1024xf32>
    %349 = vector.broadcast %347 : vector<3x1xf32> to vector<3x1024xf32>
    %350 = vector.broadcast %348 : vector<1x1024xf32> to vector<3x1024xf32>
    %351 = arith.mulf %349, %350 : vector<3x1024xf32>
    %352 = arith.addf %346, %351 : vector<3x1024xf32>
    %353 = vector.extract_strided_slice %335 {offsets = [0, 3], sizes = [3, 1], strides = [1, 1]} : vector<3x16xf32> to vector<3x1xf32>
    %354 = vector.extract_strided_slice %334 {offsets = [3, 0], sizes = [1, 1024], strides = [1, 1]} : vector<16x1024xf32> to vector<1x1024xf32>
    %355 = vector.broadcast %353 : vector<3x1xf32> to vector<3x1024xf32>
    %356 = vector.broadcast %354 : vector<1x1024xf32> to vector<3x1024xf32>
    %357 = arith.mulf %355, %356 : vector<3x1024xf32>
    %358 = arith.addf %352, %357 : vector<3x1024xf32>
    %359 = vector.extract_strided_slice %335 {offsets = [0, 4], sizes = [3, 1], strides = [1, 1]} : vector<3x16xf32> to vector<3x1xf32>
    %360 = vector.extract_strided_slice %334 {offsets = [4, 0], sizes = [1, 1024], strides = [1, 1]} : vector<16x1024xf32> to vector<1x1024xf32>
    %361 = vector.broadcast %359 : vector<3x1xf32> to vector<3x1024xf32>
    %362 = vector.broadcast %360 : vector<1x1024xf32> to vector<3x1024xf32>
    %363 = arith.mulf %361, %362 : vector<3x1024xf32>
    %364 = arith.addf %358, %363 : vector<3x1024xf32>
    %365 = vector.extract_strided_slice %335 {offsets = [0, 5], sizes = [3, 1], strides = [1, 1]} : vector<3x16xf32> to vector<3x1xf32>
    %366 = vector.extract_strided_slice %334 {offsets = [5, 0], sizes = [1, 1024], strides = [1, 1]} : vector<16x1024xf32> to vector<1x1024xf32>
    %367 = vector.broadcast %365 : vector<3x1xf32> to vector<3x1024xf32>
    %368 = vector.broadcast %366 : vector<1x1024xf32> to vector<3x1024xf32>
    %369 = arith.mulf %367, %368 : vector<3x1024xf32>
    %370 = arith.addf %364, %369 : vector<3x1024xf32>
    %371 = vector.extract_strided_slice %335 {offsets = [0, 6], sizes = [3, 1], strides = [1, 1]} : vector<3x16xf32> to vector<3x1xf32>
    %372 = vector.extract_strided_slice %334 {offsets = [6, 0], sizes = [1, 1024], strides = [1, 1]} : vector<16x1024xf32> to vector<1x1024xf32>
    %373 = vector.broadcast %371 : vector<3x1xf32> to vector<3x1024xf32>
    %374 = vector.broadcast %372 : vector<1x1024xf32> to vector<3x1024xf32>
    %375 = arith.mulf %373, %374 : vector<3x1024xf32>
    %376 = arith.addf %370, %375 : vector<3x1024xf32>
    %377 = vector.extract_strided_slice %335 {offsets = [0, 7], sizes = [3, 1], strides = [1, 1]} : vector<3x16xf32> to vector<3x1xf32>
    %378 = vector.extract_strided_slice %334 {offsets = [7, 0], sizes = [1, 1024], strides = [1, 1]} : vector<16x1024xf32> to vector<1x1024xf32>
    %379 = vector.broadcast %377 : vector<3x1xf32> to vector<3x1024xf32>
    %380 = vector.broadcast %378 : vector<1x1024xf32> to vector<3x1024xf32>
    %381 = arith.mulf %379, %380 : vector<3x1024xf32>
    %382 = arith.addf %376, %381 : vector<3x1024xf32>
    %383 = vector.extract_strided_slice %335 {offsets = [0, 8], sizes = [3, 1], strides = [1, 1]} : vector<3x16xf32> to vector<3x1xf32>
    %384 = vector.extract_strided_slice %334 {offsets = [8, 0], sizes = [1, 1024], strides = [1, 1]} : vector<16x1024xf32> to vector<1x1024xf32>
    %385 = vector.broadcast %383 : vector<3x1xf32> to vector<3x1024xf32>
    %386 = vector.broadcast %384 : vector<1x1024xf32> to vector<3x1024xf32>
    %387 = arith.mulf %385, %386 : vector<3x1024xf32>
    %388 = arith.addf %382, %387 : vector<3x1024xf32>
    %389 = vector.extract_strided_slice %335 {offsets = [0, 9], sizes = [3, 1], strides = [1, 1]} : vector<3x16xf32> to vector<3x1xf32>
    %390 = vector.extract_strided_slice %334 {offsets = [9, 0], sizes = [1, 1024], strides = [1, 1]} : vector<16x1024xf32> to vector<1x1024xf32>
    %391 = vector.broadcast %389 : vector<3x1xf32> to vector<3x1024xf32>
    %392 = vector.broadcast %390 : vector<1x1024xf32> to vector<3x1024xf32>
    %393 = arith.mulf %391, %392 : vector<3x1024xf32>
    %394 = arith.addf %388, %393 : vector<3x1024xf32>
    %395 = vector.extract_strided_slice %335 {offsets = [0, 10], sizes = [3, 1], strides = [1, 1]} : vector<3x16xf32> to vector<3x1xf32>
    %396 = vector.extract_strided_slice %334 {offsets = [10, 0], sizes = [1, 1024], strides = [1, 1]} : vector<16x1024xf32> to vector<1x1024xf32>
    %397 = vector.broadcast %395 : vector<3x1xf32> to vector<3x1024xf32>
    %398 = vector.broadcast %396 : vector<1x1024xf32> to vector<3x1024xf32>
    %399 = arith.mulf %397, %398 : vector<3x1024xf32>
    %400 = arith.addf %394, %399 : vector<3x1024xf32>
    %401 = vector.extract_strided_slice %335 {offsets = [0, 11], sizes = [3, 1], strides = [1, 1]} : vector<3x16xf32> to vector<3x1xf32>
    %402 = vector.extract_strided_slice %334 {offsets = [11, 0], sizes = [1, 1024], strides = [1, 1]} : vector<16x1024xf32> to vector<1x1024xf32>
    %403 = vector.broadcast %401 : vector<3x1xf32> to vector<3x1024xf32>
    %404 = vector.broadcast %402 : vector<1x1024xf32> to vector<3x1024xf32>
    %405 = arith.mulf %403, %404 : vector<3x1024xf32>
    %406 = arith.addf %400, %405 : vector<3x1024xf32>
    %407 = vector.extract_strided_slice %335 {offsets = [0, 12], sizes = [3, 1], strides = [1, 1]} : vector<3x16xf32> to vector<3x1xf32>
    %408 = vector.extract_strided_slice %334 {offsets = [12, 0], sizes = [1, 1024], strides = [1, 1]} : vector<16x1024xf32> to vector<1x1024xf32>
    %409 = vector.broadcast %407 : vector<3x1xf32> to vector<3x1024xf32>
    %410 = vector.broadcast %408 : vector<1x1024xf32> to vector<3x1024xf32>
    %411 = arith.mulf %409, %410 : vector<3x1024xf32>
    %412 = arith.addf %406, %411 : vector<3x1024xf32>
    %413 = vector.extract_strided_slice %335 {offsets = [0, 13], sizes = [3, 1], strides = [1, 1]} : vector<3x16xf32> to vector<3x1xf32>
    %414 = vector.extract_strided_slice %334 {offsets = [13, 0], sizes = [1, 1024], strides = [1, 1]} : vector<16x1024xf32> to vector<1x1024xf32>
    %415 = vector.broadcast %413 : vector<3x1xf32> to vector<3x1024xf32>
    %416 = vector.broadcast %414 : vector<1x1024xf32> to vector<3x1024xf32>
    %417 = arith.mulf %415, %416 : vector<3x1024xf32>
    %418 = arith.addf %412, %417 : vector<3x1024xf32>
    %419 = vector.extract_strided_slice %335 {offsets = [0, 14], sizes = [3, 1], strides = [1, 1]} : vector<3x16xf32> to vector<3x1xf32>
    %420 = vector.extract_strided_slice %334 {offsets = [14, 0], sizes = [1, 1024], strides = [1, 1]} : vector<16x1024xf32> to vector<1x1024xf32>
    %421 = vector.broadcast %419 : vector<3x1xf32> to vector<3x1024xf32>
    %422 = vector.broadcast %420 : vector<1x1024xf32> to vector<3x1024xf32>
    %423 = arith.mulf %421, %422 : vector<3x1024xf32>
    %424 = arith.addf %418, %423 : vector<3x1024xf32>
    %425 = vector.extract_strided_slice %335 {offsets = [0, 15], sizes = [3, 1], strides = [1, 1]} : vector<3x16xf32> to vector<3x1xf32>
    %426 = vector.extract_strided_slice %334 {offsets = [15, 0], sizes = [1, 1024], strides = [1, 1]} : vector<16x1024xf32> to vector<1x1024xf32>
    %427 = vector.broadcast %425 : vector<3x1xf32> to vector<3x1024xf32>
    %428 = vector.broadcast %426 : vector<1x1024xf32> to vector<3x1024xf32>
    %429 = arith.mulf %427, %428 : vector<3x1024xf32>
    %430 = arith.addf %424, %429 : vector<3x1024xf32>
    %c0_29 = arith.constant 0 : index
    %c0_30 = arith.constant 0 : index
    %431 = vector.load %arg13[%c0_29, %c0_30] : memref<3x1xf32, #tpu.memory_space<vmem>>, vector<3x1xf32>
    %432 = vector.broadcast %431 : vector<3x1xf32> to vector<3x1024xf32>
    %433 = arith.addf %430, %432 : vector<3x1024xf32>
    %c0_31 = arith.constant 0 : index
    %c0_32 = arith.constant 0 : index
    %c0_33 = arith.constant 0 : index
    %434 = vector.load %arg15[%c0_31, %c0_32, %c0_33] : memref<1x3x1024xf32, #tpu.memory_space<vmem>>, vector<1x3x1024xf32>
    %435 = vector.shape_cast %434 : vector<1x3x1024xf32> to vector<3x1024xf32>
    %436 = vector.shape_cast %433 : vector<3x1024xf32> to vector<1x3x1024xf32>
    tpu.vector_store %arg15[%c0_31, %c0_32, %c0_33], %436 {strides = array<i32>} : memref<1x3x1024xf32, #tpu.memory_space<vmem>>, vector<1x3x1024xf32>,
    return
  }
  func.func @transform_0(%arg0: i32, %arg1: i32) -> (i32, i32) {
    %c0_i32 = arith.constant 0 : i32
    %c0_i32_0 = arith.constant 0 : i32
    return %c0_i32, %arg1 : i32, i32
  }
  func.func @transform_1(%arg0: i32, %arg1: i32) -> (i32, i32, i32) {
    %c0_i32 = arith.constant 0 : i32
    %c0_i32_0 = arith.constant 0 : i32
    %c0_i32_1 = arith.constant 0 : i32
    return %arg0, %c0_i32, %c0_i32_0 : i32, i32, i32
  }
  func.func @transform_2(%arg0: i32, %arg1: i32) -> (i32, i32, i32) {
    %c0_i32 = arith.constant 0 : i32
    %c0_i32_0 = arith.constant 0 : i32
    %c0_i32_1 = arith.constant 0 : i32
    return %arg0, %c0_i32, %c0_i32_0 : i32, i32, i32
  }
  func.func @transform_3(%arg0: i32, %arg1: i32) -> (i32, i32) {
    %c0_i32 = arith.constant 0 : i32
    %c0_i32_0 = arith.constant 0 : i32
    %c0_i32_1 = arith.constant 0 : i32
    return %c0_i32, %c0_i32_0 : i32, i32
  }
  func.func @transform_4(%arg0: i32, %arg1: i32) -> (i32, i32) {
    %c0_i32 = arith.constant 0 : i32
    %c0_i32_0 = arith.constant 0 : i32
    %c0_i32_1 = arith.constant 0 : i32
    return %c0_i32, %c0_i32_0 : i32, i32
  }
  func.func @transform_5(%arg0: i32, %arg1: i32) -> (i32, i32) {
    %c0_i32 = arith.constant 0 : i32
    %c0_i32_0 = arith.constant 0 : i32
    %c0_i32_1 = arith.constant 0 : i32
    return %c0_i32, %c0_i32_0 : i32, i32
  }
  func.func @transform_6(%arg0: i32, %arg1: i32) -> (i32, i32) {
    %c0_i32 = arith.constant 0 : i32
    %c0_i32_0 = arith.constant 0 : i32
    %c0_i32_1 = arith.constant 0 : i32
    return %c0_i32, %c0_i32_0 : i32, i32
  }
  func.func @transform_7(%arg0: i32, %arg1: i32) -> (i32, i32) {
    %c0_i32 = arith.constant 0 : i32
    %c0_i32_0 = arith.constant 0 : i32
    %c0_i32_1 = arith.constant 0 : i32
    return %c0_i32, %c0_i32_0 : i32, i32
  }
  func.func @transform_8(%arg0: i32, %arg1: i32) -> (i32, i32) {
    %c0_i32 = arith.constant 0 : i32
    %c0_i32_0 = arith.constant 0 : i32
    %c0_i32_1 = arith.constant 0 : i32
    return %c0_i32, %c0_i32_0 : i32, i32
  }
  func.func @transform_9(%arg0: i32, %arg1: i32) -> (i32, i32) {
    %c0_i32 = arith.constant 0 : i32
    %c0_i32_0 = arith.constant 0 : i32
    %c0_i32_1 = arith.constant 0 : i32
    return %c0_i32, %c0_i32_0 : i32, i32
  }
  func.func @transform_10(%arg0: i32, %arg1: i32) -> (i32, i32) {
    %c0_i32 = arith.constant 0 : i32
    %c0_i32_0 = arith.constant 0 : i32
    %c0_i32_1 = arith.constant 0 : i32
    return %c0_i32, %c0_i32_0 : i32, i32
  }
  func.func @transform_11(%arg0: i32, %arg1: i32) -> (i32, i32) {
    %c0_i32 = arith.constant 0 : i32
    %c0_i32_0 = arith.constant 0 : i32
    %c0_i32_1 = arith.constant 0 : i32
    return %c0_i32, %c0_i32_0 : i32, i32
  }
  func.func @transform_12(%arg0: i32, %arg1: i32) -> (i32, i32, i32) {
    %c0_i32 = arith.constant 0 : i32
    %c0_i32_0 = arith.constant 0 : i32
    return %arg0, %c0_i32, %arg1 : i32, i32, i32
  }
  func.func @transform_13(%arg0: i32, %arg1: i32) -> (i32, i32, i32) {
    %c0_i32 = arith.constant 0 : i32
    %c0_i32_0 = arith.constant 0 : i32
    return %arg0, %c0_i32, %arg1 : i32, i32, i32
  }
}

</mosaic_0001>

<llo_original>
// kernel: tpu_custom_call.1
$region0: #{tpu_custom_call.1}
  #allocation0 [shape = 'u32[]', space=smem, size = 0x4, offset = 0x4, fixed_abs, tag = 'smem constant byte address 0x4 - core index']
  #allocation1 [shape = 'u32[72,128]{1,0:T(1,128)}', space=vmem, size = 0x9000, scoped, tag = 'internal scratch']
  %s0 = inlined_call_operand.hbm [shape: f32[16,2048], index: 0, kind: input, shape index: {}]
  %s1 = inlined_call_operand.vmem [shape: f32[2,16,1], index: 1, kind: input, shape index: {}]
  %s2 = inlined_call_operand.vmem [shape: f32[2,16,1], index: 2, kind: input, shape index: {}]
  %s3 = inlined_call_operand.vmem [shape: f32[16,16], index: 3, kind: input, shape index: {}]
  %s4 = inlined_call_operand.vmem [shape: f32[16,1], index: 4, kind: input, shape index: {}]
  %s5 = inlined_call_operand.vmem [shape: f32[3,16], index: 5, kind: input, shape index: {}]
  %s6 = inlined_call_operand.vmem [shape: f32[3,1], index: 6, kind: input, shape index: {}]
  %s7 = inlined_call_operand.vmem [shape: f32[16,3], index: 7, kind: input, shape index: {}]
  %s8 = inlined_call_operand.vmem [shape: f32[16,16], index: 8, kind: input, shape index: {}]
  %s9 = inlined_call_operand.vmem [shape: f32[16,1], index: 9, kind: input, shape index: {}]
  %s10 = inlined_call_operand.vmem [shape: f32[3,16], index: 10, kind: input, shape index: {}]
  %s11 = inlined_call_operand.vmem [shape: f32[3,1], index: 11, kind: input, shape index: {}]
  %s12 = inlined_call_operand.vmem [shape: f32[2,3,2048], index: 12, kind: output, shape index: {0}]
  %s13 = inlined_call_operand.vmem [shape: f32[2,3,2048], index: 13, kind: output, shape index: {1}]
  %14 = xla_tuple %s12, %s13
  %s15 = sld [smem:[#allocation0]]
  $region93: #{tpu_custom_call.1} parent=0
    _
  %s17 = ssub.s32 1, %s15
  %s18 = scalar_select 0, %s17, %s15
  $region1: #{tpu_custom_call.1} parent=0
    #allocation2 [shape = 'u8[131072]{0}', space=vmem, size = 0x20000, scoped, tag = 'input window, operand 0']
    #allocation3 [shape = 's32[2]{0}', space=sflag, size = 0x8, scoped, tag = 'scoped memory for tpu_custom_call.1']
    %19 = vsyncpa [#allocation3], 0
    %s20 = scalar_lea.sflag [#allocation3], 1
    %21 = vsyncpa %s20, 0
    loop: start=0, step=1, limit=6
    $region2: #{tpu_custom_call.1} parent=1 // loop_pre_header
      _
    $region3: #{tpu_custom_call.1} parent=1 // loop_header
      %s23 = sphi 0, %s27
      %p24 = scmp.ge.s32.totalorder %s23, 6
      %s30 = sphi 0, %s42
      %s31 = sphi 0, %s38
      %s32 = sphi 0, %s30
      %s33 = sphi 0, %s31
      %s34 = sphi 0, %s32
      %s35 = sphi 0, %s33
      %s45 = sphi 0, %s47
      %s48 = sphi 0, %s45
      %s49 = sphi 0, %s48
      %s65 = sphi 0, %s49
      %s71 = sphi 0, %s73
      %s74 = sphi 0, %s71
      %s75 = sphi 0, %s74
      %s91 = sphi 0, %s75
      %s97 = sphi 0, %s99
      %s100 = sphi 0, %s97
      %s101 = sphi 0, %s100
      %s117 = sphi 0, %s101
      %s121 = sphi 0, %s121
      %s123 = sphi 0, %s121
      %s124 = sphi 0, %s123
      %s138 = sphi 0, %s124
      %s142 = sphi 0, %s142
      %s144 = sphi 0, %s142
      %s145 = sphi 0, %s144
      %s159 = sphi 0, %s145
      %s163 = sphi 0, %s163
      %s165 = sphi 0, %s163
      %s166 = sphi 0, %s165
      %s180 = sphi 0, %s166
      %s184 = sphi 0, %s184
      %s186 = sphi 0, %s184
      %s187 = sphi 0, %s186
      %s201 = sphi 0, %s187
      %s205 = sphi 0, %s205
      %s207 = sphi 0, %s205
      %s208 = sphi 0, %s207
      %s222 = sphi 0, %s208
      %s226 = sphi 0, %s226
      %s228 = sphi 0, %s226
      %s229 = sphi 0, %s228
      %s243 = sphi 0, %s229
      %s247 = sphi 0, %s247
      %s249 = sphi 0, %s247
      %s250 = sphi 0, %s249
      %s264 = sphi 0, %s250
      %s268 = sphi 0, %s268
      %s270 = sphi 0, %s268
      %s271 = sphi 0, %s270
      %s285 = sphi 0, %s271
      %s289 = sphi 0, %s289
      %s291 = sphi 0, %s289
      %s292 = sphi 0, %s291
      %s306 = sphi 0, %s292
      %s314 = sphi 0, %s316
      %s317 = sphi 0, %s314
      %s318 = sphi 0, %s317
      %s334 = sphi 0, %s318
      %s342 = sphi 0, %s344
      %s345 = sphi 0, %s342
      %s346 = sphi 0, %s345
      %s362 = sphi 0, %s346
    $region4: #{tpu_custom_call.1} parent=1 // loop_header_branch
      %26 = sbr.rel (%p24) target = $region8
    $region5: #{tpu_custom_call.1} parent=1 // loop_body
      %s28 = ssub.s32 %s23, 1
      %s29 = ssub.s32 %s23, 2
      %s36 = sadd.s32 1, %s31
      %p37 = scmp.ge.s32.totalorder %s36, 2
      %s38 = scalar_select %p37, 0, %s36
      %s39 = sadd.s32 1, %s30
      %s40 = scalar_select %p37, %s39, %s30
      %p41 = scmp.ge.s32.totalorder %s40, 2
      %s42 = scalar_select %p41, 0, %s40
      %s43 = ssub.s32 %s31, %s38
      %p44 = scmp.eq.s32.totalorder %s43, 0
      %s46 = sadd.s32 %s45, 1
      %s47 = scalar_select %p44, %s45, %s46
      %p50 = pneg %p44
      %p51 = scmp.eq.s32.totalorder %s23, 3
      %p52 = por %p50, %p51
      %p53 = scmp.ne.s32.totalorder %s45, %s48
      %p54 = scmp.eq.s32.totalorder %s23, 0
      %p55 = por %p53, %p54
      %p56 = scmp.ne.s32.totalorder %s45, %s48
      %p57 = scmp.eq.s32.totalorder %s28, 3
      %p58 = por %p56, %p57
      %p59 = scmp.ne.s32.totalorder %s48, %s49
      %p60 = scmp.eq.s32.totalorder %s28, 0
      %p61 = por %p59, %p60
      %p62 = scmp.ne.s32.totalorder %s48, %s49
      %p63 = scmp.eq.s32.totalorder %s29, 3
      %p64 = por %p62, %p63
      %p66 = scmp.ne.s32.totalorder %s49, %s65
      %p67 = scmp.eq.s32.totalorder %s29, 0
      %p68 = por %p66, %p67
      %s69 = ssub.s32 %s30, %s42
      %p70 = scmp.eq.s32.totalorder %s69, 0
      %s72 = sadd.s32 %s71, 1
      %s73 = scalar_select %p70, %s71, %s72
      %p76 = pneg %p70
      %p77 = scmp.eq.s32.totalorder %s23, 3
      %p78 = por %p76, %p77
      %p79 = scmp.ne.s32.totalorder %s71, %s74
      %p80 = scmp.eq.s32.totalorder %s23, 0
      %p81 = por %p79, %p80
      %p82 = scmp.ne.s32.totalorder %s71, %s74
      %p83 = scmp.eq.s32.totalorder %s28, 3
      %p84 = por %p82, %p83
      %p85 = scmp.ne.s32.totalorder %s74, %s75
      %p86 = scmp.eq.s32.totalorder %s28, 0
      %p87 = por %p85, %p86
      %p88 = scmp.ne.s32.totalorder %s74, %s75
      %p89 = scmp.eq.s32.totalorder %s29, 3
      %p90 = por %p88, %p89
      %p92 = scmp.ne.s32.totalorder %s75, %s91
      %p93 = scmp.eq.s32.totalorder %s29, 0
      %p94 = por %p92, %p93
      %s95 = ssub.s32 %s30, %s42
      %p96 = scmp.eq.s32.totalorder %s95, 0
      %s98 = sadd.s32 %s97, 1
      %s99 = scalar_select %p96, %s97, %s98
      %p102 = pneg %p96
      %p103 = scmp.eq.s32.totalorder %s23, 3
      %p104 = por %p102, %p103
      %p105 = scmp.ne.s32.totalorder %s97, %s100
      %p106 = scmp.eq.s32.totalorder %s23, 0
      %p107 = por %p105, %p106
      %p108 = scmp.ne.s32.totalorder %s97, %s100
      %p109 = scmp.eq.s32.totalorder %s28, 3
      %p110 = por %p108, %p109
      %p111 = scmp.ne.s32.totalorder %s100, %s101
      %p112 = scmp.eq.s32.totalorder %s28, 0
      %p113 = por %p111, %p112
      %p114 = scmp.ne.s32.totalorder %s100, %s101
      %p115 = scmp.eq.s32.totalorder %s29, 3
      %p116 = por %p114, %p115
      %p118 = scmp.ne.s32.totalorder %s101, %s117
      %p119 = scmp.eq.s32.totalorder %s29, 0
      %p120 = por %p118, %p119
      %s122 = sadd.s32 %s121, 1
      %p125 = scmp.eq.s32.totalorder %s23, 3
      %p126 = scmp.ne.s32.totalorder %s121, %s123
      %p127 = scmp.eq.s32.totalorder %s23, 0
      %p128 = por %p126, %p127
      %p129 = scmp.ne.s32.totalorder %s121, %s123
      %p130 = scmp.eq.s32.totalorder %s28, 3
      %p131 = por %p129, %p130
      %p132 = scmp.ne.s32.totalorder %s123, %s124
      %p133 = scmp.eq.s32.totalorder %s28, 0
      %p134 = por %p132, %p133
      %p135 = scmp.ne.s32.totalorder %s123, %s124
      %p136 = scmp.eq.s32.totalorder %s29, 3
      %p137 = por %p135, %p136
      %p139 = scmp.ne.s32.totalorder %s124, %s138
      %p140 = scmp.eq.s32.totalorder %s29, 0
      %p141 = por %p139, %p140
      %s143 = sadd.s32 %s142, 1
      %p146 = scmp.eq.s32.totalorder %s23, 3
      %p147 = scmp.ne.s32.totalorder %s142, %s144
      %p148 = scmp.eq.s32.totalorder %s23, 0
      %p149 = por %p147, %p148
      %p150 = scmp.ne.s32.totalorder %s142, %s144
      %p151 = scmp.eq.s32.totalorder %s28, 3
      %p152 = por %p150, %p151
      %p153 = scmp.ne.s32.totalorder %s144, %s145
      %p154 = scmp.eq.s32.totalorder %s28, 0
      %p155 = por %p153, %p154
      %p156 = scmp.ne.s32.totalorder %s144, %s145
      %p157 = scmp.eq.s32.totalorder %s29, 3
      %p158 = por %p156, %p157
      %p160 = scmp.ne.s32.totalorder %s145, %s159
      %p161 = scmp.eq.s32.totalorder %s29, 0
      %p162 = por %p160, %p161
      %s164 = sadd.s32 %s163, 1
      %p167 = scmp.eq.s32.totalorder %s23, 3
      %p168 = scmp.ne.s32.totalorder %s163, %s165
      %p169 = scmp.eq.s32.totalorder %s23, 0
      %p170 = por %p168, %p169
      %p171 = scmp.ne.s32.totalorder %s163, %s165
      %p172 = scmp.eq.s32.totalorder %s28, 3
      %p173 = por %p171, %p172
      %p174 = scmp.ne.s32.totalorder %s165, %s166
      %p175 = scmp.eq.s32.totalorder %s28, 0
      %p176 = por %p174, %p175
      %p177 = scmp.ne.s32.totalorder %s165, %s166
      %p178 = scmp.eq.s32.totalorder %s29, 3
      %p179 = por %p177, %p178
      %p181 = scmp.ne.s32.totalorder %s166, %s180
      %p182 = scmp.eq.s32.totalorder %s29, 0
      %p183 = por %p181, %p182
      %s185 = sadd.s32 %s184, 1
      %p188 = scmp.eq.s32.totalorder %s23, 3
      %p189 = scmp.ne.s32.totalorder %s184, %s186
      %p190 = scmp.eq.s32.totalorder %s23, 0
      %p191 = por %p189, %p190
      %p192 = scmp.ne.s32.totalorder %s184, %s186
      %p193 = scmp.eq.s32.totalorder %s28, 3
      %p194 = por %p192, %p193
      %p195 = scmp.ne.s32.totalorder %s186, %s187
      %p196 = scmp.eq.s32.totalorder %s28, 0
      %p197 = por %p195, %p196
      %p198 = scmp.ne.s32.totalorder %s186, %s187
      %p199 = scmp.eq.s32.totalorder %s29, 3
      %p200 = por %p198, %p199
      %p202 = scmp.ne.s32.totalorder %s187, %s201
      %p203 = scmp.eq.s32.totalorder %s29, 0
      %p204 = por %p202, %p203
      %s206 = sadd.s32 %s205, 1
      %p209 = scmp.eq.s32.totalorder %s23, 3
      %p210 = scmp.ne.s32.totalorder %s205, %s207
      %p211 = scmp.eq.s32.totalorder %s23, 0
      %p212 = por %p210, %p211
      %p213 = scmp.ne.s32.totalorder %s205, %s207
      %p214 = scmp.eq.s32.totalorder %s28, 3
      %p215 = por %p213, %p214
      %p216 = scmp.ne.s32.totalorder %s207, %s208
      %p217 = scmp.eq.s32.totalorder %s28, 0
      %p218 = por %p216, %p217
      %p219 = scmp.ne.s32.totalorder %s207, %s208
      %p220 = scmp.eq.s32.totalorder %s29, 3
      %p221 = por %p219, %p220
      %p223 = scmp.ne.s32.totalorder %s208, %s222
      %p224 = scmp.eq.s32.totalorder %s29, 0
      %p225 = por %p223, %p224
      %s227 = sadd.s32 %s226, 1
      %p230 = scmp.eq.s32.totalorder %s23, 3
      %p231 = scmp.ne.s32.totalorder %s226, %s228
      %p232 = scmp.eq.s32.totalorder %s23, 0
      %p233 = por %p231, %p232
      %p234 = scmp.ne.s32.totalorder %s226, %s228
      %p235 = scmp.eq.s32.totalorder %s28, 3
      %p236 = por %p234, %p235
      %p237 = scmp.ne.s32.totalorder %s228, %s229
      %p238 = scmp.eq.s32.totalorder %s28, 0
      %p239 = por %p237, %p238
      %p240 = scmp.ne.s32.totalorder %s228, %s229
      %p241 = scmp.eq.s32.totalorder %s29, 3
      %p242 = por %p240, %p241
      %p244 = scmp.ne.s32.totalorder %s229, %s243
      %p245 = scmp.eq.s32.totalorder %s29, 0
      %p246 = por %p244, %p245
      %s248 = sadd.s32 %s247, 1
      %p251 = scmp.eq.s32.totalorder %s23, 3
      %p252 = scmp.ne.s32.totalorder %s247, %s249
      %p253 = scmp.eq.s32.totalorder %s23, 0
      %p254 = por %p252, %p253
      %p255 = scmp.ne.s32.totalorder %s247, %s249
      %p256 = scmp.eq.s32.totalorder %s28, 3
      %p257 = por %p255, %p256
      %p258 = scmp.ne.s32.totalorder %s249, %s250
      %p259 = scmp.eq.s32.totalorder %s28, 0
      %p260 = por %p258, %p259
      %p261 = scmp.ne.s32.totalorder %s249, %s250
      %p262 = scmp.eq.s32.totalorder %s29, 3
      %p263 = por %p261, %p262
      %p265 = scmp.ne.s32.totalorder %s250, %s264
      %p266 = scmp.eq.s32.totalorder %s29, 0
      %p267 = por %p265, %p266
      %s269 = sadd.s32 %s268, 1
      %p272 = scmp.eq.s32.totalorder %s23, 3
      %p273 = scmp.ne.s32.totalorder %s268, %s270
      %p274 = scmp.eq.s32.totalorder %s23, 0
      %p275 = por %p273, %p274
      %p276 = scmp.ne.s32.totalorder %s268, %s270
      %p277 = scmp.eq.s32.totalorder %s28, 3
      %p278 = por %p276, %p277
      %p279 = scmp.ne.s32.totalorder %s270, %s271
      %p280 = scmp.eq.s32.totalorder %s28, 0
      %p281 = por %p279, %p280
      %p282 = scmp.ne.s32.totalorder %s270, %s271
      %p283 = scmp.eq.s32.totalorder %s29, 3
      %p284 = por %p282, %p283
      %p286 = scmp.ne.s32.totalorder %s271, %s285
      %p287 = scmp.eq.s32.totalorder %s29, 0
      %p288 = por %p286, %p287
      %s290 = sadd.s32 %s289, 1
      %p293 = scmp.eq.s32.totalorder %s23, 3
      %p294 = scmp.ne.s32.totalorder %s289, %s291
      %p295 = scmp.eq.s32.totalorder %s23, 0
      %p296 = por %p294, %p295
      %p297 = scmp.ne.s32.totalorder %s289, %s291
      %p298 = scmp.eq.s32.totalorder %s28, 3
      %p299 = por %p297, %p298
      %p300 = scmp.ne.s32.totalorder %s291, %s292
      %p301 = scmp.eq.s32.totalorder %s28, 0
      %p302 = por %p300, %p301
      %p303 = scmp.ne.s32.totalorder %s291, %s292
      %p304 = scmp.eq.s32.totalorder %s29, 3
      %p305 = por %p303, %p304
      %p307 = scmp.ne.s32.totalorder %s292, %s306
      %p308 = scmp.eq.s32.totalorder %s29, 0
      %p309 = por %p307, %p308
      %s310 = ssub.s32 %s30, %s42
      %s311 = ssub.s32 %s31, %s38
      %s312 = sor.u32 %s310, %s311
      %p313 = scmp.eq.s32.totalorder %s312, 0
      %s315 = sadd.s32 %s314, 1
      %s316 = scalar_select %p313, %s314, %s315
      %p319 = pneg %p313
      %p320 = scmp.eq.s32.totalorder %s23, 3
      %p321 = por %p319, %p320
      %p322 = scmp.ne.s32.totalorder %s314, %s317
      %p323 = scmp.eq.s32.totalorder %s23, 0
      %p324 = por %p322, %p323
      %p325 = scmp.ne.s32.totalorder %s314, %s317
      %p326 = scmp.eq.s32.totalorder %s28, 3
      %p327 = por %p325, %p326
      %p328 = scmp.ne.s32.totalorder %s317, %s318
      %p329 = scmp.eq.s32.totalorder %s28, 0
      %p330 = por %p328, %p329
      %p331 = scmp.ne.s32.totalorder %s317, %s318
      %p332 = scmp.eq.s32.totalorder %s29, 3
      %p333 = por %p331, %p332
      %p335 = scmp.ne.s32.totalorder %s318, %s334
      %p336 = scmp.eq.s32.totalorder %s29, 0
      %p337 = por %p335, %p336
      %s338 = ssub.s32 %s30, %s42
      %s339 = ssub.s32 %s31, %s38
      %s340 = sor.u32 %s338, %s339
      %p341 = scmp.eq.s32.totalorder %s340, 0
      %s343 = sadd.s32 %s342, 1
      %s344 = scalar_select %p341, %s342, %s343
      %p347 = pneg %p341
      %p348 = scmp.eq.s32.totalorder %s23, 3
      %p349 = por %p347, %p348
      %p350 = scmp.ne.s32.totalorder %s342, %s345
      %p351 = scmp.eq.s32.totalorder %s23, 0
      %p352 = por %p350, %p351
      %p353 = scmp.ne.s32.totalorder %s342, %s345
      %p354 = scmp.eq.s32.totalorder %s28, 3
      %p355 = por %p353, %p354
      %p356 = scmp.ne.s32.totalorder %s345, %s346
      %p357 = scmp.eq.s32.totalorder %s28, 0
      %p358 = por %p356, %p357
      %p359 = scmp.ne.s32.totalorder %s345, %s346
      %p360 = scmp.eq.s32.totalorder %s29, 3
      %p361 = por %p359, %p360
      %p363 = scmp.ne.s32.totalorder %s346, %s362
      %p364 = scmp.eq.s32.totalorder %s29, 0
      %p365 = por %p363, %p364
      %p366 = scmp.le.s32.totalorder 1, %s23
      %p367 = scmp.lt.s32.totalorder %s23, 5
      %p368 = pnand %p366, %p367
      %p369 = pneg %p368
      // Predicated region
      $region9: #{tpu_custom_call.1} parent=5 // pred_check
        _
      $region10: #{tpu_custom_call.1} parent=5 // pred_check_branch
        %371 = sbr.rel (%p368) target = $region12
      $region11: #{tpu_custom_call.1} parent=5 // pred_region
        %s372 = ssub.s32 %s23, 1
        // Predicated region
        $region13: #{tpu_custom_call.1} parent=11 // pred_check
          %p373 = pneg %p134
        $region14: #{tpu_custom_call.1} parent=11 // pred_check_branch
          %375 = sbr.rel (%p373) target = $region16
        $region15: #{tpu_custom_call.1} parent=11 // pred_region
          _
        $region16: #{tpu_custom_call.1} parent=11 // pred_fallthru
          _
        // Predicated region
        $region17: #{tpu_custom_call.1} parent=11 // pred_check
          %p376 = pneg %p155
        $region18: #{tpu_custom_call.1} parent=11 // pred_check_branch
          %378 = sbr.rel (%p376) target = $region20
        $region19: #{tpu_custom_call.1} parent=11 // pred_region
          _
        $region20: #{tpu_custom_call.1} parent=11 // pred_fallthru
          _
        // Predicated region
        $region21: #{tpu_custom_call.1} parent=11 // pred_check
          %p379 = pneg %p176
        $region22: #{tpu_custom_call.1} parent=11 // pred_check_branch
          %381 = sbr.rel (%p379) target = $region24
        $region23: #{tpu_custom_call.1} parent=11 // pred_region
          _
        $region24: #{tpu_custom_call.1} parent=11 // pred_fallthru
          _
        // Predicated region
        $region25: #{tpu_custom_call.1} parent=11 // pred_check
          %p382 = pneg %p197
        $region26: #{tpu_custom_call.1} parent=11 // pred_check_branch
          %384 = sbr.rel (%p382) target = $region28
        $region27: #{tpu_custom_call.1} parent=11 // pred_region
          _
        $region28: #{tpu_custom_call.1} parent=11 // pred_fallthru
          _
        // Predicated region
        $region29: #{tpu_custom_call.1} parent=11 // pred_check
          %p385 = pneg %p218
        $region30: #{tpu_custom_call.1} parent=11 // pred_check_branch
          %387 = sbr.rel (%p385) target = $region32
        $region31: #{tpu_custom_call.1} parent=11 // pred_region
          _
        $region32: #{tpu_custom_call.1} parent=11 // pred_fallthru
          _
        // Predicated region
        $region33: #{tpu_custom_call.1} parent=11 // pred_check
          %p388 = pneg %p239
        $region34: #{tpu_custom_call.1} parent=11 // pred_check_branch
          %390 = sbr.rel (%p388) target = $region36
        $region35: #{tpu_custom_call.1} parent=11 // pred_region
          _
        $region36: #{tpu_custom_call.1} parent=11 // pred_fallthru
          _
        // Predicated region
        $region37: #{tpu_custom_call.1} parent=11 // pred_check
          %p391 = pneg %p260
        $region38: #{tpu_custom_call.1} parent=11 // pred_check_branch
          %393 = sbr.rel (%p391) target = $region40
        $region39: #{tpu_custom_call.1} parent=11 // pred_region
          _
        $region40: #{tpu_custom_call.1} parent=11 // pred_fallthru
          _
        // Predicated region
        $region41: #{tpu_custom_call.1} parent=11 // pred_check
          %p394 = pneg %p281
        $region42: #{tpu_custom_call.1} parent=11 // pred_check_branch
          %396 = sbr.rel (%p394) target = $region44
        $region43: #{tpu_custom_call.1} parent=11 // pred_region
          _
        $region44: #{tpu_custom_call.1} parent=11 // pred_fallthru
          _
        // Predicated region
        $region45: #{tpu_custom_call.1} parent=11 // pred_check
          %p397 = pneg %p302
        $region46: #{tpu_custom_call.1} parent=11 // pred_check_branch
          %399 = sbr.rel (%p397) target = $region48
        $region47: #{tpu_custom_call.1} parent=11 // pred_region
          _
        $region48: #{tpu_custom_call.1} parent=11 // pred_fallthru
          _
      $region12: #{tpu_custom_call.1} parent=5 // pred_fallthru
        _
      %p400 = scmp.lt.s32.totalorder %s23, 4
      // Predicated region
      $region49: #{tpu_custom_call.1} parent=5 // pred_check
        %p401 = pneg %p400
      $region50: #{tpu_custom_call.1} parent=5 // pred_check_branch
        %403 = sbr.rel (%p401) target = $region52
      $region51: #{tpu_custom_call.1} parent=5 // pred_region
        // Predicated region
        $region53: #{tpu_custom_call.1} parent=51 // pred_check
          %p404 = pneg %p55
        $region54: #{tpu_custom_call.1} parent=51 // pred_check_branch
          %406 = sbr.rel (%p404) target = $region56
        $region55: #{tpu_custom_call.1} parent=51 // pred_region
          %s407 = sand.u32 %s45, 1
          %s408 = scalar_lea.sflag [#allocation3], %s407
          %s409 = sand.u32 %s45, 1
          %s410 = smul.addr %s409, 128
          %s411 = scalar_lea.vmem [#allocation2], %s410
          %s412 = smul.u32 8, %s31
          %414 = vsyncadd %s408, 0
          %s415 = smul.addr %s412, 8
          %s416 = scalar_lea.hbm %s0, %s415
          %s417 = sshll.u32 %s416, 4
          %s418 = int_to_ptr.hbm [resolvable:$true] %s417
          %s419 = sshll.u32 %s411, 4
          %s420 = int_to_ptr.vmem [resolvable:$true] %s419
          %425 = dma.hbm_to_vmem [thread:$0]  %s418, 2048, %s420, %s408, 2048, 1024, 64
        $region56: #{tpu_custom_call.1} parent=51 // pred_fallthru
          _
        // Predicated region
        $region57: #{tpu_custom_call.1} parent=51 // pred_check
          %p426 = pneg %p81
        $region58: #{tpu_custom_call.1} parent=51 // pred_check_branch
          %428 = sbr.rel (%p426) target = $region60
        $region59: #{tpu_custom_call.1} parent=51 // pred_region
          %p429 = scmp.lt.s32.totalorder %s30, 1
          %s430 = scalar_select %p429, %s30, 1
          %s431 = smul.addr %s430, 2
          %s432 = smul.addr %s431, 8
          %s433 = scalar_lea.vmem %s1, %s432
        $region60: #{tpu_custom_call.1} parent=51 // pred_fallthru
          _
        // Predicated region
        $region61: #{tpu_custom_call.1} parent=51 // pred_check
          %p434 = pneg %p107
        $region62: #{tpu_custom_call.1} parent=51 // pred_check_branch
          %436 = sbr.rel (%p434) target = $region64
        $region63: #{tpu_custom_call.1} parent=51 // pred_region
          %p437 = scmp.lt.s32.totalorder %s30, 1
          %s438 = scalar_select %p437, %s30, 1
          %s439 = smul.addr %s438, 2
          %s440 = smul.addr %s439, 8
          %s441 = scalar_lea.vmem %s2, %s440
        $region64: #{tpu_custom_call.1} parent=51 // pred_fallthru
          _
      $region52: #{tpu_custom_call.1} parent=5 // pred_fallthru
        _
      %p442 = scmp.le.s32.totalorder 1, %s23
      %p443 = scmp.lt.s32.totalorder %s23, 5
      %p444 = pnand %p442, %p443
      %p445 = pneg %p444
      // Predicated region
      $region65: #{tpu_custom_call.1} parent=5 // pred_check
        _
      $region66: #{tpu_custom_call.1} parent=5 // pred_check_branch
        %447 = sbr.rel (%p444) target = $region68
      $region67: #{tpu_custom_call.1} parent=5 // pred_region
        %s448 = ssub.s32 %s23, 1
        %s449 = sand.u32 %s48, 1
        %s450 = scalar_lea.sflag [#allocation3], %s449
        %s451 = sand.u32 %s48, 1
        %s452 = smul.addr %s451, 128
        %s453 = scalar_lea.vmem [#allocation2], %s452
        // Predicated region
        $region69: #{tpu_custom_call.1} parent=67 // pred_check
          %p454 = pneg %p61
        $region70: #{tpu_custom_call.1} parent=67 // pred_check_branch
          %456 = sbr.rel (%p454) target = $region72
        $region71: #{tpu_custom_call.1} parent=67 // pred_region
          %458 = dma.done %s450, 2048
        $region72: #{tpu_custom_call.1} parent=67 // pred_fallthru
          _
        %s459 = sand.u32 %s48, 1
        %s460 = scalar_lea.sflag [#allocation3], %s459
        %s461 = sand.u32 %s48, 1
        %s462 = smul.addr %s461, 128
        %s463 = scalar_lea.vmem [#allocation2], %s462
        %p464 = pneg %p61
        %p465 = pneg %p58
        %p466 = scmp.lt.s32.totalorder %s32, 1
        %s467 = scalar_select %p466, %s32, 1
        %s468 = smul.addr %s467, 2
        %s469 = smul.addr %s468, 8
        %s470 = scalar_lea.vmem %s1, %s469
        %p471 = pneg %p87
        %p472 = pneg %p84
        %p473 = scmp.lt.s32.totalorder %s32, 1
        %s474 = scalar_select %p473, %s32, 1
        %s475 = smul.addr %s474, 2
        %s476 = smul.addr %s475, 8
        %s477 = scalar_lea.vmem %s2, %s476
        %p478 = pneg %p113
        %p479 = pneg %p110
        %p480 = pneg %p134
        %p481 = pneg %p131
        %p482 = pneg %p155
        %p483 = pneg %p152
        %p484 = pneg %p176
        %p485 = pneg %p173
        %p486 = pneg %p197
        %p487 = pneg %p194
        %p488 = pneg %p218
        %p489 = pneg %p215
        %p490 = pneg %p239
        %p491 = pneg %p236
        %p492 = pneg %p260
        %p493 = pneg %p257
        %p494 = pneg %p281
        %p495 = pneg %p278
        %p496 = pneg %p302
        %p497 = pneg %p299
        %p498 = pneg %p330
        %p499 = pneg %p327
        %s500 = smul.u32 8, %s33
        %p501 = scmp.lt.s32.totalorder %s32, 1
        %s502 = scalar_select %p501, %s32, 1
        %p503 = scmp.lt.s32.totalorder %s500, 15
        %s504 = scalar_select %p503, %s500, 15
        %s505 = smul.addr %s502, 16
        %s506 = sadd.s32 %s504, %s505
        %s507 = smul.addr %s506, 4
        %s508 = scalar_lea.vmem %s12, %s507
        %p509 = pneg %p358
        %p510 = pneg %p355
        %s511 = smul.u32 8, %s33
        %p512 = scmp.lt.s32.totalorder %s32, 1
        %s513 = scalar_select %p512, %s32, 1
        %p514 = scmp.lt.s32.totalorder %s511, 15
        %s515 = scalar_select %p514, %s511, 15
        %s516 = smul.addr %s513, 16
        %s517 = sadd.s32 %s515, %s516
        %s518 = smul.addr %s517, 4
        %s519 = scalar_lea.vmem %s13, %s518
        %s520 = smul.u32 8, %s33
        %p521 = scmp.lt.s32.totalorder %s32, 1
        %s522 = scalar_select %p521, %s32, 1
        %s523 = smul.addr %s522, 2
        %s524 = smul.addr %s523, 8
        %s525 = scalar_lea.vmem %s1, %s524
        %p526 = scmp.lt.s32.totalorder %s32, 1
        %s527 = scalar_select %p526, %s32, 1
        %s528 = smul.addr %s527, 2
        %s529 = smul.addr %s528, 8
        %s530 = scalar_lea.vmem %s2, %s529
        %s531 = smul.u32 8, %s33
        %p532 = scmp.lt.s32.totalorder %s32, 1
        %s533 = scalar_select %p532, %s32, 1
        %p534 = scmp.lt.s32.totalorder %s531, 15
        %s535 = scalar_select %p534, %s531, 15
        %s536 = smul.addr %s533, 16
        %s537 = sadd.s32 %s535, %s536
        %s538 = smul.addr %s537, 4
        %s539 = scalar_lea.vmem %s12, %s538
        %s540 = smul.u32 8, %s33
        %s541 = smul.u32 8, %s33
        %p542 = scmp.lt.s32.totalorder %s32, 1
        %s543 = scalar_select %p542, %s32, 1
        %p544 = scmp.lt.s32.totalorder %s541, 15
        %s545 = scalar_select %p544, %s541, 15
        %s546 = smul.addr %s543, 16
        %s547 = sadd.s32 %s545, %s546
        %s548 = smul.addr %s547, 4
        %s549 = scalar_lea.vmem %s13, %s548
        %s550 = smul.u32 8, %s33
        %v551 = vld [vmem:[%s453] sm:$0xff]
        %v552 = vld [vmem:[%s453 + $0x8] sm:$0xff]
        %v553 = vld [vmem:[%s453 + $0x10] sm:$0xff]
        %v554 = vld [vmem:[%s453 + $0x18] sm:$0xff]
        %v555 = vld [vmem:[%s453 + $0x20] sm:$0xff]
        %v556 = vld [vmem:[%s453 + $0x28] sm:$0xff]
        %v557 = vld [vmem:[%s453 + $0x30] sm:$0xff]
        %v558 = vld [vmem:[%s453 + $0x38] sm:$0xff]
        %v559 = vld [vmem:[%s453 + $0x40] sm:$0xff]
        %v560 = vld [vmem:[%s453 + $0x48] sm:$0xff]
        %v561 = vld [vmem:[%s453 + $0x50] sm:$0xff]
        %v562 = vld [vmem:[%s453 + $0x58] sm:$0xff]
        %v563 = vld [vmem:[%s453 + $0x60] sm:$0xff]
        %v564 = vld [vmem:[%s453 + $0x68] sm:$0xff]
        %v565 = vld [vmem:[%s453 + $0x70] sm:$0xff]
        %v566 = vld [vmem:[%s453 + $0x78] sm:$0xff]
        %v567 = vld [vmem:[%s525] sm:$0xff]
        %v568 = vld [vmem:[%s525 + $0x8] sm:$0xff]
        %570 = vset.pattern.permute.xlu0 0
        %571 = vperm.xlu0 %570, %v567
        %v572 = vpop.permute.xlu0 %571
        %575 = vset.pattern.permute.xlu0 0
        %576 = vperm.xlu0 %575, %v568
        %v577 = vpop.permute.xlu0 %576
        %v579 = vadd.f32 %v551, %v572
        %v580 = vadd.f32 %v552, %v572
        %v581 = vadd.f32 %v553, %v572
        %v582 = vadd.f32 %v554, %v572
        %v583 = vadd.f32 %v555, %v572
        %v584 = vadd.f32 %v556, %v572
        %v585 = vadd.f32 %v557, %v572
        %v586 = vadd.f32 %v558, %v572
        %v587 = vadd.f32 %v559, %v577
        %v588 = vadd.f32 %v560, %v577
        %v589 = vadd.f32 %v561, %v577
        %v590 = vadd.f32 %v562, %v577
        %v591 = vadd.f32 %v563, %v577
        %v592 = vadd.f32 %v564, %v577
        %v593 = vadd.f32 %v565, %v577
        %v594 = vadd.f32 %v566, %v577
        %v595 = vmax.f32 %v579, 0.0
        %v596 = vmax.f32 %v580, 0.0
        %v597 = vmax.f32 %v581, 0.0
        %v598 = vmax.f32 %v582, 0.0
        %v599 = vmax.f32 %v583, 0.0
        %v600 = vmax.f32 %v584, 0.0
        %v601 = vmax.f32 %v585, 0.0
        %v602 = vmax.f32 %v586, 0.0
        %v603 = vmax.f32 %v587, 0.0
        %v604 = vmax.f32 %v588, 0.0
        %v605 = vmax.f32 %v589, 0.0
        %v606 = vmax.f32 %v590, 0.0
        %v607 = vmax.f32 %v591, 0.0
        %v608 = vmax.f32 %v592, 0.0
        %v609 = vmax.f32 %v593, 0.0
        %v610 = vmax.f32 %v594, 0.0
        %v611 = vld [vmem:[%s3] sm:$0xff]
        %v612 = vld [vmem:[%s3 + $0x8] sm:$0xff]
        %614 = vset.pattern.permute.xlu0 0
        %615 = vperm.xlu0 %614, %v611
        %v616 = vpop.permute.xlu0 %615
        %619 = vset.pattern.permute.xlu0 0
        %620 = vperm.xlu0 %619, %v612
        %v621 = vpop.permute.xlu0 %620
        %v623 = vperm.slane %v595, 0
        %v624 = vperm.slane %v596, 0
        %v625 = vperm.slane %v597, 0
        %v626 = vperm.slane %v598, 0
        %v627 = vperm.slane %v599, 0
        %v628 = vperm.slane %v600, 0
        %v629 = vperm.slane %v601, 0
        %v630 = vperm.slane %v602, 0
        %v631 = vmul.f32 %v616, %v623
        %v632 = vmul.f32 %v616, %v624
        %v633 = vmul.f32 %v616, %v625
        %v634 = vmul.f32 %v616, %v626
        %v635 = vmul.f32 %v616, %v627
        %v636 = vmul.f32 %v616, %v628
        %v637 = vmul.f32 %v616, %v629
        %v638 = vmul.f32 %v616, %v630
        %v639 = vmul.f32 %v621, %v623
        %v640 = vmul.f32 %v621, %v624
        %v641 = vmul.f32 %v621, %v625
        %v642 = vmul.f32 %v621, %v626
        %v643 = vmul.f32 %v621, %v627
        %v644 = vmul.f32 %v621, %v628
        %v645 = vmul.f32 %v621, %v629
        %v646 = vmul.f32 %v621, %v630
        %647 = vset.pattern.permute.xlu0 1
        %648 = vperm.xlu0 %647, %v611
        %v649 = vpop.permute.xlu0 %648
        %651 = vset.pattern.permute.xlu0 1
        %652 = vperm.xlu0 %651, %v612
        %v653 = vpop.permute.xlu0 %652
        %v655 = vperm.slane %v595, 1
        %v656 = vperm.slane %v596, 1
        %v657 = vperm.slane %v597, 1
        %v658 = vperm.slane %v598, 1
        %v659 = vperm.slane %v599, 1
        %v660 = vperm.slane %v600, 1
        %v661 = vperm.slane %v601, 1
        %v662 = vperm.slane %v602, 1
        %v663 = vmul.f32 %v649, %v655
        %v664 = vmul.f32 %v649, %v656
        %v665 = vmul.f32 %v649, %v657
        %v666 = vmul.f32 %v649, %v658
        %v667 = vmul.f32 %v649, %v659
        %v668 = vmul.f32 %v649, %v660
        %v669 = vmul.f32 %v649, %v661
        %v670 = vmul.f32 %v649, %v662
        %v671 = vmul.f32 %v653, %v655
        %v672 = vmul.f32 %v653, %v656
        %v673 = vmul.f32 %v653, %v657
        %v674 = vmul.f32 %v653, %v658
        %v675 = vmul.f32 %v653, %v659
        %v676 = vmul.f32 %v653, %v660
        %v677 = vmul.f32 %v653, %v661
        %v678 = vmul.f32 %v653, %v662
        %v679 = vadd.f32 %v631, %v663
        %v680 = vadd.f32 %v632, %v664
        %v681 = vadd.f32 %v633, %v665
        %v682 = vadd.f32 %v634, %v666
        %v683 = vadd.f32 %v635, %v667
        %v684 = vadd.f32 %v636, %v668
        %v685 = vadd.f32 %v637, %v669
        %v686 = vadd.f32 %v638, %v670
        %v687 = vadd.f32 %v639, %v671
        %v688 = vadd.f32 %v640, %v672
        %v689 = vadd.f32 %v641, %v673
        %v690 = vadd.f32 %v642, %v674
        %v691 = vadd.f32 %v643, %v675
        %v692 = vadd.f32 %v644, %v676
        %v693 = vadd.f32 %v645, %v677
        %v694 = vadd.f32 %v646, %v678
        %695 = vset.pattern.permute.xlu0 2
        %696 = vperm.xlu0 %695, %v611
        %v697 = vpop.permute.xlu0 %696
        %699 = vset.pattern.permute.xlu0 2
        %700 = vperm.xlu0 %699, %v612
        %v701 = vpop.permute.xlu0 %700
        %v703 = vperm.slane %v595, 2
        %v704 = vperm.slane %v596, 2
        %v705 = vperm.slane %v597, 2
        %v706 = vperm.slane %v598, 2
        %v707 = vperm.slane %v599, 2
        %v708 = vperm.slane %v600, 2
        %v709 = vperm.slane %v601, 2
        %v710 = vperm.slane %v602, 2
        %v711 = vmul.f32 %v697, %v703
        %v712 = vmul.f32 %v697, %v704
        %v713 = vmul.f32 %v697, %v705
        %v714 = vmul.f32 %v697, %v706
        %v715 = vmul.f32 %v697, %v707
        %v716 = vmul.f32 %v697, %v708
        %v717 = vmul.f32 %v697, %v709
        %v718 = vmul.f32 %v697, %v710
        %v719 = vmul.f32 %v701, %v703
        %v720 = vmul.f32 %v701, %v704
        %v721 = vmul.f32 %v701, %v705
        %v722 = vmul.f32 %v701, %v706
        %v723 = vmul.f32 %v701, %v707
        %v724 = vmul.f32 %v701, %v708
        %v725 = vmul.f32 %v701, %v709
        %v726 = vmul.f32 %v701, %v710
        %v727 = vadd.f32 %v679, %v711
        %v728 = vadd.f32 %v680, %v712
        %v729 = vadd.f32 %v681, %v713
        %v730 = vadd.f32 %v682, %v714
        %v731 = vadd.f32 %v683, %v715
        %v732 = vadd.f32 %v684, %v716
        %v733 = vadd.f32 %v685, %v717
        %v734 = vadd.f32 %v686, %v718
        %v735 = vadd.f32 %v687, %v719
        %v736 = vadd.f32 %v688, %v720
        %v737 = vadd.f32 %v689, %v721
        %v738 = vadd.f32 %v690, %v722
        %v739 = vadd.f32 %v691, %v723
        %v740 = vadd.f32 %v692, %v724
        %v741 = vadd.f32 %v693, %v725
        %v742 = vadd.f32 %v694, %v726
        %743 = vset.pattern.permute.xlu0 3
        %744 = vperm.xlu0 %743, %v611
        %v745 = vpop.permute.xlu0 %744
        %747 = vset.pattern.permute.xlu0 3
        %748 = vperm.xlu0 %747, %v612
        %v749 = vpop.permute.xlu0 %748
        %v751 = vperm.slane %v595, 3
        %v752 = vperm.slane %v596, 3
        %v753 = vperm.slane %v597, 3
        %v754 = vperm.slane %v598, 3
        %v755 = vperm.slane %v599, 3
        %v756 = vperm.slane %v600, 3
        %v757 = vperm.slane %v601, 3
        %v758 = vperm.slane %v602, 3
        %v759 = vmul.f32 %v745, %v751
        %v760 = vmul.f32 %v745, %v752
        %v761 = vmul.f32 %v745, %v753
        %v762 = vmul.f32 %v745, %v754
        %v763 = vmul.f32 %v745, %v755
        %v764 = vmul.f32 %v745, %v756
        %v765 = vmul.f32 %v745, %v757
        %v766 = vmul.f32 %v745, %v758
        %v767 = vmul.f32 %v749, %v751
        %v768 = vmul.f32 %v749, %v752
        %v769 = vmul.f32 %v749, %v753
        %v770 = vmul.f32 %v749, %v754
        %v771 = vmul.f32 %v749, %v755
        %v772 = vmul.f32 %v749, %v756
        %v773 = vmul.f32 %v749, %v757
        %v774 = vmul.f32 %v749, %v758
        %v775 = vadd.f32 %v727, %v759
        %v776 = vadd.f32 %v728, %v760
        %v777 = vadd.f32 %v729, %v761
        %v778 = vadd.f32 %v730, %v762
        %v779 = vadd.f32 %v731, %v763
        %v780 = vadd.f32 %v732, %v764
        %v781 = vadd.f32 %v733, %v765
        %v782 = vadd.f32 %v734, %v766
        %v783 = vadd.f32 %v735, %v767
        %v784 = vadd.f32 %v736, %v768
        %v785 = vadd.f32 %v737, %v769
        %v786 = vadd.f32 %v738, %v770
        %v787 = vadd.f32 %v739, %v771
        %v788 = vadd.f32 %v740, %v772
        %v789 = vadd.f32 %v741, %v773
        %v790 = vadd.f32 %v742, %v774
        %791 = vset.pattern.permute.xlu0 4
        %792 = vperm.xlu0 %791, %v611
        %v793 = vpop.permute.xlu0 %792
        %795 = vset.pattern.permute.xlu0 4
        %796 = vperm.xlu0 %795, %v612
        %v797 = vpop.permute.xlu0 %796
        %v799 = vperm.slane %v595, 4
        %v800 = vperm.slane %v596, 4
        %v801 = vperm.slane %v597, 4
        %v802 = vperm.slane %v598, 4
        %v803 = vperm.slane %v599, 4
        %v804 = vperm.slane %v600, 4
        %v805 = vperm.slane %v601, 4
        %v806 = vperm.slane %v602, 4
        %v807 = vmul.f32 %v793, %v799
        %v808 = vmul.f32 %v793, %v800
        %v809 = vmul.f32 %v793, %v801
        %v810 = vmul.f32 %v793, %v802
        %v811 = vmul.f32 %v793, %v803
        %v812 = vmul.f32 %v793, %v804
        %v813 = vmul.f32 %v793, %v805
        %v814 = vmul.f32 %v793, %v806
        %v815 = vmul.f32 %v797, %v799
        %v816 = vmul.f32 %v797, %v800
        %v817 = vmul.f32 %v797, %v801
        %v818 = vmul.f32 %v797, %v802
        %v819 = vmul.f32 %v797, %v803
        %v820 = vmul.f32 %v797, %v804
        %v821 = vmul.f32 %v797, %v805
        %v822 = vmul.f32 %v797, %v806
        %v823 = vadd.f32 %v775, %v807
        %v824 = vadd.f32 %v776, %v808
        %v825 = vadd.f32 %v777, %v809
        %v826 = vadd.f32 %v778, %v810
        %v827 = vadd.f32 %v779, %v811
        %v828 = vadd.f32 %v780, %v812
        %v829 = vadd.f32 %v781, %v813
        %v830 = vadd.f32 %v782, %v814
        %v831 = vadd.f32 %v783, %v815
        %v832 = vadd.f32 %v784, %v816
        %v833 = vadd.f32 %v785, %v817
        %v834 = vadd.f32 %v786, %v818
        %v835 = vadd.f32 %v787, %v819
        %v836 = vadd.f32 %v788, %v820
        %v837 = vadd.f32 %v789, %v821
        %v838 = vadd.f32 %v790, %v822
        %839 = vset.pattern.permute.xlu0 5
        %840 = vperm.xlu0 %839, %v611
        %v841 = vpop.permute.xlu0 %840
        %843 = vset.pattern.permute.xlu0 5
        %844 = vperm.xlu0 %843, %v612
        %v845 = vpop.permute.xlu0 %844
        %v847 = vperm.slane %v595, 5
        %v848 = vperm.slane %v596, 5
        %v849 = vperm.slane %v597, 5
        %v850 = vperm.slane %v598, 5
        %v851 = vperm.slane %v599, 5
        %v852 = vperm.slane %v600, 5
        %v853 = vperm.slane %v601, 5
        %v854 = vperm.slane %v602, 5
        %v855 = vmul.f32 %v841, %v847
        %v856 = vmul.f32 %v841, %v848
        %v857 = vmul.f32 %v841, %v849
        %v858 = vmul.f32 %v841, %v850
        %v859 = vmul.f32 %v841, %v851
        %v860 = vmul.f32 %v841, %v852
        %v861 = vmul.f32 %v841, %v853
        %v862 = vmul.f32 %v841, %v854
        %v863 = vmul.f32 %v845, %v847
        %v864 = vmul.f32 %v845, %v848
        %v865 = vmul.f32 %v845, %v849
        %v866 = vmul.f32 %v845, %v850
        %v867 = vmul.f32 %v845, %v851
        %v868 = vmul.f32 %v845, %v852
        %v869 = vmul.f32 %v845, %v853
        %v870 = vmul.f32 %v845, %v854
        %v871 = vadd.f32 %v823, %v855
        %v872 = vadd.f32 %v824, %v856
        %v873 = vadd.f32 %v825, %v857
        %v874 = vadd.f32 %v826, %v858
        %v875 = vadd.f32 %v827, %v859
        %v876 = vadd.f32 %v828, %v860
        %v877 = vadd.f32 %v829, %v861
        %v878 = vadd.f32 %v830, %v862
        %v879 = vadd.f32 %v831, %v863
        %v880 = vadd.f32 %v832, %v864
        %v881 = vadd.f32 %v833, %v865
        %v882 = vadd.f32 %v834, %v866
        %v883 = vadd.f32 %v835, %v867
        %v884 = vadd.f32 %v836, %v868
        %v885 = vadd.f32 %v837, %v869
        %v886 = vadd.f32 %v838, %v870
        %887 = vset.pattern.permute.xlu0 6
        %888 = vperm.xlu0 %887, %v611
        %v889 = vpop.permute.xlu0 %888
        %891 = vset.pattern.permute.xlu0 6
        %892 = vperm.xlu0 %891, %v612
        %v893 = vpop.permute.xlu0 %892
        %v895 = vperm.slane %v595, 6
        %v896 = vperm.slane %v596, 6
        %v897 = vperm.slane %v597, 6
        %v898 = vperm.slane %v598, 6
        %v899 = vperm.slane %v599, 6
        %v900 = vperm.slane %v600, 6
        %v901 = vperm.slane %v601, 6
        %v902 = vperm.slane %v602, 6
        %v903 = vmul.f32 %v889, %v895
        %v904 = vmul.f32 %v889, %v896
        %v905 = vmul.f32 %v889, %v897
        %v906 = vmul.f32 %v889, %v898
        %v907 = vmul.f32 %v889, %v899
        %v908 = vmul.f32 %v889, %v900
        %v909 = vmul.f32 %v889, %v901
        %v910 = vmul.f32 %v889, %v902
        %v911 = vmul.f32 %v893, %v895
        %v912 = vmul.f32 %v893, %v896
        %v913 = vmul.f32 %v893, %v897
        %v914 = vmul.f32 %v893, %v898
        %v915 = vmul.f32 %v893, %v899
        %v916 = vmul.f32 %v893, %v900
        %v917 = vmul.f32 %v893, %v901
        %v918 = vmul.f32 %v893, %v902
        %v919 = vadd.f32 %v871, %v903
        %v920 = vadd.f32 %v872, %v904
        %v921 = vadd.f32 %v873, %v905
        %v922 = vadd.f32 %v874, %v906
        %v923 = vadd.f32 %v875, %v907
        %v924 = vadd.f32 %v876, %v908
        %v925 = vadd.f32 %v877, %v909
        %v926 = vadd.f32 %v878, %v910
        %v927 = vadd.f32 %v879, %v911
        %v928 = vadd.f32 %v880, %v912
        %v929 = vadd.f32 %v881, %v913
        %v930 = vadd.f32 %v882, %v914
        %v931 = vadd.f32 %v883, %v915
        %v932 = vadd.f32 %v884, %v916
        %v933 = vadd.f32 %v885, %v917
        %v934 = vadd.f32 %v886, %v918
        %935 = vset.pattern.permute.xlu0 7
        %936 = vperm.xlu0 %935, %v611
        %v937 = vpop.permute.xlu0 %936
        %939 = vset.pattern.permute.xlu0 7
        %940 = vperm.xlu0 %939, %v612
        %v941 = vpop.permute.xlu0 %940
        %v943 = vperm.slane %v595, 7
        %v944 = vperm.slane %v596, 7
        %v945 = vperm.slane %v597, 7
        %v946 = vperm.slane %v598, 7
        %v947 = vperm.slane %v599, 7
        %v948 = vperm.slane %v600, 7
        %v949 = vperm.slane %v601, 7
        %v950 = vperm.slane %v602, 7
        %v951 = vmul.f32 %v937, %v943
        %v952 = vmul.f32 %v937, %v944
        %v953 = vmul.f32 %v937, %v945
        %v954 = vmul.f32 %v937, %v946
        %v955 = vmul.f32 %v937, %v947
        %v956 = vmul.f32 %v937, %v948
        %v957 = vmul.f32 %v937, %v949
        %v958 = vmul.f32 %v937, %v950
        %v959 = vmul.f32 %v941, %v943
        %v960 = vmul.f32 %v941, %v944
        %v961 = vmul.f32 %v941, %v945
        %v962 = vmul.f32 %v941, %v946
        %v963 = vmul.f32 %v941, %v947
        %v964 = vmul.f32 %v941, %v948
        %v965 = vmul.f32 %v941, %v949
        %v966 = vmul.f32 %v941, %v950
        %v967 = vadd.f32 %v919, %v951
        %v968 = vadd.f32 %v920, %v952
        %v969 = vadd.f32 %v921, %v953
        %v970 = vadd.f32 %v922, %v954
        %v971 = vadd.f32 %v923, %v955
        %v972 = vadd.f32 %v924, %v956
        %v973 = vadd.f32 %v925, %v957
        %v974 = vadd.f32 %v926, %v958
        %v975 = vadd.f32 %v927, %v959
        %v976 = vadd.f32 %v928, %v960
        %v977 = vadd.f32 %v929, %v961
        %v978 = vadd.f32 %v930, %v962
        %v979 = vadd.f32 %v931, %v963
        %v980 = vadd.f32 %v932, %v964
        %v981 = vadd.f32 %v933, %v965
        %v982 = vadd.f32 %v934, %v966
        %983 = vset.pattern.permute.xlu0 8
        %984 = vperm.xlu0 %983, %v611
        %v985 = vpop.permute.xlu0 %984
        %987 = vset.pattern.permute.xlu0 8
        %988 = vperm.xlu0 %987, %v612
        %v989 = vpop.permute.xlu0 %988
        %v991 = vperm.slane %v603, 0
        %v992 = vperm.slane %v604, 0
        %v993 = vperm.slane %v605, 0
        %v994 = vperm.slane %v606, 0
        %v995 = vperm.slane %v607, 0
        %v996 = vperm.slane %v608, 0
        %v997 = vperm.slane %v609, 0
        %v998 = vperm.slane %v610, 0
        %v999 = vmul.f32 %v985, %v991
        %v1000 = vmul.f32 %v985, %v992
        %v1001 = vmul.f32 %v985, %v993
        %v1002 = vmul.f32 %v985, %v994
        %v1003 = vmul.f32 %v985, %v995
        %v1004 = vmul.f32 %v985, %v996
        %v1005 = vmul.f32 %v985, %v997
        %v1006 = vmul.f32 %v985, %v998
        %v1007 = vmul.f32 %v989, %v991
        %v1008 = vmul.f32 %v989, %v992
        %v1009 = vmul.f32 %v989, %v993
        %v1010 = vmul.f32 %v989, %v994
        %v1011 = vmul.f32 %v989, %v995
        %v1012 = vmul.f32 %v989, %v996
        %v1013 = vmul.f32 %v989, %v997
        %v1014 = vmul.f32 %v989, %v998
        %v1015 = vadd.f32 %v967, %v999
        %v1016 = vadd.f32 %v968, %v1000
        %v1017 = vadd.f32 %v969, %v1001
        %v1018 = vadd.f32 %v970, %v1002
        %v1019 = vadd.f32 %v971, %v1003
        %v1020 = vadd.f32 %v972, %v1004
        %v1021 = vadd.f32 %v973, %v1005
        %v1022 = vadd.f32 %v974, %v1006
        %v1023 = vadd.f32 %v975, %v1007
        %v1024 = vadd.f32 %v976, %v1008
        %v1025 = vadd.f32 %v977, %v1009
        %v1026 = vadd.f32 %v978, %v1010
        %v1027 = vadd.f32 %v979, %v1011
        %v1028 = vadd.f32 %v980, %v1012
        %v1029 = vadd.f32 %v981, %v1013
        %v1030 = vadd.f32 %v982, %v1014
        %1031 = vset.pattern.permute.xlu0 9
        %1032 = vperm.xlu0 %1031, %v611
        %v1033 = vpop.permute.xlu0 %1032
        %1035 = vset.pattern.permute.xlu0 9
        %1036 = vperm.xlu0 %1035, %v612
        %v1037 = vpop.permute.xlu0 %1036
        %v1039 = vperm.slane %v603, 1
        %v1040 = vperm.slane %v604, 1
        %v1041 = vperm.slane %v605, 1
        %v1042 = vperm.slane %v606, 1
        %v1043 = vperm.slane %v607, 1
        %v1044 = vperm.slane %v608, 1
        %v1045 = vperm.slane %v609, 1
        %v1046 = vperm.slane %v610, 1
        %v1047 = vmul.f32 %v1033, %v1039
        %v1048 = vmul.f32 %v1033, %v1040
        %v1049 = vmul.f32 %v1033, %v1041
        %v1050 = vmul.f32 %v1033, %v1042
        %v1051 = vmul.f32 %v1033, %v1043
        %v1052 = vmul.f32 %v1033, %v1044
        %v1053 = vmul.f32 %v1033, %v1045
        %v1054 = vmul.f32 %v1033, %v1046
        %v1055 = vmul.f32 %v1037, %v1039
        %v1056 = vmul.f32 %v1037, %v1040
        %v1057 = vmul.f32 %v1037, %v1041
        %v1058 = vmul.f32 %v1037, %v1042
        %v1059 = vmul.f32 %v1037, %v1043
        %v1060 = vmul.f32 %v1037, %v1044
        %v1061 = vmul.f32 %v1037, %v1045
        %v1062 = vmul.f32 %v1037, %v1046
        %v1063 = vadd.f32 %v1015, %v1047
        %v1064 = vadd.f32 %v1016, %v1048
        %v1065 = vadd.f32 %v1017, %v1049
        %v1066 = vadd.f32 %v1018, %v1050
        %v1067 = vadd.f32 %v1019, %v1051
        %v1068 = vadd.f32 %v1020, %v1052
        %v1069 = vadd.f32 %v1021, %v1053
        %v1070 = vadd.f32 %v1022, %v1054
        %v1071 = vadd.f32 %v1023, %v1055
        %v1072 = vadd.f32 %v1024, %v1056
        %v1073 = vadd.f32 %v1025, %v1057
        %v1074 = vadd.f32 %v1026, %v1058
        %v1075 = vadd.f32 %v1027, %v1059
        %v1076 = vadd.f32 %v1028, %v1060
        %v1077 = vadd.f32 %v1029, %v1061
        %v1078 = vadd.f32 %v1030, %v1062
        %1079 = vset.pattern.permute.xlu0 10
        %1080 = vperm.xlu0 %1079, %v611
        %v1081 = vpop.permute.xlu0 %1080
        %1083 = vset.pattern.permute.xlu0 10
        %1084 = vperm.xlu0 %1083, %v612
        %v1085 = vpop.permute.xlu0 %1084
        %v1087 = vperm.slane %v603, 2
        %v1088 = vperm.slane %v604, 2
        %v1089 = vperm.slane %v605, 2
        %v1090 = vperm.slane %v606, 2
        %v1091 = vperm.slane %v607, 2
        %v1092 = vperm.slane %v608, 2
        %v1093 = vperm.slane %v609, 2
        %v1094 = vperm.slane %v610, 2
        %v1095 = vmul.f32 %v1081, %v1087
        %v1096 = vmul.f32 %v1081, %v1088
        %v1097 = vmul.f32 %v1081, %v1089
        %v1098 = vmul.f32 %v1081, %v1090
        %v1099 = vmul.f32 %v1081, %v1091
        %v1100 = vmul.f32 %v1081, %v1092
        %v1101 = vmul.f32 %v1081, %v1093
        %v1102 = vmul.f32 %v1081, %v1094
        %v1103 = vmul.f32 %v1085, %v1087
        %v1104 = vmul.f32 %v1085, %v1088
        %v1105 = vmul.f32 %v1085, %v1089
        %v1106 = vmul.f32 %v1085, %v1090
        %v1107 = vmul.f32 %v1085, %v1091
        %v1108 = vmul.f32 %v1085, %v1092
        %v1109 = vmul.f32 %v1085, %v1093
        %v1110 = vmul.f32 %v1085, %v1094
        %v1111 = vadd.f32 %v1063, %v1095
        %v1112 = vadd.f32 %v1064, %v1096
        %v1113 = vadd.f32 %v1065, %v1097
        %v1114 = vadd.f32 %v1066, %v1098
        %v1115 = vadd.f32 %v1067, %v1099
        %v1116 = vadd.f32 %v1068, %v1100
        %v1117 = vadd.f32 %v1069, %v1101
        %v1118 = vadd.f32 %v1070, %v1102
        %v1119 = vadd.f32 %v1071, %v1103
        %v1120 = vadd.f32 %v1072, %v1104
        %v1121 = vadd.f32 %v1073, %v1105
        %v1122 = vadd.f32 %v1074, %v1106
        %v1123 = vadd.f32 %v1075, %v1107
        %v1124 = vadd.f32 %v1076, %v1108
        %v1125 = vadd.f32 %v1077, %v1109
        %v1126 = vadd.f32 %v1078, %v1110
        %1127 = vset.pattern.permute.xlu0 11
        %1128 = vperm.xlu0 %1127, %v611
        %v1129 = vpop.permute.xlu0 %1128
        %1131 = vset.pattern.permute.xlu0 11
        %1132 = vperm.xlu0 %1131, %v612
        %v1133 = vpop.permute.xlu0 %1132
        %v1135 = vperm.slane %v603, 3
        %v1136 = vperm.slane %v604, 3
        %v1137 = vperm.slane %v605, 3
        %v1138 = vperm.slane %v606, 3
        %v1139 = vperm.slane %v607, 3
        %v1140 = vperm.slane %v608, 3
        %v1141 = vperm.slane %v609, 3
        %v1142 = vperm.slane %v610, 3
        %v1143 = vmul.f32 %v1129, %v1135
        %v1144 = vmul.f32 %v1129, %v1136
        %v1145 = vmul.f32 %v1129, %v1137
        %v1146 = vmul.f32 %v1129, %v1138
        %v1147 = vmul.f32 %v1129, %v1139
        %v1148 = vmul.f32 %v1129, %v1140
        %v1149 = vmul.f32 %v1129, %v1141
        %v1150 = vmul.f32 %v1129, %v1142
        %v1151 = vmul.f32 %v1133, %v1135
        %v1152 = vmul.f32 %v1133, %v1136
        %v1153 = vmul.f32 %v1133, %v1137
        %v1154 = vmul.f32 %v1133, %v1138
        %v1155 = vmul.f32 %v1133, %v1139
        %v1156 = vmul.f32 %v1133, %v1140
        %v1157 = vmul.f32 %v1133, %v1141
        %v1158 = vmul.f32 %v1133, %v1142
        %v1159 = vadd.f32 %v1111, %v1143
        %v1160 = vadd.f32 %v1112, %v1144
        %v1161 = vadd.f32 %v1113, %v1145
        %v1162 = vadd.f32 %v1114, %v1146
        %v1163 = vadd.f32 %v1115, %v1147
        %v1164 = vadd.f32 %v1116, %v1148
        %v1165 = vadd.f32 %v1117, %v1149
        %v1166 = vadd.f32 %v1118, %v1150
        %v1167 = vadd.f32 %v1119, %v1151
        %v1168 = vadd.f32 %v1120, %v1152
        %v1169 = vadd.f32 %v1121, %v1153
        %v1170 = vadd.f32 %v1122, %v1154
        %v1171 = vadd.f32 %v1123, %v1155
        %v1172 = vadd.f32 %v1124, %v1156
        %v1173 = vadd.f32 %v1125, %v1157
        %v1174 = vadd.f32 %v1126, %v1158
        %1175 = vset.pattern.permute.xlu0 12
        %1176 = vperm.xlu0 %1175, %v611
        %v1177 = vpop.permute.xlu0 %1176
        %1179 = vset.pattern.permute.xlu0 12
        %1180 = vperm.xlu0 %1179, %v612
        %v1181 = vpop.permute.xlu0 %1180
        %v1183 = vperm.slane %v603, 4
        %v1184 = vperm.slane %v604, 4
        %v1185 = vperm.slane %v605, 4
        %v1186 = vperm.slane %v606, 4
        %v1187 = vperm.slane %v607, 4
        %v1188 = vperm.slane %v608, 4
        %v1189 = vperm.slane %v609, 4
        %v1190 = vperm.slane %v610, 4
        %v1191 = vmul.f32 %v1177, %v1183
        %v1192 = vmul.f32 %v1177, %v1184
        %v1193 = vmul.f32 %v1177, %v1185
        %v1194 = vmul.f32 %v1177, %v1186
        %v1195 = vmul.f32 %v1177, %v1187
        %v1196 = vmul.f32 %v1177, %v1188
        %v1197 = vmul.f32 %v1177, %v1189
        %v1198 = vmul.f32 %v1177, %v1190
        %v1199 = vmul.f32 %v1181, %v1183
        %v1200 = vmul.f32 %v1181, %v1184
        %v1201 = vmul.f32 %v1181, %v1185
        %v1202 = vmul.f32 %v1181, %v1186
        %v1203 = vmul.f32 %v1181, %v1187
        %v1204 = vmul.f32 %v1181, %v1188
        %v1205 = vmul.f32 %v1181, %v1189
        %v1206 = vmul.f32 %v1181, %v1190
        %v1207 = vadd.f32 %v1159, %v1191
        %v1208 = vadd.f32 %v1160, %v1192
        %v1209 = vadd.f32 %v1161, %v1193
        %v1210 = vadd.f32 %v1162, %v1194
        %v1211 = vadd.f32 %v1163, %v1195
        %v1212 = vadd.f32 %v1164, %v1196
        %v1213 = vadd.f32 %v1165, %v1197
        %v1214 = vadd.f32 %v1166, %v1198
        %v1215 = vadd.f32 %v1167, %v1199
        %v1216 = vadd.f32 %v1168, %v1200
        %v1217 = vadd.f32 %v1169, %v1201
        %v1218 = vadd.f32 %v1170, %v1202
        %v1219 = vadd.f32 %v1171, %v1203
        %v1220 = vadd.f32 %v1172, %v1204
        %v1221 = vadd.f32 %v1173, %v1205
        %v1222 = vadd.f32 %v1174, %v1206
        %1223 = vset.pattern.permute.xlu0 13
        %1224 = vperm.xlu0 %1223, %v611
        %v1225 = vpop.permute.xlu0 %1224
        %1227 = vset.pattern.permute.xlu0 13
        %1228 = vperm.xlu0 %1227, %v612
        %v1229 = vpop.permute.xlu0 %1228
        %v1231 = vperm.slane %v603, 5
        %v1232 = vperm.slane %v604, 5
        %v1233 = vperm.slane %v605, 5
        %v1234 = vperm.slane %v606, 5
        %v1235 = vperm.slane %v607, 5
        %v1236 = vperm.slane %v608, 5
        %v1237 = vperm.slane %v609, 5
        %v1238 = vperm.slane %v610, 5
        %v1239 = vmul.f32 %v1225, %v1231
        %v1240 = vmul.f32 %v1225, %v1232
        %v1241 = vmul.f32 %v1225, %v1233
        %v1242 = vmul.f32 %v1225, %v1234
        %v1243 = vmul.f32 %v1225, %v1235
        %v1244 = vmul.f32 %v1225, %v1236
        %v1245 = vmul.f32 %v1225, %v1237
        %v1246 = vmul.f32 %v1225, %v1238
        %v1247 = vmul.f32 %v1229, %v1231
        %v1248 = vmul.f32 %v1229, %v1232
        %v1249 = vmul.f32 %v1229, %v1233
        %v1250 = vmul.f32 %v1229, %v1234
        %v1251 = vmul.f32 %v1229, %v1235
        %v1252 = vmul.f32 %v1229, %v1236
        %v1253 = vmul.f32 %v1229, %v1237
        %v1254 = vmul.f32 %v1229, %v1238
        %v1255 = vadd.f32 %v1207, %v1239
        %v1256 = vadd.f32 %v1208, %v1240
        %v1257 = vadd.f32 %v1209, %v1241
        %v1258 = vadd.f32 %v1210, %v1242
        %v1259 = vadd.f32 %v1211, %v1243
        %v1260 = vadd.f32 %v1212, %v1244
        %v1261 = vadd.f32 %v1213, %v1245
        %v1262 = vadd.f32 %v1214, %v1246
        %v1263 = vadd.f32 %v1215, %v1247
        %v1264 = vadd.f32 %v1216, %v1248
        %v1265 = vadd.f32 %v1217, %v1249
        %v1266 = vadd.f32 %v1218, %v1250
        %v1267 = vadd.f32 %v1219, %v1251
        %v1268 = vadd.f32 %v1220, %v1252
        %v1269 = vadd.f32 %v1221, %v1253
        %v1270 = vadd.f32 %v1222, %v1254
        %1271 = vset.pattern.permute.xlu0 14
        %1272 = vperm.xlu0 %1271, %v611
        %v1273 = vpop.permute.xlu0 %1272
        %1275 = vset.pattern.permute.xlu0 14
        %1276 = vperm.xlu0 %1275, %v612
        %v1277 = vpop.permute.xlu0 %1276
        %v1279 = vperm.slane %v603, 6
        %v1280 = vperm.slane %v604, 6
        %v1281 = vperm.slane %v605, 6
        %v1282 = vperm.slane %v606, 6
        %v1283 = vperm.slane %v607, 6
        %v1284 = vperm.slane %v608, 6
        %v1285 = vperm.slane %v609, 6
        %v1286 = vperm.slane %v610, 6
        %v1287 = vmul.f32 %v1273, %v1279
        %v1288 = vmul.f32 %v1273, %v1280
        %v1289 = vmul.f32 %v1273, %v1281
        %v1290 = vmul.f32 %v1273, %v1282
        %v1291 = vmul.f32 %v1273, %v1283
        %v1292 = vmul.f32 %v1273, %v1284
        %v1293 = vmul.f32 %v1273, %v1285
        %v1294 = vmul.f32 %v1273, %v1286
        %v1295 = vmul.f32 %v1277, %v1279
        %v1296 = vmul.f32 %v1277, %v1280
        %v1297 = vmul.f32 %v1277, %v1281
        %v1298 = vmul.f32 %v1277, %v1282
        %v1299 = vmul.f32 %v1277, %v1283
        %v1300 = vmul.f32 %v1277, %v1284
        %v1301 = vmul.f32 %v1277, %v1285
        %v1302 = vmul.f32 %v1277, %v1286
        %v1303 = vadd.f32 %v1255, %v1287
        %v1304 = vadd.f32 %v1256, %v1288
        %v1305 = vadd.f32 %v1257, %v1289
        %v1306 = vadd.f32 %v1258, %v1290
        %v1307 = vadd.f32 %v1259, %v1291
        %v1308 = vadd.f32 %v1260, %v1292
        %v1309 = vadd.f32 %v1261, %v1293
        %v1310 = vadd.f32 %v1262, %v1294
        %v1311 = vadd.f32 %v1263, %v1295
        %v1312 = vadd.f32 %v1264, %v1296
        %v1313 = vadd.f32 %v1265, %v1297
        %v1314 = vadd.f32 %v1266, %v1298
        %v1315 = vadd.f32 %v1267, %v1299
        %v1316 = vadd.f32 %v1268, %v1300
        %v1317 = vadd.f32 %v1269, %v1301
        %v1318 = vadd.f32 %v1270, %v1302
        %1319 = vset.pattern.permute.xlu0 15
        %1320 = vperm.xlu0 %1319, %v611
        %v1321 = vpop.permute.xlu0 %1320
        %1323 = vset.pattern.permute.xlu0 15
        %1324 = vperm.xlu0 %1323, %v612
        %v1325 = vpop.permute.xlu0 %1324
        %v1327 = vperm.slane %v603, 7
        %v1328 = vperm.slane %v604, 7
        %v1329 = vperm.slane %v605, 7
        %v1330 = vperm.slane %v606, 7
        %v1331 = vperm.slane %v607, 7
        %v1332 = vperm.slane %v608, 7
        %v1333 = vperm.slane %v609, 7
        %v1334 = vperm.slane %v610, 7
        %v1335 = vmul.f32 %v1321, %v1327
        %v1336 = vmul.f32 %v1321, %v1328
        %v1337 = vmul.f32 %v1321, %v1329
        %v1338 = vmul.f32 %v1321, %v1330
        %v1339 = vmul.f32 %v1321, %v1331
        %v1340 = vmul.f32 %v1321, %v1332
        %v1341 = vmul.f32 %v1321, %v1333
        %v1342 = vmul.f32 %v1321, %v1334
        %v1343 = vmul.f32 %v1325, %v1327
        %v1344 = vmul.f32 %v1325, %v1328
        %v1345 = vmul.f32 %v1325, %v1329
        %v1346 = vmul.f32 %v1325, %v1330
        %v1347 = vmul.f32 %v1325, %v1331
        %v1348 = vmul.f32 %v1325, %v1332
        %v1349 = vmul.f32 %v1325, %v1333
        %v1350 = vmul.f32 %v1325, %v1334
        %v1351 = vadd.f32 %v1303, %v1335
        %v1352 = vadd.f32 %v1304, %v1336
        %v1353 = vadd.f32 %v1305, %v1337
        %v1354 = vadd.f32 %v1306, %v1338
        %v1355 = vadd.f32 %v1307, %v1339
        %v1356 = vadd.f32 %v1308, %v1340
        %v1357 = vadd.f32 %v1309, %v1341
        %v1358 = vadd.f32 %v1310, %v1342
        %v1359 = vadd.f32 %v1311, %v1343
        %v1360 = vadd.f32 %v1312, %v1344
        %v1361 = vadd.f32 %v1313, %v1345
        %v1362 = vadd.f32 %v1314, %v1346
        %v1363 = vadd.f32 %v1315, %v1347
        %v1364 = vadd.f32 %v1316, %v1348
        %v1365 = vadd.f32 %v1317, %v1349
        %v1366 = vadd.f32 %v1318, %v1350
        %v1367 = vld [vmem:[%s4] sm:$0xff]
        %v1368 = vld [vmem:[%s4 + $0x8] sm:$0xff]
        %1370 = vset.pattern.permute.xlu0 0
        %1371 = vperm.xlu0 %1370, %v1367
        %v1372 = vpop.permute.xlu0 %1371
        %1375 = vset.pattern.permute.xlu0 0
        %1376 = vperm.xlu0 %1375, %v1368
        %v1377 = vpop.permute.xlu0 %1376
        %v1379 = vadd.f32 %v1351, %v1372
        %v1380 = vadd.f32 %v1352, %v1372
        %v1381 = vadd.f32 %v1353, %v1372
        %v1382 = vadd.f32 %v1354, %v1372
        %v1383 = vadd.f32 %v1355, %v1372
        %v1384 = vadd.f32 %v1356, %v1372
        %v1385 = vadd.f32 %v1357, %v1372
        %v1386 = vadd.f32 %v1358, %v1372
        %v1387 = vadd.f32 %v1359, %v1377
        %v1388 = vadd.f32 %v1360, %v1377
        %v1389 = vadd.f32 %v1361, %v1377
        %v1390 = vadd.f32 %v1362, %v1377
        %v1391 = vadd.f32 %v1363, %v1377
        %v1392 = vadd.f32 %v1364, %v1377
        %v1393 = vadd.f32 %v1365, %v1377
        %v1394 = vadd.f32 %v1366, %v1377
        %v1395 = vmax.f32 %v1379, 0.0
        %v1396 = vmax.f32 %v1380, 0.0
        %v1397 = vmax.f32 %v1381, 0.0
        %v1398 = vmax.f32 %v1382, 0.0
        %v1399 = vmax.f32 %v1383, 0.0
        %v1400 = vmax.f32 %v1384, 0.0
        %v1401 = vmax.f32 %v1385, 0.0
        %v1402 = vmax.f32 %v1386, 0.0
        %v1403 = vmax.f32 %v1387, 0.0
        %v1404 = vmax.f32 %v1388, 0.0
        %v1405 = vmax.f32 %v1389, 0.0
        %v1406 = vmax.f32 %v1390, 0.0
        %v1407 = vmax.f32 %v1391, 0.0
        %v1408 = vmax.f32 %v1392, 0.0
        %v1409 = vmax.f32 %v1393, 0.0
        %v1410 = vmax.f32 %v1394, 0.0
        %v1411 = vld [vmem:[%s5] sm:$0x7]
        %1413 = vset.pattern.permute.xlu0 0
        %1414 = vperm.xlu0 %1413, %v1411
        %v1415 = vpop.permute.xlu0 %1414
        %v1417 = vperm.slane %v1395, 0
        %v1418 = vperm.slane %v1396, 0
        %v1419 = vperm.slane %v1397, 0
        %v1420 = vperm.slane %v1398, 0
        %v1421 = vperm.slane %v1399, 0
        %v1422 = vperm.slane %v1400, 0
        %v1423 = vperm.slane %v1401, 0
        %v1424 = vperm.slane %v1402, 0
        %v1425 = vmul.f32 %v1415, %v1417
        %v1426 = vmul.f32 %v1415, %v1418
        %v1427 = vmul.f32 %v1415, %v1419
        %v1428 = vmul.f32 %v1415, %v1420
        %v1429 = vmul.f32 %v1415, %v1421
        %v1430 = vmul.f32 %v1415, %v1422
        %v1431 = vmul.f32 %v1415, %v1423
        %v1432 = vmul.f32 %v1415, %v1424
        %1433 = vset.pattern.permute.xlu0 1
        %1434 = vperm.xlu0 %1433, %v1411
        %v1435 = vpop.permute.xlu0 %1434
        %v1437 = vperm.slane %v1395, 1
        %v1438 = vperm.slane %v1396, 1
        %v1439 = vperm.slane %v1397, 1
        %v1440 = vperm.slane %v1398, 1
        %v1441 = vperm.slane %v1399, 1
        %v1442 = vperm.slane %v1400, 1
        %v1443 = vperm.slane %v1401, 1
        %v1444 = vperm.slane %v1402, 1
        %v1445 = vmul.f32 %v1435, %v1437
        %v1446 = vmul.f32 %v1435, %v1438
        %v1447 = vmul.f32 %v1435, %v1439
        %v1448 = vmul.f32 %v1435, %v1440
        %v1449 = vmul.f32 %v1435, %v1441
        %v1450 = vmul.f32 %v1435, %v1442
        %v1451 = vmul.f32 %v1435, %v1443
        %v1452 = vmul.f32 %v1435, %v1444
        %v1453 = vadd.f32 %v1425, %v1445
        %v1454 = vadd.f32 %v1426, %v1446
        %v1455 = vadd.f32 %v1427, %v1447
        %v1456 = vadd.f32 %v1428, %v1448
        %v1457 = vadd.f32 %v1429, %v1449
        %v1458 = vadd.f32 %v1430, %v1450
        %v1459 = vadd.f32 %v1431, %v1451
        %v1460 = vadd.f32 %v1432, %v1452
        %1461 = vset.pattern.permute.xlu0 2
        %1462 = vperm.xlu0 %1461, %v1411
        %v1463 = vpop.permute.xlu0 %1462
        %v1465 = vperm.slane %v1395, 2
        %v1466 = vperm.slane %v1396, 2
        %v1467 = vperm.slane %v1397, 2
        %v1468 = vperm.slane %v1398, 2
        %v1469 = vperm.slane %v1399, 2
        %v1470 = vperm.slane %v1400, 2
        %v1471 = vperm.slane %v1401, 2
        %v1472 = vperm.slane %v1402, 2
        %v1473 = vmul.f32 %v1463, %v1465
        %v1474 = vmul.f32 %v1463, %v1466
        %v1475 = vmul.f32 %v1463, %v1467
        %v1476 = vmul.f32 %v1463, %v1468
        %v1477 = vmul.f32 %v1463, %v1469
        %v1478 = vmul.f32 %v1463, %v1470
        %v1479 = vmul.f32 %v1463, %v1471
        %v1480 = vmul.f32 %v1463, %v1472
        %v1481 = vadd.f32 %v1453, %v1473
        %v1482 = vadd.f32 %v1454, %v1474
        %v1483 = vadd.f32 %v1455, %v1475
        %v1484 = vadd.f32 %v1456, %v1476
        %v1485 = vadd.f32 %v1457, %v1477
        %v1486 = vadd.f32 %v1458, %v1478
        %v1487 = vadd.f32 %v1459, %v1479
        %v1488 = vadd.f32 %v1460, %v1480
        %1489 = vset.pattern.permute.xlu0 3
        %1490 = vperm.xlu0 %1489, %v1411
        %v1491 = vpop.permute.xlu0 %1490
        %v1493 = vperm.slane %v1395, 3
        %v1494 = vperm.slane %v1396, 3
        %v1495 = vperm.slane %v1397, 3
        %v1496 = vperm.slane %v1398, 3
        %v1497 = vperm.slane %v1399, 3
        %v1498 = vperm.slane %v1400, 3
        %v1499 = vperm.slane %v1401, 3
        %v1500 = vperm.slane %v1402, 3
        %v1501 = vmul.f32 %v1491, %v1493
        %v1502 = vmul.f32 %v1491, %v1494
        %v1503 = vmul.f32 %v1491, %v1495
        %v1504 = vmul.f32 %v1491, %v1496
        %v1505 = vmul.f32 %v1491, %v1497
        %v1506 = vmul.f32 %v1491, %v1498
        %v1507 = vmul.f32 %v1491, %v1499
        %v1508 = vmul.f32 %v1491, %v1500
        %v1509 = vadd.f32 %v1481, %v1501
        %v1510 = vadd.f32 %v1482, %v1502
        %v1511 = vadd.f32 %v1483, %v1503
        %v1512 = vadd.f32 %v1484, %v1504
        %v1513 = vadd.f32 %v1485, %v1505
        %v1514 = vadd.f32 %v1486, %v1506
        %v1515 = vadd.f32 %v1487, %v1507
        %v1516 = vadd.f32 %v1488, %v1508
        %1517 = vset.pattern.permute.xlu0 4
        %1518 = vperm.xlu0 %1517, %v1411
        %v1519 = vpop.permute.xlu0 %1518
        %v1521 = vperm.slane %v1395, 4
        %v1522 = vperm.slane %v1396, 4
        %v1523 = vperm.slane %v1397, 4
        %v1524 = vperm.slane %v1398, 4
        %v1525 = vperm.slane %v1399, 4
        %v1526 = vperm.slane %v1400, 4
        %v1527 = vperm.slane %v1401, 4
        %v1528 = vperm.slane %v1402, 4
        %v1529 = vmul.f32 %v1519, %v1521
        %v1530 = vmul.f32 %v1519, %v1522
        %v1531 = vmul.f32 %v1519, %v1523
        %v1532 = vmul.f32 %v1519, %v1524
        %v1533 = vmul.f32 %v1519, %v1525
        %v1534 = vmul.f32 %v1519, %v1526
        %v1535 = vmul.f32 %v1519, %v1527
        %v1536 = vmul.f32 %v1519, %v1528
        %v1537 = vadd.f32 %v1509, %v1529
        %v1538 = vadd.f32 %v1510, %v1530
        %v1539 = vadd.f32 %v1511, %v1531
        %v1540 = vadd.f32 %v1512, %v1532
        %v1541 = vadd.f32 %v1513, %v1533
        %v1542 = vadd.f32 %v1514, %v1534
        %v1543 = vadd.f32 %v1515, %v1535
        %v1544 = vadd.f32 %v1516, %v1536
        %1545 = vset.pattern.permute.xlu0 5
        %1546 = vperm.xlu0 %1545, %v1411
        %v1547 = vpop.permute.xlu0 %1546
        %v1549 = vperm.slane %v1395, 5
        %v1550 = vperm.slane %v1396, 5
        %v1551 = vperm.slane %v1397, 5
        %v1552 = vperm.slane %v1398, 5
        %v1553 = vperm.slane %v1399, 5
        %v1554 = vperm.slane %v1400, 5
        %v1555 = vperm.slane %v1401, 5
        %v1556 = vperm.slane %v1402, 5
        %v1557 = vmul.f32 %v1547, %v1549
        %v1558 = vmul.f32 %v1547, %v1550
        %v1559 = vmul.f32 %v1547, %v1551
        %v1560 = vmul.f32 %v1547, %v1552
        %v1561 = vmul.f32 %v1547, %v1553
        %v1562 = vmul.f32 %v1547, %v1554
        %v1563 = vmul.f32 %v1547, %v1555
        %v1564 = vmul.f32 %v1547, %v1556
        %v1565 = vadd.f32 %v1537, %v1557
        %v1566 = vadd.f32 %v1538, %v1558
        %v1567 = vadd.f32 %v1539, %v1559
        %v1568 = vadd.f32 %v1540, %v1560
        %v1569 = vadd.f32 %v1541, %v1561
        %v1570 = vadd.f32 %v1542, %v1562
        %v1571 = vadd.f32 %v1543, %v1563
        %v1572 = vadd.f32 %v1544, %v1564
        %1573 = vset.pattern.permute.xlu0 6
        %1574 = vperm.xlu0 %1573, %v1411
        %v1575 = vpop.permute.xlu0 %1574
        %v1577 = vperm.slane %v1395, 6
        %v1578 = vperm.slane %v1396, 6
        %v1579 = vperm.slane %v1397, 6
        %v1580 = vperm.slane %v1398, 6
        %v1581 = vperm.slane %v1399, 6
        %v1582 = vperm.slane %v1400, 6
        %v1583 = vperm.slane %v1401, 6
        %v1584 = vperm.slane %v1402, 6
        %v1585 = vmul.f32 %v1575, %v1577
        %v1586 = vmul.f32 %v1575, %v1578
        %v1587 = vmul.f32 %v1575, %v1579
        %v1588 = vmul.f32 %v1575, %v1580
        %v1589 = vmul.f32 %v1575, %v1581
        %v1590 = vmul.f32 %v1575, %v1582
        %v1591 = vmul.f32 %v1575, %v1583
        %v1592 = vmul.f32 %v1575, %v1584
        %v1593 = vadd.f32 %v1565, %v1585
        %v1594 = vadd.f32 %v1566, %v1586
        %v1595 = vadd.f32 %v1567, %v1587
        %v1596 = vadd.f32 %v1568, %v1588
        %v1597 = vadd.f32 %v1569, %v1589
        %v1598 = vadd.f32 %v1570, %v1590
        %v1599 = vadd.f32 %v1571, %v1591
        %v1600 = vadd.f32 %v1572, %v1592
        %1601 = vset.pattern.permute.xlu0 7
        %1602 = vperm.xlu0 %1601, %v1411
        %v1603 = vpop.permute.xlu0 %1602
        %v1605 = vperm.slane %v1395, 7
        %v1606 = vperm.slane %v1396, 7
        %v1607 = vperm.slane %v1397, 7
        %v1608 = vperm.slane %v1398, 7
        %v1609 = vperm.slane %v1399, 7
        %v1610 = vperm.slane %v1400, 7
        %v1611 = vperm.slane %v1401, 7
        %v1612 = vperm.slane %v1402, 7
        %v1613 = vmul.f32 %v1603, %v1605
        %v1614 = vmul.f32 %v1603, %v1606
        %v1615 = vmul.f32 %v1603, %v1607
        %v1616 = vmul.f32 %v1603, %v1608
        %v1617 = vmul.f32 %v1603, %v1609
        %v1618 = vmul.f32 %v1603, %v1610
        %v1619 = vmul.f32 %v1603, %v1611
        %v1620 = vmul.f32 %v1603, %v1612
        %v1621 = vadd.f32 %v1593, %v1613
        %v1622 = vadd.f32 %v1594, %v1614
        %v1623 = vadd.f32 %v1595, %v1615
        %v1624 = vadd.f32 %v1596, %v1616
        %v1625 = vadd.f32 %v1597, %v1617
        %v1626 = vadd.f32 %v1598, %v1618
        %v1627 = vadd.f32 %v1599, %v1619
        %v1628 = vadd.f32 %v1600, %v1620
        %1629 = vset.pattern.permute.xlu0 8
        %1630 = vperm.xlu0 %1629, %v1411
        %v1631 = vpop.permute.xlu0 %1630
        %v1633 = vperm.slane %v1403, 0
        %v1634 = vperm.slane %v1404, 0
        %v1635 = vperm.slane %v1405, 0
        %v1636 = vperm.slane %v1406, 0
        %v1637 = vperm.slane %v1407, 0
        %v1638 = vperm.slane %v1408, 0
        %v1639 = vperm.slane %v1409, 0
        %v1640 = vperm.slane %v1410, 0
        %v1641 = vmul.f32 %v1631, %v1633
        %v1642 = vmul.f32 %v1631, %v1634
        %v1643 = vmul.f32 %v1631, %v1635
        %v1644 = vmul.f32 %v1631, %v1636
        %v1645 = vmul.f32 %v1631, %v1637
        %v1646 = vmul.f32 %v1631, %v1638
        %v1647 = vmul.f32 %v1631, %v1639
        %v1648 = vmul.f32 %v1631, %v1640
        %v1649 = vadd.f32 %v1621, %v1641
        %v1650 = vadd.f32 %v1622, %v1642
        %v1651 = vadd.f32 %v1623, %v1643
        %v1652 = vadd.f32 %v1624, %v1644
        %v1653 = vadd.f32 %v1625, %v1645
        %v1654 = vadd.f32 %v1626, %v1646
        %v1655 = vadd.f32 %v1627, %v1647
        %v1656 = vadd.f32 %v1628, %v1648
        %1657 = vset.pattern.permute.xlu0 9
        %1658 = vperm.xlu0 %1657, %v1411
        %v1659 = vpop.permute.xlu0 %1658
        %v1661 = vperm.slane %v1403, 1
        %v1662 = vperm.slane %v1404, 1
        %v1663 = vperm.slane %v1405, 1
        %v1664 = vperm.slane %v1406, 1
        %v1665 = vperm.slane %v1407, 1
        %v1666 = vperm.slane %v1408, 1
        %v1667 = vperm.slane %v1409, 1
        %v1668 = vperm.slane %v1410, 1
        %v1669 = vmul.f32 %v1659, %v1661
        %v1670 = vmul.f32 %v1659, %v1662
        %v1671 = vmul.f32 %v1659, %v1663
        %v1672 = vmul.f32 %v1659, %v1664
        %v1673 = vmul.f32 %v1659, %v1665
        %v1674 = vmul.f32 %v1659, %v1666
        %v1675 = vmul.f32 %v1659, %v1667
        %v1676 = vmul.f32 %v1659, %v1668
        %v1677 = vadd.f32 %v1649, %v1669
        %v1678 = vadd.f32 %v1650, %v1670
        %v1679 = vadd.f32 %v1651, %v1671
        %v1680 = vadd.f32 %v1652, %v1672
        %v1681 = vadd.f32 %v1653, %v1673
        %v1682 = vadd.f32 %v1654, %v1674
        %v1683 = vadd.f32 %v1655, %v1675
        %v1684 = vadd.f32 %v1656, %v1676
        %1685 = vset.pattern.permute.xlu0 10
        %1686 = vperm.xlu0 %1685, %v1411
        %v1687 = vpop.permute.xlu0 %1686
        %v1689 = vperm.slane %v1403, 2
        %v1690 = vperm.slane %v1404, 2
        %v1691 = vperm.slane %v1405, 2
        %v1692 = vperm.slane %v1406, 2
        %v1693 = vperm.slane %v1407, 2
        %v1694 = vperm.slane %v1408, 2
        %v1695 = vperm.slane %v1409, 2
        %v1696 = vperm.slane %v1410, 2
        %v1697 = vmul.f32 %v1687, %v1689
        %v1698 = vmul.f32 %v1687, %v1690
        %v1699 = vmul.f32 %v1687, %v1691
        %v1700 = vmul.f32 %v1687, %v1692
        %v1701 = vmul.f32 %v1687, %v1693
        %v1702 = vmul.f32 %v1687, %v1694
        %v1703 = vmul.f32 %v1687, %v1695
        %v1704 = vmul.f32 %v1687, %v1696
        %v1705 = vadd.f32 %v1677, %v1697
        %v1706 = vadd.f32 %v1678, %v1698
        %v1707 = vadd.f32 %v1679, %v1699
        %v1708 = vadd.f32 %v1680, %v1700
        %v1709 = vadd.f32 %v1681, %v1701
        %v1710 = vadd.f32 %v1682, %v1702
        %v1711 = vadd.f32 %v1683, %v1703
        %v1712 = vadd.f32 %v1684, %v1704
        %1713 = vset.pattern.permute.xlu0 11
        %1714 = vperm.xlu0 %1713, %v1411
        %v1715 = vpop.permute.xlu0 %1714
        %v1717 = vperm.slane %v1403, 3
        %v1718 = vperm.slane %v1404, 3
        %v1719 = vperm.slane %v1405, 3
        %v1720 = vperm.slane %v1406, 3
        %v1721 = vperm.slane %v1407, 3
        %v1722 = vperm.slane %v1408, 3
        %v1723 = vperm.slane %v1409, 3
        %v1724 = vperm.slane %v1410, 3
        %v1725 = vmul.f32 %v1715, %v1717
        %v1726 = vmul.f32 %v1715, %v1718
        %v1727 = vmul.f32 %v1715, %v1719
        %v1728 = vmul.f32 %v1715, %v1720
        %v1729 = vmul.f32 %v1715, %v1721
        %v1730 = vmul.f32 %v1715, %v1722
        %v1731 = vmul.f32 %v1715, %v1723
        %v1732 = vmul.f32 %v1715, %v1724
        %v1733 = vadd.f32 %v1705, %v1725
        %v1734 = vadd.f32 %v1706, %v1726
        %v1735 = vadd.f32 %v1707, %v1727
        %v1736 = vadd.f32 %v1708, %v1728
        %v1737 = vadd.f32 %v1709, %v1729
        %v1738 = vadd.f32 %v1710, %v1730
        %v1739 = vadd.f32 %v1711, %v1731
        %v1740 = vadd.f32 %v1712, %v1732
        %1741 = vset.pattern.permute.xlu0 12
        %1742 = vperm.xlu0 %1741, %v1411
        %v1743 = vpop.permute.xlu0 %1742
        %v1745 = vperm.slane %v1403, 4
        %v1746 = vperm.slane %v1404, 4
        %v1747 = vperm.slane %v1405, 4
        %v1748 = vperm.slane %v1406, 4
        %v1749 = vperm.slane %v1407, 4
        %v1750 = vperm.slane %v1408, 4
        %v1751 = vperm.slane %v1409, 4
        %v1752 = vperm.slane %v1410, 4
        %v1753 = vmul.f32 %v1743, %v1745
        %v1754 = vmul.f32 %v1743, %v1746
        %v1755 = vmul.f32 %v1743, %v1747
        %v1756 = vmul.f32 %v1743, %v1748
        %v1757 = vmul.f32 %v1743, %v1749
        %v1758 = vmul.f32 %v1743, %v1750
        %v1759 = vmul.f32 %v1743, %v1751
        %v1760 = vmul.f32 %v1743, %v1752
        %v1761 = vadd.f32 %v1733, %v1753
        %v1762 = vadd.f32 %v1734, %v1754
        %v1763 = vadd.f32 %v1735, %v1755
        %v1764 = vadd.f32 %v1736, %v1756
        %v1765 = vadd.f32 %v1737, %v1757
        %v1766 = vadd.f32 %v1738, %v1758
        %v1767 = vadd.f32 %v1739, %v1759
        %v1768 = vadd.f32 %v1740, %v1760
        %1769 = vset.pattern.permute.xlu0 13
        %1770 = vperm.xlu0 %1769, %v1411
        %v1771 = vpop.permute.xlu0 %1770
        %v1773 = vperm.slane %v1403, 5
        %v1774 = vperm.slane %v1404, 5
        %v1775 = vperm.slane %v1405, 5
        %v1776 = vperm.slane %v1406, 5
        %v1777 = vperm.slane %v1407, 5
        %v1778 = vperm.slane %v1408, 5
        %v1779 = vperm.slane %v1409, 5
        %v1780 = vperm.slane %v1410, 5
        %v1781 = vmul.f32 %v1771, %v1773
        %v1782 = vmul.f32 %v1771, %v1774
        %v1783 = vmul.f32 %v1771, %v1775
        %v1784 = vmul.f32 %v1771, %v1776
        %v1785 = vmul.f32 %v1771, %v1777
        %v1786 = vmul.f32 %v1771, %v1778
        %v1787 = vmul.f32 %v1771, %v1779
        %v1788 = vmul.f32 %v1771, %v1780
        %v1789 = vadd.f32 %v1761, %v1781
        %v1790 = vadd.f32 %v1762, %v1782
        %v1791 = vadd.f32 %v1763, %v1783
        %v1792 = vadd.f32 %v1764, %v1784
        %v1793 = vadd.f32 %v1765, %v1785
        %v1794 = vadd.f32 %v1766, %v1786
        %v1795 = vadd.f32 %v1767, %v1787
        %v1796 = vadd.f32 %v1768, %v1788
        %1797 = vset.pattern.permute.xlu0 14
        %1798 = vperm.xlu0 %1797, %v1411
        %v1799 = vpop.permute.xlu0 %1798
        %v1801 = vperm.slane %v1403, 6
        %v1802 = vperm.slane %v1404, 6
        %v1803 = vperm.slane %v1405, 6
        %v1804 = vperm.slane %v1406, 6
        %v1805 = vperm.slane %v1407, 6
        %v1806 = vperm.slane %v1408, 6
        %v1807 = vperm.slane %v1409, 6
        %v1808 = vperm.slane %v1410, 6
        %v1809 = vmul.f32 %v1799, %v1801
        %v1810 = vmul.f32 %v1799, %v1802
        %v1811 = vmul.f32 %v1799, %v1803
        %v1812 = vmul.f32 %v1799, %v1804
        %v1813 = vmul.f32 %v1799, %v1805
        %v1814 = vmul.f32 %v1799, %v1806
        %v1815 = vmul.f32 %v1799, %v1807
        %v1816 = vmul.f32 %v1799, %v1808
        %v1817 = vadd.f32 %v1789, %v1809
        %v1818 = vadd.f32 %v1790, %v1810
        %v1819 = vadd.f32 %v1791, %v1811
        %v1820 = vadd.f32 %v1792, %v1812
        %v1821 = vadd.f32 %v1793, %v1813
        %v1822 = vadd.f32 %v1794, %v1814
        %v1823 = vadd.f32 %v1795, %v1815
        %v1824 = vadd.f32 %v1796, %v1816
        %1825 = vset.pattern.permute.xlu0 15
        %1826 = vperm.xlu0 %1825, %v1411
        %v1827 = vpop.permute.xlu0 %1826
        %v1829 = vperm.slane %v1403, 7
        %v1830 = vperm.slane %v1404, 7
        %v1831 = vperm.slane %v1405, 7
        %v1832 = vperm.slane %v1406, 7
        %v1833 = vperm.slane %v1407, 7
        %v1834 = vperm.slane %v1408, 7
        %v1835 = vperm.slane %v1409, 7
        %v1836 = vperm.slane %v1410, 7
        %v1837 = vmul.f32 %v1827, %v1829
        %v1838 = vmul.f32 %v1827, %v1830
        %v1839 = vmul.f32 %v1827, %v1831
        %v1840 = vmul.f32 %v1827, %v1832
        %v1841 = vmul.f32 %v1827, %v1833
        %v1842 = vmul.f32 %v1827, %v1834
        %v1843 = vmul.f32 %v1827, %v1835
        %v1844 = vmul.f32 %v1827, %v1836
        %v1845 = vadd.f32 %v1817, %v1837
        %v1846 = vadd.f32 %v1818, %v1838
        %v1847 = vadd.f32 %v1819, %v1839
        %v1848 = vadd.f32 %v1820, %v1840
        %v1849 = vadd.f32 %v1821, %v1841
        %v1850 = vadd.f32 %v1822, %v1842
        %v1851 = vadd.f32 %v1823, %v1843
        %v1852 = vadd.f32 %v1824, %v1844
        %v1853 = vld [vmem:[%s6] sm:$0x7]
        %1855 = vset.pattern.permute.xlu0 0
        %1856 = vperm.xlu0 %1855, %v1853
        %v1857 = vpop.permute.xlu0 %1856
        %v1859 = vadd.f32 %v1845, %v1857
        %v1860 = vadd.f32 %v1846, %v1857
        %v1861 = vadd.f32 %v1847, %v1857
        %v1862 = vadd.f32 %v1848, %v1857
        %v1863 = vadd.f32 %v1849, %v1857
        %v1864 = vadd.f32 %v1850, %v1857
        %v1865 = vadd.f32 %v1851, %v1857
        %v1866 = vadd.f32 %v1852, %v1857
        %v1875 = vrot.slane %v1860, 4
        %v1876 = vrot.slane %v1862, 4
        %v1877 = vrot.slane %v1864, 4
        %v1878 = vrot.slane %v1866, 4
        %vm1879 = vcmask 1043456
        %v1880 = vsel %vm1879, %v1859, %v1875
        %v1881 = vsel %vm1879, %v1861, %v1876
        %v1882 = vsel %vm1879, %v1863, %v1877
        %v1883 = vsel %vm1879, %v1865, %v1878
        %1888 = vst [vmem:[%s539] sm:$0x77] %v1880
        %1889 = vst [vmem:[%s539 + $0x8] sm:$0x77] %v1881
        %1890 = vst [vmem:[%s539 + $0x10] sm:$0x77] %v1882
        %1891 = vst [vmem:[%s539 + $0x18] sm:$0x77] %v1883
        %v1892 = vld [vmem:[%s7] sm:$0xff]
        %v1893 = vld [vmem:[%s7 + $0x8] sm:$0xff]
        %v1894 = vld [vmem:[%s530] sm:$0xff]
        %v1895 = vld [vmem:[%s530 + $0x8] sm:$0xff]
        %1897 = vset.pattern.permute.xlu0 0
        %1898 = vperm.xlu0 %1897, %v1892
        %v1899 = vpop.permute.xlu0 %1898
        %1902 = vset.pattern.permute.xlu0 0
        %1903 = vperm.xlu0 %1902, %v1893
        %v1904 = vpop.permute.xlu0 %1903
        %v1906 = vperm.slane %v1859, 0
        %v1907 = vperm.slane %v1860, 0
        %v1908 = vperm.slane %v1861, 0
        %v1909 = vperm.slane %v1862, 0
        %v1910 = vperm.slane %v1863, 0
        %v1911 = vperm.slane %v1864, 0
        %v1912 = vperm.slane %v1865, 0
        %v1913 = vperm.slane %v1866, 0
        %v1914 = vmul.f32 %v1899, %v1906
        %v1915 = vmul.f32 %v1899, %v1907
        %v1916 = vmul.f32 %v1899, %v1908
        %v1917 = vmul.f32 %v1899, %v1909
        %v1918 = vmul.f32 %v1899, %v1910
        %v1919 = vmul.f32 %v1899, %v1911
        %v1920 = vmul.f32 %v1899, %v1912
        %v1921 = vmul.f32 %v1899, %v1913
        %v1922 = vmul.f32 %v1904, %v1906
        %v1923 = vmul.f32 %v1904, %v1907
        %v1924 = vmul.f32 %v1904, %v1908
        %v1925 = vmul.f32 %v1904, %v1909
        %v1926 = vmul.f32 %v1904, %v1910
        %v1927 = vmul.f32 %v1904, %v1911
        %v1928 = vmul.f32 %v1904, %v1912
        %v1929 = vmul.f32 %v1904, %v1913
        %1931 = vset.pattern.permute.xlu0 0
        %1932 = vperm.xlu0 %1931, %v1894
        %v1933 = vpop.permute.xlu0 %1932
        %1936 = vset.pattern.permute.xlu0 0
        %1937 = vperm.xlu0 %1936, %v1895
        %v1938 = vpop.permute.xlu0 %1937
        %v1940 = vadd.f32 %v1933, %v1914
        %v1941 = vadd.f32 %v1933, %v1915
        %v1942 = vadd.f32 %v1933, %v1916
        %v1943 = vadd.f32 %v1933, %v1917
        %v1944 = vadd.f32 %v1933, %v1918
        %v1945 = vadd.f32 %v1933, %v1919
        %v1946 = vadd.f32 %v1933, %v1920
        %v1947 = vadd.f32 %v1933, %v1921
        %v1948 = vadd.f32 %v1938, %v1922
        %v1949 = vadd.f32 %v1938, %v1923
        %v1950 = vadd.f32 %v1938, %v1924
        %v1951 = vadd.f32 %v1938, %v1925
        %v1952 = vadd.f32 %v1938, %v1926
        %v1953 = vadd.f32 %v1938, %v1927
        %v1954 = vadd.f32 %v1938, %v1928
        %v1955 = vadd.f32 %v1938, %v1929
        %1956 = vset.pattern.permute.xlu0 1
        %1957 = vperm.xlu0 %1956, %v1892
        %v1958 = vpop.permute.xlu0 %1957
        %1960 = vset.pattern.permute.xlu0 1
        %1961 = vperm.xlu0 %1960, %v1893
        %v1962 = vpop.permute.xlu0 %1961
        %v1964 = vperm.slane %v1859, 1
        %v1965 = vperm.slane %v1860, 1
        %v1966 = vperm.slane %v1861, 1
        %v1967 = vperm.slane %v1862, 1
        %v1968 = vperm.slane %v1863, 1
        %v1969 = vperm.slane %v1864, 1
        %v1970 = vperm.slane %v1865, 1
        %v1971 = vperm.slane %v1866, 1
        %v1972 = vmul.f32 %v1958, %v1964
        %v1973 = vmul.f32 %v1958, %v1965
        %v1974 = vmul.f32 %v1958, %v1966
        %v1975 = vmul.f32 %v1958, %v1967
        %v1976 = vmul.f32 %v1958, %v1968
        %v1977 = vmul.f32 %v1958, %v1969
        %v1978 = vmul.f32 %v1958, %v1970
        %v1979 = vmul.f32 %v1958, %v1971
        %v1980 = vmul.f32 %v1962, %v1964
        %v1981 = vmul.f32 %v1962, %v1965
        %v1982 = vmul.f32 %v1962, %v1966
        %v1983 = vmul.f32 %v1962, %v1967
        %v1984 = vmul.f32 %v1962, %v1968
        %v1985 = vmul.f32 %v1962, %v1969
        %v1986 = vmul.f32 %v1962, %v1970
        %v1987 = vmul.f32 %v1962, %v1971
        %v1988 = vadd.f32 %v1940, %v1972
        %v1989 = vadd.f32 %v1941, %v1973
        %v1990 = vadd.f32 %v1942, %v1974
        %v1991 = vadd.f32 %v1943, %v1975
        %v1992 = vadd.f32 %v1944, %v1976
        %v1993 = vadd.f32 %v1945, %v1977
        %v1994 = vadd.f32 %v1946, %v1978
        %v1995 = vadd.f32 %v1947, %v1979
        %v1996 = vadd.f32 %v1948, %v1980
        %v1997 = vadd.f32 %v1949, %v1981
        %v1998 = vadd.f32 %v1950, %v1982
        %v1999 = vadd.f32 %v1951, %v1983
        %v2000 = vadd.f32 %v1952, %v1984
        %v2001 = vadd.f32 %v1953, %v1985
        %v2002 = vadd.f32 %v1954, %v1986
        %v2003 = vadd.f32 %v1955, %v1987
        %2004 = vset.pattern.permute.xlu0 2
        %2005 = vperm.xlu0 %2004, %v1892
        %v2006 = vpop.permute.xlu0 %2005
        %2008 = vset.pattern.permute.xlu0 2
        %2009 = vperm.xlu0 %2008, %v1893
        %v2010 = vpop.permute.xlu0 %2009
        %v2012 = vperm.slane %v1859, 2
        %v2013 = vperm.slane %v1860, 2
        %v2014 = vperm.slane %v1861, 2
        %v2015 = vperm.slane %v1862, 2
        %v2016 = vperm.slane %v1863, 2
        %v2017 = vperm.slane %v1864, 2
        %v2018 = vperm.slane %v1865, 2
        %v2019 = vperm.slane %v1866, 2
        %v2020 = vmul.f32 %v2006, %v2012
        %v2021 = vmul.f32 %v2006, %v2013
        %v2022 = vmul.f32 %v2006, %v2014
        %v2023 = vmul.f32 %v2006, %v2015
        %v2024 = vmul.f32 %v2006, %v2016
        %v2025 = vmul.f32 %v2006, %v2017
        %v2026 = vmul.f32 %v2006, %v2018
        %v2027 = vmul.f32 %v2006, %v2019
        %v2028 = vmul.f32 %v2010, %v2012
        %v2029 = vmul.f32 %v2010, %v2013
        %v2030 = vmul.f32 %v2010, %v2014
        %v2031 = vmul.f32 %v2010, %v2015
        %v2032 = vmul.f32 %v2010, %v2016
        %v2033 = vmul.f32 %v2010, %v2017
        %v2034 = vmul.f32 %v2010, %v2018
        %v2035 = vmul.f32 %v2010, %v2019
        %v2036 = vadd.f32 %v1988, %v2020
        %v2037 = vadd.f32 %v1989, %v2021
        %v2038 = vadd.f32 %v1990, %v2022
        %v2039 = vadd.f32 %v1991, %v2023
        %v2040 = vadd.f32 %v1992, %v2024
        %v2041 = vadd.f32 %v1993, %v2025
        %v2042 = vadd.f32 %v1994, %v2026
        %v2043 = vadd.f32 %v1995, %v2027
        %v2044 = vadd.f32 %v1996, %v2028
        %v2045 = vadd.f32 %v1997, %v2029
        %v2046 = vadd.f32 %v1998, %v2030
        %v2047 = vadd.f32 %v1999, %v2031
        %v2048 = vadd.f32 %v2000, %v2032
        %v2049 = vadd.f32 %v2001, %v2033
        %v2050 = vadd.f32 %v2002, %v2034
        %v2051 = vadd.f32 %v2003, %v2035
        %v2052 = vmax.f32 %v2036, 0.0
        %v2053 = vmax.f32 %v2037, 0.0
        %v2054 = vmax.f32 %v2038, 0.0
        %v2055 = vmax.f32 %v2039, 0.0
        %v2056 = vmax.f32 %v2040, 0.0
        %v2057 = vmax.f32 %v2041, 0.0
        %v2058 = vmax.f32 %v2042, 0.0
        %v2059 = vmax.f32 %v2043, 0.0
        %v2060 = vmax.f32 %v2044, 0.0
        %v2061 = vmax.f32 %v2045, 0.0
        %v2062 = vmax.f32 %v2046, 0.0
        %v2063 = vmax.f32 %v2047, 0.0
        %v2064 = vmax.f32 %v2048, 0.0
        %v2065 = vmax.f32 %v2049, 0.0
        %v2066 = vmax.f32 %v2050, 0.0
        %v2067 = vmax.f32 %v2051, 0.0
        %v2068 = vld [vmem:[%s8] sm:$0xff]
        %v2069 = vld [vmem:[%s8 + $0x8] sm:$0xff]
        %2071 = vset.pattern.permute.xlu0 0
        %2072 = vperm.xlu0 %2071, %v2068
        %v2073 = vpop.permute.xlu0 %2072
        %2076 = vset.pattern.permute.xlu0 0
        %2077 = vperm.xlu0 %2076, %v2069
        %v2078 = vpop.permute.xlu0 %2077
        %v2080 = vperm.slane %v2052, 0
        %v2081 = vperm.slane %v2053, 0
        %v2082 = vperm.slane %v2054, 0
        %v2083 = vperm.slane %v2055, 0
        %v2084 = vperm.slane %v2056, 0
        %v2085 = vperm.slane %v2057, 0
        %v2086 = vperm.slane %v2058, 0
        %v2087 = vperm.slane %v2059, 0
        %v2088 = vmul.f32 %v2073, %v2080
        %v2089 = vmul.f32 %v2073, %v2081
        %v2090 = vmul.f32 %v2073, %v2082
        %v2091 = vmul.f32 %v2073, %v2083
        %v2092 = vmul.f32 %v2073, %v2084
        %v2093 = vmul.f32 %v2073, %v2085
        %v2094 = vmul.f32 %v2073, %v2086
        %v2095 = vmul.f32 %v2073, %v2087
        %v2096 = vmul.f32 %v2078, %v2080
        %v2097 = vmul.f32 %v2078, %v2081
        %v2098 = vmul.f32 %v2078, %v2082
        %v2099 = vmul.f32 %v2078, %v2083
        %v2100 = vmul.f32 %v2078, %v2084
        %v2101 = vmul.f32 %v2078, %v2085
        %v2102 = vmul.f32 %v2078, %v2086
        %v2103 = vmul.f32 %v2078, %v2087
        %2104 = vset.pattern.permute.xlu0 1
        %2105 = vperm.xlu0 %2104, %v2068
        %v2106 = vpop.permute.xlu0 %2105
        %2108 = vset.pattern.permute.xlu0 1
        %2109 = vperm.xlu0 %2108, %v2069
        %v2110 = vpop.permute.xlu0 %2109
        %v2112 = vperm.slane %v2052, 1
        %v2113 = vperm.slane %v2053, 1
        %v2114 = vperm.slane %v2054, 1
        %v2115 = vperm.slane %v2055, 1
        %v2116 = vperm.slane %v2056, 1
        %v2117 = vperm.slane %v2057, 1
        %v2118 = vperm.slane %v2058, 1
        %v2119 = vperm.slane %v2059, 1
        %v2120 = vmul.f32 %v2106, %v2112
        %v2121 = vmul.f32 %v2106, %v2113
        %v2122 = vmul.f32 %v2106, %v2114
        %v2123 = vmul.f32 %v2106, %v2115
        %v2124 = vmul.f32 %v2106, %v2116
        %v2125 = vmul.f32 %v2106, %v2117
        %v2126 = vmul.f32 %v2106, %v2118
        %v2127 = vmul.f32 %v2106, %v2119
        %v2128 = vmul.f32 %v2110, %v2112
        %v2129 = vmul.f32 %v2110, %v2113
        %v2130 = vmul.f32 %v2110, %v2114
        %v2131 = vmul.f32 %v2110, %v2115
        %v2132 = vmul.f32 %v2110, %v2116
        %v2133 = vmul.f32 %v2110, %v2117
        %v2134 = vmul.f32 %v2110, %v2118
        %v2135 = vmul.f32 %v2110, %v2119
        %v2136 = vadd.f32 %v2088, %v2120
        %v2137 = vadd.f32 %v2089, %v2121
        %v2138 = vadd.f32 %v2090, %v2122
        %v2139 = vadd.f32 %v2091, %v2123
        %v2140 = vadd.f32 %v2092, %v2124
        %v2141 = vadd.f32 %v2093, %v2125
        %v2142 = vadd.f32 %v2094, %v2126
        %v2143 = vadd.f32 %v2095, %v2127
        %v2144 = vadd.f32 %v2096, %v2128
        %v2145 = vadd.f32 %v2097, %v2129
        %v2146 = vadd.f32 %v2098, %v2130
        %v2147 = vadd.f32 %v2099, %v2131
        %v2148 = vadd.f32 %v2100, %v2132
        %v2149 = vadd.f32 %v2101, %v2133
        %v2150 = vadd.f32 %v2102, %v2134
        %v2151 = vadd.f32 %v2103, %v2135
        %2152 = vset.pattern.permute.xlu0 2
        %2153 = vperm.xlu0 %2152, %v2068
        %v2154 = vpop.permute.xlu0 %2153
        %2156 = vset.pattern.permute.xlu0 2
        %2157 = vperm.xlu0 %2156, %v2069
        %v2158 = vpop.permute.xlu0 %2157
        %v2160 = vperm.slane %v2052, 2
        %v2161 = vperm.slane %v2053, 2
        %v2162 = vperm.slane %v2054, 2
        %v2163 = vperm.slane %v2055, 2
        %v2164 = vperm.slane %v2056, 2
        %v2165 = vperm.slane %v2057, 2
        %v2166 = vperm.slane %v2058, 2
        %v2167 = vperm.slane %v2059, 2
        %v2168 = vmul.f32 %v2154, %v2160
        %v2169 = vmul.f32 %v2154, %v2161
        %v2170 = vmul.f32 %v2154, %v2162
        %v2171 = vmul.f32 %v2154, %v2163
        %v2172 = vmul.f32 %v2154, %v2164
        %v2173 = vmul.f32 %v2154, %v2165
        %v2174 = vmul.f32 %v2154, %v2166
        %v2175 = vmul.f32 %v2154, %v2167
        %v2176 = vmul.f32 %v2158, %v2160
        %v2177 = vmul.f32 %v2158, %v2161
        %v2178 = vmul.f32 %v2158, %v2162
        %v2179 = vmul.f32 %v2158, %v2163
        %v2180 = vmul.f32 %v2158, %v2164
        %v2181 = vmul.f32 %v2158, %v2165
        %v2182 = vmul.f32 %v2158, %v2166
        %v2183 = vmul.f32 %v2158, %v2167
        %v2184 = vadd.f32 %v2136, %v2168
        %v2185 = vadd.f32 %v2137, %v2169
        %v2186 = vadd.f32 %v2138, %v2170
        %v2187 = vadd.f32 %v2139, %v2171
        %v2188 = vadd.f32 %v2140, %v2172
        %v2189 = vadd.f32 %v2141, %v2173
        %v2190 = vadd.f32 %v2142, %v2174
        %v2191 = vadd.f32 %v2143, %v2175
        %v2192 = vadd.f32 %v2144, %v2176
        %v2193 = vadd.f32 %v2145, %v2177
        %v2194 = vadd.f32 %v2146, %v2178
        %v2195 = vadd.f32 %v2147, %v2179
        %v2196 = vadd.f32 %v2148, %v2180
        %v2197 = vadd.f32 %v2149, %v2181
        %v2198 = vadd.f32 %v2150, %v2182
        %v2199 = vadd.f32 %v2151, %v2183
        %2200 = vset.pattern.permute.xlu0 3
        %2201 = vperm.xlu0 %2200, %v2068
        %v2202 = vpop.permute.xlu0 %2201
        %2204 = vset.pattern.permute.xlu0 3
        %2205 = vperm.xlu0 %2204, %v2069
        %v2206 = vpop.permute.xlu0 %2205
        %v2208 = vperm.slane %v2052, 3
        %v2209 = vperm.slane %v2053, 3
        %v2210 = vperm.slane %v2054, 3
        %v2211 = vperm.slane %v2055, 3
        %v2212 = vperm.slane %v2056, 3
        %v2213 = vperm.slane %v2057, 3
        %v2214 = vperm.slane %v2058, 3
        %v2215 = vperm.slane %v2059, 3
        %v2216 = vmul.f32 %v2202, %v2208
        %v2217 = vmul.f32 %v2202, %v2209
        %v2218 = vmul.f32 %v2202, %v2210
        %v2219 = vmul.f32 %v2202, %v2211
        %v2220 = vmul.f32 %v2202, %v2212
        %v2221 = vmul.f32 %v2202, %v2213
        %v2222 = vmul.f32 %v2202, %v2214
        %v2223 = vmul.f32 %v2202, %v2215
        %v2224 = vmul.f32 %v2206, %v2208
        %v2225 = vmul.f32 %v2206, %v2209
        %v2226 = vmul.f32 %v2206, %v2210
        %v2227 = vmul.f32 %v2206, %v2211
        %v2228 = vmul.f32 %v2206, %v2212
        %v2229 = vmul.f32 %v2206, %v2213
        %v2230 = vmul.f32 %v2206, %v2214
        %v2231 = vmul.f32 %v2206, %v2215
        %v2232 = vadd.f32 %v2184, %v2216
        %v2233 = vadd.f32 %v2185, %v2217
        %v2234 = vadd.f32 %v2186, %v2218
        %v2235 = vadd.f32 %v2187, %v2219
        %v2236 = vadd.f32 %v2188, %v2220
        %v2237 = vadd.f32 %v2189, %v2221
        %v2238 = vadd.f32 %v2190, %v2222
        %v2239 = vadd.f32 %v2191, %v2223
        %v2240 = vadd.f32 %v2192, %v2224
        %v2241 = vadd.f32 %v2193, %v2225
        %v2242 = vadd.f32 %v2194, %v2226
        %v2243 = vadd.f32 %v2195, %v2227
        %v2244 = vadd.f32 %v2196, %v2228
        %v2245 = vadd.f32 %v2197, %v2229
        %v2246 = vadd.f32 %v2198, %v2230
        %v2247 = vadd.f32 %v2199, %v2231
        %2248 = vset.pattern.permute.xlu0 4
        %2249 = vperm.xlu0 %2248, %v2068
        %v2250 = vpop.permute.xlu0 %2249
        %2252 = vset.pattern.permute.xlu0 4
        %2253 = vperm.xlu0 %2252, %v2069
        %v2254 = vpop.permute.xlu0 %2253
        %v2256 = vperm.slane %v2052, 4
        %v2257 = vperm.slane %v2053, 4
        %v2258 = vperm.slane %v2054, 4
        %v2259 = vperm.slane %v2055, 4
        %v2260 = vperm.slane %v2056, 4
        %v2261 = vperm.slane %v2057, 4
        %v2262 = vperm.slane %v2058, 4
        %v2263 = vperm.slane %v2059, 4
        %v2264 = vmul.f32 %v2250, %v2256
        %v2265 = vmul.f32 %v2250, %v2257
        %v2266 = vmul.f32 %v2250, %v2258
        %v2267 = vmul.f32 %v2250, %v2259
        %v2268 = vmul.f32 %v2250, %v2260
        %v2269 = vmul.f32 %v2250, %v2261
        %v2270 = vmul.f32 %v2250, %v2262
        %v2271 = vmul.f32 %v2250, %v2263
        %v2272 = vmul.f32 %v2254, %v2256
        %v2273 = vmul.f32 %v2254, %v2257
        %v2274 = vmul.f32 %v2254, %v2258
        %v2275 = vmul.f32 %v2254, %v2259
        %v2276 = vmul.f32 %v2254, %v2260
        %v2277 = vmul.f32 %v2254, %v2261
        %v2278 = vmul.f32 %v2254, %v2262
        %v2279 = vmul.f32 %v2254, %v2263
        %v2280 = vadd.f32 %v2232, %v2264
        %v2281 = vadd.f32 %v2233, %v2265
        %v2282 = vadd.f32 %v2234, %v2266
        %v2283 = vadd.f32 %v2235, %v2267
        %v2284 = vadd.f32 %v2236, %v2268
        %v2285 = vadd.f32 %v2237, %v2269
        %v2286 = vadd.f32 %v2238, %v2270
        %v2287 = vadd.f32 %v2239, %v2271
        %v2288 = vadd.f32 %v2240, %v2272
        %v2289 = vadd.f32 %v2241, %v2273
        %v2290 = vadd.f32 %v2242, %v2274
        %v2291 = vadd.f32 %v2243, %v2275
        %v2292 = vadd.f32 %v2244, %v2276
        %v2293 = vadd.f32 %v2245, %v2277
        %v2294 = vadd.f32 %v2246, %v2278
        %v2295 = vadd.f32 %v2247, %v2279
        %2296 = vset.pattern.permute.xlu0 5
        %2297 = vperm.xlu0 %2296, %v2068
        %v2298 = vpop.permute.xlu0 %2297
        %2300 = vset.pattern.permute.xlu0 5
        %2301 = vperm.xlu0 %2300, %v2069
        %v2302 = vpop.permute.xlu0 %2301
        %v2304 = vperm.slane %v2052, 5
        %v2305 = vperm.slane %v2053, 5
        %v2306 = vperm.slane %v2054, 5
        %v2307 = vperm.slane %v2055, 5
        %v2308 = vperm.slane %v2056, 5
        %v2309 = vperm.slane %v2057, 5
        %v2310 = vperm.slane %v2058, 5
        %v2311 = vperm.slane %v2059, 5
        %v2312 = vmul.f32 %v2298, %v2304
        %v2313 = vmul.f32 %v2298, %v2305
        %v2314 = vmul.f32 %v2298, %v2306
        %v2315 = vmul.f32 %v2298, %v2307
        %v2316 = vmul.f32 %v2298, %v2308
        %v2317 = vmul.f32 %v2298, %v2309
        %v2318 = vmul.f32 %v2298, %v2310
        %v2319 = vmul.f32 %v2298, %v2311
        %v2320 = vmul.f32 %v2302, %v2304
        %v2321 = vmul.f32 %v2302, %v2305
        %v2322 = vmul.f32 %v2302, %v2306
        %v2323 = vmul.f32 %v2302, %v2307
        %v2324 = vmul.f32 %v2302, %v2308
        %v2325 = vmul.f32 %v2302, %v2309
        %v2326 = vmul.f32 %v2302, %v2310
        %v2327 = vmul.f32 %v2302, %v2311
        %v2328 = vadd.f32 %v2280, %v2312
        %v2329 = vadd.f32 %v2281, %v2313
        %v2330 = vadd.f32 %v2282, %v2314
        %v2331 = vadd.f32 %v2283, %v2315
        %v2332 = vadd.f32 %v2284, %v2316
        %v2333 = vadd.f32 %v2285, %v2317
        %v2334 = vadd.f32 %v2286, %v2318
        %v2335 = vadd.f32 %v2287, %v2319
        %v2336 = vadd.f32 %v2288, %v2320
        %v2337 = vadd.f32 %v2289, %v2321
        %v2338 = vadd.f32 %v2290, %v2322
        %v2339 = vadd.f32 %v2291, %v2323
        %v2340 = vadd.f32 %v2292, %v2324
        %v2341 = vadd.f32 %v2293, %v2325
        %v2342 = vadd.f32 %v2294, %v2326
        %v2343 = vadd.f32 %v2295, %v2327
        %2344 = vset.pattern.permute.xlu0 6
        %2345 = vperm.xlu0 %2344, %v2068
        %v2346 = vpop.permute.xlu0 %2345
        %2348 = vset.pattern.permute.xlu0 6
        %2349 = vperm.xlu0 %2348, %v2069
        %v2350 = vpop.permute.xlu0 %2349
        %v2352 = vperm.slane %v2052, 6
        %v2353 = vperm.slane %v2053, 6
        %v2354 = vperm.slane %v2054, 6
        %v2355 = vperm.slane %v2055, 6
        %v2356 = vperm.slane %v2056, 6
        %v2357 = vperm.slane %v2057, 6
        %v2358 = vperm.slane %v2058, 6
        %v2359 = vperm.slane %v2059, 6
        %v2360 = vmul.f32 %v2346, %v2352
        %v2361 = vmul.f32 %v2346, %v2353
        %v2362 = vmul.f32 %v2346, %v2354
        %v2363 = vmul.f32 %v2346, %v2355
        %v2364 = vmul.f32 %v2346, %v2356
        %v2365 = vmul.f32 %v2346, %v2357
        %v2366 = vmul.f32 %v2346, %v2358
        %v2367 = vmul.f32 %v2346, %v2359
        %v2368 = vmul.f32 %v2350, %v2352
        %v2369 = vmul.f32 %v2350, %v2353
        %v2370 = vmul.f32 %v2350, %v2354
        %v2371 = vmul.f32 %v2350, %v2355
        %v2372 = vmul.f32 %v2350, %v2356
        %v2373 = vmul.f32 %v2350, %v2357
        %v2374 = vmul.f32 %v2350, %v2358
        %v2375 = vmul.f32 %v2350, %v2359
        %v2376 = vadd.f32 %v2328, %v2360
        %v2377 = vadd.f32 %v2329, %v2361
        %v2378 = vadd.f32 %v2330, %v2362
        %v2379 = vadd.f32 %v2331, %v2363
        %v2380 = vadd.f32 %v2332, %v2364
        %v2381 = vadd.f32 %v2333, %v2365
        %v2382 = vadd.f32 %v2334, %v2366
        %v2383 = vadd.f32 %v2335, %v2367
        %v2384 = vadd.f32 %v2336, %v2368
        %v2385 = vadd.f32 %v2337, %v2369
        %v2386 = vadd.f32 %v2338, %v2370
        %v2387 = vadd.f32 %v2339, %v2371
        %v2388 = vadd.f32 %v2340, %v2372
        %v2389 = vadd.f32 %v2341, %v2373
        %v2390 = vadd.f32 %v2342, %v2374
        %v2391 = vadd.f32 %v2343, %v2375
        %2392 = vset.pattern.permute.xlu0 7
        %2393 = vperm.xlu0 %2392, %v2068
        %v2394 = vpop.permute.xlu0 %2393
        %2396 = vset.pattern.permute.xlu0 7
        %2397 = vperm.xlu0 %2396, %v2069
        %v2398 = vpop.permute.xlu0 %2397
        %v2400 = vperm.slane %v2052, 7
        %v2401 = vperm.slane %v2053, 7
        %v2402 = vperm.slane %v2054, 7
        %v2403 = vperm.slane %v2055, 7
        %v2404 = vperm.slane %v2056, 7
        %v2405 = vperm.slane %v2057, 7
        %v2406 = vperm.slane %v2058, 7
        %v2407 = vperm.slane %v2059, 7
        %v2408 = vmul.f32 %v2394, %v2400
        %v2409 = vmul.f32 %v2394, %v2401
        %v2410 = vmul.f32 %v2394, %v2402
        %v2411 = vmul.f32 %v2394, %v2403
        %v2412 = vmul.f32 %v2394, %v2404
        %v2413 = vmul.f32 %v2394, %v2405
        %v2414 = vmul.f32 %v2394, %v2406
        %v2415 = vmul.f32 %v2394, %v2407
        %v2416 = vmul.f32 %v2398, %v2400
        %v2417 = vmul.f32 %v2398, %v2401
        %v2418 = vmul.f32 %v2398, %v2402
        %v2419 = vmul.f32 %v2398, %v2403
        %v2420 = vmul.f32 %v2398, %v2404
        %v2421 = vmul.f32 %v2398, %v2405
        %v2422 = vmul.f32 %v2398, %v2406
        %v2423 = vmul.f32 %v2398, %v2407
        %v2424 = vadd.f32 %v2376, %v2408
        %v2425 = vadd.f32 %v2377, %v2409
        %v2426 = vadd.f32 %v2378, %v2410
        %v2427 = vadd.f32 %v2379, %v2411
        %v2428 = vadd.f32 %v2380, %v2412
        %v2429 = vadd.f32 %v2381, %v2413
        %v2430 = vadd.f32 %v2382, %v2414
        %v2431 = vadd.f32 %v2383, %v2415
        %v2432 = vadd.f32 %v2384, %v2416
        %v2433 = vadd.f32 %v2385, %v2417
        %v2434 = vadd.f32 %v2386, %v2418
        %v2435 = vadd.f32 %v2387, %v2419
        %v2436 = vadd.f32 %v2388, %v2420
        %v2437 = vadd.f32 %v2389, %v2421
        %v2438 = vadd.f32 %v2390, %v2422
        %v2439 = vadd.f32 %v2391, %v2423
        %2440 = vset.pattern.permute.xlu0 8
        %2441 = vperm.xlu0 %2440, %v2068
        %v2442 = vpop.permute.xlu0 %2441
        %2444 = vset.pattern.permute.xlu0 8
        %2445 = vperm.xlu0 %2444, %v2069
        %v2446 = vpop.permute.xlu0 %2445
        %v2448 = vperm.slane %v2060, 0
        %v2449 = vperm.slane %v2061, 0
        %v2450 = vperm.slane %v2062, 0
        %v2451 = vperm.slane %v2063, 0
        %v2452 = vperm.slane %v2064, 0
        %v2453 = vperm.slane %v2065, 0
        %v2454 = vperm.slane %v2066, 0
        %v2455 = vperm.slane %v2067, 0
        %v2456 = vmul.f32 %v2442, %v2448
        %v2457 = vmul.f32 %v2442, %v2449
        %v2458 = vmul.f32 %v2442, %v2450
        %v2459 = vmul.f32 %v2442, %v2451
        %v2460 = vmul.f32 %v2442, %v2452
        %v2461 = vmul.f32 %v2442, %v2453
        %v2462 = vmul.f32 %v2442, %v2454
        %v2463 = vmul.f32 %v2442, %v2455
        %v2464 = vmul.f32 %v2446, %v2448
        %v2465 = vmul.f32 %v2446, %v2449
        %v2466 = vmul.f32 %v2446, %v2450
        %v2467 = vmul.f32 %v2446, %v2451
        %v2468 = vmul.f32 %v2446, %v2452
        %v2469 = vmul.f32 %v2446, %v2453
        %v2470 = vmul.f32 %v2446, %v2454
        %v2471 = vmul.f32 %v2446, %v2455
        %v2472 = vadd.f32 %v2424, %v2456
        %v2473 = vadd.f32 %v2425, %v2457
        %v2474 = vadd.f32 %v2426, %v2458
        %v2475 = vadd.f32 %v2427, %v2459
        %v2476 = vadd.f32 %v2428, %v2460
        %v2477 = vadd.f32 %v2429, %v2461
        %v2478 = vadd.f32 %v2430, %v2462
        %v2479 = vadd.f32 %v2431, %v2463
        %v2480 = vadd.f32 %v2432, %v2464
        %v2481 = vadd.f32 %v2433, %v2465
        %v2482 = vadd.f32 %v2434, %v2466
        %v2483 = vadd.f32 %v2435, %v2467
        %v2484 = vadd.f32 %v2436, %v2468
        %v2485 = vadd.f32 %v2437, %v2469
        %v2486 = vadd.f32 %v2438, %v2470
        %v2487 = vadd.f32 %v2439, %v2471
        %2488 = vset.pattern.permute.xlu0 9
        %2489 = vperm.xlu0 %2488, %v2068
        %v2490 = vpop.permute.xlu0 %2489
        %2492 = vset.pattern.permute.xlu0 9
        %2493 = vperm.xlu0 %2492, %v2069
        %v2494 = vpop.permute.xlu0 %2493
        %v2496 = vperm.slane %v2060, 1
        %v2497 = vperm.slane %v2061, 1
        %v2498 = vperm.slane %v2062, 1
        %v2499 = vperm.slane %v2063, 1
        %v2500 = vperm.slane %v2064, 1
        %v2501 = vperm.slane %v2065, 1
        %v2502 = vperm.slane %v2066, 1
        %v2503 = vperm.slane %v2067, 1
        %v2504 = vmul.f32 %v2490, %v2496
        %v2505 = vmul.f32 %v2490, %v2497
        %v2506 = vmul.f32 %v2490, %v2498
        %v2507 = vmul.f32 %v2490, %v2499
        %v2508 = vmul.f32 %v2490, %v2500
        %v2509 = vmul.f32 %v2490, %v2501
        %v2510 = vmul.f32 %v2490, %v2502
        %v2511 = vmul.f32 %v2490, %v2503
        %v2512 = vmul.f32 %v2494, %v2496
        %v2513 = vmul.f32 %v2494, %v2497
        %v2514 = vmul.f32 %v2494, %v2498
        %v2515 = vmul.f32 %v2494, %v2499
        %v2516 = vmul.f32 %v2494, %v2500
        %v2517 = vmul.f32 %v2494, %v2501
        %v2518 = vmul.f32 %v2494, %v2502
        %v2519 = vmul.f32 %v2494, %v2503
        %v2520 = vadd.f32 %v2472, %v2504
        %v2521 = vadd.f32 %v2473, %v2505
        %v2522 = vadd.f32 %v2474, %v2506
        %v2523 = vadd.f32 %v2475, %v2507
        %v2524 = vadd.f32 %v2476, %v2508
        %v2525 = vadd.f32 %v2477, %v2509
        %v2526 = vadd.f32 %v2478, %v2510
        %v2527 = vadd.f32 %v2479, %v2511
        %v2528 = vadd.f32 %v2480, %v2512
        %v2529 = vadd.f32 %v2481, %v2513
        %v2530 = vadd.f32 %v2482, %v2514
        %v2531 = vadd.f32 %v2483, %v2515
        %v2532 = vadd.f32 %v2484, %v2516
        %v2533 = vadd.f32 %v2485, %v2517
        %v2534 = vadd.f32 %v2486, %v2518
        %v2535 = vadd.f32 %v2487, %v2519
        %2536 = vset.pattern.permute.xlu0 10
        %2537 = vperm.xlu0 %2536, %v2068
        %v2538 = vpop.permute.xlu0 %2537
        %2540 = vset.pattern.permute.xlu0 10
        %2541 = vperm.xlu0 %2540, %v2069
        %v2542 = vpop.permute.xlu0 %2541
        %v2544 = vperm.slane %v2060, 2
        %v2545 = vperm.slane %v2061, 2
        %v2546 = vperm.slane %v2062, 2
        %v2547 = vperm.slane %v2063, 2
        %v2548 = vperm.slane %v2064, 2
        %v2549 = vperm.slane %v2065, 2
        %v2550 = vperm.slane %v2066, 2
        %v2551 = vperm.slane %v2067, 2
        %v2552 = vmul.f32 %v2538, %v2544
        %v2553 = vmul.f32 %v2538, %v2545
        %v2554 = vmul.f32 %v2538, %v2546
        %v2555 = vmul.f32 %v2538, %v2547
        %v2556 = vmul.f32 %v2538, %v2548
        %v2557 = vmul.f32 %v2538, %v2549
        %v2558 = vmul.f32 %v2538, %v2550
        %v2559 = vmul.f32 %v2538, %v2551
        %v2560 = vmul.f32 %v2542, %v2544
        %v2561 = vmul.f32 %v2542, %v2545
        %v2562 = vmul.f32 %v2542, %v2546
        %v2563 = vmul.f32 %v2542, %v2547
        %v2564 = vmul.f32 %v2542, %v2548
        %v2565 = vmul.f32 %v2542, %v2549
        %v2566 = vmul.f32 %v2542, %v2550
        %v2567 = vmul.f32 %v2542, %v2551
        %v2568 = vadd.f32 %v2520, %v2552
        %v2569 = vadd.f32 %v2521, %v2553
        %v2570 = vadd.f32 %v2522, %v2554
        %v2571 = vadd.f32 %v2523, %v2555
        %v2572 = vadd.f32 %v2524, %v2556
        %v2573 = vadd.f32 %v2525, %v2557
        %v2574 = vadd.f32 %v2526, %v2558
        %v2575 = vadd.f32 %v2527, %v2559
        %v2576 = vadd.f32 %v2528, %v2560
        %v2577 = vadd.f32 %v2529, %v2561
        %v2578 = vadd.f32 %v2530, %v2562
        %v2579 = vadd.f32 %v2531, %v2563
        %v2580 = vadd.f32 %v2532, %v2564
        %v2581 = vadd.f32 %v2533, %v2565
        %v2582 = vadd.f32 %v2534, %v2566
        %v2583 = vadd.f32 %v2535, %v2567
        %2584 = vset.pattern.permute.xlu0 11
        %2585 = vperm.xlu0 %2584, %v2068
        %v2586 = vpop.permute.xlu0 %2585
        %2588 = vset.pattern.permute.xlu0 11
        %2589 = vperm.xlu0 %2588, %v2069
        %v2590 = vpop.permute.xlu0 %2589
        %v2592 = vperm.slane %v2060, 3
        %v2593 = vperm.slane %v2061, 3
        %v2594 = vperm.slane %v2062, 3
        %v2595 = vperm.slane %v2063, 3
        %v2596 = vperm.slane %v2064, 3
        %v2597 = vperm.slane %v2065, 3
        %v2598 = vperm.slane %v2066, 3
        %v2599 = vperm.slane %v2067, 3
        %v2600 = vmul.f32 %v2586, %v2592
        %v2601 = vmul.f32 %v2586, %v2593
        %v2602 = vmul.f32 %v2586, %v2594
        %v2603 = vmul.f32 %v2586, %v2595
        %v2604 = vmul.f32 %v2586, %v2596
        %v2605 = vmul.f32 %v2586, %v2597
        %v2606 = vmul.f32 %v2586, %v2598
        %v2607 = vmul.f32 %v2586, %v2599
        %v2608 = vmul.f32 %v2590, %v2592
        %v2609 = vmul.f32 %v2590, %v2593
        %v2610 = vmul.f32 %v2590, %v2594
        %v2611 = vmul.f32 %v2590, %v2595
        %v2612 = vmul.f32 %v2590, %v2596
        %v2613 = vmul.f32 %v2590, %v2597
        %v2614 = vmul.f32 %v2590, %v2598
        %v2615 = vmul.f32 %v2590, %v2599
        %v2616 = vadd.f32 %v2568, %v2600
        %v2617 = vadd.f32 %v2569, %v2601
        %v2618 = vadd.f32 %v2570, %v2602
        %v2619 = vadd.f32 %v2571, %v2603
        %v2620 = vadd.f32 %v2572, %v2604
        %v2621 = vadd.f32 %v2573, %v2605
        %v2622 = vadd.f32 %v2574, %v2606
        %v2623 = vadd.f32 %v2575, %v2607
        %v2624 = vadd.f32 %v2576, %v2608
        %v2625 = vadd.f32 %v2577, %v2609
        %v2626 = vadd.f32 %v2578, %v2610
        %v2627 = vadd.f32 %v2579, %v2611
        %v2628 = vadd.f32 %v2580, %v2612
        %v2629 = vadd.f32 %v2581, %v2613
        %v2630 = vadd.f32 %v2582, %v2614
        %v2631 = vadd.f32 %v2583, %v2615
        %2632 = vset.pattern.permute.xlu0 12
        %2633 = vperm.xlu0 %2632, %v2068
        %v2634 = vpop.permute.xlu0 %2633
        %2636 = vset.pattern.permute.xlu0 12
        %2637 = vperm.xlu0 %2636, %v2069
        %v2638 = vpop.permute.xlu0 %2637
        %v2640 = vperm.slane %v2060, 4
        %v2641 = vperm.slane %v2061, 4
        %v2642 = vperm.slane %v2062, 4
        %v2643 = vperm.slane %v2063, 4
        %v2644 = vperm.slane %v2064, 4
        %v2645 = vperm.slane %v2065, 4
        %v2646 = vperm.slane %v2066, 4
        %v2647 = vperm.slane %v2067, 4
        %v2648 = vmul.f32 %v2634, %v2640
        %v2649 = vmul.f32 %v2634, %v2641
        %v2650 = vmul.f32 %v2634, %v2642
        %v2651 = vmul.f32 %v2634, %v2643
        %v2652 = vmul.f32 %v2634, %v2644
        %v2653 = vmul.f32 %v2634, %v2645
        %v2654 = vmul.f32 %v2634, %v2646
        %v2655 = vmul.f32 %v2634, %v2647
        %v2656 = vmul.f32 %v2638, %v2640
        %v2657 = vmul.f32 %v2638, %v2641
        %v2658 = vmul.f32 %v2638, %v2642
        %v2659 = vmul.f32 %v2638, %v2643
        %v2660 = vmul.f32 %v2638, %v2644
        %v2661 = vmul.f32 %v2638, %v2645
        %v2662 = vmul.f32 %v2638, %v2646
        %v2663 = vmul.f32 %v2638, %v2647
        %v2664 = vadd.f32 %v2616, %v2648
        %v2665 = vadd.f32 %v2617, %v2649
        %v2666 = vadd.f32 %v2618, %v2650
        %v2667 = vadd.f32 %v2619, %v2651
        %v2668 = vadd.f32 %v2620, %v2652
        %v2669 = vadd.f32 %v2621, %v2653
        %v2670 = vadd.f32 %v2622, %v2654
        %v2671 = vadd.f32 %v2623, %v2655
        %v2672 = vadd.f32 %v2624, %v2656
        %v2673 = vadd.f32 %v2625, %v2657
        %v2674 = vadd.f32 %v2626, %v2658
        %v2675 = vadd.f32 %v2627, %v2659
        %v2676 = vadd.f32 %v2628, %v2660
        %v2677 = vadd.f32 %v2629, %v2661
        %v2678 = vadd.f32 %v2630, %v2662
        %v2679 = vadd.f32 %v2631, %v2663
        %2680 = vset.pattern.permute.xlu0 13
        %2681 = vperm.xlu0 %2680, %v2068
        %v2682 = vpop.permute.xlu0 %2681
        %2684 = vset.pattern.permute.xlu0 13
        %2685 = vperm.xlu0 %2684, %v2069
        %v2686 = vpop.permute.xlu0 %2685
        %v2688 = vperm.slane %v2060, 5
        %v2689 = vperm.slane %v2061, 5
        %v2690 = vperm.slane %v2062, 5
        %v2691 = vperm.slane %v2063, 5
        %v2692 = vperm.slane %v2064, 5
        %v2693 = vperm.slane %v2065, 5
        %v2694 = vperm.slane %v2066, 5
        %v2695 = vperm.slane %v2067, 5
        %v2696 = vmul.f32 %v2682, %v2688
        %v2697 = vmul.f32 %v2682, %v2689
        %v2698 = vmul.f32 %v2682, %v2690
        %v2699 = vmul.f32 %v2682, %v2691
        %v2700 = vmul.f32 %v2682, %v2692
        %v2701 = vmul.f32 %v2682, %v2693
        %v2702 = vmul.f32 %v2682, %v2694
        %v2703 = vmul.f32 %v2682, %v2695
        %v2704 = vmul.f32 %v2686, %v2688
        %v2705 = vmul.f32 %v2686, %v2689
        %v2706 = vmul.f32 %v2686, %v2690
        %v2707 = vmul.f32 %v2686, %v2691
        %v2708 = vmul.f32 %v2686, %v2692
        %v2709 = vmul.f32 %v2686, %v2693
        %v2710 = vmul.f32 %v2686, %v2694
        %v2711 = vmul.f32 %v2686, %v2695
        %v2712 = vadd.f32 %v2664, %v2696
        %v2713 = vadd.f32 %v2665, %v2697
        %v2714 = vadd.f32 %v2666, %v2698
        %v2715 = vadd.f32 %v2667, %v2699
        %v2716 = vadd.f32 %v2668, %v2700
        %v2717 = vadd.f32 %v2669, %v2701
        %v2718 = vadd.f32 %v2670, %v2702
        %v2719 = vadd.f32 %v2671, %v2703
        %v2720 = vadd.f32 %v2672, %v2704
        %v2721 = vadd.f32 %v2673, %v2705
        %v2722 = vadd.f32 %v2674, %v2706
        %v2723 = vadd.f32 %v2675, %v2707
        %v2724 = vadd.f32 %v2676, %v2708
        %v2725 = vadd.f32 %v2677, %v2709
        %v2726 = vadd.f32 %v2678, %v2710
        %v2727 = vadd.f32 %v2679, %v2711
        %2728 = vset.pattern.permute.xlu0 14
        %2729 = vperm.xlu0 %2728, %v2068
        %v2730 = vpop.permute.xlu0 %2729
        %2732 = vset.pattern.permute.xlu0 14
        %2733 = vperm.xlu0 %2732, %v2069
        %v2734 = vpop.permute.xlu0 %2733
        %v2736 = vperm.slane %v2060, 6
        %v2737 = vperm.slane %v2061, 6
        %v2738 = vperm.slane %v2062, 6
        %v2739 = vperm.slane %v2063, 6
        %v2740 = vperm.slane %v2064, 6
        %v2741 = vperm.slane %v2065, 6
        %v2742 = vperm.slane %v2066, 6
        %v2743 = vperm.slane %v2067, 6
        %v2744 = vmul.f32 %v2730, %v2736
        %v2745 = vmul.f32 %v2730, %v2737
        %v2746 = vmul.f32 %v2730, %v2738
        %v2747 = vmul.f32 %v2730, %v2739
        %v2748 = vmul.f32 %v2730, %v2740
        %v2749 = vmul.f32 %v2730, %v2741
        %v2750 = vmul.f32 %v2730, %v2742
        %v2751 = vmul.f32 %v2730, %v2743
        %v2752 = vmul.f32 %v2734, %v2736
        %v2753 = vmul.f32 %v2734, %v2737
        %v2754 = vmul.f32 %v2734, %v2738
        %v2755 = vmul.f32 %v2734, %v2739
        %v2756 = vmul.f32 %v2734, %v2740
        %v2757 = vmul.f32 %v2734, %v2741
        %v2758 = vmul.f32 %v2734, %v2742
        %v2759 = vmul.f32 %v2734, %v2743
        %v2760 = vadd.f32 %v2712, %v2744
        %v2761 = vadd.f32 %v2713, %v2745
        %v2762 = vadd.f32 %v2714, %v2746
        %v2763 = vadd.f32 %v2715, %v2747
        %v2764 = vadd.f32 %v2716, %v2748
        %v2765 = vadd.f32 %v2717, %v2749
        %v2766 = vadd.f32 %v2718, %v2750
        %v2767 = vadd.f32 %v2719, %v2751
        %v2768 = vadd.f32 %v2720, %v2752
        %v2769 = vadd.f32 %v2721, %v2753
        %v2770 = vadd.f32 %v2722, %v2754
        %v2771 = vadd.f32 %v2723, %v2755
        %v2772 = vadd.f32 %v2724, %v2756
        %v2773 = vadd.f32 %v2725, %v2757
        %v2774 = vadd.f32 %v2726, %v2758
        %v2775 = vadd.f32 %v2727, %v2759
        %2776 = vset.pattern.permute.xlu0 15
        %2777 = vperm.xlu0 %2776, %v2068
        %v2778 = vpop.permute.xlu0 %2777
        %2780 = vset.pattern.permute.xlu0 15
        %2781 = vperm.xlu0 %2780, %v2069
        %v2782 = vpop.permute.xlu0 %2781
        %v2784 = vperm.slane %v2060, 7
        %v2785 = vperm.slane %v2061, 7
        %v2786 = vperm.slane %v2062, 7
        %v2787 = vperm.slane %v2063, 7
        %v2788 = vperm.slane %v2064, 7
        %v2789 = vperm.slane %v2065, 7
        %v2790 = vperm.slane %v2066, 7
        %v2791 = vperm.slane %v2067, 7
        %v2792 = vmul.f32 %v2778, %v2784
        %v2793 = vmul.f32 %v2778, %v2785
        %v2794 = vmul.f32 %v2778, %v2786
        %v2795 = vmul.f32 %v2778, %v2787
        %v2796 = vmul.f32 %v2778, %v2788
        %v2797 = vmul.f32 %v2778, %v2789
        %v2798 = vmul.f32 %v2778, %v2790
        %v2799 = vmul.f32 %v2778, %v2791
        %v2800 = vmul.f32 %v2782, %v2784
        %v2801 = vmul.f32 %v2782, %v2785
        %v2802 = vmul.f32 %v2782, %v2786
        %v2803 = vmul.f32 %v2782, %v2787
        %v2804 = vmul.f32 %v2782, %v2788
        %v2805 = vmul.f32 %v2782, %v2789
        %v2806 = vmul.f32 %v2782, %v2790
        %v2807 = vmul.f32 %v2782, %v2791
        %v2808 = vadd.f32 %v2760, %v2792
        %v2809 = vadd.f32 %v2761, %v2793
        %v2810 = vadd.f32 %v2762, %v2794
        %v2811 = vadd.f32 %v2763, %v2795
        %v2812 = vadd.f32 %v2764, %v2796
        %v2813 = vadd.f32 %v2765, %v2797
        %v2814 = vadd.f32 %v2766, %v2798
        %v2815 = vadd.f32 %v2767, %v2799
        %v2816 = vadd.f32 %v2768, %v2800
        %v2817 = vadd.f32 %v2769, %v2801
        %v2818 = vadd.f32 %v2770, %v2802
        %v2819 = vadd.f32 %v2771, %v2803
        %v2820 = vadd.f32 %v2772, %v2804
        %v2821 = vadd.f32 %v2773, %v2805
        %v2822 = vadd.f32 %v2774, %v2806
        %v2823 = vadd.f32 %v2775, %v2807
        %v2824 = vld [vmem:[%s9] sm:$0xff]
        %v2825 = vld [vmem:[%s9 + $0x8] sm:$0xff]
        %2827 = vset.pattern.permute.xlu0 0
        %2828 = vperm.xlu0 %2827, %v2824
        %v2829 = vpop.permute.xlu0 %2828
        %2832 = vset.pattern.permute.xlu0 0
        %2833 = vperm.xlu0 %2832, %v2825
        %v2834 = vpop.permute.xlu0 %2833
        %v2836 = vadd.f32 %v2808, %v2829
        %v2837 = vadd.f32 %v2809, %v2829
        %v2838 = vadd.f32 %v2810, %v2829
        %v2839 = vadd.f32 %v2811, %v2829
        %v2840 = vadd.f32 %v2812, %v2829
        %v2841 = vadd.f32 %v2813, %v2829
        %v2842 = vadd.f32 %v2814, %v2829
        %v2843 = vadd.f32 %v2815, %v2829
        %v2844 = vadd.f32 %v2816, %v2834
        %v2845 = vadd.f32 %v2817, %v2834
        %v2846 = vadd.f32 %v2818, %v2834
        %v2847 = vadd.f32 %v2819, %v2834
        %v2848 = vadd.f32 %v2820, %v2834
        %v2849 = vadd.f32 %v2821, %v2834
        %v2850 = vadd.f32 %v2822, %v2834
        %v2851 = vadd.f32 %v2823, %v2834
        %v2852 = vmax.f32 %v2836, 0.0
        %v2853 = vmax.f32 %v2837, 0.0
        %v2854 = vmax.f32 %v2838, 0.0
        %v2855 = vmax.f32 %v2839, 0.0
        %v2856 = vmax.f32 %v2840, 0.0
        %v2857 = vmax.f32 %v2841, 0.0
        %v2858 = vmax.f32 %v2842, 0.0
        %v2859 = vmax.f32 %v2843, 0.0
        %v2860 = vmax.f32 %v2844, 0.0
        %v2861 = vmax.f32 %v2845, 0.0
        %v2862 = vmax.f32 %v2846, 0.0
        %v2863 = vmax.f32 %v2847, 0.0
        %v2864 = vmax.f32 %v2848, 0.0
        %v2865 = vmax.f32 %v2849, 0.0
        %v2866 = vmax.f32 %v2850, 0.0
        %v2867 = vmax.f32 %v2851, 0.0
        %v2868 = vld [vmem:[%s10] sm:$0x7]
        %2870 = vset.pattern.permute.xlu0 0
        %2871 = vperm.xlu0 %2870, %v2868
        %v2872 = vpop.permute.xlu0 %2871
        %v2874 = vperm.slane %v2852, 0
        %v2875 = vperm.slane %v2853, 0
        %v2876 = vperm.slane %v2854, 0
        %v2877 = vperm.slane %v2855, 0
        %v2878 = vperm.slane %v2856, 0
        %v2879 = vperm.slane %v2857, 0
        %v2880 = vperm.slane %v2858, 0
        %v2881 = vperm.slane %v2859, 0
        %v2882 = vmul.f32 %v2872, %v2874
        %v2883 = vmul.f32 %v2872, %v2875
        %v2884 = vmul.f32 %v2872, %v2876
        %v2885 = vmul.f32 %v2872, %v2877
        %v2886 = vmul.f32 %v2872, %v2878
        %v2887 = vmul.f32 %v2872, %v2879
        %v2888 = vmul.f32 %v2872, %v2880
        %v2889 = vmul.f32 %v2872, %v2881
        %2890 = vset.pattern.permute.xlu0 1
        %2891 = vperm.xlu0 %2890, %v2868
        %v2892 = vpop.permute.xlu0 %2891
        %v2894 = vperm.slane %v2852, 1
        %v2895 = vperm.slane %v2853, 1
        %v2896 = vperm.slane %v2854, 1
        %v2897 = vperm.slane %v2855, 1
        %v2898 = vperm.slane %v2856, 1
        %v2899 = vperm.slane %v2857, 1
        %v2900 = vperm.slane %v2858, 1
        %v2901 = vperm.slane %v2859, 1
        %v2902 = vmul.f32 %v2892, %v2894
        %v2903 = vmul.f32 %v2892, %v2895
        %v2904 = vmul.f32 %v2892, %v2896
        %v2905 = vmul.f32 %v2892, %v2897
        %v2906 = vmul.f32 %v2892, %v2898
        %v2907 = vmul.f32 %v2892, %v2899
        %v2908 = vmul.f32 %v2892, %v2900
        %v2909 = vmul.f32 %v2892, %v2901
        %v2910 = vadd.f32 %v2882, %v2902
        %v2911 = vadd.f32 %v2883, %v2903
        %v2912 = vadd.f32 %v2884, %v2904
        %v2913 = vadd.f32 %v2885, %v2905
        %v2914 = vadd.f32 %v2886, %v2906
        %v2915 = vadd.f32 %v2887, %v2907
        %v2916 = vadd.f32 %v2888, %v2908
        %v2917 = vadd.f32 %v2889, %v2909
        %2918 = vset.pattern.permute.xlu0 2
        %2919 = vperm.xlu0 %2918, %v2868
        %v2920 = vpop.permute.xlu0 %2919
        %v2922 = vperm.slane %v2852, 2
        %v2923 = vperm.slane %v2853, 2
        %v2924 = vperm.slane %v2854, 2
        %v2925 = vperm.slane %v2855, 2
        %v2926 = vperm.slane %v2856, 2
        %v2927 = vperm.slane %v2857, 2
        %v2928 = vperm.slane %v2858, 2
        %v2929 = vperm.slane %v2859, 2
        %v2930 = vmul.f32 %v2920, %v2922
        %v2931 = vmul.f32 %v2920, %v2923
        %v2932 = vmul.f32 %v2920, %v2924
        %v2933 = vmul.f32 %v2920, %v2925
        %v2934 = vmul.f32 %v2920, %v2926
        %v2935 = vmul.f32 %v2920, %v2927
        %v2936 = vmul.f32 %v2920, %v2928
        %v2937 = vmul.f32 %v2920, %v2929
        %v2938 = vadd.f32 %v2910, %v2930
        %v2939 = vadd.f32 %v2911, %v2931
        %v2940 = vadd.f32 %v2912, %v2932
        %v2941 = vadd.f32 %v2913, %v2933
        %v2942 = vadd.f32 %v2914, %v2934
        %v2943 = vadd.f32 %v2915, %v2935
        %v2944 = vadd.f32 %v2916, %v2936
        %v2945 = vadd.f32 %v2917, %v2937
        %2946 = vset.pattern.permute.xlu0 3
        %2947 = vperm.xlu0 %2946, %v2868
        %v2948 = vpop.permute.xlu0 %2947
        %v2950 = vperm.slane %v2852, 3
        %v2951 = vperm.slane %v2853, 3
        %v2952 = vperm.slane %v2854, 3
        %v2953 = vperm.slane %v2855, 3
        %v2954 = vperm.slane %v2856, 3
        %v2955 = vperm.slane %v2857, 3
        %v2956 = vperm.slane %v2858, 3
        %v2957 = vperm.slane %v2859, 3
        %v2958 = vmul.f32 %v2948, %v2950
        %v2959 = vmul.f32 %v2948, %v2951
        %v2960 = vmul.f32 %v2948, %v2952
        %v2961 = vmul.f32 %v2948, %v2953
        %v2962 = vmul.f32 %v2948, %v2954
        %v2963 = vmul.f32 %v2948, %v2955
        %v2964 = vmul.f32 %v2948, %v2956
        %v2965 = vmul.f32 %v2948, %v2957
        %v2966 = vadd.f32 %v2938, %v2958
        %v2967 = vadd.f32 %v2939, %v2959
        %v2968 = vadd.f32 %v2940, %v2960
        %v2969 = vadd.f32 %v2941, %v2961
        %v2970 = vadd.f32 %v2942, %v2962
        %v2971 = vadd.f32 %v2943, %v2963
        %v2972 = vadd.f32 %v2944, %v2964
        %v2973 = vadd.f32 %v2945, %v2965
        %2974 = vset.pattern.permute.xlu0 4
        %2975 = vperm.xlu0 %2974, %v2868
        %v2976 = vpop.permute.xlu0 %2975
        %v2978 = vperm.slane %v2852, 4
        %v2979 = vperm.slane %v2853, 4
        %v2980 = vperm.slane %v2854, 4
        %v2981 = vperm.slane %v2855, 4
        %v2982 = vperm.slane %v2856, 4
        %v2983 = vperm.slane %v2857, 4
        %v2984 = vperm.slane %v2858, 4
        %v2985 = vperm.slane %v2859, 4
        %v2986 = vmul.f32 %v2976, %v2978
        %v2987 = vmul.f32 %v2976, %v2979
        %v2988 = vmul.f32 %v2976, %v2980
        %v2989 = vmul.f32 %v2976, %v2981
        %v2990 = vmul.f32 %v2976, %v2982
        %v2991 = vmul.f32 %v2976, %v2983
        %v2992 = vmul.f32 %v2976, %v2984
        %v2993 = vmul.f32 %v2976, %v2985
        %v2994 = vadd.f32 %v2966, %v2986
        %v2995 = vadd.f32 %v2967, %v2987
        %v2996 = vadd.f32 %v2968, %v2988
        %v2997 = vadd.f32 %v2969, %v2989
        %v2998 = vadd.f32 %v2970, %v2990
        %v2999 = vadd.f32 %v2971, %v2991
        %v3000 = vadd.f32 %v2972, %v2992
        %v3001 = vadd.f32 %v2973, %v2993
        %3002 = vset.pattern.permute.xlu0 5
        %3003 = vperm.xlu0 %3002, %v2868
        %v3004 = vpop.permute.xlu0 %3003
        %v3006 = vperm.slane %v2852, 5
        %v3007 = vperm.slane %v2853, 5
        %v3008 = vperm.slane %v2854, 5
        %v3009 = vperm.slane %v2855, 5
        %v3010 = vperm.slane %v2856, 5
        %v3011 = vperm.slane %v2857, 5
        %v3012 = vperm.slane %v2858, 5
        %v3013 = vperm.slane %v2859, 5
        %v3014 = vmul.f32 %v3004, %v3006
        %v3015 = vmul.f32 %v3004, %v3007
        %v3016 = vmul.f32 %v3004, %v3008
        %v3017 = vmul.f32 %v3004, %v3009
        %v3018 = vmul.f32 %v3004, %v3010
        %v3019 = vmul.f32 %v3004, %v3011
        %v3020 = vmul.f32 %v3004, %v3012
        %v3021 = vmul.f32 %v3004, %v3013
        %v3022 = vadd.f32 %v2994, %v3014
        %v3023 = vadd.f32 %v2995, %v3015
        %v3024 = vadd.f32 %v2996, %v3016
        %v3025 = vadd.f32 %v2997, %v3017
        %v3026 = vadd.f32 %v2998, %v3018
        %v3027 = vadd.f32 %v2999, %v3019
        %v3028 = vadd.f32 %v3000, %v3020
        %v3029 = vadd.f32 %v3001, %v3021
        %3030 = vset.pattern.permute.xlu0 6
        %3031 = vperm.xlu0 %3030, %v2868
        %v3032 = vpop.permute.xlu0 %3031
        %v3034 = vperm.slane %v2852, 6
        %v3035 = vperm.slane %v2853, 6
        %v3036 = vperm.slane %v2854, 6
        %v3037 = vperm.slane %v2855, 6
        %v3038 = vperm.slane %v2856, 6
        %v3039 = vperm.slane %v2857, 6
        %v3040 = vperm.slane %v2858, 6
        %v3041 = vperm.slane %v2859, 6
        %v3042 = vmul.f32 %v3032, %v3034
        %v3043 = vmul.f32 %v3032, %v3035
        %v3044 = vmul.f32 %v3032, %v3036
        %v3045 = vmul.f32 %v3032, %v3037
        %v3046 = vmul.f32 %v3032, %v3038
        %v3047 = vmul.f32 %v3032, %v3039
        %v3048 = vmul.f32 %v3032, %v3040
        %v3049 = vmul.f32 %v3032, %v3041
        %v3050 = vadd.f32 %v3022, %v3042
        %v3051 = vadd.f32 %v3023, %v3043
        %v3052 = vadd.f32 %v3024, %v3044
        %v3053 = vadd.f32 %v3025, %v3045
        %v3054 = vadd.f32 %v3026, %v3046
        %v3055 = vadd.f32 %v3027, %v3047
        %v3056 = vadd.f32 %v3028, %v3048
        %v3057 = vadd.f32 %v3029, %v3049
        %3058 = vset.pattern.permute.xlu0 7
        %3059 = vperm.xlu0 %3058, %v2868
        %v3060 = vpop.permute.xlu0 %3059
        %v3062 = vperm.slane %v2852, 7
        %v3063 = vperm.slane %v2853, 7
        %v3064 = vperm.slane %v2854, 7
        %v3065 = vperm.slane %v2855, 7
        %v3066 = vperm.slane %v2856, 7
        %v3067 = vperm.slane %v2857, 7
        %v3068 = vperm.slane %v2858, 7
        %v3069 = vperm.slane %v2859, 7
        %v3070 = vmul.f32 %v3060, %v3062
        %v3071 = vmul.f32 %v3060, %v3063
        %v3072 = vmul.f32 %v3060, %v3064
        %v3073 = vmul.f32 %v3060, %v3065
        %v3074 = vmul.f32 %v3060, %v3066
        %v3075 = vmul.f32 %v3060, %v3067
        %v3076 = vmul.f32 %v3060, %v3068
        %v3077 = vmul.f32 %v3060, %v3069
        %v3078 = vadd.f32 %v3050, %v3070
        %v3079 = vadd.f32 %v3051, %v3071
        %v3080 = vadd.f32 %v3052, %v3072
        %v3081 = vadd.f32 %v3053, %v3073
        %v3082 = vadd.f32 %v3054, %v3074
        %v3083 = vadd.f32 %v3055, %v3075
        %v3084 = vadd.f32 %v3056, %v3076
        %v3085 = vadd.f32 %v3057, %v3077
        %3086 = vset.pattern.permute.xlu0 8
        %3087 = vperm.xlu0 %3086, %v2868
        %v3088 = vpop.permute.xlu0 %3087
        %v3090 = vperm.slane %v2860, 0
        %v3091 = vperm.slane %v2861, 0
        %v3092 = vperm.slane %v2862, 0
        %v3093 = vperm.slane %v2863, 0
        %v3094 = vperm.slane %v2864, 0
        %v3095 = vperm.slane %v2865, 0
        %v3096 = vperm.slane %v2866, 0
        %v3097 = vperm.slane %v2867, 0
        %v3098 = vmul.f32 %v3088, %v3090
        %v3099 = vmul.f32 %v3088, %v3091
        %v3100 = vmul.f32 %v3088, %v3092
        %v3101 = vmul.f32 %v3088, %v3093
        %v3102 = vmul.f32 %v3088, %v3094
        %v3103 = vmul.f32 %v3088, %v3095
        %v3104 = vmul.f32 %v3088, %v3096
        %v3105 = vmul.f32 %v3088, %v3097
        %v3106 = vadd.f32 %v3078, %v3098
        %v3107 = vadd.f32 %v3079, %v3099
        %v3108 = vadd.f32 %v3080, %v3100
        %v3109 = vadd.f32 %v3081, %v3101
        %v3110 = vadd.f32 %v3082, %v3102
        %v3111 = vadd.f32 %v3083, %v3103
        %v3112 = vadd.f32 %v3084, %v3104
        %v3113 = vadd.f32 %v3085, %v3105
        %3114 = vset.pattern.permute.xlu0 9
        %3115 = vperm.xlu0 %3114, %v2868
        %v3116 = vpop.permute.xlu0 %3115
        %v3118 = vperm.slane %v2860, 1
        %v3119 = vperm.slane %v2861, 1
        %v3120 = vperm.slane %v2862, 1
        %v3121 = vperm.slane %v2863, 1
        %v3122 = vperm.slane %v2864, 1
        %v3123 = vperm.slane %v2865, 1
        %v3124 = vperm.slane %v2866, 1
        %v3125 = vperm.slane %v2867, 1
        %v3126 = vmul.f32 %v3116, %v3118
        %v3127 = vmul.f32 %v3116, %v3119
        %v3128 = vmul.f32 %v3116, %v3120
        %v3129 = vmul.f32 %v3116, %v3121
        %v3130 = vmul.f32 %v3116, %v3122
        %v3131 = vmul.f32 %v3116, %v3123
        %v3132 = vmul.f32 %v3116, %v3124
        %v3133 = vmul.f32 %v3116, %v3125
        %v3134 = vadd.f32 %v3106, %v3126
        %v3135 = vadd.f32 %v3107, %v3127
        %v3136 = vadd.f32 %v3108, %v3128
        %v3137 = vadd.f32 %v3109, %v3129
        %v3138 = vadd.f32 %v3110, %v3130
        %v3139 = vadd.f32 %v3111, %v3131
        %v3140 = vadd.f32 %v3112, %v3132
        %v3141 = vadd.f32 %v3113, %v3133
        %3142 = vset.pattern.permute.xlu0 10
        %3143 = vperm.xlu0 %3142, %v2868
        %v3144 = vpop.permute.xlu0 %3143
        %v3146 = vperm.slane %v2860, 2
        %v3147 = vperm.slane %v2861, 2
        %v3148 = vperm.slane %v2862, 2
        %v3149 = vperm.slane %v2863, 2
        %v3150 = vperm.slane %v2864, 2
        %v3151 = vperm.slane %v2865, 2
        %v3152 = vperm.slane %v2866, 2
        %v3153 = vperm.slane %v2867, 2
        %v3154 = vmul.f32 %v3144, %v3146
        %v3155 = vmul.f32 %v3144, %v3147
        %v3156 = vmul.f32 %v3144, %v3148
        %v3157 = vmul.f32 %v3144, %v3149
        %v3158 = vmul.f32 %v3144, %v3150
        %v3159 = vmul.f32 %v3144, %v3151
        %v3160 = vmul.f32 %v3144, %v3152
        %v3161 = vmul.f32 %v3144, %v3153
        %v3162 = vadd.f32 %v3134, %v3154
        %v3163 = vadd.f32 %v3135, %v3155
        %v3164 = vadd.f32 %v3136, %v3156
        %v3165 = vadd.f32 %v3137, %v3157
        %v3166 = vadd.f32 %v3138, %v3158
        %v3167 = vadd.f32 %v3139, %v3159
        %v3168 = vadd.f32 %v3140, %v3160
        %v3169 = vadd.f32 %v3141, %v3161
        %3170 = vset.pattern.permute.xlu0 11
        %3171 = vperm.xlu0 %3170, %v2868
        %v3172 = vpop.permute.xlu0 %3171
        %v3174 = vperm.slane %v2860, 3
        %v3175 = vperm.slane %v2861, 3
        %v3176 = vperm.slane %v2862, 3
        %v3177 = vperm.slane %v2863, 3
        %v3178 = vperm.slane %v2864, 3
        %v3179 = vperm.slane %v2865, 3
        %v3180 = vperm.slane %v2866, 3
        %v3181 = vperm.slane %v2867, 3
        %v3182 = vmul.f32 %v3172, %v3174
        %v3183 = vmul.f32 %v3172, %v3175
        %v3184 = vmul.f32 %v3172, %v3176
        %v3185 = vmul.f32 %v3172, %v3177
        %v3186 = vmul.f32 %v3172, %v3178
        %v3187 = vmul.f32 %v3172, %v3179
        %v3188 = vmul.f32 %v3172, %v3180
        %v3189 = vmul.f32 %v3172, %v3181
        %v3190 = vadd.f32 %v3162, %v3182
        %v3191 = vadd.f32 %v3163, %v3183
        %v3192 = vadd.f32 %v3164, %v3184
        %v3193 = vadd.f32 %v3165, %v3185
        %v3194 = vadd.f32 %v3166, %v3186
        %v3195 = vadd.f32 %v3167, %v3187
        %v3196 = vadd.f32 %v3168, %v3188
        %v3197 = vadd.f32 %v3169, %v3189
        %3198 = vset.pattern.permute.xlu0 12
        %3199 = vperm.xlu0 %3198, %v2868
        %v3200 = vpop.permute.xlu0 %3199
        %v3202 = vperm.slane %v2860, 4
        %v3203 = vperm.slane %v2861, 4
        %v3204 = vperm.slane %v2862, 4
        %v3205 = vperm.slane %v2863, 4
        %v3206 = vperm.slane %v2864, 4
        %v3207 = vperm.slane %v2865, 4
        %v3208 = vperm.slane %v2866, 4
        %v3209 = vperm.slane %v2867, 4
        %v3210 = vmul.f32 %v3200, %v3202
        %v3211 = vmul.f32 %v3200, %v3203
        %v3212 = vmul.f32 %v3200, %v3204
        %v3213 = vmul.f32 %v3200, %v3205
        %v3214 = vmul.f32 %v3200, %v3206
        %v3215 = vmul.f32 %v3200, %v3207
        %v3216 = vmul.f32 %v3200, %v3208
        %v3217 = vmul.f32 %v3200, %v3209
        %v3218 = vadd.f32 %v3190, %v3210
        %v3219 = vadd.f32 %v3191, %v3211
        %v3220 = vadd.f32 %v3192, %v3212
        %v3221 = vadd.f32 %v3193, %v3213
        %v3222 = vadd.f32 %v3194, %v3214
        %v3223 = vadd.f32 %v3195, %v3215
        %v3224 = vadd.f32 %v3196, %v3216
        %v3225 = vadd.f32 %v3197, %v3217
        %3226 = vset.pattern.permute.xlu0 13
        %3227 = vperm.xlu0 %3226, %v2868
        %v3228 = vpop.permute.xlu0 %3227
        %v3230 = vperm.slane %v2860, 5
        %v3231 = vperm.slane %v2861, 5
        %v3232 = vperm.slane %v2862, 5
        %v3233 = vperm.slane %v2863, 5
        %v3234 = vperm.slane %v2864, 5
        %v3235 = vperm.slane %v2865, 5
        %v3236 = vperm.slane %v2866, 5
        %v3237 = vperm.slane %v2867, 5
        %v3238 = vmul.f32 %v3228, %v3230
        %v3239 = vmul.f32 %v3228, %v3231
        %v3240 = vmul.f32 %v3228, %v3232
        %v3241 = vmul.f32 %v3228, %v3233
        %v3242 = vmul.f32 %v3228, %v3234
        %v3243 = vmul.f32 %v3228, %v3235
        %v3244 = vmul.f32 %v3228, %v3236
        %v3245 = vmul.f32 %v3228, %v3237
        %v3246 = vadd.f32 %v3218, %v3238
        %v3247 = vadd.f32 %v3219, %v3239
        %v3248 = vadd.f32 %v3220, %v3240
        %v3249 = vadd.f32 %v3221, %v3241
        %v3250 = vadd.f32 %v3222, %v3242
        %v3251 = vadd.f32 %v3223, %v3243
        %v3252 = vadd.f32 %v3224, %v3244
        %v3253 = vadd.f32 %v3225, %v3245
        %3254 = vset.pattern.permute.xlu0 14
        %3255 = vperm.xlu0 %3254, %v2868
        %v3256 = vpop.permute.xlu0 %3255
        %v3258 = vperm.slane %v2860, 6
        %v3259 = vperm.slane %v2861, 6
        %v3260 = vperm.slane %v2862, 6
        %v3261 = vperm.slane %v2863, 6
        %v3262 = vperm.slane %v2864, 6
        %v3263 = vperm.slane %v2865, 6
        %v3264 = vperm.slane %v2866, 6
        %v3265 = vperm.slane %v2867, 6
        %v3266 = vmul.f32 %v3256, %v3258
        %v3267 = vmul.f32 %v3256, %v3259
        %v3268 = vmul.f32 %v3256, %v3260
        %v3269 = vmul.f32 %v3256, %v3261
        %v3270 = vmul.f32 %v3256, %v3262
        %v3271 = vmul.f32 %v3256, %v3263
        %v3272 = vmul.f32 %v3256, %v3264
        %v3273 = vmul.f32 %v3256, %v3265
        %v3274 = vadd.f32 %v3246, %v3266
        %v3275 = vadd.f32 %v3247, %v3267
        %v3276 = vadd.f32 %v3248, %v3268
        %v3277 = vadd.f32 %v3249, %v3269
        %v3278 = vadd.f32 %v3250, %v3270
        %v3279 = vadd.f32 %v3251, %v3271
        %v3280 = vadd.f32 %v3252, %v3272
        %v3281 = vadd.f32 %v3253, %v3273
        %3282 = vset.pattern.permute.xlu0 15
        %3283 = vperm.xlu0 %3282, %v2868
        %v3284 = vpop.permute.xlu0 %3283
        %v3286 = vperm.slane %v2860, 7
        %v3287 = vperm.slane %v2861, 7
        %v3288 = vperm.slane %v2862, 7
        %v3289 = vperm.slane %v2863, 7
        %v3290 = vperm.slane %v2864, 7
        %v3291 = vperm.slane %v2865, 7
        %v3292 = vperm.slane %v2866, 7
        %v3293 = vperm.slane %v2867, 7
        %v3294 = vmul.f32 %v3284, %v3286
        %v3295 = vmul.f32 %v3284, %v3287
        %v3296 = vmul.f32 %v3284, %v3288
        %v3297 = vmul.f32 %v3284, %v3289
        %v3298 = vmul.f32 %v3284, %v3290
        %v3299 = vmul.f32 %v3284, %v3291
        %v3300 = vmul.f32 %v3284, %v3292
        %v3301 = vmul.f32 %v3284, %v3293
        %v3302 = vadd.f32 %v3274, %v3294
        %v3303 = vadd.f32 %v3275, %v3295
        %v3304 = vadd.f32 %v3276, %v3296
        %v3305 = vadd.f32 %v3277, %v3297
        %v3306 = vadd.f32 %v3278, %v3298
        %v3307 = vadd.f32 %v3279, %v3299
        %v3308 = vadd.f32 %v3280, %v3300
        %v3309 = vadd.f32 %v3281, %v3301
        %v3310 = vld [vmem:[%s11] sm:$0x7]
        %3312 = vset.pattern.permute.xlu0 0
        %3313 = vperm.xlu0 %3312, %v3310
        %v3314 = vpop.permute.xlu0 %3313
        %v3316 = vadd.f32 %v3302, %v3314
        %v3317 = vadd.f32 %v3303, %v3314
        %v3318 = vadd.f32 %v3304, %v3314
        %v3319 = vadd.f32 %v3305, %v3314
        %v3320 = vadd.f32 %v3306, %v3314
        %v3321 = vadd.f32 %v3307, %v3314
        %v3322 = vadd.f32 %v3308, %v3314
        %v3323 = vadd.f32 %v3309, %v3314
        %v3332 = vrot.slane %v3317, 4
        %v3333 = vrot.slane %v3319, 4
        %v3334 = vrot.slane %v3321, 4
        %v3335 = vrot.slane %v3323, 4
        %v3336 = vsel %vm1879, %v3316, %v3332
        %v3337 = vsel %vm1879, %v3318, %v3333
        %v3338 = vsel %vm1879, %v3320, %v3334
        %v3339 = vsel %vm1879, %v3322, %v3335
        %3344 = vst [vmem:[%s549] sm:$0x77] %v3336
        %3345 = vst [vmem:[%s549 + $0x8] sm:$0x77] %v3337
        %3346 = vst [vmem:[%s549 + $0x10] sm:$0x77] %v3338
        %3347 = vst [vmem:[%s549 + $0x18] sm:$0x77] %v3339
        %s3348 = smul.u32 8, %s33
        %p3349 = scmp.lt.s32.totalorder %s32, 1
        %s3350 = scalar_select %p3349, %s32, 1
        %p3351 = scmp.lt.s32.totalorder %s3348, 15
        %s3352 = scalar_select %p3351, %s3348, 15
        %s3353 = smul.addr %s3350, 16
        %s3354 = sadd.s32 %s3352, %s3353
        %s3355 = smul.addr %s3354, 4
        %s3356 = scalar_lea.vmem %s12, %s3355
        %s3357 = smul.u32 8, %s33
        %p3358 = scmp.lt.s32.totalorder %s32, 1
        %s3359 = scalar_select %p3358, %s32, 1
        %p3360 = scmp.lt.s32.totalorder %s3357, 15
        %s3361 = scalar_select %p3360, %s3357, 15
        %s3362 = smul.addr %s3359, 16
        %s3363 = sadd.s32 %s3361, %s3362
        %s3364 = smul.addr %s3363, 4
        %s3365 = scalar_lea.vmem %s13, %s3364
        // Predicated region
        $region73: #{tpu_custom_call.1} parent=67 // pred_check
          %p3366 = pneg %p327
        $region74: #{tpu_custom_call.1} parent=67 // pred_check_branch
          %3368 = sbr.rel (%p3366) target = $region76
        $region75: #{tpu_custom_call.1} parent=67 // pred_region
          %s3369 = smul.u32 8, %s33
        $region76: #{tpu_custom_call.1} parent=67 // pred_fallthru
          _
        // Predicated region
        $region77: #{tpu_custom_call.1} parent=67 // pred_check
          %p3370 = pneg %p355
        $region78: #{tpu_custom_call.1} parent=67 // pred_check_branch
          %3372 = sbr.rel (%p3370) target = $region80
        $region79: #{tpu_custom_call.1} parent=67 // pred_region
          %s3373 = smul.u32 8, %s33
        $region80: #{tpu_custom_call.1} parent=67 // pred_fallthru
          _
      $region68: #{tpu_custom_call.1} parent=5 // pred_fallthru
        _
      %p3374 = scmp.le.s32.totalorder 2, %s23
      // Predicated region
      $region81: #{tpu_custom_call.1} parent=5 // pred_check
        %p3375 = pneg %p3374
      $region82: #{tpu_custom_call.1} parent=5 // pred_check_branch
        %3377 = sbr.rel (%p3375) target = $region84
      $region83: #{tpu_custom_call.1} parent=5 // pred_region
        %s3378 = ssub.s32 %s23, 2
        // Predicated region
        $region85: #{tpu_custom_call.1} parent=83 // pred_check
          %p3379 = pneg %p333
        $region86: #{tpu_custom_call.1} parent=83 // pred_check_branch
          %3381 = sbr.rel (%p3379) target = $region88
        $region87: #{tpu_custom_call.1} parent=83 // pred_region
          %s3382 = smul.u32 8, %s35
          %p3383 = scmp.lt.s32.totalorder %s34, 1
          %s3384 = scalar_select %p3383, %s34, 1
          %p3385 = scmp.lt.s32.totalorder %s3382, 15
          %s3386 = scalar_select %p3385, %s3382, 15
          %s3387 = smul.addr %s3384, 16
          %s3388 = sadd.s32 %s3386, %s3387
          %s3389 = smul.addr %s3388, 4
          %s3390 = scalar_lea.vmem %s12, %s3389
        $region88: #{tpu_custom_call.1} parent=83 // pred_fallthru
          _
        // Predicated region
        $region89: #{tpu_custom_call.1} parent=83 // pred_check
          %p3391 = pneg %p361
        $region90: #{tpu_custom_call.1} parent=83 // pred_check_branch
          %3393 = sbr.rel (%p3391) target = $region92
        $region91: #{tpu_custom_call.1} parent=83 // pred_region
          %s3394 = smul.u32 8, %s35
          %p3395 = scmp.lt.s32.totalorder %s34, 1
          %s3396 = scalar_select %p3395, %s34, 1
          %p3397 = scmp.lt.s32.totalorder %s3394, 15
          %s3398 = scalar_select %p3397, %s3394, 15
          %s3399 = smul.addr %s3396, 16
          %s3400 = sadd.s32 %s3398, %s3399
          %s3401 = smul.addr %s3400, 4
          %s3402 = scalar_lea.vmem %s13, %s3401
        $region92: #{tpu_custom_call.1} parent=83 // pred_fallthru
          _
      $region84: #{tpu_custom_call.1} parent=5 // pred_fallthru
        _
    $region6: #{tpu_custom_call.1} parent=1 // loop_footer
      %s27 = sadd.s32 1, %s23
    $region7: #{tpu_custom_call.1} parent=1 // loop_footer_branch
      %22 = sbr.rel target = $region3
    $region8: #{tpu_custom_call.1} parent=1 // loop_exit
      _
    %3403 = vsyncpa [#allocation3], 1
    %s3404 = scalar_lea.sflag [#allocation3], 1
    %3405 = vsyncpa %s3404, 1

// kernel: tpu_custom_call.1
$region0: #{tpu_custom_call.1}
  #allocation0 [shape = 'u32[]', space=smem, size = 0x4, offset = 0x4, fixed_abs, tag = 'smem constant byte address 0x4 - core index']
  #allocation1 [shape = 'u32[72,128]{1,0:T(1,128)}', space=vmem, size = 0x9000, scoped, tag = 'internal scratch']
  %s0 = inlined_call_operand.hbm [shape: f32[16,2048], index: 0, kind: input, shape index: {}]
  %s1 = inlined_call_operand.vmem [shape: f32[2,16,1], index: 1, kind: input, shape index: {}]
  %s2 = inlined_call_operand.vmem [shape: f32[2,16,1], index: 2, kind: input, shape index: {}]
  %s3 = inlined_call_operand.vmem [shape: f32[16,16], index: 3, kind: input, shape index: {}]
  %s4 = inlined_call_operand.vmem [shape: f32[16,1], index: 4, kind: input, shape index: {}]
  %s5 = inlined_call_operand.vmem [shape: f32[3,16], index: 5, kind: input, shape index: {}]
  %s6 = inlined_call_operand.vmem [shape: f32[3,1], index: 6, kind: input, shape index: {}]
  %s7 = inlined_call_operand.vmem [shape: f32[16,3], index: 7, kind: input, shape index: {}]
  %s8 = inlined_call_operand.vmem [shape: f32[16,16], index: 8, kind: input, shape index: {}]
  %s9 = inlined_call_operand.vmem [shape: f32[16,1], index: 9, kind: input, shape index: {}]
  %s10 = inlined_call_operand.vmem [shape: f32[3,16], index: 10, kind: input, shape index: {}]
  %s11 = inlined_call_operand.vmem [shape: f32[3,1], index: 11, kind: input, shape index: {}]
  %s12 = inlined_call_operand.vmem [shape: f32[2,3,2048], index: 12, kind: output, shape index: {0}]
  %s13 = inlined_call_operand.vmem [shape: f32[2,3,2048], index: 13, kind: output, shape index: {1}]
  %14 = xla_tuple %s12, %s13
  %s15 = sld [smem:[#allocation0]]
  $region93: #{tpu_custom_call.1} parent=0
    _
  %s17 = ssub.s32 1, %s15
  %s18 = scalar_select 0, %s17, %s15
  $region1: #{tpu_custom_call.1} parent=0
    #allocation2 [shape = 'u8[131072]{0}', space=vmem, size = 0x20000, scoped, tag = 'input window, operand 0']
    #allocation3 [shape = 's32[2]{0}', space=sflag, size = 0x8, scoped, tag = 'scoped memory for tpu_custom_call.1']
    %19 = vsyncpa [#allocation3], 0
    %s20 = scalar_lea.sflag [#allocation3], 1
    %21 = vsyncpa %s20, 0
    loop: start=0, step=1, limit=6
    $region2: #{tpu_custom_call.1} parent=1 // loop_pre_header
      _
    $region3: #{tpu_custom_call.1} parent=1 // loop_header
      %s23 = sphi 0, %s27
      %p24 = scmp.ge.s32.totalorder %s23, 6
      %s30 = sphi 0, %s42
      %s31 = sphi 0, %s38
      %s32 = sphi 0, %s30
      %s33 = sphi 0, %s31
      %s34 = sphi 0, %s32
      %s35 = sphi 0, %s33
      %s45 = sphi 0, %s47
      %s48 = sphi 0, %s45
      %s49 = sphi 0, %s48
      %s65 = sphi 0, %s49
      %s71 = sphi 0, %s73
      %s74 = sphi 0, %s71
      %s75 = sphi 0, %s74
      %s91 = sphi 0, %s75
      %s97 = sphi 0, %s99
      %s100 = sphi 0, %s97
      %s101 = sphi 0, %s100
      %s117 = sphi 0, %s101
      %s121 = sphi 0, %s121
      %s123 = sphi 0, %s121
      %s124 = sphi 0, %s123
      %s138 = sphi 0, %s124
      %s142 = sphi 0, %s142
      %s144 = sphi 0, %s142
      %s145 = sphi 0, %s144
      %s159 = sphi 0, %s145
      %s163 = sphi 0, %s163
      %s165 = sphi 0, %s163
      %s166 = sphi 0, %s165
      %s180 = sphi 0, %s166
      %s184 = sphi 0, %s184
      %s186 = sphi 0, %s184
      %s187 = sphi 0, %s186
      %s201 = sphi 0, %s187
      %s205 = sphi 0, %s205
      %s207 = sphi 0, %s205
      %s208 = sphi 0, %s207
      %s222 = sphi 0, %s208
      %s226 = sphi 0, %s226
      %s228 = sphi 0, %s226
      %s229 = sphi 0, %s228
      %s243 = sphi 0, %s229
      %s247 = sphi 0, %s247
      %s249 = sphi 0, %s247
      %s250 = sphi 0, %s249
      %s264 = sphi 0, %s250
      %s268 = sphi 0, %s268
      %s270 = sphi 0, %s268
      %s271 = sphi 0, %s270
      %s285 = sphi 0, %s271
      %s289 = sphi 0, %s289
      %s291 = sphi 0, %s289
      %s292 = sphi 0, %s291
      %s306 = sphi 0, %s292
      %s314 = sphi 0, %s316
      %s317 = sphi 0, %s314
      %s318 = sphi 0, %s317
      %s334 = sphi 0, %s318
      %s342 = sphi 0, %s344
      %s345 = sphi 0, %s342
      %s346 = sphi 0, %s345
      %s362 = sphi 0, %s346
    $region4: #{tpu_custom_call.1} parent=1 // loop_header_branch
      %26 = sbr.rel (%p24) target = $region8
    $region5: #{tpu_custom_call.1} parent=1 // loop_body
      %s28 = ssub.s32 %s23, 1
      %s29 = ssub.s32 %s23, 2
      %s36 = sadd.s32 1, %s31
      %p37 = scmp.ge.s32.totalorder %s36, 2
      %s38 = scalar_select %p37, 0, %s36
      %s39 = sadd.s32 1, %s30
      %s40 = scalar_select %p37, %s39, %s30
      %p41 = scmp.ge.s32.totalorder %s40, 2
      %s42 = scalar_select %p41, 0, %s40
      %s43 = ssub.s32 %s31, %s38
      %p44 = scmp.eq.s32.totalorder %s43, 0
      %s46 = sadd.s32 %s45, 1
      %s47 = scalar_select %p44, %s45, %s46
      %p50 = pneg %p44
      %p51 = scmp.eq.s32.totalorder %s23, 3
      %p52 = por %p50, %p51
      %p53 = scmp.ne.s32.totalorder %s45, %s48
      %p54 = scmp.eq.s32.totalorder %s23, 0
      %p55 = por %p53, %p54
      %p56 = scmp.ne.s32.totalorder %s45, %s48
      %p57 = scmp.eq.s32.totalorder %s28, 3
      %p58 = por %p56, %p57
      %p59 = scmp.ne.s32.totalorder %s48, %s49
      %p60 = scmp.eq.s32.totalorder %s28, 0
      %p61 = por %p59, %p60
      %p62 = scmp.ne.s32.totalorder %s48, %s49
      %p63 = scmp.eq.s32.totalorder %s29, 3
      %p64 = por %p62, %p63
      %p66 = scmp.ne.s32.totalorder %s49, %s65
      %p67 = scmp.eq.s32.totalorder %s29, 0
      %p68 = por %p66, %p67
      %s69 = ssub.s32 %s30, %s42
      %p70 = scmp.eq.s32.totalorder %s69, 0
      %s72 = sadd.s32 %s71, 1
      %s73 = scalar_select %p70, %s71, %s72
      %p76 = pneg %p70
      %p77 = scmp.eq.s32.totalorder %s23, 3
      %p78 = por %p76, %p77
      %p79 = scmp.ne.s32.totalorder %s71, %s74
      %p80 = scmp.eq.s32.totalorder %s23, 0
      %p81 = por %p79, %p80
      %p82 = scmp.ne.s32.totalorder %s71, %s74
      %p83 = scmp.eq.s32.totalorder %s28, 3
      %p84 = por %p82, %p83
      %p85 = scmp.ne.s32.totalorder %s74, %s75
      %p86 = scmp.eq.s32.totalorder %s28, 0
      %p87 = por %p85, %p86
      %p88 = scmp.ne.s32.totalorder %s74, %s75
      %p89 = scmp.eq.s32.totalorder %s29, 3
      %p90 = por %p88, %p89
      %p92 = scmp.ne.s32.totalorder %s75, %s91
      %p93 = scmp.eq.s32.totalorder %s29, 0
      %p94 = por %p92, %p93
      %s95 = ssub.s32 %s30, %s42
      %p96 = scmp.eq.s32.totalorder %s95, 0
      %s98 = sadd.s32 %s97, 1
      %s99 = scalar_select %p96, %s97, %s98
      %p102 = pneg %p96
      %p103 = scmp.eq.s32.totalorder %s23, 3
      %p104 = por %p102, %p103
      %p105 = scmp.ne.s32.totalorder %s97, %s100
      %p106 = scmp.eq.s32.totalorder %s23, 0
      %p107 = por %p105, %p106
      %p108 = scmp.ne.s32.totalorder %s97, %s100
      %p109 = scmp.eq.s32.totalorder %s28, 3
      %p110 = por %p108, %p109
      %p111 = scmp.ne.s32.totalorder %s100, %s101
      %p112 = scmp.eq.s32.totalorder %s28, 0
      %p113 = por %p111, %p112
      %p114 = scmp.ne.s32.totalorder %s100, %s101
      %p115 = scmp.eq.s32.totalorder %s29, 3
      %p116 = por %p114, %p115
      %p118 = scmp.ne.s32.totalorder %s101, %s117
      %p119 = scmp.eq.s32.totalorder %s29, 0
      %p120 = por %p118, %p119
      %s122 = sadd.s32 %s121, 1
      %p125 = scmp.eq.s32.totalorder %s23, 3
      %p126 = scmp.ne.s32.totalorder %s121, %s123
      %p127 = scmp.eq.s32.totalorder %s23, 0
      %p128 = por %p126, %p127
      %p129 = scmp.ne.s32.totalorder %s121, %s123
      %p130 = scmp.eq.s32.totalorder %s28, 3
      %p131 = por %p129, %p130
      %p132 = scmp.ne.s32.totalorder %s123, %s124
      %p133 = scmp.eq.s32.totalorder %s28, 0
      %p134 = por %p132, %p133
      %p135 = scmp.ne.s32.totalorder %s123, %s124
      %p136 = scmp.eq.s32.totalorder %s29, 3
      %p137 = por %p135, %p136
      %p139 = scmp.ne.s32.totalorder %s124, %s138
      %p140 = scmp.eq.s32.totalorder %s29, 0
      %p141 = por %p139, %p140
      %s143 = sadd.s32 %s142, 1
      %p146 = scmp.eq.s32.totalorder %s23, 3
      %p147 = scmp.ne.s32.totalorder %s142, %s144
      %p148 = scmp.eq.s32.totalorder %s23, 0
      %p149 = por %p147, %p148
      %p150 = scmp.ne.s32.totalorder %s142, %s144
      %p151 = scmp.eq.s32.totalorder %s28, 3
      %p152 = por %p150, %p151
      %p153 = scmp.ne.s32.totalorder %s144, %s145
      %p154 = scmp.eq.s32.totalorder %s28, 0
      %p155 = por %p153, %p154
      %p156 = scmp.ne.s32.totalorder %s144, %s145
      %p157 = scmp.eq.s32.totalorder %s29, 3
      %p158 = por %p156, %p157
      %p160 = scmp.ne.s32.totalorder %s145, %s159
      %p161 = scmp.eq.s32.totalorder %s29, 0
      %p162 = por %p160, %p161
      %s164 = sadd.s32 %s163, 1
      %p167 = scmp.eq.s32.totalorder %s23, 3
      %p168 = scmp.ne.s32.totalorder %s163, %s165
      %p169 = scmp.eq.s32.totalorder %s23, 0
      %p170 = por %p168, %p169
      %p171 = scmp.ne.s32.totalorder %s163, %s165
      %p172 = scmp.eq.s32.totalorder %s28, 3
      %p173 = por %p171, %p172
      %p174 = scmp.ne.s32.totalorder %s165, %s166
      %p175 = scmp.eq.s32.totalorder %s28, 0
      %p176 = por %p174, %p175
      %p177 = scmp.ne.s32.totalorder %s165, %s166
      %p178 = scmp.eq.s32.totalorder %s29, 3
      %p179 = por %p177, %p178
      %p181 = scmp.ne.s32.totalorder %s166, %s180
      %p182 = scmp.eq.s32.totalorder %s29, 0
      %p183 = por %p181, %p182
      %s185 = sadd.s32 %s184, 1
      %p188 = scmp.eq.s32.totalorder %s23, 3
      %p189 = scmp.ne.s32.totalorder %s184, %s186
      %p190 = scmp.eq.s32.totalorder %s23, 0
      %p191 = por %p189, %p190
      %p192 = scmp.ne.s32.totalorder %s184, %s186
      %p193 = scmp.eq.s32.totalorder %s28, 3
      %p194 = por %p192, %p193
      %p195 = scmp.ne.s32.totalorder %s186, %s187
      %p196 = scmp.eq.s32.totalorder %s28, 0
      %p197 = por %p195, %p196
      %p198 = scmp.ne.s32.totalorder %s186, %s187
      %p199 = scmp.eq.s32.totalorder %s29, 3
      %p200 = por %p198, %p199
      %p202 = scmp.ne.s32.totalorder %s187, %s201
      %p203 = scmp.eq.s32.totalorder %s29, 0
      %p204 = por %p202, %p203
      %s206 = sadd.s32 %s205, 1
      %p209 = scmp.eq.s32.totalorder %s23, 3
      %p210 = scmp.ne.s32.totalorder %s205, %s207
      %p211 = scmp.eq.s32.totalorder %s23, 0
      %p212 = por %p210, %p211
      %p213 = scmp.ne.s32.totalorder %s205, %s207
      %p214 = scmp.eq.s32.totalorder %s28, 3
      %p215 = por %p213, %p214
      %p216 = scmp.ne.s32.totalorder %s207, %s208
      %p217 = scmp.eq.s32.totalorder %s28, 0
      %p218 = por %p216, %p217
      %p219 = scmp.ne.s32.totalorder %s207, %s208
      %p220 = scmp.eq.s32.totalorder %s29, 3
      %p221 = por %p219, %p220
      %p223 = scmp.ne.s32.totalorder %s208, %s222
      %p224 = scmp.eq.s32.totalorder %s29, 0
      %p225 = por %p223, %p224
      %s227 = sadd.s32 %s226, 1
      %p230 = scmp.eq.s32.totalorder %s23, 3
      %p231 = scmp.ne.s32.totalorder %s226, %s228
      %p232 = scmp.eq.s32.totalorder %s23, 0
      %p233 = por %p231, %p232
      %p234 = scmp.ne.s32.totalorder %s226, %s228
      %p235 = scmp.eq.s32.totalorder %s28, 3
      %p236 = por %p234, %p235
      %p237 = scmp.ne.s32.totalorder %s228, %s229
      %p238 = scmp.eq.s32.totalorder %s28, 0
      %p239 = por %p237, %p238
      %p240 = scmp.ne.s32.totalorder %s228, %s229
      %p241 = scmp.eq.s32.totalorder %s29, 3
      %p242 = por %p240, %p241
      %p244 = scmp.ne.s32.totalorder %s229, %s243
      %p245 = scmp.eq.s32.totalorder %s29, 0
      %p246 = por %p244, %p245
      %s248 = sadd.s32 %s247, 1
      %p251 = scmp.eq.s32.totalorder %s23, 3
      %p252 = scmp.ne.s32.totalorder %s247, %s249
      %p253 = scmp.eq.s32.totalorder %s23, 0
      %p254 = por %p252, %p253
      %p255 = scmp.ne.s32.totalorder %s247, %s249
      %p256 = scmp.eq.s32.totalorder %s28, 3
      %p257 = por %p255, %p256
      %p258 = scmp.ne.s32.totalorder %s249, %s250
      %p259 = scmp.eq.s32.totalorder %s28, 0
      %p260 = por %p258, %p259
      %p261 = scmp.ne.s32.totalorder %s249, %s250
      %p262 = scmp.eq.s32.totalorder %s29, 3
      %p263 = por %p261, %p262
      %p265 = scmp.ne.s32.totalorder %s250, %s264
      %p266 = scmp.eq.s32.totalorder %s29, 0
      %p267 = por %p265, %p266
      %s269 = sadd.s32 %s268, 1
      %p272 = scmp.eq.s32.totalorder %s23, 3
      %p273 = scmp.ne.s32.totalorder %s268, %s270
      %p274 = scmp.eq.s32.totalorder %s23, 0
      %p275 = por %p273, %p274
      %p276 = scmp.ne.s32.totalorder %s268, %s270
      %p277 = scmp.eq.s32.totalorder %s28, 3
      %p278 = por %p276, %p277
      %p279 = scmp.ne.s32.totalorder %s270, %s271
      %p280 = scmp.eq.s32.totalorder %s28, 0
      %p281 = por %p279, %p280
      %p282 = scmp.ne.s32.totalorder %s270, %s271
      %p283 = scmp.eq.s32.totalorder %s29, 3
      %p284 = por %p282, %p283
      %p286 = scmp.ne.s32.totalorder %s271, %s285
      %p287 = scmp.eq.s32.totalorder %s29, 0
      %p288 = por %p286, %p287
      %s290 = sadd.s32 %s289, 1
      %p293 = scmp.eq.s32.totalorder %s23, 3
      %p294 = scmp.ne.s32.totalorder %s289, %s291
      %p295 = scmp.eq.s32.totalorder %s23, 0
      %p296 = por %p294, %p295
      %p297 = scmp.ne.s32.totalorder %s289, %s291
      %p298 = scmp.eq.s32.totalorder %s28, 3
      %p299 = por %p297, %p298
      %p300 = scmp.ne.s32.totalorder %s291, %s292
      %p301 = scmp.eq.s32.totalorder %s28, 0
      %p302 = por %p300, %p301
      %p303 = scmp.ne.s32.totalorder %s291, %s292
      %p304 = scmp.eq.s32.totalorder %s29, 3
      %p305 = por %p303, %p304
      %p307 = scmp.ne.s32.totalorder %s292, %s306
      %p308 = scmp.eq.s32.totalorder %s29, 0
      %p309 = por %p307, %p308
      %s310 = ssub.s32 %s30, %s42
      %s311 = ssub.s32 %s31, %s38
      %s312 = sor.u32 %s310, %s311
      %p313 = scmp.eq.s32.totalorder %s312, 0
      %s315 = sadd.s32 %s314, 1
      %s316 = scalar_select %p313, %s314, %s315
      %p319 = pneg %p313
      %p320 = scmp.eq.s32.totalorder %s23, 3
      %p321 = por %p319, %p320
      %p322 = scmp.ne.s32.totalorder %s314, %s317
      %p323 = scmp.eq.s32.totalorder %s23, 0
      %p324 = por %p322, %p323
      %p325 = scmp.ne.s32.totalorder %s314, %s317
      %p326 = scmp.eq.s32.totalorder %s28, 3
      %p327 = por %p325, %p326
      %p328 = scmp.ne.s32.totalorder %s317, %s318
      %p329 = scmp.eq.s32.totalorder %s28, 0
      %p330 = por %p328, %p329
      %p331 = scmp.ne.s32.totalorder %s317, %s318
      %p332 = scmp.eq.s32.totalorder %s29, 3
      %p333 = por %p331, %p332
      %p335 = scmp.ne.s32.totalorder %s318, %s334
      %p336 = scmp.eq.s32.totalorder %s29, 0
      %p337 = por %p335, %p336
      %s338 = ssub.s32 %s30, %s42
      %s339 = ssub.s32 %s31, %s38
      %s340 = sor.u32 %s338, %s339
      %p341 = scmp.eq.s32.totalorder %s340, 0
      %s343 = sadd.s32 %s342, 1
      %s344 = scalar_select %p341, %s342, %s343
      %p347 = pneg %p341
      %p348 = scmp.eq.s32.totalorder %s23, 3
      %p349 = por %p347, %p348
      %p350 = scmp.ne.s32.totalorder %s342, %s345
      %p351 = scmp.eq.s32.totalorder %s23, 0
      %p352 = por %p350, %p351
      %p353 = scmp.ne.s32.totalorder %s342, %s345
      %p354 = scmp.eq.s32.totalorder %s28, 3
      %p355 = por %p353, %p354
      %p356 = scmp.ne.s32.totalorder %s345, %s346
      %p357 = scmp.eq.s32.totalorder %s28, 0
      %p358 = por %p356, %p357
      %p359 = scmp.ne.s32.totalorder %s345, %s346
      %p360 = scmp.eq.s32.totalorder %s29, 3
      %p361 = por %p359, %p360
      %p363 = scmp.ne.s32.totalorder %s346, %s362
      %p364 = scmp.eq.s32.totalorder %s29, 0
      %p365 = por %p363, %p364
      %p366 = scmp.le.s32.totalorder 1, %s23
      %p367 = scmp.lt.s32.totalorder %s23, 5
      %p368 = pnand %p366, %p367
      %p369 = pneg %p368
      // Predicated region
      $region9: #{tpu_custom_call.1} parent=5 // pred_check
        _
      $region10: #{tpu_custom_call.1} parent=5 // pred_check_branch
        %371 = sbr.rel (%p368) target = $region12
      $region11: #{tpu_custom_call.1} parent=5 // pred_region
        %s372 = ssub.s32 %s23, 1
        // Predicated region
        $region13: #{tpu_custom_call.1} parent=11 // pred_check
          %p373 = pneg %p134
        $region14: #{tpu_custom_call.1} parent=11 // pred_check_branch
          %375 = sbr.rel (%p373) target = $region16
        $region15: #{tpu_custom_call.1} parent=11 // pred_region
          _
        $region16: #{tpu_custom_call.1} parent=11 // pred_fallthru
          _
        // Predicated region
        $region17: #{tpu_custom_call.1} parent=11 // pred_check
          %p376 = pneg %p155
        $region18: #{tpu_custom_call.1} parent=11 // pred_check_branch
          %378 = sbr.rel (%p376) target = $region20
        $region19: #{tpu_custom_call.1} parent=11 // pred_region
          _
        $region20: #{tpu_custom_call.1} parent=11 // pred_fallthru
          _
        // Predicated region
        $region21: #{tpu_custom_call.1} parent=11 // pred_check
          %p379 = pneg %p176
        $region22: #{tpu_custom_call.1} parent=11 // pred_check_branch
          %381 = sbr.rel (%p379) target = $region24
        $region23: #{tpu_custom_call.1} parent=11 // pred_region
          _
        $region24: #{tpu_custom_call.1} parent=11 // pred_fallthru
          _
        // Predicated region
        $region25: #{tpu_custom_call.1} parent=11 // pred_check
          %p382 = pneg %p197
        $region26: #{tpu_custom_call.1} parent=11 // pred_check_branch
          %384 = sbr.rel (%p382) target = $region28
        $region27: #{tpu_custom_call.1} parent=11 // pred_region
          _
        $region28: #{tpu_custom_call.1} parent=11 // pred_fallthru
          _
        // Predicated region
        $region29: #{tpu_custom_call.1} parent=11 // pred_check
          %p385 = pneg %p218
        $region30: #{tpu_custom_call.1} parent=11 // pred_check_branch
          %387 = sbr.rel (%p385) target = $region32
        $region31: #{tpu_custom_call.1} parent=11 // pred_region
          _
        $region32: #{tpu_custom_call.1} parent=11 // pred_fallthru
          _
        // Predicated region
        $region33: #{tpu_custom_call.1} parent=11 // pred_check
          %p388 = pneg %p239
        $region34: #{tpu_custom_call.1} parent=11 // pred_check_branch
          %390 = sbr.rel (%p388) target = $region36
        $region35: #{tpu_custom_call.1} parent=11 // pred_region
          _
        $region36: #{tpu_custom_call.1} parent=11 // pred_fallthru
          _
        // Predicated region
        $region37: #{tpu_custom_call.1} parent=11 // pred_check
          %p391 = pneg %p260
        $region38: #{tpu_custom_call.1} parent=11 // pred_check_branch
          %393 = sbr.rel (%p391) target = $region40
        $region39: #{tpu_custom_call.1} parent=11 // pred_region
          _
        $region40: #{tpu_custom_call.1} parent=11 // pred_fallthru
          _
        // Predicated region
        $region41: #{tpu_custom_call.1} parent=11 // pred_check
          %p394 = pneg %p281
        $region42: #{tpu_custom_call.1} parent=11 // pred_check_branch
          %396 = sbr.rel (%p394) target = $region44
        $region43: #{tpu_custom_call.1} parent=11 // pred_region
          _
        $region44: #{tpu_custom_call.1} parent=11 // pred_fallthru
          _
        // Predicated region
        $region45: #{tpu_custom_call.1} parent=11 // pred_check
          %p397 = pneg %p302
        $region46: #{tpu_custom_call.1} parent=11 // pred_check_branch
          %399 = sbr.rel (%p397) target = $region48
        $region47: #{tpu_custom_call.1} parent=11 // pred_region
          _
        $region48: #{tpu_custom_call.1} parent=11 // pred_fallthru
          _
      $region12: #{tpu_custom_call.1} parent=5 // pred_fallthru
        _
      %p400 = scmp.lt.s32.totalorder %s23, 4
      // Predicated region
      $region49: #{tpu_custom_call.1} parent=5 // pred_check
        %p401 = pneg %p400
      $region50: #{tpu_custom_call.1} parent=5 // pred_check_branch
        %403 = sbr.rel (%p401) target = $region52
      $region51: #{tpu_custom_call.1} parent=5 // pred_region
        // Predicated region
        $region53: #{tpu_custom_call.1} parent=51 // pred_check
          %p404 = pneg %p55
        $region54: #{tpu_custom_call.1} parent=51 // pred_check_branch
          %406 = sbr.rel (%p404) target = $region56
        $region55: #{tpu_custom_call.1} parent=51 // pred_region
          %s407 = sand.u32 %s45, 1
          %s408 = scalar_lea.sflag [#allocation3], %s407
          %s409 = sand.u32 %s45, 1
          %s410 = smul.addr %s409, 128
          %s411 = scalar_lea.vmem [#allocation2], %s410
          %s412 = smul.u32 8, %s31
          %414 = vsyncadd %s408, 0
          %s415 = smul.addr %s412, 8
          %s416 = scalar_lea.hbm %s0, %s415
          %s417 = sshll.u32 %s416, 4
          %s418 = int_to_ptr.hbm [resolvable:$true] %s417
          %s419 = sshll.u32 %s411, 4
          %s420 = int_to_ptr.vmem [resolvable:$true] %s419
          %425 = dma.hbm_to_vmem [thread:$0]  %s418, 2048, %s420, %s408, 2048, 1024, 64
        $region56: #{tpu_custom_call.1} parent=51 // pred_fallthru
          _
        // Predicated region
        $region57: #{tpu_custom_call.1} parent=51 // pred_check
          %p426 = pneg %p81
        $region58: #{tpu_custom_call.1} parent=51 // pred_check_branch
          %428 = sbr.rel (%p426) target = $region60
        $region59: #{tpu_custom_call.1} parent=51 // pred_region
          %p429 = scmp.lt.s32.totalorder %s30, 1
          %s430 = scalar_select %p429, %s30, 1
          %s431 = smul.addr %s430, 2
          %s432 = smul.addr %s431, 8
          %s433 = scalar_lea.vmem %s1, %s432
        $region60: #{tpu_custom_call.1} parent=51 // pred_fallthru
          _
        // Predicated region
        $region61: #{tpu_custom_call.1} parent=51 // pred_check
          %p434 = pneg %p107
        $region62: #{tpu_custom_call.1} parent=51 // pred_check_branch
          %436 = sbr.rel (%p434) target = $region64
        $region63: #{tpu_custom_call.1} parent=51 // pred_region
          %p437 = scmp.lt.s32.totalorder %s30, 1
          %s438 = scalar_select %p437, %s30, 1
          %s439 = smul.addr %s438, 2
          %s440 = smul.addr %s439, 8
          %s441 = scalar_lea.vmem %s2, %s440
        $region64: #{tpu_custom_call.1} parent=51 // pred_fallthru
          _
      $region52: #{tpu_custom_call.1} parent=5 // pred_fallthru
        _
      %p442 = scmp.le.s32.totalorder 1, %s23
      %p443 = scmp.lt.s32.totalorder %s23, 5
      %p444 = pnand %p442, %p443
      %p445 = pneg %p444
      // Predicated region
      $region65: #{tpu_custom_call.1} parent=5 // pred_check
        _
      $region66: #{tpu_custom_call.1} parent=5 // pred_check_branch
        %447 = sbr.rel (%p444) target = $region68
      $region67: #{tpu_custom_call.1} parent=5 // pred_region
        %s448 = ssub.s32 %s23, 1
        %s449 = sand.u32 %s48, 1
        %s450 = scalar_lea.sflag [#allocation3], %s449
        %s451 = sand.u32 %s48, 1
        %s452 = smul.addr %s451, 128
        %s453 = scalar_lea.vmem [#allocation2], %s452
        // Predicated region
        $region69: #{tpu_custom_call.1} parent=67 // pred_check
          %p454 = pneg %p61
        $region70: #{tpu_custom_call.1} parent=67 // pred_check_branch
          %456 = sbr.rel (%p454) target = $region72
        $region71: #{tpu_custom_call.1} parent=67 // pred_region
          %458 = dma.done %s450, 2048
        $region72: #{tpu_custom_call.1} parent=67 // pred_fallthru
          _
        %s459 = sand.u32 %s48, 1
        %s460 = scalar_lea.sflag [#allocation3], %s459
        %s461 = sand.u32 %s48, 1
        %s462 = smul.addr %s461, 128
        %s463 = scalar_lea.vmem [#allocation2], %s462
        %p464 = pneg %p61
        %p465 = pneg %p58
        %p466 = scmp.lt.s32.totalorder %s32, 1
        %s467 = scalar_select %p466, %s32, 1
        %s468 = smul.addr %s467, 2
        %s469 = smul.addr %s468, 8
        %s470 = scalar_lea.vmem %s1, %s469
        %p471 = pneg %p87
        %p472 = pneg %p84
        %p473 = scmp.lt.s32.totalorder %s32, 1
        %s474 = scalar_select %p473, %s32, 1
        %s475 = smul.addr %s474, 2
        %s476 = smul.addr %s475, 8
        %s477 = scalar_lea.vmem %s2, %s476
        %p478 = pneg %p113
        %p479 = pneg %p110
        %p480 = pneg %p134
        %p481 = pneg %p131
        %p482 = pneg %p155
        %p483 = pneg %p152
        %p484 = pneg %p176
        %p485 = pneg %p173
        %p486 = pneg %p197
        %p487 = pneg %p194
        %p488 = pneg %p218
        %p489 = pneg %p215
        %p490 = pneg %p239
        %p491 = pneg %p236
        %p492 = pneg %p260
        %p493 = pneg %p257
        %p494 = pneg %p281
        %p495 = pneg %p278
        %p496 = pneg %p302
        %p497 = pneg %p299
        %p498 = pneg %p330
        %p499 = pneg %p327
        %s500 = smul.u32 8, %s33
        %p501 = scmp.lt.s32.totalorder %s32, 1
        %s502 = scalar_select %p501, %s32, 1
        %p503 = scmp.lt.s32.totalorder %s500, 15
        %s504 = scalar_select %p503, %s500, 15
        %s505 = smul.addr %s502, 16
        %s506 = sadd.s32 %s504, %s505
        %s507 = smul.addr %s506, 4
        %s508 = scalar_lea.vmem %s12, %s507
        %p509 = pneg %p358
        %p510 = pneg %p355
        %s511 = smul.u32 8, %s33
        %p512 = scmp.lt.s32.totalorder %s32, 1
        %s513 = scalar_select %p512, %s32, 1
        %p514 = scmp.lt.s32.totalorder %s511, 15
        %s515 = scalar_select %p514, %s511, 15
        %s516 = smul.addr %s513, 16
        %s517 = sadd.s32 %s515, %s516
        %s518 = smul.addr %s517, 4
        %s519 = scalar_lea.vmem %s13, %s518
        %s520 = smul.u32 8, %s33
        %p521 = scmp.lt.s32.totalorder %s32, 1
        %s522 = scalar_select %p521, %s32, 1
        %s523 = smul.addr %s522, 2
        %s524 = smul.addr %s523, 8
        %s525 = scalar_lea.vmem %s1, %s524
        %p526 = scmp.lt.s32.totalorder %s32, 1
        %s527 = scalar_select %p526, %s32, 1
        %s528 = smul.addr %s527, 2
        %s529 = smul.addr %s528, 8
        %s530 = scalar_lea.vmem %s2, %s529
        %s531 = smul.u32 8, %s33
        %p532 = scmp.lt.s32.totalorder %s32, 1
        %s533 = scalar_select %p532, %s32, 1
        %p534 = scmp.lt.s32.totalorder %s531, 15
        %s535 = scalar_select %p534, %s531, 15
        %s536 = smul.addr %s533, 16
        %s537 = sadd.s32 %s535, %s536
        %s538 = smul.addr %s537, 4
        %s539 = scalar_lea.vmem %s12, %s538
        %s540 = smul.u32 8, %s33
        %s541 = smul.u32 8, %s33
        %p542 = scmp.lt.s32.totalorder %s32, 1
        %s543 = scalar_select %p542, %s32, 1
        %p544 = scmp.lt.s32.totalorder %s541, 15
        %s545 = scalar_select %p544, %s541, 15
        %s546 = smul.addr %s543, 16
        %s547 = sadd.s32 %s545, %s546
        %s548 = smul.addr %s547, 4
        %s549 = scalar_lea.vmem %s13, %s548
        %s550 = smul.u32 8, %s33
        %v551 = vld [vmem:[%s453] sm:$0xff]
        %v552 = vld [vmem:[%s453 + $0x8] sm:$0xff]
        %v553 = vld [vmem:[%s453 + $0x10] sm:$0xff]
        %v554 = vld [vmem:[%s453 + $0x18] sm:$0xff]
        %v555 = vld [vmem:[%s453 + $0x20] sm:$0xff]
        %v556 = vld [vmem:[%s453 + $0x28] sm:$0xff]
        %v557 = vld [vmem:[%s453 + $0x30] sm:$0xff]
        %v558 = vld [vmem:[%s453 + $0x38] sm:$0xff]
        %v559 = vld [vmem:[%s453 + $0x40] sm:$0xff]
        %v560 = vld [vmem:[%s453 + $0x48] sm:$0xff]
        %v561 = vld [vmem:[%s453 + $0x50] sm:$0xff]
        %v562 = vld [vmem:[%s453 + $0x58] sm:$0xff]
        %v563 = vld [vmem:[%s453 + $0x60] sm:$0xff]
        %v564 = vld [vmem:[%s453 + $0x68] sm:$0xff]
        %v565 = vld [vmem:[%s453 + $0x70] sm:$0xff]
        %v566 = vld [vmem:[%s453 + $0x78] sm:$0xff]
        %v567 = vld [vmem:[%s525] sm:$0xff]
        %v568 = vld [vmem:[%s525 + $0x8] sm:$0xff]
        %570 = vset.pattern.permute.xlu0 0
        %571 = vperm.xlu0 %570, %v567
        %v572 = vpop.permute.xlu0 %571
        %575 = vset.pattern.permute.xlu0 0
        %576 = vperm.xlu0 %575, %v568
        %v577 = vpop.permute.xlu0 %576
        %v579 = vadd.f32 %v551, %v572
        %v580 = vadd.f32 %v552, %v572
        %v581 = vadd.f32 %v553, %v572
        %v582 = vadd.f32 %v554, %v572
        %v583 = vadd.f32 %v555, %v572
        %v584 = vadd.f32 %v556, %v572
        %v585 = vadd.f32 %v557, %v572
        %v586 = vadd.f32 %v558, %v572
        %v587 = vadd.f32 %v559, %v577
        %v588 = vadd.f32 %v560, %v577
        %v589 = vadd.f32 %v561, %v577
        %v590 = vadd.f32 %v562, %v577
        %v591 = vadd.f32 %v563, %v577
        %v592 = vadd.f32 %v564, %v577
        %v593 = vadd.f32 %v565, %v577
        %v594 = vadd.f32 %v566, %v577
        %v595 = vmax.f32 %v579, 0.0
        %v596 = vmax.f32 %v580, 0.0
        %v597 = vmax.f32 %v581, 0.0
        %v598 = vmax.f32 %v582, 0.0
        %v599 = vmax.f32 %v583, 0.0
        %v600 = vmax.f32 %v584, 0.0
        %v601 = vmax.f32 %v585, 0.0
        %v602 = vmax.f32 %v586, 0.0
        %v603 = vmax.f32 %v587, 0.0
        %v604 = vmax.f32 %v588, 0.0
        %v605 = vmax.f32 %v589, 0.0
        %v606 = vmax.f32 %v590, 0.0
        %v607 = vmax.f32 %v591, 0.0
        %v608 = vmax.f32 %v592, 0.0
        %v609 = vmax.f32 %v593, 0.0
        %v610 = vmax.f32 %v594, 0.0
        %v611 = vld [vmem:[%s3] sm:$0xff]
        %v612 = vld [vmem:[%s3 + $0x8] sm:$0xff]
        %614 = vset.pattern.permute.xlu0 0
        %615 = vperm.xlu0 %614, %v611
        %v616 = vpop.permute.xlu0 %615
        %619 = vset.pattern.permute.xlu0 0
        %620 = vperm.xlu0 %619, %v612
        %v621 = vpop.permute.xlu0 %620
        %v623 = vperm.slane %v595, 0
        %v624 = vperm.slane %v596, 0
        %v625 = vperm.slane %v597, 0
        %v626 = vperm.slane %v598, 0
        %v627 = vperm.slane %v599, 0
        %v628 = vperm.slane %v600, 0
        %v629 = vperm.slane %v601, 0
        %v630 = vperm.slane %v602, 0
        %v631 = vmul.f32 %v616, %v623
        %v632 = vmul.f32 %v616, %v624
        %v633 = vmul.f32 %v616, %v625
        %v634 = vmul.f32 %v616, %v626
        %v635 = vmul.f32 %v616, %v627
        %v636 = vmul.f32 %v616, %v628
        %v637 = vmul.f32 %v616, %v629
        %v638 = vmul.f32 %v616, %v630
        %v639 = vmul.f32 %v621, %v623
        %v640 = vmul.f32 %v621, %v624
        %v641 = vmul.f32 %v621, %v625
        %v642 = vmul.f32 %v621, %v626
        %v643 = vmul.f32 %v621, %v627
        %v644 = vmul.f32 %v621, %v628
        %v645 = vmul.f32 %v621, %v629
        %v646 = vmul.f32 %v621, %v630
        %647 = vset.pattern.permute.xlu0 1
        %648 = vperm.xlu0 %647, %v611
        %v649 = vpop.permute.xlu0 %648
        %651 = vset.pattern.permute.xlu0 1
        %652 = vperm.xlu0 %651, %v612
        %v653 = vpop.permute.xlu0 %652
        %v655 = vperm.slane %v595, 1
        %v656 = vperm.slane %v596, 1
        %v657 = vperm.slane %v597, 1
        %v658 = vperm.slane %v598, 1
        %v659 = vperm.slane %v599, 1
        %v660 = vperm.slane %v600, 1
        %v661 = vperm.slane %v601, 1
        %v662 = vperm.slane %v602, 1
        %v663 = vmul.f32 %v649, %v655
        %v664 = vmul.f32 %v649, %v656
        %v665 = vmul.f32 %v649, %v657
        %v666 = vmul.f32 %v649, %v658
        %v667 = vmul.f32 %v649, %v659
        %v668 = vmul.f32 %v649, %v660
        %v669 = vmul.f32 %v649, %v661
        %v670 = vmul.f32 %v649, %v662
        %v671 = vmul.f32 %v653, %v655
        %v672 = vmul.f32 %v653, %v656
        %v673 = vmul.f32 %v653, %v657
        %v674 = vmul.f32 %v653, %v658
        %v675 = vmul.f32 %v653, %v659
        %v676 = vmul.f32 %v653, %v660
        %v677 = vmul.f32 %v653, %v661
        %v678 = vmul.f32 %v653, %v662
        %v679 = vadd.f32 %v631, %v663
        %v680 = vadd.f32 %v632, %v664
        %v681 = vadd.f32 %v633, %v665
        %v682 = vadd.f32 %v634, %v666
        %v683 = vadd.f32 %v635, %v667
        %v684 = vadd.f32 %v636, %v668
        %v685 = vadd.f32 %v637, %v669
        %v686 = vadd.f32 %v638, %v670
        %v687 = vadd.f32 %v639, %v671
        %v688 = vadd.f32 %v640, %v672
        %v689 = vadd.f32 %v641, %v673
        %v690 = vadd.f32 %v642, %v674
        %v691 = vadd.f32 %v643, %v675
        %v692 = vadd.f32 %v644, %v676
        %v693 = vadd.f32 %v645, %v677
        %v694 = vadd.f32 %v646, %v678
        %695 = vset.pattern.permute.xlu0 2
        %696 = vperm.xlu0 %695, %v611
        %v697 = vpop.permute.xlu0 %696
        %699 = vset.pattern.permute.xlu0 2
        %700 = vperm.xlu0 %699, %v612
        %v701 = vpop.permute.xlu0 %700
        %v703 = vperm.slane %v595, 2
        %v704 = vperm.slane %v596, 2
        %v705 = vperm.slane %v597, 2
        %v706 = vperm.slane %v598, 2
        %v707 = vperm.slane %v599, 2
        %v708 = vperm.slane %v600, 2
        %v709 = vperm.slane %v601, 2
        %v710 = vperm.slane %v602, 2
        %v711 = vmul.f32 %v697, %v703
        %v712 = vmul.f32 %v697, %v704
        %v713 = vmul.f32 %v697, %v705
        %v714 = vmul.f32 %v697, %v706
        %v715 = vmul.f32 %v697, %v707
        %v716 = vmul.f32 %v697, %v708
        %v717 = vmul.f32 %v697, %v709
        %v718 = vmul.f32 %v697, %v710
        %v719 = vmul.f32 %v701, %v703
        %v720 = vmul.f32 %v701, %v704
        %v721 = vmul.f32 %v701, %v705
        %v722 = vmul.f32 %v701, %v706
        %v723 = vmul.f32 %v701, %v707
        %v724 = vmul.f32 %v701, %v708
        %v725 = vmul.f32 %v701, %v709
        %v726 = vmul.f32 %v701, %v710
        %v727 = vadd.f32 %v679, %v711
        %v728 = vadd.f32 %v680, %v712
        %v729 = vadd.f32 %v681, %v713
        %v730 = vadd.f32 %v682, %v714
        %v731 = vadd.f32 %v683, %v715
        %v732 = vadd.f32 %v684, %v716
        %v733 = vadd.f32 %v685, %v717
        %v734 = vadd.f32 %v686, %v718
        %v735 = vadd.f32 %v687, %v719
        %v736 = vadd.f32 %v688, %v720
        %v737 = vadd.f32 %v689, %v721
        %v738 = vadd.f32 %v690, %v722
        %v739 = vadd.f32 %v691, %v723
        %v740 = vadd.f32 %v692, %v724
        %v741 = vadd.f32 %v693, %v725
        %v742 = vadd.f32 %v694, %v726
        %743 = vset.pattern.permute.xlu0 3
        %744 = vperm.xlu0 %743, %v611
        %v745 = vpop.permute.xlu0 %744
        %747 = vset.pattern.permute.xlu0 3
        %748 = vperm.xlu0 %747, %v612
        %v749 = vpop.permute.xlu0 %748
        %v751 = vperm.slane %v595, 3
        %v752 = vperm.slane %v596, 3
        %v753 = vperm.slane %v597, 3
        %v754 = vperm.slane %v598, 3
        %v755 = vperm.slane %v599, 3
        %v756 = vperm.slane %v600, 3
        %v757 = vperm.slane %v601, 3
        %v758 = vperm.slane %v602, 3
        %v759 = vmul.f32 %v745, %v751
        %v760 = vmul.f32 %v745, %v752
        %v761 = vmul.f32 %v745, %v753
        %v762 = vmul.f32 %v745, %v754
        %v763 = vmul.f32 %v745, %v755
        %v764 = vmul.f32 %v745, %v756
        %v765 = vmul.f32 %v745, %v757
        %v766 = vmul.f32 %v745, %v758
        %v767 = vmul.f32 %v749, %v751
        %v768 = vmul.f32 %v749, %v752
        %v769 = vmul.f32 %v749, %v753
        %v770 = vmul.f32 %v749, %v754
        %v771 = vmul.f32 %v749, %v755
        %v772 = vmul.f32 %v749, %v756
        %v773 = vmul.f32 %v749, %v757
        %v774 = vmul.f32 %v749, %v758
        %v775 = vadd.f32 %v727, %v759
        %v776 = vadd.f32 %v728, %v760
        %v777 = vadd.f32 %v729, %v761
        %v778 = vadd.f32 %v730, %v762
        %v779 = vadd.f32 %v731, %v763
        %v780 = vadd.f32 %v732, %v764
        %v781 = vadd.f32 %v733, %v765
        %v782 = vadd.f32 %v734, %v766
        %v783 = vadd.f32 %v735, %v767
        %v784 = vadd.f32 %v736, %v768
        %v785 = vadd.f32 %v737, %v769
        %v786 = vadd.f32 %v738, %v770
        %v787 = vadd.f32 %v739, %v771
        %v788 = vadd.f32 %v740, %v772
        %v789 = vadd.f32 %v741, %v773
        %v790 = vadd.f32 %v742, %v774
        %791 = vset.pattern.permute.xlu0 4
        %792 = vperm.xlu0 %791, %v611
        %v793 = vpop.permute.xlu0 %792
        %795 = vset.pattern.permute.xlu0 4
        %796 = vperm.xlu0 %795, %v612
        %v797 = vpop.permute.xlu0 %796
        %v799 = vperm.slane %v595, 4
        %v800 = vperm.slane %v596, 4
        %v801 = vperm.slane %v597, 4
        %v802 = vperm.slane %v598, 4
        %v803 = vperm.slane %v599, 4
        %v804 = vperm.slane %v600, 4
        %v805 = vperm.slane %v601, 4
        %v806 = vperm.slane %v602, 4
        %v807 = vmul.f32 %v793, %v799
        %v808 = vmul.f32 %v793, %v800
        %v809 = vmul.f32 %v793, %v801
        %v810 = vmul.f32 %v793, %v802
        %v811 = vmul.f32 %v793, %v803
        %v812 = vmul.f32 %v793, %v804
        %v813 = vmul.f32 %v793, %v805
        %v814 = vmul.f32 %v793, %v806
        %v815 = vmul.f32 %v797, %v799
        %v816 = vmul.f32 %v797, %v800
        %v817 = vmul.f32 %v797, %v801
        %v818 = vmul.f32 %v797, %v802
        %v819 = vmul.f32 %v797, %v803
        %v820 = vmul.f32 %v797, %v804
        %v821 = vmul.f32 %v797, %v805
        %v822 = vmul.f32 %v797, %v806
        %v823 = vadd.f32 %v775, %v807
        %v824 = vadd.f32 %v776, %v808
        %v825 = vadd.f32 %v777, %v809
        %v826 = vadd.f32 %v778, %v810
        %v827 = vadd.f32 %v779, %v811
        %v828 = vadd.f32 %v780, %v812
        %v829 = vadd.f32 %v781, %v813
        %v830 = vadd.f32 %v782, %v814
        %v831 = vadd.f32 %v783, %v815
        %v832 = vadd.f32 %v784, %v816
        %v833 = vadd.f32 %v785, %v817
        %v834 = vadd.f32 %v786, %v818
        %v835 = vadd.f32 %v787, %v819
        %v836 = vadd.f32 %v788, %v820
        %v837 = vadd.f32 %v789, %v821
        %v838 = vadd.f32 %v790, %v822
        %839 = vset.pattern.permute.xlu0 5
        %840 = vperm.xlu0 %839, %v611
        %v841 = vpop.permute.xlu0 %840
        %843 = vset.pattern.permute.xlu0 5
        %844 = vperm.xlu0 %843, %v612
        %v845 = vpop.permute.xlu0 %844
        %v847 = vperm.slane %v595, 5
        %v848 = vperm.slane %v596, 5
        %v849 = vperm.slane %v597, 5
        %v850 = vperm.slane %v598, 5
        %v851 = vperm.slane %v599, 5
        %v852 = vperm.slane %v600, 5
        %v853 = vperm.slane %v601, 5
        %v854 = vperm.slane %v602, 5
        %v855 = vmul.f32 %v841, %v847
        %v856 = vmul.f32 %v841, %v848
        %v857 = vmul.f32 %v841, %v849
        %v858 = vmul.f32 %v841, %v850
        %v859 = vmul.f32 %v841, %v851
        %v860 = vmul.f32 %v841, %v852
        %v861 = vmul.f32 %v841, %v853
        %v862 = vmul.f32 %v841, %v854
        %v863 = vmul.f32 %v845, %v847
        %v864 = vmul.f32 %v845, %v848
        %v865 = vmul.f32 %v845, %v849
        %v866 = vmul.f32 %v845, %v850
        %v867 = vmul.f32 %v845, %v851
        %v868 = vmul.f32 %v845, %v852
        %v869 = vmul.f32 %v845, %v853
        %v870 = vmul.f32 %v845, %v854
        %v871 = vadd.f32 %v823, %v855
        %v872 = vadd.f32 %v824, %v856
        %v873 = vadd.f32 %v825, %v857
        %v874 = vadd.f32 %v826, %v858
        %v875 = vadd.f32 %v827, %v859
        %v876 = vadd.f32 %v828, %v860
        %v877 = vadd.f32 %v829, %v861
        %v878 = vadd.f32 %v830, %v862
        %v879 = vadd.f32 %v831, %v863
        %v880 = vadd.f32 %v832, %v864
        %v881 = vadd.f32 %v833, %v865
        %v882 = vadd.f32 %v834, %v866
        %v883 = vadd.f32 %v835, %v867
        %v884 = vadd.f32 %v836, %v868
        %v885 = vadd.f32 %v837, %v869
        %v886 = vadd.f32 %v838, %v870
        %887 = vset.pattern.permute.xlu0 6
        %888 = vperm.xlu0 %887, %v611
        %v889 = vpop.permute.xlu0 %888
        %891 = vset.pattern.permute.xlu0 6
        %892 = vperm.xlu0 %891, %v612
        %v893 = vpop.permute.xlu0 %892
        %v895 = vperm.slane %v595, 6
        %v896 = vperm.slane %v596, 6
        %v897 = vperm.slane %v597, 6
        %v898 = vperm.slane %v598, 6
        %v899 = vperm.slane %v599, 6
        %v900 = vperm.slane %v600, 6
        %v901 = vperm.slane %v601, 6
        %v902 = vperm.slane %v602, 6
        %v903 = vmul.f32 %v889, %v895
        %v904 = vmul.f32 %v889, %v896
        %v905 = vmul.f32 %v889, %v897
        %v906 = vmul.f32 %v889, %v898
        %v907 = vmul.f32 %v889, %v899
        %v908 = vmul.f32 %v889, %v900
        %v909 = vmul.f32 %v889, %v901
        %v910 = vmul.f32 %v889, %v902
        %v911 = vmul.f32 %v893, %v895
        %v912 = vmul.f32 %v893, %v896
        %v913 = vmul.f32 %v893, %v897
        %v914 = vmul.f32 %v893, %v898
        %v915 = vmul.f32 %v893, %v899
        %v916 = vmul.f32 %v893, %v900
        %v917 = vmul.f32 %v893, %v901
        %v918 = vmul.f32 %v893, %v902
        %v919 = vadd.f32 %v871, %v903
        %v920 = vadd.f32 %v872, %v904
        %v921 = vadd.f32 %v873, %v905
        %v922 = vadd.f32 %v874, %v906
        %v923 = vadd.f32 %v875, %v907
        %v924 = vadd.f32 %v876, %v908
        %v925 = vadd.f32 %v877, %v909
        %v926 = vadd.f32 %v878, %v910
        %v927 = vadd.f32 %v879, %v911
        %v928 = vadd.f32 %v880, %v912
        %v929 = vadd.f32 %v881, %v913
        %v930 = vadd.f32 %v882, %v914
        %v931 = vadd.f32 %v883, %v915
        %v932 = vadd.f32 %v884, %v916
        %v933 = vadd.f32 %v885, %v917
        %v934 = vadd.f32 %v886, %v918
        %935 = vset.pattern.permute.xlu0 7
        %936 = vperm.xlu0 %935, %v611
        %v937 = vpop.permute.xlu0 %936
        %939 = vset.pattern.permute.xlu0 7
        %940 = vperm.xlu0 %939, %v612
        %v941 = vpop.permute.xlu0 %940
        %v943 = vperm.slane %v595, 7
        %v944 = vperm.slane %v596, 7
        %v945 = vperm.slane %v597, 7
        %v946 = vperm.slane %v598, 7
        %v947 = vperm.slane %v599, 7
        %v948 = vperm.slane %v600, 7
        %v949 = vperm.slane %v601, 7
        %v950 = vperm.slane %v602, 7
        %v951 = vmul.f32 %v937, %v943
        %v952 = vmul.f32 %v937, %v944
        %v953 = vmul.f32 %v937, %v945
        %v954 = vmul.f32 %v937, %v946
        %v955 = vmul.f32 %v937, %v947
        %v956 = vmul.f32 %v937, %v948
        %v957 = vmul.f32 %v937, %v949
        %v958 = vmul.f32 %v937, %v950
        %v959 = vmul.f32 %v941, %v943
        %v960 = vmul.f32 %v941, %v944
        %v961 = vmul.f32 %v941, %v945
        %v962 = vmul.f32 %v941, %v946
        %v963 = vmul.f32 %v941, %v947
        %v964 = vmul.f32 %v941, %v948
        %v965 = vmul.f32 %v941, %v949
        %v966 = vmul.f32 %v941, %v950
        %v967 = vadd.f32 %v919, %v951
        %v968 = vadd.f32 %v920, %v952
        %v969 = vadd.f32 %v921, %v953
        %v970 = vadd.f32 %v922, %v954
        %v971 = vadd.f32 %v923, %v955
        %v972 = vadd.f32 %v924, %v956
        %v973 = vadd.f32 %v925, %v957
        %v974 = vadd.f32 %v926, %v958
        %v975 = vadd.f32 %v927, %v959
        %v976 = vadd.f32 %v928, %v960
        %v977 = vadd.f32 %v929, %v961
        %v978 = vadd.f32 %v930, %v962
        %v979 = vadd.f32 %v931, %v963
        %v980 = vadd.f32 %v932, %v964
        %v981 = vadd.f32 %v933, %v965
        %v982 = vadd.f32 %v934, %v966
        %983 = vset.pattern.permute.xlu0 8
        %984 = vperm.xlu0 %983, %v611
        %v985 = vpop.permute.xlu0 %984
        %987 = vset.pattern.permute.xlu0 8
        %988 = vperm.xlu0 %987, %v612
        %v989 = vpop.permute.xlu0 %988
        %v991 = vperm.slane %v603, 0
        %v992 = vperm.slane %v604, 0
        %v993 = vperm.slane %v605, 0
        %v994 = vperm.slane %v606, 0
        %v995 = vperm.slane %v607, 0
        %v996 = vperm.slane %v608, 0
        %v997 = vperm.slane %v609, 0
        %v998 = vperm.slane %v610, 0
        %v999 = vmul.f32 %v985, %v991
        %v1000 = vmul.f32 %v985, %v992
        %v1001 = vmul.f32 %v985, %v993
        %v1002 = vmul.f32 %v985, %v994
        %v1003 = vmul.f32 %v985, %v995
        %v1004 = vmul.f32 %v985, %v996
        %v1005 = vmul.f32 %v985, %v997
        %v1006 = vmul.f32 %v985, %v998
        %v1007 = vmul.f32 %v989, %v991
        %v1008 = vmul.f32 %v989, %v992
        %v1009 = vmul.f32 %v989, %v993
        %v1010 = vmul.f32 %v989, %v994
        %v1011 = vmul.f32 %v989, %v995
        %v1012 = vmul.f32 %v989, %v996
        %v1013 = vmul.f32 %v989, %v997
        %v1014 = vmul.f32 %v989, %v998
        %v1015 = vadd.f32 %v967, %v999
        %v1016 = vadd.f32 %v968, %v1000
        %v1017 = vadd.f32 %v969, %v1001
        %v1018 = vadd.f32 %v970, %v1002
        %v1019 = vadd.f32 %v971, %v1003
        %v1020 = vadd.f32 %v972, %v1004
        %v1021 = vadd.f32 %v973, %v1005
        %v1022 = vadd.f32 %v974, %v1006
        %v1023 = vadd.f32 %v975, %v1007
        %v1024 = vadd.f32 %v976, %v1008
        %v1025 = vadd.f32 %v977, %v1009
        %v1026 = vadd.f32 %v978, %v1010
        %v1027 = vadd.f32 %v979, %v1011
        %v1028 = vadd.f32 %v980, %v1012
        %v1029 = vadd.f32 %v981, %v1013
        %v1030 = vadd.f32 %v982, %v1014
        %1031 = vset.pattern.permute.xlu0 9
        %1032 = vperm.xlu0 %1031, %v611
        %v1033 = vpop.permute.xlu0 %1032
        %1035 = vset.pattern.permute.xlu0 9
        %1036 = vperm.xlu0 %1035, %v612
        %v1037 = vpop.permute.xlu0 %1036
        %v1039 = vperm.slane %v603, 1
        %v1040 = vperm.slane %v604, 1
        %v1041 = vperm.slane %v605, 1
        %v1042 = vperm.slane %v606, 1
        %v1043 = vperm.slane %v607, 1
        %v1044 = vperm.slane %v608, 1
        %v1045 = vperm.slane %v609, 1
        %v1046 = vperm.slane %v610, 1
        %v1047 = vmul.f32 %v1033, %v1039
        %v1048 = vmul.f32 %v1033, %v1040
        %v1049 = vmul.f32 %v1033, %v1041
        %v1050 = vmul.f32 %v1033, %v1042
        %v1051 = vmul.f32 %v1033, %v1043
        %v1052 = vmul.f32 %v1033, %v1044
        %v1053 = vmul.f32 %v1033, %v1045
        %v1054 = vmul.f32 %v1033, %v1046
        %v1055 = vmul.f32 %v1037, %v1039
        %v1056 = vmul.f32 %v1037, %v1040
        %v1057 = vmul.f32 %v1037, %v1041
        %v1058 = vmul.f32 %v1037, %v1042
        %v1059 = vmul.f32 %v1037, %v1043
        %v1060 = vmul.f32 %v1037, %v1044
        %v1061 = vmul.f32 %v1037, %v1045
        %v1062 = vmul.f32 %v1037, %v1046
        %v1063 = vadd.f32 %v1015, %v1047
        %v1064 = vadd.f32 %v1016, %v1048
        %v1065 = vadd.f32 %v1017, %v1049
        %v1066 = vadd.f32 %v1018, %v1050
        %v1067 = vadd.f32 %v1019, %v1051
        %v1068 = vadd.f32 %v1020, %v1052
        %v1069 = vadd.f32 %v1021, %v1053
        %v1070 = vadd.f32 %v1022, %v1054
        %v1071 = vadd.f32 %v1023, %v1055
        %v1072 = vadd.f32 %v1024, %v1056
        %v1073 = vadd.f32 %v1025, %v1057
        %v1074 = vadd.f32 %v1026, %v1058
        %v1075 = vadd.f32 %v1027, %v1059
        %v1076 = vadd.f32 %v1028, %v1060
        %v1077 = vadd.f32 %v1029, %v1061
        %v1078 = vadd.f32 %v1030, %v1062
        %1079 = vset.pattern.permute.xlu0 10
        %1080 = vperm.xlu0 %1079, %v611
        %v1081 = vpop.permute.xlu0 %1080
        %1083 = vset.pattern.permute.xlu0 10
        %1084 = vperm.xlu0 %1083, %v612
        %v1085 = vpop.permute.xlu0 %1084
        %v1087 = vperm.slane %v603, 2
        %v1088 = vperm.slane %v604, 2
        %v1089 = vperm.slane %v605, 2
        %v1090 = vperm.slane %v606, 2
        %v1091 = vperm.slane %v607, 2
        %v1092 = vperm.slane %v608, 2
        %v1093 = vperm.slane %v609, 2
        %v1094 = vperm.slane %v610, 2
        %v1095 = vmul.f32 %v1081, %v1087
        %v1096 = vmul.f32 %v1081, %v1088
        %v1097 = vmul.f32 %v1081, %v1089
        %v1098 = vmul.f32 %v1081, %v1090
        %v1099 = vmul.f32 %v1081, %v1091
        %v1100 = vmul.f32 %v1081, %v1092
        %v1101 = vmul.f32 %v1081, %v1093
        %v1102 = vmul.f32 %v1081, %v1094
        %v1103 = vmul.f32 %v1085, %v1087
        %v1104 = vmul.f32 %v1085, %v1088
        %v1105 = vmul.f32 %v1085, %v1089
        %v1106 = vmul.f32 %v1085, %v1090
        %v1107 = vmul.f32 %v1085, %v1091
        %v1108 = vmul.f32 %v1085, %v1092
        %v1109 = vmul.f32 %v1085, %v1093
        %v1110 = vmul.f32 %v1085, %v1094
        %v1111 = vadd.f32 %v1063, %v1095
        %v1112 = vadd.f32 %v1064, %v1096
        %v1113 = vadd.f32 %v1065, %v1097
        %v1114 = vadd.f32 %v1066, %v1098
        %v1115 = vadd.f32 %v1067, %v1099
        %v1116 = vadd.f32 %v1068, %v1100
        %v1117 = vadd.f32 %v1069, %v1101
        %v1118 = vadd.f32 %v1070, %v1102
        %v1119 = vadd.f32 %v1071, %v1103
        %v1120 = vadd.f32 %v1072, %v1104
        %v1121 = vadd.f32 %v1073, %v1105
        %v1122 = vadd.f32 %v1074, %v1106
        %v1123 = vadd.f32 %v1075, %v1107
        %v1124 = vadd.f32 %v1076, %v1108
        %v1125 = vadd.f32 %v1077, %v1109
        %v1126 = vadd.f32 %v1078, %v1110
        %1127 = vset.pattern.permute.xlu0 11
        %1128 = vperm.xlu0 %1127, %v611
        %v1129 = vpop.permute.xlu0 %1128
        %1131 = vset.pattern.permute.xlu0 11
        %1132 = vperm.xlu0 %1131, %v612
        %v1133 = vpop.permute.xlu0 %1132
        %v1135 = vperm.slane %v603, 3
        %v1136 = vperm.slane %v604, 3
        %v1137 = vperm.slane %v605, 3
        %v1138 = vperm.slane %v606, 3
        %v1139 = vperm.slane %v607, 3
        %v1140 = vperm.slane %v608, 3
        %v1141 = vperm.slane %v609, 3
        %v1142 = vperm.slane %v610, 3
        %v1143 = vmul.f32 %v1129, %v1135
        %v1144 = vmul.f32 %v1129, %v1136
        %v1145 = vmul.f32 %v1129, %v1137
        %v1146 = vmul.f32 %v1129, %v1138
        %v1147 = vmul.f32 %v1129, %v1139
        %v1148 = vmul.f32 %v1129, %v1140
        %v1149 = vmul.f32 %v1129, %v1141
        %v1150 = vmul.f32 %v1129, %v1142
        %v1151 = vmul.f32 %v1133, %v1135
        %v1152 = vmul.f32 %v1133, %v1136
        %v1153 = vmul.f32 %v1133, %v1137
        %v1154 = vmul.f32 %v1133, %v1138
        %v1155 = vmul.f32 %v1133, %v1139
        %v1156 = vmul.f32 %v1133, %v1140
        %v1157 = vmul.f32 %v1133, %v1141
        %v1158 = vmul.f32 %v1133, %v1142
        %v1159 = vadd.f32 %v1111, %v1143
        %v1160 = vadd.f32 %v1112, %v1144
        %v1161 = vadd.f32 %v1113, %v1145
        %v1162 = vadd.f32 %v1114, %v1146
        %v1163 = vadd.f32 %v1115, %v1147
        %v1164 = vadd.f32 %v1116, %v1148
        %v1165 = vadd.f32 %v1117, %v1149
        %v1166 = vadd.f32 %v1118, %v1150
        %v1167 = vadd.f32 %v1119, %v1151
        %v1168 = vadd.f32 %v1120, %v1152
        %v1169 = vadd.f32 %v1121, %v1153
        %v1170 = vadd.f32 %v1122, %v1154
        %v1171 = vadd.f32 %v1123, %v1155
        %v1172 = vadd.f32 %v1124, %v1156
        %v1173 = vadd.f32 %v1125, %v1157
        %v1174 = vadd.f32 %v1126, %v1158
        %1175 = vset.pattern.permute.xlu0 12
        %1176 = vperm.xlu0 %1175, %v611
        %v1177 = vpop.permute.xlu0 %1176
        %1179 = vset.pattern.permute.xlu0 12
        %1180 = vperm.xlu0 %1179, %v612
        %v1181 = vpop.permute.xlu0 %1180
        %v1183 = vperm.slane %v603, 4
        %v1184 = vperm.slane %v604, 4
        %v1185 = vperm.slane %v605, 4
        %v1186 = vperm.slane %v606, 4
        %v1187 = vperm.slane %v607, 4
        %v1188 = vperm.slane %v608, 4
        %v1189 = vperm.slane %v609, 4
        %v1190 = vperm.slane %v610, 4
        %v1191 = vmul.f32 %v1177, %v1183
        %v1192 = vmul.f32 %v1177, %v1184
        %v1193 = vmul.f32 %v1177, %v1185
        %v1194 = vmul.f32 %v1177, %v1186
        %v1195 = vmul.f32 %v1177, %v1187
        %v1196 = vmul.f32 %v1177, %v1188
        %v1197 = vmul.f32 %v1177, %v1189
        %v1198 = vmul.f32 %v1177, %v1190
        %v1199 = vmul.f32 %v1181, %v1183
        %v1200 = vmul.f32 %v1181, %v1184
        %v1201 = vmul.f32 %v1181, %v1185
        %v1202 = vmul.f32 %v1181, %v1186
        %v1203 = vmul.f32 %v1181, %v1187
        %v1204 = vmul.f32 %v1181, %v1188
        %v1205 = vmul.f32 %v1181, %v1189
        %v1206 = vmul.f32 %v1181, %v1190
        %v1207 = vadd.f32 %v1159, %v1191
        %v1208 = vadd.f32 %v1160, %v1192
        %v1209 = vadd.f32 %v1161, %v1193
        %v1210 = vadd.f32 %v1162, %v1194
        %v1211 = vadd.f32 %v1163, %v1195
        %v1212 = vadd.f32 %v1164, %v1196
        %v1213 = vadd.f32 %v1165, %v1197
        %v1214 = vadd.f32 %v1166, %v1198
        %v1215 = vadd.f32 %v1167, %v1199
        %v1216 = vadd.f32 %v1168, %v1200
        %v1217 = vadd.f32 %v1169, %v1201
        %v1218 = vadd.f32 %v1170, %v1202
        %v1219 = vadd.f32 %v1171, %v1203
        %v1220 = vadd.f32 %v1172, %v1204
        %v1221 = vadd.f32 %v1173, %v1205
        %v1222 = vadd.f32 %v1174, %v1206
        %1223 = vset.pattern.permute.xlu0 13
        %1224 = vperm.xlu0 %1223, %v611
        %v1225 = vpop.permute.xlu0 %1224
        %1227 = vset.pattern.permute.xlu0 13
        %1228 = vperm.xlu0 %1227, %v612
        %v1229 = vpop.permute.xlu0 %1228
        %v1231 = vperm.slane %v603, 5
        %v1232 = vperm.slane %v604, 5
        %v1233 = vperm.slane %v605, 5
        %v1234 = vperm.slane %v606, 5
        %v1235 = vperm.slane %v607, 5
        %v1236 = vperm.slane %v608, 5
        %v1237 = vperm.slane %v609, 5
        %v1238 = vperm.slane %v610, 5
        %v1239 = vmul.f32 %v1225, %v1231
        %v1240 = vmul.f32 %v1225, %v1232
        %v1241 = vmul.f32 %v1225, %v1233
        %v1242 = vmul.f32 %v1225, %v1234
        %v1243 = vmul.f32 %v1225, %v1235
        %v1244 = vmul.f32 %v1225, %v1236
        %v1245 = vmul.f32 %v1225, %v1237
        %v1246 = vmul.f32 %v1225, %v1238
        %v1247 = vmul.f32 %v1229, %v1231
        %v1248 = vmul.f32 %v1229, %v1232
        %v1249 = vmul.f32 %v1229, %v1233
        %v1250 = vmul.f32 %v1229, %v1234
        %v1251 = vmul.f32 %v1229, %v1235
        %v1252 = vmul.f32 %v1229, %v1236
        %v1253 = vmul.f32 %v1229, %v1237
        %v1254 = vmul.f32 %v1229, %v1238
        %v1255 = vadd.f32 %v1207, %v1239
        %v1256 = vadd.f32 %v1208, %v1240
        %v1257 = vadd.f32 %v1209, %v1241
        %v1258 = vadd.f32 %v1210, %v1242
        %v1259 = vadd.f32 %v1211, %v1243
        %v1260 = vadd.f32 %v1212, %v1244
        %v1261 = vadd.f32 %v1213, %v1245
        %v1262 = vadd.f32 %v1214, %v1246
        %v1263 = vadd.f32 %v1215, %v1247
        %v1264 = vadd.f32 %v1216, %v1248
        %v1265 = vadd.f32 %v1217, %v1249
        %v1266 = vadd.f32 %v1218, %v1250
        %v1267 = vadd.f32 %v1219, %v1251
        %v1268 = vadd.f32 %v1220, %v1252
        %v1269 = vadd.f32 %v1221, %v1253
        %v1270 = vadd.f32 %v1222, %v1254
        %1271 = vset.pattern.permute.xlu0 14
        %1272 = vperm.xlu0 %1271, %v611
        %v1273 = vpop.permute.xlu0 %1272
        %1275 = vset.pattern.permute.xlu0 14
        %1276 = vperm.xlu0 %1275, %v612
        %v1277 = vpop.permute.xlu0 %1276
        %v1279 = vperm.slane %v603, 6
        %v1280 = vperm.slane %v604, 6
        %v1281 = vperm.slane %v605, 6
        %v1282 = vperm.slane %v606, 6
        %v1283 = vperm.slane %v607, 6
        %v1284 = vperm.slane %v608, 6
        %v1285 = vperm.slane %v609, 6
        %v1286 = vperm.slane %v610, 6
        %v1287 = vmul.f32 %v1273, %v1279
        %v1288 = vmul.f32 %v1273, %v1280
        %v1289 = vmul.f32 %v1273, %v1281
        %v1290 = vmul.f32 %v1273, %v1282
        %v1291 = vmul.f32 %v1273, %v1283
        %v1292 = vmul.f32 %v1273, %v1284
        %v1293 = vmul.f32 %v1273, %v1285
        %v1294 = vmul.f32 %v1273, %v1286
        %v1295 = vmul.f32 %v1277, %v1279
        %v1296 = vmul.f32 %v1277, %v1280
        %v1297 = vmul.f32 %v1277, %v1281
        %v1298 = vmul.f32 %v1277, %v1282
        %v1299 = vmul.f32 %v1277, %v1283
        %v1300 = vmul.f32 %v1277, %v1284
        %v1301 = vmul.f32 %v1277, %v1285
        %v1302 = vmul.f32 %v1277, %v1286
        %v1303 = vadd.f32 %v1255, %v1287
        %v1304 = vadd.f32 %v1256, %v1288
        %v1305 = vadd.f32 %v1257, %v1289
        %v1306 = vadd.f32 %v1258, %v1290
        %v1307 = vadd.f32 %v1259, %v1291
        %v1308 = vadd.f32 %v1260, %v1292
        %v1309 = vadd.f32 %v1261, %v1293
        %v1310 = vadd.f32 %v1262, %v1294
        %v1311 = vadd.f32 %v1263, %v1295
        %v1312 = vadd.f32 %v1264, %v1296
        %v1313 = vadd.f32 %v1265, %v1297
        %v1314 = vadd.f32 %v1266, %v1298
        %v1315 = vadd.f32 %v1267, %v1299
        %v1316 = vadd.f32 %v1268, %v1300
        %v1317 = vadd.f32 %v1269, %v1301
        %v1318 = vadd.f32 %v1270, %v1302
        %1319 = vset.pattern.permute.xlu0 15
        %1320 = vperm.xlu0 %1319, %v611
        %v1321 = vpop.permute.xlu0 %1320
        %1323 = vset.pattern.permute.xlu0 15
        %1324 = vperm.xlu0 %1323, %v612
        %v1325 = vpop.permute.xlu0 %1324
        %v1327 = vperm.slane %v603, 7
        %v1328 = vperm.slane %v604, 7
        %v1329 = vperm.slane %v605, 7
        %v1330 = vperm.slane %v606, 7
        %v1331 = vperm.slane %v607, 7
        %v1332 = vperm.slane %v608, 7
        %v1333 = vperm.slane %v609, 7
        %v1334 = vperm.slane %v610, 7
        %v1335 = vmul.f32 %v1321, %v1327
        %v1336 = vmul.f32 %v1321, %v1328
        %v1337 = vmul.f32 %v1321, %v1329
        %v1338 = vmul.f32 %v1321, %v1330
        %v1339 = vmul.f32 %v1321, %v1331
        %v1340 = vmul.f32 %v1321, %v1332
        %v1341 = vmul.f32 %v1321, %v1333
        %v1342 = vmul.f32 %v1321, %v1334
        %v1343 = vmul.f32 %v1325, %v1327
        %v1344 = vmul.f32 %v1325, %v1328
        %v1345 = vmul.f32 %v1325, %v1329
        %v1346 = vmul.f32 %v1325, %v1330
        %v1347 = vmul.f32 %v1325, %v1331
        %v1348 = vmul.f32 %v1325, %v1332
        %v1349 = vmul.f32 %v1325, %v1333
        %v1350 = vmul.f32 %v1325, %v1334
        %v1351 = vadd.f32 %v1303, %v1335
        %v1352 = vadd.f32 %v1304, %v1336
        %v1353 = vadd.f32 %v1305, %v1337
        %v1354 = vadd.f32 %v1306, %v1338
        %v1355 = vadd.f32 %v1307, %v1339
        %v1356 = vadd.f32 %v1308, %v1340
        %v1357 = vadd.f32 %v1309, %v1341
        %v1358 = vadd.f32 %v1310, %v1342
        %v1359 = vadd.f32 %v1311, %v1343
        %v1360 = vadd.f32 %v1312, %v1344
        %v1361 = vadd.f32 %v1313, %v1345
        %v1362 = vadd.f32 %v1314, %v1346
        %v1363 = vadd.f32 %v1315, %v1347
        %v1364 = vadd.f32 %v1316, %v1348
        %v1365 = vadd.f32 %v1317, %v1349
        %v1366 = vadd.f32 %v1318, %v1350
        %v1367 = vld [vmem:[%s4] sm:$0xff]
        %v1368 = vld [vmem:[%s4 + $0x8] sm:$0xff]
        %1370 = vset.pattern.permute.xlu0 0
        %1371 = vperm.xlu0 %1370, %v1367
        %v1372 = vpop.permute.xlu0 %1371
        %1375 = vset.pattern.permute.xlu0 0
        %1376 = vperm.xlu0 %1375, %v1368
        %v1377 = vpop.permute.xlu0 %1376
        %v1379 = vadd.f32 %v1351, %v1372
        %v1380 = vadd.f32 %v1352, %v1372
        %v1381 = vadd.f32 %v1353, %v1372
        %v1382 = vadd.f32 %v1354, %v1372
        %v1383 = vadd.f32 %v1355, %v1372
        %v1384 = vadd.f32 %v1356, %v1372
        %v1385 = vadd.f32 %v1357, %v1372
        %v1386 = vadd.f32 %v1358, %v1372
        %v1387 = vadd.f32 %v1359, %v1377
        %v1388 = vadd.f32 %v1360, %v1377
        %v1389 = vadd.f32 %v1361, %v1377
        %v1390 = vadd.f32 %v1362, %v1377
        %v1391 = vadd.f32 %v1363, %v1377
        %v1392 = vadd.f32 %v1364, %v1377
        %v1393 = vadd.f32 %v1365, %v1377
        %v1394 = vadd.f32 %v1366, %v1377
        %v1395 = vmax.f32 %v1379, 0.0
        %v1396 = vmax.f32 %v1380, 0.0
        %v1397 = vmax.f32 %v1381, 0.0
        %v1398 = vmax.f32 %v1382, 0.0
        %v1399 = vmax.f32 %v1383, 0.0
        %v1400 = vmax.f32 %v1384, 0.0
        %v1401 = vmax.f32 %v1385, 0.0
        %v1402 = vmax.f32 %v1386, 0.0
        %v1403 = vmax.f32 %v1387, 0.0
        %v1404 = vmax.f32 %v1388, 0.0
        %v1405 = vmax.f32 %v1389, 0.0
        %v1406 = vmax.f32 %v1390, 0.0
        %v1407 = vmax.f32 %v1391, 0.0
        %v1408 = vmax.f32 %v1392, 0.0
        %v1409 = vmax.f32 %v1393, 0.0
        %v1410 = vmax.f32 %v1394, 0.0
        %v1411 = vld [vmem:[%s5] sm:$0x7]
        %1413 = vset.pattern.permute.xlu0 0
        %1414 = vperm.xlu0 %1413, %v1411
        %v1415 = vpop.permute.xlu0 %1414
        %v1417 = vperm.slane %v1395, 0
        %v1418 = vperm.slane %v1396, 0
        %v1419 = vperm.slane %v1397, 0
        %v1420 = vperm.slane %v1398, 0
        %v1421 = vperm.slane %v1399, 0
        %v1422 = vperm.slane %v1400, 0
        %v1423 = vperm.slane %v1401, 0
        %v1424 = vperm.slane %v1402, 0
        %v1425 = vmul.f32 %v1415, %v1417
        %v1426 = vmul.f32 %v1415, %v1418
        %v1427 = vmul.f32 %v1415, %v1419
        %v1428 = vmul.f32 %v1415, %v1420
        %v1429 = vmul.f32 %v1415, %v1421
        %v1430 = vmul.f32 %v1415, %v1422
        %v1431 = vmul.f32 %v1415, %v1423
        %v1432 = vmul.f32 %v1415, %v1424
        %1433 = vset.pattern.permute.xlu0 1
        %1434 = vperm.xlu0 %1433, %v1411
        %v1435 = vpop.permute.xlu0 %1434
        %v1437 = vperm.slane %v1395, 1
        %v1438 = vperm.slane %v1396, 1
        %v1439 = vperm.slane %v1397, 1
        %v1440 = vperm.slane %v1398, 1
        %v1441 = vperm.slane %v1399, 1
        %v1442 = vperm.slane %v1400, 1
        %v1443 = vperm.slane %v1401, 1
        %v1444 = vperm.slane %v1402, 1
        %v1445 = vmul.f32 %v1435, %v1437
        %v1446 = vmul.f32 %v1435, %v1438
        %v1447 = vmul.f32 %v1435, %v1439
        %v1448 = vmul.f32 %v1435, %v1440
        %v1449 = vmul.f32 %v1435, %v1441
        %v1450 = vmul.f32 %v1435, %v1442
        %v1451 = vmul.f32 %v1435, %v1443
        %v1452 = vmul.f32 %v1435, %v1444
        %v1453 = vadd.f32 %v1425, %v1445
        %v1454 = vadd.f32 %v1426, %v1446
        %v1455 = vadd.f32 %v1427, %v1447
        %v1456 = vadd.f32 %v1428, %v1448
        %v1457 = vadd.f32 %v1429, %v1449
        %v1458 = vadd.f32 %v1430, %v1450
        %v1459 = vadd.f32 %v1431, %v1451
        %v1460 = vadd.f32 %v1432, %v1452
        %1461 = vset.pattern.permute.xlu0 2
        %1462 = vperm.xlu0 %1461, %v1411
        %v1463 = vpop.permute.xlu0 %1462
        %v1465 = vperm.slane %v1395, 2
        %v1466 = vperm.slane %v1396, 2
        %v1467 = vperm.slane %v1397, 2
        %v1468 = vperm.slane %v1398, 2
        %v1469 = vperm.slane %v1399, 2
        %v1470 = vperm.slane %v1400, 2
        %v1471 = vperm.slane %v1401, 2
        %v1472 = vperm.slane %v1402, 2
        %v1473 = vmul.f32 %v1463, %v1465
        %v1474 = vmul.f32 %v1463, %v1466
        %v1475 = vmul.f32 %v1463, %v1467
        %v1476 = vmul.f32 %v1463, %v1468
        %v1477 = vmul.f32 %v1463, %v1469
        %v1478 = vmul.f32 %v1463, %v1470
        %v1479 = vmul.f32 %v1463, %v1471
        %v1480 = vmul.f32 %v1463, %v1472
        %v1481 = vadd.f32 %v1453, %v1473
        %v1482 = vadd.f32 %v1454, %v1474
        %v1483 = vadd.f32 %v1455, %v1475
        %v1484 = vadd.f32 %v1456, %v1476
        %v1485 = vadd.f32 %v1457, %v1477
        %v1486 = vadd.f32 %v1458, %v1478
        %v1487 = vadd.f32 %v1459, %v1479
        %v1488 = vadd.f32 %v1460, %v1480
        %1489 = vset.pattern.permute.xlu0 3
        %1490 = vperm.xlu0 %1489, %v1411
        %v1491 = vpop.permute.xlu0 %1490
        %v1493 = vperm.slane %v1395, 3
        %v1494 = vperm.slane %v1396, 3
        %v1495 = vperm.slane %v1397, 3
        %v1496 = vperm.slane %v1398, 3
        %v1497 = vperm.slane %v1399, 3
        %v1498 = vperm.slane %v1400, 3
        %v1499 = vperm.slane %v1401, 3
        %v1500 = vperm.slane %v1402, 3
        %v1501 = vmul.f32 %v1491, %v1493
        %v1502 = vmul.f32 %v1491, %v1494
        %v1503 = vmul.f32 %v1491, %v1495
        %v1504 = vmul.f32 %v1491, %v1496
        %v1505 = vmul.f32 %v1491, %v1497
        %v1506 = vmul.f32 %v1491, %v1498
        %v1507 = vmul.f32 %v1491, %v1499
        %v1508 = vmul.f32 %v1491, %v1500
        %v1509 = vadd.f32 %v1481, %v1501
        %v1510 = vadd.f32 %v1482, %v1502
        %v1511 = vadd.f32 %v1483, %v1503
        %v1512 = vadd.f32 %v1484, %v1504
        %v1513 = vadd.f32 %v1485, %v1505
        %v1514 = vadd.f32 %v1486, %v1506
        %v1515 = vadd.f32 %v1487, %v1507
        %v1516 = vadd.f32 %v1488, %v1508
        %1517 = vset.pattern.permute.xlu0 4
        %1518 = vperm.xlu0 %1517, %v1411
        %v1519 = vpop.permute.xlu0 %1518
        %v1521 = vperm.slane %v1395, 4
        %v1522 = vperm.slane %v1396, 4
        %v1523 = vperm.slane %v1397, 4
        %v1524 = vperm.slane %v1398, 4
        %v1525 = vperm.slane %v1399, 4
        %v1526 = vperm.slane %v1400, 4
        %v1527 = vperm.slane %v1401, 4
        %v1528 = vperm.slane %v1402, 4
        %v1529 = vmul.f32 %v1519, %v1521
        %v1530 = vmul.f32 %v1519, %v1522
        %v1531 = vmul.f32 %v1519, %v1523
        %v1532 = vmul.f32 %v1519, %v1524
        %v1533 = vmul.f32 %v1519, %v1525
        %v1534 = vmul.f32 %v1519, %v1526
        %v1535 = vmul.f32 %v1519, %v1527
        %v1536 = vmul.f32 %v1519, %v1528
        %v1537 = vadd.f32 %v1509, %v1529
        %v1538 = vadd.f32 %v1510, %v1530
        %v1539 = vadd.f32 %v1511, %v1531
        %v1540 = vadd.f32 %v1512, %v1532
        %v1541 = vadd.f32 %v1513, %v1533
        %v1542 = vadd.f32 %v1514, %v1534
        %v1543 = vadd.f32 %v1515, %v1535
        %v1544 = vadd.f32 %v1516, %v1536
        %1545 = vset.pattern.permute.xlu0 5
        %1546 = vperm.xlu0 %1545, %v1411
        %v1547 = vpop.permute.xlu0 %1546
        %v1549 = vperm.slane %v1395, 5
        %v1550 = vperm.slane %v1396, 5
        %v1551 = vperm.slane %v1397, 5
        %v1552 = vperm.slane %v1398, 5
        %v1553 = vperm.slane %v1399, 5
        %v1554 = vperm.slane %v1400, 5
        %v1555 = vperm.slane %v1401, 5
        %v1556 = vperm.slane %v1402, 5
        %v1557 = vmul.f32 %v1547, %v1549
        %v1558 = vmul.f32 %v1547, %v1550
        %v1559 = vmul.f32 %v1547, %v1551
        %v1560 = vmul.f32 %v1547, %v1552
        %v1561 = vmul.f32 %v1547, %v1553
        %v1562 = vmul.f32 %v1547, %v1554
        %v1563 = vmul.f32 %v1547, %v1555
        %v1564 = vmul.f32 %v1547, %v1556
        %v1565 = vadd.f32 %v1537, %v1557
        %v1566 = vadd.f32 %v1538, %v1558
        %v1567 = vadd.f32 %v1539, %v1559
        %v1568 = vadd.f32 %v1540, %v1560
        %v1569 = vadd.f32 %v1541, %v1561
        %v1570 = vadd.f32 %v1542, %v1562
        %v1571 = vadd.f32 %v1543, %v1563
        %v1572 = vadd.f32 %v1544, %v1564
        %1573 = vset.pattern.permute.xlu0 6
        %1574 = vperm.xlu0 %1573, %v1411
        %v1575 = vpop.permute.xlu0 %1574
        %v1577 = vperm.slane %v1395, 6
        %v1578 = vperm.slane %v1396, 6
        %v1579 = vperm.slane %v1397, 6
        %v1580 = vperm.slane %v1398, 6
        %v1581 = vperm.slane %v1399, 6
        %v1582 = vperm.slane %v1400, 6
        %v1583 = vperm.slane %v1401, 6
        %v1584 = vperm.slane %v1402, 6
        %v1585 = vmul.f32 %v1575, %v1577
        %v1586 = vmul.f32 %v1575, %v1578
        %v1587 = vmul.f32 %v1575, %v1579
        %v1588 = vmul.f32 %v1575, %v1580
        %v1589 = vmul.f32 %v1575, %v1581
        %v1590 = vmul.f32 %v1575, %v1582
        %v1591 = vmul.f32 %v1575, %v1583
        %v1592 = vmul.f32 %v1575, %v1584
        %v1593 = vadd.f32 %v1565, %v1585
        %v1594 = vadd.f32 %v1566, %v1586
        %v1595 = vadd.f32 %v1567, %v1587
        %v1596 = vadd.f32 %v1568, %v1588
        %v1597 = vadd.f32 %v1569, %v1589
        %v1598 = vadd.f32 %v1570, %v1590
        %v1599 = vadd.f32 %v1571, %v1591
        %v1600 = vadd.f32 %v1572, %v1592
        %1601 = vset.pattern.permute.xlu0 7
        %1602 = vperm.xlu0 %1601, %v1411
        %v1603 = vpop.permute.xlu0 %1602
        %v1605 = vperm.slane %v1395, 7
        %v1606 = vperm.slane %v1396, 7
        %v1607 = vperm.slane %v1397, 7
        %v1608 = vperm.slane %v1398, 7
        %v1609 = vperm.slane %v1399, 7
        %v1610 = vperm.slane %v1400, 7
        %v1611 = vperm.slane %v1401, 7
        %v1612 = vperm.slane %v1402, 7
        %v1613 = vmul.f32 %v1603, %v1605
        %v1614 = vmul.f32 %v1603, %v1606
        %v1615 = vmul.f32 %v1603, %v1607
        %v1616 = vmul.f32 %v1603, %v1608
        %v1617 = vmul.f32 %v1603, %v1609
        %v1618 = vmul.f32 %v1603, %v1610
        %v1619 = vmul.f32 %v1603, %v1611
        %v1620 = vmul.f32 %v1603, %v1612
        %v1621 = vadd.f32 %v1593, %v1613
        %v1622 = vadd.f32 %v1594, %v1614
        %v1623 = vadd.f32 %v1595, %v1615
        %v1624 = vadd.f32 %v1596, %v1616
        %v1625 = vadd.f32 %v1597, %v1617
        %v1626 = vadd.f32 %v1598, %v1618
        %v1627 = vadd.f32 %v1599, %v1619
        %v1628 = vadd.f32 %v1600, %v1620
        %1629 = vset.pattern.permute.xlu0 8
        %1630 = vperm.xlu0 %1629, %v1411
        %v1631 = vpop.permute.xlu0 %1630
        %v1633 = vperm.slane %v1403, 0
        %v1634 = vperm.slane %v1404, 0
        %v1635 = vperm.slane %v1405, 0
        %v1636 = vperm.slane %v1406, 0
        %v1637 = vperm.slane %v1407, 0
        %v1638 = vperm.slane %v1408, 0
        %v1639 = vperm.slane %v1409, 0
        %v1640 = vperm.slane %v1410, 0
        %v1641 = vmul.f32 %v1631, %v1633
        %v1642 = vmul.f32 %v1631, %v1634
        %v1643 = vmul.f32 %v1631, %v1635
        %v1644 = vmul.f32 %v1631, %v1636
        %v1645 = vmul.f32 %v1631, %v1637
        %v1646 = vmul.f32 %v1631, %v1638
        %v1647 = vmul.f32 %v1631, %v1639
        %v1648 = vmul.f32 %v1631, %v1640
        %v1649 = vadd.f32 %v1621, %v1641
        %v1650 = vadd.f32 %v1622, %v1642
        %v1651 = vadd.f32 %v1623, %v1643
        %v1652 = vadd.f32 %v1624, %v1644
        %v1653 = vadd.f32 %v1625, %v1645
        %v1654 = vadd.f32 %v1626, %v1646
        %v1655 = vadd.f32 %v1627, %v1647
        %v1656 = vadd.f32 %v1628, %v1648
        %1657 = vset.pattern.permute.xlu0 9
        %1658 = vperm.xlu0 %1657, %v1411
        %v1659 = vpop.permute.xlu0 %1658
        %v1661 = vperm.slane %v1403, 1
        %v1662 = vperm.slane %v1404, 1
        %v1663 = vperm.slane %v1405, 1
        %v1664 = vperm.slane %v1406, 1
        %v1665 = vperm.slane %v1407, 1
        %v1666 = vperm.slane %v1408, 1
        %v1667 = vperm.slane %v1409, 1
        %v1668 = vperm.slane %v1410, 1
        %v1669 = vmul.f32 %v1659, %v1661
        %v1670 = vmul.f32 %v1659, %v1662
        %v1671 = vmul.f32 %v1659, %v1663
        %v1672 = vmul.f32 %v1659, %v1664
        %v1673 = vmul.f32 %v1659, %v1665
        %v1674 = vmul.f32 %v1659, %v1666
        %v1675 = vmul.f32 %v1659, %v1667
        %v1676 = vmul.f32 %v1659, %v1668
        %v1677 = vadd.f32 %v1649, %v1669
        %v1678 = vadd.f32 %v1650, %v1670
        %v1679 = vadd.f32 %v1651, %v1671
        %v1680 = vadd.f32 %v1652, %v1672
        %v1681 = vadd.f32 %v1653, %v1673
        %v1682 = vadd.f32 %v1654, %v1674
        %v1683 = vadd.f32 %v1655, %v1675
        %v1684 = vadd.f32 %v1656, %v1676
        %1685 = vset.pattern.permute.xlu0 10
        %1686 = vperm.xlu0 %1685, %v1411
        %v1687 = vpop.permute.xlu0 %1686
        %v1689 = vperm.slane %v1403, 2
        %v1690 = vperm.slane %v1404, 2
        %v1691 = vperm.slane %v1405, 2
        %v1692 = vperm.slane %v1406, 2
        %v1693 = vperm.slane %v1407, 2
        %v1694 = vperm.slane %v1408, 2
        %v1695 = vperm.slane %v1409, 2
        %v1696 = vperm.slane %v1410, 2
        %v1697 = vmul.f32 %v1687, %v1689
        %v1698 = vmul.f32 %v1687, %v1690
        %v1699 = vmul.f32 %v1687, %v1691
        %v1700 = vmul.f32 %v1687, %v1692
        %v1701 = vmul.f32 %v1687, %v1693
        %v1702 = vmul.f32 %v1687, %v1694
        %v1703 = vmul.f32 %v1687, %v1695
        %v1704 = vmul.f32 %v1687, %v1696
        %v1705 = vadd.f32 %v1677, %v1697
        %v1706 = vadd.f32 %v1678, %v1698
        %v1707 = vadd.f32 %v1679, %v1699
        %v1708 = vadd.f32 %v1680, %v1700
        %v1709 = vadd.f32 %v1681, %v1701
        %v1710 = vadd.f32 %v1682, %v1702
        %v1711 = vadd.f32 %v1683, %v1703
        %v1712 = vadd.f32 %v1684, %v1704
        %1713 = vset.pattern.permute.xlu0 11
        %1714 = vperm.xlu0 %1713, %v1411
        %v1715 = vpop.permute.xlu0 %1714
        %v1717 = vperm.slane %v1403, 3
        %v1718 = vperm.slane %v1404, 3
        %v1719 = vperm.slane %v1405, 3
        %v1720 = vperm.slane %v1406, 3
        %v1721 = vperm.slane %v1407, 3
        %v1722 = vperm.slane %v1408, 3
        %v1723 = vperm.slane %v1409, 3
        %v1724 = vperm.slane %v1410, 3
        %v1725 = vmul.f32 %v1715, %v1717
        %v1726 = vmul.f32 %v1715, %v1718
        %v1727 = vmul.f32 %v1715, %v1719
        %v1728 = vmul.f32 %v1715, %v1720
        %v1729 = vmul.f32 %v1715, %v1721
        %v1730 = vmul.f32 %v1715, %v1722
        %v1731 = vmul.f32 %v1715, %v1723
        %v1732 = vmul.f32 %v1715, %v1724
        %v1733 = vadd.f32 %v1705, %v1725
        %v1734 = vadd.f32 %v1706, %v1726
        %v1735 = vadd.f32 %v1707, %v1727
        %v1736 = vadd.f32 %v1708, %v1728
        %v1737 = vadd.f32 %v1709, %v1729
        %v1738 = vadd.f32 %v1710, %v1730
        %v1739 = vadd.f32 %v1711, %v1731
        %v1740 = vadd.f32 %v1712, %v1732
        %1741 = vset.pattern.permute.xlu0 12
        %1742 = vperm.xlu0 %1741, %v1411
        %v1743 = vpop.permute.xlu0 %1742
        %v1745 = vperm.slane %v1403, 4
        %v1746 = vperm.slane %v1404, 4
        %v1747 = vperm.slane %v1405, 4
        %v1748 = vperm.slane %v1406, 4
        %v1749 = vperm.slane %v1407, 4
        %v1750 = vperm.slane %v1408, 4
        %v1751 = vperm.slane %v1409, 4
        %v1752 = vperm.slane %v1410, 4
        %v1753 = vmul.f32 %v1743, %v1745
        %v1754 = vmul.f32 %v1743, %v1746
        %v1755 = vmul.f32 %v1743, %v1747
        %v1756 = vmul.f32 %v1743, %v1748
        %v1757 = vmul.f32 %v1743, %v1749
        %v1758 = vmul.f32 %v1743, %v1750
        %v1759 = vmul.f32 %v1743, %v1751
        %v1760 = vmul.f32 %v1743, %v1752
        %v1761 = vadd.f32 %v1733, %v1753
        %v1762 = vadd.f32 %v1734, %v1754
        %v1763 = vadd.f32 %v1735, %v1755
        %v1764 = vadd.f32 %v1736, %v1756
        %v1765 = vadd.f32 %v1737, %v1757
        %v1766 = vadd.f32 %v1738, %v1758
        %v1767 = vadd.f32 %v1739, %v1759
        %v1768 = vadd.f32 %v1740, %v1760
        %1769 = vset.pattern.permute.xlu0 13
        %1770 = vperm.xlu0 %1769, %v1411
        %v1771 = vpop.permute.xlu0 %1770
        %v1773 = vperm.slane %v1403, 5
        %v1774 = vperm.slane %v1404, 5
        %v1775 = vperm.slane %v1405, 5
        %v1776 = vperm.slane %v1406, 5
        %v1777 = vperm.slane %v1407, 5
        %v1778 = vperm.slane %v1408, 5
        %v1779 = vperm.slane %v1409, 5
        %v1780 = vperm.slane %v1410, 5
        %v1781 = vmul.f32 %v1771, %v1773
        %v1782 = vmul.f32 %v1771, %v1774
        %v1783 = vmul.f32 %v1771, %v1775
        %v1784 = vmul.f32 %v1771, %v1776
        %v1785 = vmul.f32 %v1771, %v1777
        %v1786 = vmul.f32 %v1771, %v1778
        %v1787 = vmul.f32 %v1771, %v1779
        %v1788 = vmul.f32 %v1771, %v1780
        %v1789 = vadd.f32 %v1761, %v1781
        %v1790 = vadd.f32 %v1762, %v1782
        %v1791 = vadd.f32 %v1763, %v1783
        %v1792 = vadd.f32 %v1764, %v1784
        %v1793 = vadd.f32 %v1765, %v1785
        %v1794 = vadd.f32 %v1766, %v1786
        %v1795 = vadd.f32 %v1767, %v1787
        %v1796 = vadd.f32 %v1768, %v1788
        %1797 = vset.pattern.permute.xlu0 14
        %1798 = vperm.xlu0 %1797, %v1411
        %v1799 = vpop.permute.xlu0 %1798
        %v1801 = vperm.slane %v1403, 6
        %v1802 = vperm.slane %v1404, 6
        %v1803 = vperm.slane %v1405, 6
        %v1804 = vperm.slane %v1406, 6
        %v1805 = vperm.slane %v1407, 6
        %v1806 = vperm.slane %v1408, 6
        %v1807 = vperm.slane %v1409, 6
        %v1808 = vperm.slane %v1410, 6
        %v1809 = vmul.f32 %v1799, %v1801
        %v1810 = vmul.f32 %v1799, %v1802
        %v1811 = vmul.f32 %v1799, %v1803
        %v1812 = vmul.f32 %v1799, %v1804
        %v1813 = vmul.f32 %v1799, %v1805
        %v1814 = vmul.f32 %v1799, %v1806
        %v1815 = vmul.f32 %v1799, %v1807
        %v1816 = vmul.f32 %v1799, %v1808
        %v1817 = vadd.f32 %v1789, %v1809
        %v1818 = vadd.f32 %v1790, %v1810
        %v1819 = vadd.f32 %v1791, %v1811
        %v1820 = vadd.f32 %v1792, %v1812
        %v1821 = vadd.f32 %v1793, %v1813
        %v1822 = vadd.f32 %v1794, %v1814
        %v1823 = vadd.f32 %v1795, %v1815
        %v1824 = vadd.f32 %v1796, %v1816
        %1825 = vset.pattern.permute.xlu0 15
        %1826 = vperm.xlu0 %1825, %v1411
        %v1827 = vpop.permute.xlu0 %1826
        %v1829 = vperm.slane %v1403, 7
        %v1830 = vperm.slane %v1404, 7
        %v1831 = vperm.slane %v1405, 7
        %v1832 = vperm.slane %v1406, 7
        %v1833 = vperm.slane %v1407, 7
        %v1834 = vperm.slane %v1408, 7
        %v1835 = vperm.slane %v1409, 7
        %v1836 = vperm.slane %v1410, 7
        %v1837 = vmul.f32 %v1827, %v1829
        %v1838 = vmul.f32 %v1827, %v1830
        %v1839 = vmul.f32 %v1827, %v1831
        %v1840 = vmul.f32 %v1827, %v1832
        %v1841 = vmul.f32 %v1827, %v1833
        %v1842 = vmul.f32 %v1827, %v1834
        %v1843 = vmul.f32 %v1827, %v1835
        %v1844 = vmul.f32 %v1827, %v1836
        %v1845 = vadd.f32 %v1817, %v1837
        %v1846 = vadd.f32 %v1818, %v1838
        %v1847 = vadd.f32 %v1819, %v1839
        %v1848 = vadd.f32 %v1820, %v1840
        %v1849 = vadd.f32 %v1821, %v1841
        %v1850 = vadd.f32 %v1822, %v1842
        %v1851 = vadd.f32 %v1823, %v1843
        %v1852 = vadd.f32 %v1824, %v1844
        %v1853 = vld [vmem:[%s6] sm:$0x7]
        %1855 = vset.pattern.permute.xlu0 0
        %1856 = vperm.xlu0 %1855, %v1853
        %v1857 = vpop.permute.xlu0 %1856
        %v1859 = vadd.f32 %v1845, %v1857
        %v1860 = vadd.f32 %v1846, %v1857
        %v1861 = vadd.f32 %v1847, %v1857
        %v1862 = vadd.f32 %v1848, %v1857
        %v1863 = vadd.f32 %v1849, %v1857
        %v1864 = vadd.f32 %v1850, %v1857
        %v1865 = vadd.f32 %v1851, %v1857
        %v1866 = vadd.f32 %v1852, %v1857
        %v1875 = vrot.slane %v1860, 4
        %v1876 = vrot.slane %v1862, 4
        %v1877 = vrot.slane %v1864, 4
        %v1878 = vrot.slane %v1866, 4
        %vm1879 = vcmask 1043456
        %v1880 = vsel %vm1879, %v1859, %v1875
        %v1881 = vsel %vm1879, %v1861, %v1876
        %v1882 = vsel %vm1879, %v1863, %v1877
        %v1883 = vsel %vm1879, %v1865, %v1878
        %1888 = vst [vmem:[%s539] sm:$0x77] %v1880
        %1889 = vst [vmem:[%s539 + $0x8] sm:$0x77] %v1881
        %1890 = vst [vmem:[%s539 + $0x10] sm:$0x77] %v1882
        %1891 = vst [vmem:[%s539 + $0x18] sm:$0x77] %v1883
        %v1892 = vld [vmem:[%s7] sm:$0xff]
        %v1893 = vld [vmem:[%s7 + $0x8] sm:$0xff]
        %v1894 = vld [vmem:[%s530] sm:$0xff]
        %v1895 = vld [vmem:[%s530 + $0x8] sm:$0xff]
        %1897 = vset.pattern.permute.xlu0 0
        %1898 = vperm.xlu0 %1897, %v1892
        %v1899 = vpop.permute.xlu0 %1898
        %1902 = vset.pattern.permute.xlu0 0
        %1903 = vperm.xlu0 %1902, %v1893
        %v1904 = vpop.permute.xlu0 %1903
        %v1906 = vperm.slane %v1859, 0
        %v1907 = vperm.slane %v1860, 0
        %v1908 = vperm.slane %v1861, 0
        %v1909 = vperm.slane %v1862, 0
        %v1910 = vperm.slane %v1863, 0
        %v1911 = vperm.slane %v1864, 0
        %v1912 = vperm.slane %v1865, 0
        %v1913 = vperm.slane %v1866, 0
        %v1914 = vmul.f32 %v1899, %v1906
        %v1915 = vmul.f32 %v1899, %v1907
        %v1916 = vmul.f32 %v1899, %v1908
        %v1917 = vmul.f32 %v1899, %v1909
        %v1918 = vmul.f32 %v1899, %v1910
        %v1919 = vmul.f32 %v1899, %v1911
        %v1920 = vmul.f32 %v1899, %v1912
        %v1921 = vmul.f32 %v1899, %v1913
        %v1922 = vmul.f32 %v1904, %v1906
        %v1923 = vmul.f32 %v1904, %v1907
        %v1924 = vmul.f32 %v1904, %v1908
        %v1925 = vmul.f32 %v1904, %v1909
        %v1926 = vmul.f32 %v1904, %v1910
        %v1927 = vmul.f32 %v1904, %v1911
        %v1928 = vmul.f32 %v1904, %v1912
        %v1929 = vmul.f32 %v1904, %v1913
        %1931 = vset.pattern.permute.xlu0 0
        %1932 = vperm.xlu0 %1931, %v1894
        %v1933 = vpop.permute.xlu0 %1932
        %1936 = vset.pattern.permute.xlu0 0
        %1937 = vperm.xlu0 %1936, %v1895
        %v1938 = vpop.permute.xlu0 %1937
        %v1940 = vadd.f32 %v1933, %v1914
        %v1941 = vadd.f32 %v1933, %v1915
        %v1942 = vadd.f32 %v1933, %v1916
        %v1943 = vadd.f32 %v1933, %v1917
        %v1944 = vadd.f32 %v1933, %v1918
        %v1945 = vadd.f32 %v1933, %v1919
        %v1946 = vadd.f32 %v1933, %v1920
        %v1947 = vadd.f32 %v1933, %v1921
        %v1948 = vadd.f32 %v1938, %v1922
        %v1949 = vadd.f32 %v1938, %v1923
        %v1950 = vadd.f32 %v1938, %v1924
        %v1951 = vadd.f32 %v1938, %v1925
        %v1952 = vadd.f32 %v1938, %v1926
        %v1953 = vadd.f32 %v1938, %v1927
        %v1954 = vadd.f32 %v1938, %v1928
        %v1955 = vadd.f32 %v1938, %v1929
        %1956 = vset.pattern.permute.xlu0 1
        %1957 = vperm.xlu0 %1956, %v1892
        %v1958 = vpop.permute.xlu0 %1957
        %1960 = vset.pattern.permute.xlu0 1
        %1961 = vperm.xlu0 %1960, %v1893
        %v1962 = vpop.permute.xlu0 %1961
        %v1964 = vperm.slane %v1859, 1
        %v1965 = vperm.slane %v1860, 1
        %v1966 = vperm.slane %v1861, 1
        %v1967 = vperm.slane %v1862, 1
        %v1968 = vperm.slane %v1863, 1
        %v1969 = vperm.slane %v1864, 1
        %v1970 = vperm.slane %v1865, 1
        %v1971 = vperm.slane %v1866, 1
        %v1972 = vmul.f32 %v1958, %v1964
        %v1973 = vmul.f32 %v1958, %v1965
        %v1974 = vmul.f32 %v1958, %v1966
        %v1975 = vmul.f32 %v1958, %v1967
        %v1976 = vmul.f32 %v1958, %v1968
        %v1977 = vmul.f32 %v1958, %v1969
        %v1978 = vmul.f32 %v1958, %v1970
        %v1979 = vmul.f32 %v1958, %v1971
        %v1980 = vmul.f32 %v1962, %v1964
        %v1981 = vmul.f32 %v1962, %v1965
        %v1982 = vmul.f32 %v1962, %v1966
        %v1983 = vmul.f32 %v1962, %v1967
        %v1984 = vmul.f32 %v1962, %v1968
        %v1985 = vmul.f32 %v1962, %v1969
        %v1986 = vmul.f32 %v1962, %v1970
        %v1987 = vmul.f32 %v1962, %v1971
        %v1988 = vadd.f32 %v1940, %v1972
        %v1989 = vadd.f32 %v1941, %v1973
        %v1990 = vadd.f32 %v1942, %v1974
        %v1991 = vadd.f32 %v1943, %v1975
        %v1992 = vadd.f32 %v1944, %v1976
        %v1993 = vadd.f32 %v1945, %v1977
        %v1994 = vadd.f32 %v1946, %v1978
        %v1995 = vadd.f32 %v1947, %v1979
        %v1996 = vadd.f32 %v1948, %v1980
        %v1997 = vadd.f32 %v1949, %v1981
        %v1998 = vadd.f32 %v1950, %v1982
        %v1999 = vadd.f32 %v1951, %v1983
        %v2000 = vadd.f32 %v1952, %v1984
        %v2001 = vadd.f32 %v1953, %v1985
        %v2002 = vadd.f32 %v1954, %v1986
        %v2003 = vadd.f32 %v1955, %v1987
        %2004 = vset.pattern.permute.xlu0 2
        %2005 = vperm.xlu0 %2004, %v1892
        %v2006 = vpop.permute.xlu0 %2005
        %2008 = vset.pattern.permute.xlu0 2
        %2009 = vperm.xlu0 %2008, %v1893
        %v2010 = vpop.permute.xlu0 %2009
        %v2012 = vperm.slane %v1859, 2
        %v2013 = vperm.slane %v1860, 2
        %v2014 = vperm.slane %v1861, 2
        %v2015 = vperm.slane %v1862, 2
        %v2016 = vperm.slane %v1863, 2
        %v2017 = vperm.slane %v1864, 2
        %v2018 = vperm.slane %v1865, 2
        %v2019 = vperm.slane %v1866, 2
        %v2020 = vmul.f32 %v2006, %v2012
        %v2021 = vmul.f32 %v2006, %v2013
        %v2022 = vmul.f32 %v2006, %v2014
        %v2023 = vmul.f32 %v2006, %v2015
        %v2024 = vmul.f32 %v2006, %v2016
        %v2025 = vmul.f32 %v2006, %v2017
        %v2026 = vmul.f32 %v2006, %v2018
        %v2027 = vmul.f32 %v2006, %v2019
        %v2028 = vmul.f32 %v2010, %v2012
        %v2029 = vmul.f32 %v2010, %v2013
        %v2030 = vmul.f32 %v2010, %v2014
        %v2031 = vmul.f32 %v2010, %v2015
        %v2032 = vmul.f32 %v2010, %v2016
        %v2033 = vmul.f32 %v2010, %v2017
        %v2034 = vmul.f32 %v2010, %v2018
        %v2035 = vmul.f32 %v2010, %v2019
        %v2036 = vadd.f32 %v1988, %v2020
        %v2037 = vadd.f32 %v1989, %v2021
        %v2038 = vadd.f32 %v1990, %v2022
        %v2039 = vadd.f32 %v1991, %v2023
        %v2040 = vadd.f32 %v1992, %v2024
        %v2041 = vadd.f32 %v1993, %v2025
        %v2042 = vadd.f32 %v1994, %v2026
        %v2043 = vadd.f32 %v1995, %v2027
        %v2044 = vadd.f32 %v1996, %v2028
        %v2045 = vadd.f32 %v1997, %v2029
        %v2046 = vadd.f32 %v1998, %v2030
        %v2047 = vadd.f32 %v1999, %v2031
        %v2048 = vadd.f32 %v2000, %v2032
        %v2049 = vadd.f32 %v2001, %v2033
        %v2050 = vadd.f32 %v2002, %v2034
        %v2051 = vadd.f32 %v2003, %v2035
        %v2052 = vmax.f32 %v2036, 0.0
        %v2053 = vmax.f32 %v2037, 0.0
        %v2054 = vmax.f32 %v2038, 0.0
        %v2055 = vmax.f32 %v2039, 0.0
        %v2056 = vmax.f32 %v2040, 0.0
        %v2057 = vmax.f32 %v2041, 0.0
        %v2058 = vmax.f32 %v2042, 0.0
        %v2059 = vmax.f32 %v2043, 0.0
        %v2060 = vmax.f32 %v2044, 0.0
        %v2061 = vmax.f32 %v2045, 0.0
        %v2062 = vmax.f32 %v2046, 0.0
        %v2063 = vmax.f32 %v2047, 0.0
        %v2064 = vmax.f32 %v2048, 0.0
        %v2065 = vmax.f32 %v2049, 0.0
        %v2066 = vmax.f32 %v2050, 0.0
        %v2067 = vmax.f32 %v2051, 0.0
        %v2068 = vld [vmem:[%s8] sm:$0xff]
        %v2069 = vld [vmem:[%s8 + $0x8] sm:$0xff]
        %2071 = vset.pattern.permute.xlu0 0
        %2072 = vperm.xlu0 %2071, %v2068
        %v2073 = vpop.permute.xlu0 %2072
        %2076 = vset.pattern.permute.xlu0 0
        %2077 = vperm.xlu0 %2076, %v2069
        %v2078 = vpop.permute.xlu0 %2077
        %v2080 = vperm.slane %v2052, 0
        %v2081 = vperm.slane %v2053, 0
        %v2082 = vperm.slane %v2054, 0
        %v2083 = vperm.slane %v2055, 0
        %v2084 = vperm.slane %v2056, 0
        %v2085 = vperm.slane %v2057, 0
        %v2086 = vperm.slane %v2058, 0
        %v2087 = vperm.slane %v2059, 0
        %v2088 = vmul.f32 %v2073, %v2080
        %v2089 = vmul.f32 %v2073, %v2081
        %v2090 = vmul.f32 %v2073, %v2082
        %v2091 = vmul.f32 %v2073, %v2083
        %v2092 = vmul.f32 %v2073, %v2084
        %v2093 = vmul.f32 %v2073, %v2085
        %v2094 = vmul.f32 %v2073, %v2086
        %v2095 = vmul.f32 %v2073, %v2087
        %v2096 = vmul.f32 %v2078, %v2080
        %v2097 = vmul.f32 %v2078, %v2081
        %v2098 = vmul.f32 %v2078, %v2082
        %v2099 = vmul.f32 %v2078, %v2083
        %v2100 = vmul.f32 %v2078, %v2084
        %v2101 = vmul.f32 %v2078, %v2085
        %v2102 = vmul.f32 %v2078, %v2086
        %v2103 = vmul.f32 %v2078, %v2087
        %2104 = vset.pattern.permute.xlu0 1
        %2105 = vperm.xlu0 %2104, %v2068
        %v2106 = vpop.permute.xlu0 %2105
        %2108 = vset.pattern.permute.xlu0 1
        %2109 = vperm.xlu0 %2108, %v2069
        %v2110 = vpop.permute.xlu0 %2109
        %v2112 = vperm.slane %v2052, 1
        %v2113 = vperm.slane %v2053, 1
        %v2114 = vperm.slane %v2054, 1
        %v2115 = vperm.slane %v2055, 1
        %v2116 = vperm.slane %v2056, 1
        %v2117 = vperm.slane %v2057, 1
        %v2118 = vperm.slane %v2058, 1
        %v2119 = vperm.slane %v2059, 1
        %v2120 = vmul.f32 %v2106, %v2112
        %v2121 = vmul.f32 %v2106, %v2113
        %v2122 = vmul.f32 %v2106, %v2114
        %v2123 = vmul.f32 %v2106, %v2115
        %v2124 = vmul.f32 %v2106, %v2116
        %v2125 = vmul.f32 %v2106, %v2117
        %v2126 = vmul.f32 %v2106, %v2118
        %v2127 = vmul.f32 %v2106, %v2119
        %v2128 = vmul.f32 %v2110, %v2112
        %v2129 = vmul.f32 %v2110, %v2113
        %v2130 = vmul.f32 %v2110, %v2114
        %v2131 = vmul.f32 %v2110, %v2115
        %v2132 = vmul.f32 %v2110, %v2116
        %v2133 = vmul.f32 %v2110, %v2117
        %v2134 = vmul.f32 %v2110, %v2118
        %v2135 = vmul.f32 %v2110, %v2119
        %v2136 = vadd.f32 %v2088, %v2120
        %v2137 = vadd.f32 %v2089, %v2121
        %v2138 = vadd.f32 %v2090, %v2122
        %v2139 = vadd.f32 %v2091, %v2123
        %v2140 = vadd.f32 %v2092, %v2124
        %v2141 = vadd.f32 %v2093, %v2125
        %v2142 = vadd.f32 %v2094, %v2126
        %v2143 = vadd.f32 %v2095, %v2127
        %v2144 = vadd.f32 %v2096, %v2128
        %v2145 = vadd.f32 %v2097, %v2129
        %v2146 = vadd.f32 %v2098, %v2130
        %v2147 = vadd.f32 %v2099, %v2131
        %v2148 = vadd.f32 %v2100, %v2132
        %v2149 = vadd.f32 %v2101, %v2133
        %v2150 = vadd.f32 %v2102, %v2134
        %v2151 = vadd.f32 %v2103, %v2135
        %2152 = vset.pattern.permute.xlu0 2
        %2153 = vperm.xlu0 %2152, %v2068
        %v2154 = vpop.permute.xlu0 %2153
        %2156 = vset.pattern.permute.xlu0 2
        %2157 = vperm.xlu0 %2156, %v2069
        %v2158 = vpop.permute.xlu0 %2157
        %v2160 = vperm.slane %v2052, 2
        %v2161 = vperm.slane %v2053, 2
        %v2162 = vperm.slane %v2054, 2
        %v2163 = vperm.slane %v2055, 2
        %v2164 = vperm.slane %v2056, 2
        %v2165 = vperm.slane %v2057, 2
        %v2166 = vperm.slane %v2058, 2
        %v2167 = vperm.slane %v2059, 2
        %v2168 = vmul.f32 %v2154, %v2160
        %v2169 = vmul.f32 %v2154, %v2161
        %v2170 = vmul.f32 %v2154, %v2162
        %v2171 = vmul.f32 %v2154, %v2163
        %v2172 = vmul.f32 %v2154, %v2164
        %v2173 = vmul.f32 %v2154, %v2165
        %v2174 = vmul.f32 %v2154, %v2166
        %v2175 = vmul.f32 %v2154, %v2167
        %v2176 = vmul.f32 %v2158, %v2160
        %v2177 = vmul.f32 %v2158, %v2161
        %v2178 = vmul.f32 %v2158, %v2162
        %v2179 = vmul.f32 %v2158, %v2163
        %v2180 = vmul.f32 %v2158, %v2164
        %v2181 = vmul.f32 %v2158, %v2165
        %v2182 = vmul.f32 %v2158, %v2166
        %v2183 = vmul.f32 %v2158, %v2167
        %v2184 = vadd.f32 %v2136, %v2168
        %v2185 = vadd.f32 %v2137, %v2169
        %v2186 = vadd.f32 %v2138, %v2170
        %v2187 = vadd.f32 %v2139, %v2171
        %v2188 = vadd.f32 %v2140, %v2172
        %v2189 = vadd.f32 %v2141, %v2173
        %v2190 = vadd.f32 %v2142, %v2174
        %v2191 = vadd.f32 %v2143, %v2175
        %v2192 = vadd.f32 %v2144, %v2176
        %v2193 = vadd.f32 %v2145, %v2177
        %v2194 = vadd.f32 %v2146, %v2178
        %v2195 = vadd.f32 %v2147, %v2179
        %v2196 = vadd.f32 %v2148, %v2180
        %v2197 = vadd.f32 %v2149, %v2181
        %v2198 = vadd.f32 %v2150, %v2182
        %v2199 = vadd.f32 %v2151, %v2183
        %2200 = vset.pattern.permute.xlu0 3
        %2201 = vperm.xlu0 %2200, %v2068
        %v2202 = vpop.permute.xlu0 %2201
        %2204 = vset.pattern.permute.xlu0 3
        %2205 = vperm.xlu0 %2204, %v2069
        %v2206 = vpop.permute.xlu0 %2205
        %v2208 = vperm.slane %v2052, 3
        %v2209 = vperm.slane %v2053, 3
        %v2210 = vperm.slane %v2054, 3
        %v2211 = vperm.slane %v2055, 3
        %v2212 = vperm.slane %v2056, 3
        %v2213 = vperm.slane %v2057, 3
        %v2214 = vperm.slane %v2058, 3
        %v2215 = vperm.slane %v2059, 3
        %v2216 = vmul.f32 %v2202, %v2208
        %v2217 = vmul.f32 %v2202, %v2209
        %v2218 = vmul.f32 %v2202, %v2210
        %v2219 = vmul.f32 %v2202, %v2211
        %v2220 = vmul.f32 %v2202, %v2212
        %v2221 = vmul.f32 %v2202, %v2213
        %v2222 = vmul.f32 %v2202, %v2214
        %v2223 = vmul.f32 %v2202, %v2215
        %v2224 = vmul.f32 %v2206, %v2208
        %v2225 = vmul.f32 %v2206, %v2209
        %v2226 = vmul.f32 %v2206, %v2210
        %v2227 = vmul.f32 %v2206, %v2211
        %v2228 = vmul.f32 %v2206, %v2212
        %v2229 = vmul.f32 %v2206, %v2213
        %v2230 = vmul.f32 %v2206, %v2214
        %v2231 = vmul.f32 %v2206, %v2215
        %v2232 = vadd.f32 %v2184, %v2216
        %v2233 = vadd.f32 %v2185, %v2217
        %v2234 = vadd.f32 %v2186, %v2218
        %v2235 = vadd.f32 %v2187, %v2219
        %v2236 = vadd.f32 %v2188, %v2220
        %v2237 = vadd.f32 %v2189, %v2221
        %v2238 = vadd.f32 %v2190, %v2222
        %v2239 = vadd.f32 %v2191, %v2223
        %v2240 = vadd.f32 %v2192, %v2224
        %v2241 = vadd.f32 %v2193, %v2225
        %v2242 = vadd.f32 %v2194, %v2226
        %v2243 = vadd.f32 %v2195, %v2227
        %v2244 = vadd.f32 %v2196, %v2228
        %v2245 = vadd.f32 %v2197, %v2229
        %v2246 = vadd.f32 %v2198, %v2230
        %v2247 = vadd.f32 %v2199, %v2231
        %2248 = vset.pattern.permute.xlu0 4
        %2249 = vperm.xlu0 %2248, %v2068
        %v2250 = vpop.permute.xlu0 %2249
        %2252 = vset.pattern.permute.xlu0 4
        %2253 = vperm.xlu0 %2252, %v2069
        %v2254 = vpop.permute.xlu0 %2253
        %v2256 = vperm.slane %v2052, 4
        %v2257 = vperm.slane %v2053, 4
        %v2258 = vperm.slane %v2054, 4
        %v2259 = vperm.slane %v2055, 4
        %v2260 = vperm.slane %v2056, 4
        %v2261 = vperm.slane %v2057, 4
        %v2262 = vperm.slane %v2058, 4
        %v2263 = vperm.slane %v2059, 4
        %v2264 = vmul.f32 %v2250, %v2256
        %v2265 = vmul.f32 %v2250, %v2257
        %v2266 = vmul.f32 %v2250, %v2258
        %v2267 = vmul.f32 %v2250, %v2259
        %v2268 = vmul.f32 %v2250, %v2260
        %v2269 = vmul.f32 %v2250, %v2261
        %v2270 = vmul.f32 %v2250, %v2262
        %v2271 = vmul.f32 %v2250, %v2263
        %v2272 = vmul.f32 %v2254, %v2256
        %v2273 = vmul.f32 %v2254, %v2257
        %v2274 = vmul.f32 %v2254, %v2258
        %v2275 = vmul.f32 %v2254, %v2259
        %v2276 = vmul.f32 %v2254, %v2260
        %v2277 = vmul.f32 %v2254, %v2261
        %v2278 = vmul.f32 %v2254, %v2262
        %v2279 = vmul.f32 %v2254, %v2263
        %v2280 = vadd.f32 %v2232, %v2264
        %v2281 = vadd.f32 %v2233, %v2265
        %v2282 = vadd.f32 %v2234, %v2266
        %v2283 = vadd.f32 %v2235, %v2267
        %v2284 = vadd.f32 %v2236, %v2268
        %v2285 = vadd.f32 %v2237, %v2269
        %v2286 = vadd.f32 %v2238, %v2270
        %v2287 = vadd.f32 %v2239, %v2271
        %v2288 = vadd.f32 %v2240, %v2272
        %v2289 = vadd.f32 %v2241, %v2273
        %v2290 = vadd.f32 %v2242, %v2274
        %v2291 = vadd.f32 %v2243, %v2275
        %v2292 = vadd.f32 %v2244, %v2276
        %v2293 = vadd.f32 %v2245, %v2277
        %v2294 = vadd.f32 %v2246, %v2278
        %v2295 = vadd.f32 %v2247, %v2279
        %2296 = vset.pattern.permute.xlu0 5
        %2297 = vperm.xlu0 %2296, %v2068
        %v2298 = vpop.permute.xlu0 %2297
        %2300 = vset.pattern.permute.xlu0 5
        %2301 = vperm.xlu0 %2300, %v2069
        %v2302 = vpop.permute.xlu0 %2301
        %v2304 = vperm.slane %v2052, 5
        %v2305 = vperm.slane %v2053, 5
        %v2306 = vperm.slane %v2054, 5
        %v2307 = vperm.slane %v2055, 5
        %v2308 = vperm.slane %v2056, 5
        %v2309 = vperm.slane %v2057, 5
        %v2310 = vperm.slane %v2058, 5
        %v2311 = vperm.slane %v2059, 5
        %v2312 = vmul.f32 %v2298, %v2304
        %v2313 = vmul.f32 %v2298, %v2305
        %v2314 = vmul.f32 %v2298, %v2306
        %v2315 = vmul.f32 %v2298, %v2307
        %v2316 = vmul.f32 %v2298, %v2308
        %v2317 = vmul.f32 %v2298, %v2309
        %v2318 = vmul.f32 %v2298, %v2310
        %v2319 = vmul.f32 %v2298, %v2311
        %v2320 = vmul.f32 %v2302, %v2304
        %v2321 = vmul.f32 %v2302, %v2305
        %v2322 = vmul.f32 %v2302, %v2306
        %v2323 = vmul.f32 %v2302, %v2307
        %v2324 = vmul.f32 %v2302, %v2308
        %v2325 = vmul.f32 %v2302, %v2309
        %v2326 = vmul.f32 %v2302, %v2310
        %v2327 = vmul.f32 %v2302, %v2311
        %v2328 = vadd.f32 %v2280, %v2312
        %v2329 = vadd.f32 %v2281, %v2313
        %v2330 = vadd.f32 %v2282, %v2314
        %v2331 = vadd.f32 %v2283, %v2315
        %v2332 = vadd.f32 %v2284, %v2316
        %v2333 = vadd.f32 %v2285, %v2317
        %v2334 = vadd.f32 %v2286, %v2318
        %v2335 = vadd.f32 %v2287, %v2319
        %v2336 = vadd.f32 %v2288, %v2320
        %v2337 = vadd.f32 %v2289, %v2321
        %v2338 = vadd.f32 %v2290, %v2322
        %v2339 = vadd.f32 %v2291, %v2323
        %v2340 = vadd.f32 %v2292, %v2324
        %v2341 = vadd.f32 %v2293, %v2325
        %v2342 = vadd.f32 %v2294, %v2326
        %v2343 = vadd.f32 %v2295, %v2327
        %2344 = vset.pattern.permute.xlu0 6
        %2345 = vperm.xlu0 %2344, %v2068
        %v2346 = vpop.permute.xlu0 %2345
        %2348 = vset.pattern.permute.xlu0 6
        %2349 = vperm.xlu0 %2348, %v2069
        %v2350 = vpop.permute.xlu0 %2349
        %v2352 = vperm.slane %v2052, 6
        %v2353 = vperm.slane %v2053, 6
        %v2354 = vperm.slane %v2054, 6
        %v2355 = vperm.slane %v2055, 6
        %v2356 = vperm.slane %v2056, 6
        %v2357 = vperm.slane %v2057, 6
        %v2358 = vperm.slane %v2058, 6
        %v2359 = vperm.slane %v2059, 6
        %v2360 = vmul.f32 %v2346, %v2352
        %v2361 = vmul.f32 %v2346, %v2353
        %v2362 = vmul.f32 %v2346, %v2354
        %v2363 = vmul.f32 %v2346, %v2355
        %v2364 = vmul.f32 %v2346, %v2356
        %v2365 = vmul.f32 %v2346, %v2357
        %v2366 = vmul.f32 %v2346, %v2358
        %v2367 = vmul.f32 %v2346, %v2359
        %v2368 = vmul.f32 %v2350, %v2352
        %v2369 = vmul.f32 %v2350, %v2353
        %v2370 = vmul.f32 %v2350, %v2354
        %v2371 = vmul.f32 %v2350, %v2355
        %v2372 = vmul.f32 %v2350, %v2356
        %v2373 = vmul.f32 %v2350, %v2357
        %v2374 = vmul.f32 %v2350, %v2358
        %v2375 = vmul.f32 %v2350, %v2359
        %v2376 = vadd.f32 %v2328, %v2360
        %v2377 = vadd.f32 %v2329, %v2361
        %v2378 = vadd.f32 %v2330, %v2362
        %v2379 = vadd.f32 %v2331, %v2363
        %v2380 = vadd.f32 %v2332, %v2364
        %v2381 = vadd.f32 %v2333, %v2365
        %v2382 = vadd.f32 %v2334, %v2366
        %v2383 = vadd.f32 %v2335, %v2367
        %v2384 = vadd.f32 %v2336, %v2368
        %v2385 = vadd.f32 %v2337, %v2369
        %v2386 = vadd.f32 %v2338, %v2370
        %v2387 = vadd.f32 %v2339, %v2371
        %v2388 = vadd.f32 %v2340, %v2372
        %v2389 = vadd.f32 %v2341, %v2373
        %v2390 = vadd.f32 %v2342, %v2374
        %v2391 = vadd.f32 %v2343, %v2375
        %2392 = vset.pattern.permute.xlu0 7
        %2393 = vperm.xlu0 %2392, %v2068
        %v2394 = vpop.permute.xlu0 %2393
        %2396 = vset.pattern.permute.xlu0 7
        %2397 = vperm.xlu0 %2396, %v2069
        %v2398 = vpop.permute.xlu0 %2397
        %v2400 = vperm.slane %v2052, 7
        %v2401 = vperm.slane %v2053, 7
        %v2402 = vperm.slane %v2054, 7
        %v2403 = vperm.slane %v2055, 7
        %v2404 = vperm.slane %v2056, 7
        %v2405 = vperm.slane %v2057, 7
        %v2406 = vperm.slane %v2058, 7
        %v2407 = vperm.slane %v2059, 7
        %v2408 = vmul.f32 %v2394, %v2400
        %v2409 = vmul.f32 %v2394, %v2401
        %v2410 = vmul.f32 %v2394, %v2402
        %v2411 = vmul.f32 %v2394, %v2403
        %v2412 = vmul.f32 %v2394, %v2404
        %v2413 = vmul.f32 %v2394, %v2405
        %v2414 = vmul.f32 %v2394, %v2406
        %v2415 = vmul.f32 %v2394, %v2407
        %v2416 = vmul.f32 %v2398, %v2400
        %v2417 = vmul.f32 %v2398, %v2401
        %v2418 = vmul.f32 %v2398, %v2402
        %v2419 = vmul.f32 %v2398, %v2403
        %v2420 = vmul.f32 %v2398, %v2404
        %v2421 = vmul.f32 %v2398, %v2405
        %v2422 = vmul.f32 %v2398, %v2406
        %v2423 = vmul.f32 %v2398, %v2407
        %v2424 = vadd.f32 %v2376, %v2408
        %v2425 = vadd.f32 %v2377, %v2409
        %v2426 = vadd.f32 %v2378, %v2410
        %v2427 = vadd.f32 %v2379, %v2411
        %v2428 = vadd.f32 %v2380, %v2412
        %v2429 = vadd.f32 %v2381, %v2413
        %v2430 = vadd.f32 %v2382, %v2414
        %v2431 = vadd.f32 %v2383, %v2415
        %v2432 = vadd.f32 %v2384, %v2416
        %v2433 = vadd.f32 %v2385, %v2417
        %v2434 = vadd.f32 %v2386, %v2418
        %v2435 = vadd.f32 %v2387, %v2419
        %v2436 = vadd.f32 %v2388, %v2420
        %v2437 = vadd.f32 %v2389, %v2421
        %v2438 = vadd.f32 %v2390, %v2422
        %v2439 = vadd.f32 %v2391, %v2423
        %2440 = vset.pattern.permute.xlu0 8
        %2441 = vperm.xlu0 %2440, %v2068
        %v2442 = vpop.permute.xlu0 %2441
        %2444 = vset.pattern.permute.xlu0 8
        %2445 = vperm.xlu0 %2444, %v2069
        %v2446 = vpop.permute.xlu0 %2445
        %v2448 = vperm.slane %v2060, 0
        %v2449 = vperm.slane %v2061, 0
        %v2450 = vperm.slane %v2062, 0
        %v2451 = vperm.slane %v2063, 0
        %v2452 = vperm.slane %v2064, 0
        %v2453 = vperm.slane %v2065, 0
        %v2454 = vperm.slane %v2066, 0
        %v2455 = vperm.slane %v2067, 0
        %v2456 = vmul.f32 %v2442, %v2448
        %v2457 = vmul.f32 %v2442, %v2449
        %v2458 = vmul.f32 %v2442, %v2450
        %v2459 = vmul.f32 %v2442, %v2451
        %v2460 = vmul.f32 %v2442, %v2452
        %v2461 = vmul.f32 %v2442, %v2453
        %v2462 = vmul.f32 %v2442, %v2454
        %v2463 = vmul.f32 %v2442, %v2455
        %v2464 = vmul.f32 %v2446, %v2448
        %v2465 = vmul.f32 %v2446, %v2449
        %v2466 = vmul.f32 %v2446, %v2450
        %v2467 = vmul.f32 %v2446, %v2451
        %v2468 = vmul.f32 %v2446, %v2452
        %v2469 = vmul.f32 %v2446, %v2453
        %v2470 = vmul.f32 %v2446, %v2454
        %v2471 = vmul.f32 %v2446, %v2455
        %v2472 = vadd.f32 %v2424, %v2456
        %v2473 = vadd.f32 %v2425, %v2457
        %v2474 = vadd.f32 %v2426, %v2458
        %v2475 = vadd.f32 %v2427, %v2459
        %v2476 = vadd.f32 %v2428, %v2460
        %v2477 = vadd.f32 %v2429, %v2461
        %v2478 = vadd.f32 %v2430, %v2462
        %v2479 = vadd.f32 %v2431, %v2463
        %v2480 = vadd.f32 %v2432, %v2464
        %v2481 = vadd.f32 %v2433, %v2465
        %v2482 = vadd.f32 %v2434, %v2466
        %v2483 = vadd.f32 %v2435, %v2467
        %v2484 = vadd.f32 %v2436, %v2468
        %v2485 = vadd.f32 %v2437, %v2469
        %v2486 = vadd.f32 %v2438, %v2470
        %v2487 = vadd.f32 %v2439, %v2471
        %2488 = vset.pattern.permute.xlu0 9
        %2489 = vperm.xlu0 %2488, %v2068
        %v2490 = vpop.permute.xlu0 %2489
        %2492 = vset.pattern.permute.xlu0 9
        %2493 = vperm.xlu0 %2492, %v2069
        %v2494 = vpop.permute.xlu0 %2493
        %v2496 = vperm.slane %v2060, 1
        %v2497 = vperm.slane %v2061, 1
        %v2498 = vperm.slane %v2062, 1
        %v2499 = vperm.slane %v2063, 1
        %v2500 = vperm.slane %v2064, 1
        %v2501 = vperm.slane %v2065, 1
        %v2502 = vperm.slane %v2066, 1
        %v2503 = vperm.slane %v2067, 1
        %v2504 = vmul.f32 %v2490, %v2496
        %v2505 = vmul.f32 %v2490, %v2497
        %v2506 = vmul.f32 %v2490, %v2498
        %v2507 = vmul.f32 %v2490, %v2499
        %v2508 = vmul.f32 %v2490, %v2500
        %v2509 = vmul.f32 %v2490, %v2501
        %v2510 = vmul.f32 %v2490, %v2502
        %v2511 = vmul.f32 %v2490, %v2503
        %v2512 = vmul.f32 %v2494, %v2496
        %v2513 = vmul.f32 %v2494, %v2497
        %v2514 = vmul.f32 %v2494, %v2498
        %v2515 = vmul.f32 %v2494, %v2499
        %v2516 = vmul.f32 %v2494, %v2500
        %v2517 = vmul.f32 %v2494, %v2501
        %v2518 = vmul.f32 %v2494, %v2502
        %v2519 = vmul.f32 %v2494, %v2503
        %v2520 = vadd.f32 %v2472, %v2504
        %v2521 = vadd.f32 %v2473, %v2505
        %v2522 = vadd.f32 %v2474, %v2506
        %v2523 = vadd.f32 %v2475, %v2507
        %v2524 = vadd.f32 %v2476, %v2508
        %v2525 = vadd.f32 %v2477, %v2509
        %v2526 = vadd.f32 %v2478, %v2510
        %v2527 = vadd.f32 %v2479, %v2511
        %v2528 = vadd.f32 %v2480, %v2512
        %v2529 = vadd.f32 %v2481, %v2513
        %v2530 = vadd.f32 %v2482, %v2514
        %v2531 = vadd.f32 %v2483, %v2515
        %v2532 = vadd.f32 %v2484, %v2516
        %v2533 = vadd.f32 %v2485, %v2517
        %v2534 = vadd.f32 %v2486, %v2518
        %v2535 = vadd.f32 %v2487, %v2519
        %2536 = vset.pattern.permute.xlu0 10
        %2537 = vperm.xlu0 %2536, %v2068
        %v2538 = vpop.permute.xlu0 %2537
        %2540 = vset.pattern.permute.xlu0 10
        %2541 = vperm.xlu0 %2540, %v2069
        %v2542 = vpop.permute.xlu0 %2541
        %v2544 = vperm.slane %v2060, 2
        %v2545 = vperm.slane %v2061, 2
        %v2546 = vperm.slane %v2062, 2
        %v2547 = vperm.slane %v2063, 2
        %v2548 = vperm.slane %v2064, 2
        %v2549 = vperm.slane %v2065, 2
        %v2550 = vperm.slane %v2066, 2
        %v2551 = vperm.slane %v2067, 2
        %v2552 = vmul.f32 %v2538, %v2544
        %v2553 = vmul.f32 %v2538, %v2545
        %v2554 = vmul.f32 %v2538, %v2546
        %v2555 = vmul.f32 %v2538, %v2547
        %v2556 = vmul.f32 %v2538, %v2548
        %v2557 = vmul.f32 %v2538, %v2549
        %v2558 = vmul.f32 %v2538, %v2550
        %v2559 = vmul.f32 %v2538, %v2551
        %v2560 = vmul.f32 %v2542, %v2544
        %v2561 = vmul.f32 %v2542, %v2545
        %v2562 = vmul.f32 %v2542, %v2546
        %v2563 = vmul.f32 %v2542, %v2547
        %v2564 = vmul.f32 %v2542, %v2548
        %v2565 = vmul.f32 %v2542, %v2549
        %v2566 = vmul.f32 %v2542, %v2550
        %v2567 = vmul.f32 %v2542, %v2551
        %v2568 = vadd.f32 %v2520, %v2552
        %v2569 = vadd.f32 %v2521, %v2553
        %v2570 = vadd.f32 %v2522, %v2554
        %v2571 = vadd.f32 %v2523, %v2555
        %v2572 = vadd.f32 %v2524, %v2556
        %v2573 = vadd.f32 %v2525, %v2557
        %v2574 = vadd.f32 %v2526, %v2558
        %v2575 = vadd.f32 %v2527, %v2559
        %v2576 = vadd.f32 %v2528, %v2560
        %v2577 = vadd.f32 %v2529, %v2561
        %v2578 = vadd.f32 %v2530, %v2562
        %v2579 = vadd.f32 %v2531, %v2563
        %v2580 = vadd.f32 %v2532, %v2564
        %v2581 = vadd.f32 %v2533, %v2565
        %v2582 = vadd.f32 %v2534, %v2566
        %v2583 = vadd.f32 %v2535, %v2567
        %2584 = vset.pattern.permute.xlu0 11
        %2585 = vperm.xlu0 %2584, %v2068
        %v2586 = vpop.permute.xlu0 %2585
        %2588 = vset.pattern.permute.xlu0 11
        %2589 = vperm.xlu0 %2588, %v2069
        %v2590 = vpop.permute.xlu0 %2589
        %v2592 = vperm.slane %v2060, 3
        %v2593 = vperm.slane %v2061, 3
        %v2594 = vperm.slane %v2062, 3
        %v2595 = vperm.slane %v2063, 3
        %v2596 = vperm.slane %v2064, 3
        %v2597 = vperm.slane %v2065, 3
        %v2598 = vperm.slane %v2066, 3
        %v2599 = vperm.slane %v2067, 3
        %v2600 = vmul.f32 %v2586, %v2592
        %v2601 = vmul.f32 %v2586, %v2593
        %v2602 = vmul.f32 %v2586, %v2594
        %v2603 = vmul.f32 %v2586, %v2595
        %v2604 = vmul.f32 %v2586, %v2596
        %v2605 = vmul.f32 %v2586, %v2597
        %v2606 = vmul.f32 %v2586, %v2598
        %v2607 = vmul.f32 %v2586, %v2599
        %v2608 = vmul.f32 %v2590, %v2592
        %v2609 = vmul.f32 %v2590, %v2593
        %v2610 = vmul.f32 %v2590, %v2594
        %v2611 = vmul.f32 %v2590, %v2595
        %v2612 = vmul.f32 %v2590, %v2596
        %v2613 = vmul.f32 %v2590, %v2597
        %v2614 = vmul.f32 %v2590, %v2598
        %v2615 = vmul.f32 %v2590, %v2599
        %v2616 = vadd.f32 %v2568, %v2600
        %v2617 = vadd.f32 %v2569, %v2601
        %v2618 = vadd.f32 %v2570, %v2602
        %v2619 = vadd.f32 %v2571, %v2603
        %v2620 = vadd.f32 %v2572, %v2604
        %v2621 = vadd.f32 %v2573, %v2605
        %v2622 = vadd.f32 %v2574, %v2606
        %v2623 = vadd.f32 %v2575, %v2607
        %v2624 = vadd.f32 %v2576, %v2608
        %v2625 = vadd.f32 %v2577, %v2609
        %v2626 = vadd.f32 %v2578, %v2610
        %v2627 = vadd.f32 %v2579, %v2611
        %v2628 = vadd.f32 %v2580, %v2612
        %v2629 = vadd.f32 %v2581, %v2613
        %v2630 = vadd.f32 %v2582, %v2614
        %v2631 = vadd.f32 %v2583, %v2615
        %2632 = vset.pattern.permute.xlu0 12
        %2633 = vperm.xlu0 %2632, %v2068
        %v2634 = vpop.permute.xlu0 %2633
        %2636 = vset.pattern.permute.xlu0 12
        %2637 = vperm.xlu0 %2636, %v2069
        %v2638 = vpop.permute.xlu0 %2637
        %v2640 = vperm.slane %v2060, 4
        %v2641 = vperm.slane %v2061, 4
        %v2642 = vperm.slane %v2062, 4
        %v2643 = vperm.slane %v2063, 4
        %v2644 = vperm.slane %v2064, 4
        %v2645 = vperm.slane %v2065, 4
        %v2646 = vperm.slane %v2066, 4
        %v2647 = vperm.slane %v2067, 4
        %v2648 = vmul.f32 %v2634, %v2640
        %v2649 = vmul.f32 %v2634, %v2641
        %v2650 = vmul.f32 %v2634, %v2642
        %v2651 = vmul.f32 %v2634, %v2643
        %v2652 = vmul.f32 %v2634, %v2644
        %v2653 = vmul.f32 %v2634, %v2645
        %v2654 = vmul.f32 %v2634, %v2646
        %v2655 = vmul.f32 %v2634, %v2647
        %v2656 = vmul.f32 %v2638, %v2640
        %v2657 = vmul.f32 %v2638, %v2641
        %v2658 = vmul.f32 %v2638, %v2642
        %v2659 = vmul.f32 %v2638, %v2643
        %v2660 = vmul.f32 %v2638, %v2644
        %v2661 = vmul.f32 %v2638, %v2645
        %v2662 = vmul.f32 %v2638, %v2646
        %v2663 = vmul.f32 %v2638, %v2647
        %v2664 = vadd.f32 %v2616, %v2648
        %v2665 = vadd.f32 %v2617, %v2649
        %v2666 = vadd.f32 %v2618, %v2650
        %v2667 = vadd.f32 %v2619, %v2651
        %v2668 = vadd.f32 %v2620, %v2652
        %v2669 = vadd.f32 %v2621, %v2653
        %v2670 = vadd.f32 %v2622, %v2654
        %v2671 = vadd.f32 %v2623, %v2655
        %v2672 = vadd.f32 %v2624, %v2656
        %v2673 = vadd.f32 %v2625, %v2657
        %v2674 = vadd.f32 %v2626, %v2658
        %v2675 = vadd.f32 %v2627, %v2659
        %v2676 = vadd.f32 %v2628, %v2660
        %v2677 = vadd.f32 %v2629, %v2661
        %v2678 = vadd.f32 %v2630, %v2662
        %v2679 = vadd.f32 %v2631, %v2663
        %2680 = vset.pattern.permute.xlu0 13
        %2681 = vperm.xlu0 %2680, %v2068
        %v2682 = vpop.permute.xlu0 %2681
        %2684 = vset.pattern.permute.xlu0 13
        %2685 = vperm.xlu0 %2684, %v2069
        %v2686 = vpop.permute.xlu0 %2685
        %v2688 = vperm.slane %v2060, 5
        %v2689 = vperm.slane %v2061, 5
        %v2690 = vperm.slane %v2062, 5
        %v2691 = vperm.slane %v2063, 5
        %v2692 = vperm.slane %v2064, 5
        %v2693 = vperm.slane %v2065, 5
        %v2694 = vperm.slane %v2066, 5
        %v2695 = vperm.slane %v2067, 5
        %v2696 = vmul.f32 %v2682, %v2688
        %v2697 = vmul.f32 %v2682, %v2689
        %v2698 = vmul.f32 %v2682, %v2690
        %v2699 = vmul.f32 %v2682, %v2691
        %v2700 = vmul.f32 %v2682, %v2692
        %v2701 = vmul.f32 %v2682, %v2693
        %v2702 = vmul.f32 %v2682, %v2694
        %v2703 = vmul.f32 %v2682, %v2695
        %v2704 = vmul.f32 %v2686, %v2688
        %v2705 = vmul.f32 %v2686, %v2689
        %v2706 = vmul.f32 %v2686, %v2690
        %v2707 = vmul.f32 %v2686, %v2691
        %v2708 = vmul.f32 %v2686, %v2692
        %v2709 = vmul.f32 %v2686, %v2693
        %v2710 = vmul.f32 %v2686, %v2694
        %v2711 = vmul.f32 %v2686, %v2695
        %v2712 = vadd.f32 %v2664, %v2696
        %v2713 = vadd.f32 %v2665, %v2697
        %v2714 = vadd.f32 %v2666, %v2698
        %v2715 = vadd.f32 %v2667, %v2699
        %v2716 = vadd.f32 %v2668, %v2700
        %v2717 = vadd.f32 %v2669, %v2701
        %v2718 = vadd.f32 %v2670, %v2702
        %v2719 = vadd.f32 %v2671, %v2703
        %v2720 = vadd.f32 %v2672, %v2704
        %v2721 = vadd.f32 %v2673, %v2705
        %v2722 = vadd.f32 %v2674, %v2706
        %v2723 = vadd.f32 %v2675, %v2707
        %v2724 = vadd.f32 %v2676, %v2708
        %v2725 = vadd.f32 %v2677, %v2709
        %v2726 = vadd.f32 %v2678, %v2710
        %v2727 = vadd.f32 %v2679, %v2711
        %2728 = vset.pattern.permute.xlu0 14
        %2729 = vperm.xlu0 %2728, %v2068
        %v2730 = vpop.permute.xlu0 %2729
        %2732 = vset.pattern.permute.xlu0 14
        %2733 = vperm.xlu0 %2732, %v2069
        %v2734 = vpop.permute.xlu0 %2733
        %v2736 = vperm.slane %v2060, 6
        %v2737 = vperm.slane %v2061, 6
        %v2738 = vperm.slane %v2062, 6
        %v2739 = vperm.slane %v2063, 6
        %v2740 = vperm.slane %v2064, 6
        %v2741 = vperm.slane %v2065, 6
        %v2742 = vperm.slane %v2066, 6
        %v2743 = vperm.slane %v2067, 6
        %v2744 = vmul.f32 %v2730, %v2736
        %v2745 = vmul.f32 %v2730, %v2737
        %v2746 = vmul.f32 %v2730, %v2738
        %v2747 = vmul.f32 %v2730, %v2739
        %v2748 = vmul.f32 %v2730, %v2740
        %v2749 = vmul.f32 %v2730, %v2741
        %v2750 = vmul.f32 %v2730, %v2742
        %v2751 = vmul.f32 %v2730, %v2743
        %v2752 = vmul.f32 %v2734, %v2736
        %v2753 = vmul.f32 %v2734, %v2737
        %v2754 = vmul.f32 %v2734, %v2738
        %v2755 = vmul.f32 %v2734, %v2739
        %v2756 = vmul.f32 %v2734, %v2740
        %v2757 = vmul.f32 %v2734, %v2741
        %v2758 = vmul.f32 %v2734, %v2742
        %v2759 = vmul.f32 %v2734, %v2743
        %v2760 = vadd.f32 %v2712, %v2744
        %v2761 = vadd.f32 %v2713, %v2745
        %v2762 = vadd.f32 %v2714, %v2746
        %v2763 = vadd.f32 %v2715, %v2747
        %v2764 = vadd.f32 %v2716, %v2748
        %v2765 = vadd.f32 %v2717, %v2749
        %v2766 = vadd.f32 %v2718, %v2750
        %v2767 = vadd.f32 %v2719, %v2751
        %v2768 = vadd.f32 %v2720, %v2752
        %v2769 = vadd.f32 %v2721, %v2753
        %v2770 = vadd.f32 %v2722, %v2754
        %v2771 = vadd.f32 %v2723, %v2755
        %v2772 = vadd.f32 %v2724, %v2756
        %v2773 = vadd.f32 %v2725, %v2757
        %v2774 = vadd.f32 %v2726, %v2758
        %v2775 = vadd.f32 %v2727, %v2759
        %2776 = vset.pattern.permute.xlu0 15
        %2777 = vperm.xlu0 %2776, %v2068
        %v2778 = vpop.permute.xlu0 %2777
        %2780 = vset.pattern.permute.xlu0 15
        %2781 = vperm.xlu0 %2780, %v2069
        %v2782 = vpop.permute.xlu0 %2781
        %v2784 = vperm.slane %v2060, 7
        %v2785 = vperm.slane %v2061, 7
        %v2786 = vperm.slane %v2062, 7
        %v2787 = vperm.slane %v2063, 7
        %v2788 = vperm.slane %v2064, 7
        %v2789 = vperm.slane %v2065, 7
        %v2790 = vperm.slane %v2066, 7
        %v2791 = vperm.slane %v2067, 7
        %v2792 = vmul.f32 %v2778, %v2784
        %v2793 = vmul.f32 %v2778, %v2785
        %v2794 = vmul.f32 %v2778, %v2786
        %v2795 = vmul.f32 %v2778, %v2787
        %v2796 = vmul.f32 %v2778, %v2788
        %v2797 = vmul.f32 %v2778, %v2789
        %v2798 = vmul.f32 %v2778, %v2790
        %v2799 = vmul.f32 %v2778, %v2791
        %v2800 = vmul.f32 %v2782, %v2784
        %v2801 = vmul.f32 %v2782, %v2785
        %v2802 = vmul.f32 %v2782, %v2786
        %v2803 = vmul.f32 %v2782, %v2787
        %v2804 = vmul.f32 %v2782, %v2788
        %v2805 = vmul.f32 %v2782, %v2789
        %v2806 = vmul.f32 %v2782, %v2790
        %v2807 = vmul.f32 %v2782, %v2791
        %v2808 = vadd.f32 %v2760, %v2792
        %v2809 = vadd.f32 %v2761, %v2793
        %v2810 = vadd.f32 %v2762, %v2794
        %v2811 = vadd.f32 %v2763, %v2795
        %v2812 = vadd.f32 %v2764, %v2796
        %v2813 = vadd.f32 %v2765, %v2797
        %v2814 = vadd.f32 %v2766, %v2798
        %v2815 = vadd.f32 %v2767, %v2799
        %v2816 = vadd.f32 %v2768, %v2800
        %v2817 = vadd.f32 %v2769, %v2801
        %v2818 = vadd.f32 %v2770, %v2802
        %v2819 = vadd.f32 %v2771, %v2803
        %v2820 = vadd.f32 %v2772, %v2804
        %v2821 = vadd.f32 %v2773, %v2805
        %v2822 = vadd.f32 %v2774, %v2806
        %v2823 = vadd.f32 %v2775, %v2807
        %v2824 = vld [vmem:[%s9] sm:$0xff]
        %v2825 = vld [vmem:[%s9 + $0x8] sm:$0xff]
        %2827 = vset.pattern.permute.xlu0 0
        %2828 = vperm.xlu0 %2827, %v2824
        %v2829 = vpop.permute.xlu0 %2828
        %2832 = vset.pattern.permute.xlu0 0
        %2833 = vperm.xlu0 %2832, %v2825
        %v2834 = vpop.permute.xlu0 %2833
        %v2836 = vadd.f32 %v2808, %v2829
        %v2837 = vadd.f32 %v2809, %v2829
        %v2838 = vadd.f32 %v2810, %v2829
        %v2839 = vadd.f32 %v2811, %v2829
        %v2840 = vadd.f32 %v2812, %v2829
        %v2841 = vadd.f32 %v2813, %v2829
        %v2842 = vadd.f32 %v2814, %v2829
        %v2843 = vadd.f32 %v2815, %v2829
        %v2844 = vadd.f32 %v2816, %v2834
        %v2845 = vadd.f32 %v2817, %v2834
        %v2846 = vadd.f32 %v2818, %v2834
        %v2847 = vadd.f32 %v2819, %v2834
        %v2848 = vadd.f32 %v2820, %v2834
        %v2849 = vadd.f32 %v2821, %v2834
        %v2850 = vadd.f32 %v2822, %v2834
        %v2851 = vadd.f32 %v2823, %v2834
        %v2852 = vmax.f32 %v2836, 0.0
        %v2853 = vmax.f32 %v2837, 0.0
        %v2854 = vmax.f32 %v2838, 0.0
        %v2855 = vmax.f32 %v2839, 0.0
        %v2856 = vmax.f32 %v2840, 0.0
        %v2857 = vmax.f32 %v2841, 0.0
        %v2858 = vmax.f32 %v2842, 0.0
        %v2859 = vmax.f32 %v2843, 0.0
        %v2860 = vmax.f32 %v2844, 0.0
        %v2861 = vmax.f32 %v2845, 0.0
        %v2862 = vmax.f32 %v2846, 0.0
        %v2863 = vmax.f32 %v2847, 0.0
        %v2864 = vmax.f32 %v2848, 0.0
        %v2865 = vmax.f32 %v2849, 0.0
        %v2866 = vmax.f32 %v2850, 0.0
        %v2867 = vmax.f32 %v2851, 0.0
        %v2868 = vld [vmem:[%s10] sm:$0x7]
        %2870 = vset.pattern.permute.xlu0 0
        %2871 = vperm.xlu0 %2870, %v2868
        %v2872 = vpop.permute.xlu0 %2871
        %v2874 = vperm.slane %v2852, 0
        %v2875 = vperm.slane %v2853, 0
        %v2876 = vperm.slane %v2854, 0
        %v2877 = vperm.slane %v2855, 0
        %v2878 = vperm.slane %v2856, 0
        %v2879 = vperm.slane %v2857, 0
        %v2880 = vperm.slane %v2858, 0
        %v2881 = vperm.slane %v2859, 0
        %v2882 = vmul.f32 %v2872, %v2874
        %v2883 = vmul.f32 %v2872, %v2875
        %v2884 = vmul.f32 %v2872, %v2876
        %v2885 = vmul.f32 %v2872, %v2877
        %v2886 = vmul.f32 %v2872, %v2878
        %v2887 = vmul.f32 %v2872, %v2879
        %v2888 = vmul.f32 %v2872, %v2880
        %v2889 = vmul.f32 %v2872, %v2881
        %2890 = vset.pattern.permute.xlu0 1
        %2891 = vperm.xlu0 %2890, %v2868
        %v2892 = vpop.permute.xlu0 %2891
        %v2894 = vperm.slane %v2852, 1
        %v2895 = vperm.slane %v2853, 1
        %v2896 = vperm.slane %v2854, 1
        %v2897 = vperm.slane %v2855, 1
        %v2898 = vperm.slane %v2856, 1
        %v2899 = vperm.slane %v2857, 1
        %v2900 = vperm.slane %v2858, 1
        %v2901 = vperm.slane %v2859, 1
        %v2902 = vmul.f32 %v2892, %v2894
        %v2903 = vmul.f32 %v2892, %v2895
        %v2904 = vmul.f32 %v2892, %v2896
        %v2905 = vmul.f32 %v2892, %v2897
        %v2906 = vmul.f32 %v2892, %v2898
        %v2907 = vmul.f32 %v2892, %v2899
        %v2908 = vmul.f32 %v2892, %v2900
        %v2909 = vmul.f32 %v2892, %v2901
        %v2910 = vadd.f32 %v2882, %v2902
        %v2911 = vadd.f32 %v2883, %v2903
        %v2912 = vadd.f32 %v2884, %v2904
        %v2913 = vadd.f32 %v2885, %v2905
        %v2914 = vadd.f32 %v2886, %v2906
        %v2915 = vadd.f32 %v2887, %v2907
        %v2916 = vadd.f32 %v2888, %v2908
        %v2917 = vadd.f32 %v2889, %v2909
        %2918 = vset.pattern.permute.xlu0 2
        %2919 = vperm.xlu0 %2918, %v2868
        %v2920 = vpop.permute.xlu0 %2919
        %v2922 = vperm.slane %v2852, 2
        %v2923 = vperm.slane %v2853, 2
        %v2924 = vperm.slane %v2854, 2
        %v2925 = vperm.slane %v2855, 2
        %v2926 = vperm.slane %v2856, 2
        %v2927 = vperm.slane %v2857, 2
        %v2928 = vperm.slane %v2858, 2
        %v2929 = vperm.slane %v2859, 2
        %v2930 = vmul.f32 %v2920, %v2922
        %v2931 = vmul.f32 %v2920, %v2923
        %v2932 = vmul.f32 %v2920, %v2924
        %v2933 = vmul.f32 %v2920, %v2925
        %v2934 = vmul.f32 %v2920, %v2926
        %v2935 = vmul.f32 %v2920, %v2927
        %v2936 = vmul.f32 %v2920, %v2928
        %v2937 = vmul.f32 %v2920, %v2929
        %v2938 = vadd.f32 %v2910, %v2930
        %v2939 = vadd.f32 %v2911, %v2931
        %v2940 = vadd.f32 %v2912, %v2932
        %v2941 = vadd.f32 %v2913, %v2933
        %v2942 = vadd.f32 %v2914, %v2934
        %v2943 = vadd.f32 %v2915, %v2935
        %v2944 = vadd.f32 %v2916, %v2936
        %v2945 = vadd.f32 %v2917, %v2937
        %2946 = vset.pattern.permute.xlu0 3
        %2947 = vperm.xlu0 %2946, %v2868
        %v2948 = vpop.permute.xlu0 %2947
        %v2950 = vperm.slane %v2852, 3
        %v2951 = vperm.slane %v2853, 3
        %v2952 = vperm.slane %v2854, 3
        %v2953 = vperm.slane %v2855, 3
        %v2954 = vperm.slane %v2856, 3
        %v2955 = vperm.slane %v2857, 3
        %v2956 = vperm.slane %v2858, 3
        %v2957 = vperm.slane %v2859, 3
        %v2958 = vmul.f32 %v2948, %v2950
        %v2959 = vmul.f32 %v2948, %v2951
        %v2960 = vmul.f32 %v2948, %v2952
        %v2961 = vmul.f32 %v2948, %v2953
        %v2962 = vmul.f32 %v2948, %v2954
        %v2963 = vmul.f32 %v2948, %v2955
        %v2964 = vmul.f32 %v2948, %v2956
        %v2965 = vmul.f32 %v2948, %v2957
        %v2966 = vadd.f32 %v2938, %v2958
        %v2967 = vadd.f32 %v2939, %v2959
        %v2968 = vadd.f32 %v2940, %v2960
        %v2969 = vadd.f32 %v2941, %v2961
        %v2970 = vadd.f32 %v2942, %v2962
        %v2971 = vadd.f32 %v2943, %v2963
        %v2972 = vadd.f32 %v2944, %v2964
        %v2973 = vadd.f32 %v2945, %v2965
        %2974 = vset.pattern.permute.xlu0 4
        %2975 = vperm.xlu0 %2974, %v2868
        %v2976 = vpop.permute.xlu0 %2975
        %v2978 = vperm.slane %v2852, 4
        %v2979 = vperm.slane %v2853, 4
        %v2980 = vperm.slane %v2854, 4
        %v2981 = vperm.slane %v2855, 4
        %v2982 = vperm.slane %v2856, 4
        %v2983 = vperm.slane %v2857, 4
        %v2984 = vperm.slane %v2858, 4
        %v2985 = vperm.slane %v2859, 4
        %v2986 = vmul.f32 %v2976, %v2978
        %v2987 = vmul.f32 %v2976, %v2979
        %v2988 = vmul.f32 %v2976, %v2980
        %v2989 = vmul.f32 %v2976, %v2981
        %v2990 = vmul.f32 %v2976, %v2982
        %v2991 = vmul.f32 %v2976, %v2983
        %v2992 = vmul.f32 %v2976, %v2984
        %v2993 = vmul.f32 %v2976, %v2985
        %v2994 = vadd.f32 %v2966, %v2986
        %v2995 = vadd.f32 %v2967, %v2987
        %v2996 = vadd.f32 %v2968, %v2988
        %v2997 = vadd.f32 %v2969, %v2989
        %v2998 = vadd.f32 %v2970, %v2990
        %v2999 = vadd.f32 %v2971, %v2991
        %v3000 = vadd.f32 %v2972, %v2992
        %v3001 = vadd.f32 %v2973, %v2993
        %3002 = vset.pattern.permute.xlu0 5
        %3003 = vperm.xlu0 %3002, %v2868
        %v3004 = vpop.permute.xlu0 %3003
        %v3006 = vperm.slane %v2852, 5
        %v3007 = vperm.slane %v2853, 5
        %v3008 = vperm.slane %v2854, 5
        %v3009 = vperm.slane %v2855, 5
        %v3010 = vperm.slane %v2856, 5
        %v3011 = vperm.slane %v2857, 5
        %v3012 = vperm.slane %v2858, 5
        %v3013 = vperm.slane %v2859, 5
        %v3014 = vmul.f32 %v3004, %v3006
        %v3015 = vmul.f32 %v3004, %v3007
        %v3016 = vmul.f32 %v3004, %v3008
        %v3017 = vmul.f32 %v3004, %v3009
        %v3018 = vmul.f32 %v3004, %v3010
        %v3019 = vmul.f32 %v3004, %v3011
        %v3020 = vmul.f32 %v3004, %v3012
        %v3021 = vmul.f32 %v3004, %v3013
        %v3022 = vadd.f32 %v2994, %v3014
        %v3023 = vadd.f32 %v2995, %v3015
        %v3024 = vadd.f32 %v2996, %v3016
        %v3025 = vadd.f32 %v2997, %v3017
        %v3026 = vadd.f32 %v2998, %v3018
        %v3027 = vadd.f32 %v2999, %v3019
        %v3028 = vadd.f32 %v3000, %v3020
        %v3029 = vadd.f32 %v3001, %v3021
        %3030 = vset.pattern.permute.xlu0 6
        %3031 = vperm.xlu0 %3030, %v2868
        %v3032 = vpop.permute.xlu0 %3031
        %v3034 = vperm.slane %v2852, 6
        %v3035 = vperm.slane %v2853, 6
        %v3036 = vperm.slane %v2854, 6
        %v3037 = vperm.slane %v2855, 6
        %v3038 = vperm.slane %v2856, 6
        %v3039 = vperm.slane %v2857, 6
        %v3040 = vperm.slane %v2858, 6
        %v3041 = vperm.slane %v2859, 6
        %v3042 = vmul.f32 %v3032, %v3034
        %v3043 = vmul.f32 %v3032, %v3035
        %v3044 = vmul.f32 %v3032, %v3036
        %v3045 = vmul.f32 %v3032, %v3037
        %v3046 = vmul.f32 %v3032, %v3038
        %v3047 = vmul.f32 %v3032, %v3039
        %v3048 = vmul.f32 %v3032, %v3040
        %v3049 = vmul.f32 %v3032, %v3041
        %v3050 = vadd.f32 %v3022, %v3042
        %v3051 = vadd.f32 %v3023, %v3043
        %v3052 = vadd.f32 %v3024, %v3044
        %v3053 = vadd.f32 %v3025, %v3045
        %v3054 = vadd.f32 %v3026, %v3046
        %v3055 = vadd.f32 %v3027, %v3047
        %v3056 = vadd.f32 %v3028, %v3048
        %v3057 = vadd.f32 %v3029, %v3049
        %3058 = vset.pattern.permute.xlu0 7
        %3059 = vperm.xlu0 %3058, %v2868
        %v3060 = vpop.permute.xlu0 %3059
        %v3062 = vperm.slane %v2852, 7
        %v3063 = vperm.slane %v2853, 7
        %v3064 = vperm.slane %v2854, 7
        %v3065 = vperm.slane %v2855, 7
        %v3066 = vperm.slane %v2856, 7
        %v3067 = vperm.slane %v2857, 7
        %v3068 = vperm.slane %v2858, 7
        %v3069 = vperm.slane %v2859, 7
        %v3070 = vmul.f32 %v3060, %v3062
        %v3071 = vmul.f32 %v3060, %v3063
        %v3072 = vmul.f32 %v3060, %v3064
        %v3073 = vmul.f32 %v3060, %v3065
        %v3074 = vmul.f32 %v3060, %v3066
        %v3075 = vmul.f32 %v3060, %v3067
        %v3076 = vmul.f32 %v3060, %v3068
        %v3077 = vmul.f32 %v3060, %v3069
        %v3078 = vadd.f32 %v3050, %v3070
        %v3079 = vadd.f32 %v3051, %v3071
        %v3080 = vadd.f32 %v3052, %v3072
        %v3081 = vadd.f32 %v3053, %v3073
        %v3082 = vadd.f32 %v3054, %v3074
        %v3083 = vadd.f32 %v3055, %v3075
        %v3084 = vadd.f32 %v3056, %v3076
        %v3085 = vadd.f32 %v3057, %v3077
        %3086 = vset.pattern.permute.xlu0 8
        %3087 = vperm.xlu0 %3086, %v2868
        %v3088 = vpop.permute.xlu0 %3087
        %v3090 = vperm.slane %v2860, 0
        %v3091 = vperm.slane %v2861, 0
        %v3092 = vperm.slane %v2862, 0
        %v3093 = vperm.slane %v2863, 0
        %v3094 = vperm.slane %v2864, 0
        %v3095 = vperm.slane %v2865, 0
        %v3096 = vperm.slane %v2866, 0
        %v3097 = vperm.slane %v2867, 0
        %v3098 = vmul.f32 %v3088, %v3090
        %v3099 = vmul.f32 %v3088, %v3091
        %v3100 = vmul.f32 %v3088, %v3092
        %v3101 = vmul.f32 %v3088, %v3093
        %v3102 = vmul.f32 %v3088, %v3094
        %v3103 = vmul.f32 %v3088, %v3095
        %v3104 = vmul.f32 %v3088, %v3096
        %v3105 = vmul.f32 %v3088, %v3097
        %v3106 = vadd.f32 %v3078, %v3098
        %v3107 = vadd.f32 %v3079, %v3099
        %v3108 = vadd.f32 %v3080, %v3100
        %v3109 = vadd.f32 %v3081, %v3101
        %v3110 = vadd.f32 %v3082, %v3102
        %v3111 = vadd.f32 %v3083, %v3103
        %v3112 = vadd.f32 %v3084, %v3104
        %v3113 = vadd.f32 %v3085, %v3105
        %3114 = vset.pattern.permute.xlu0 9
        %3115 = vperm.xlu0 %3114, %v2868
        %v3116 = vpop.permute.xlu0 %3115
        %v3118 = vperm.slane %v2860, 1
        %v3119 = vperm.slane %v2861, 1
        %v3120 = vperm.slane %v2862, 1
        %v3121 = vperm.slane %v2863, 1
        %v3122 = vperm.slane %v2864, 1
        %v3123 = vperm.slane %v2865, 1
        %v3124 = vperm.slane %v2866, 1
        %v3125 = vperm.slane %v2867, 1
        %v3126 = vmul.f32 %v3116, %v3118
        %v3127 = vmul.f32 %v3116, %v3119
        %v3128 = vmul.f32 %v3116, %v3120
        %v3129 = vmul.f32 %v3116, %v3121
        %v3130 = vmul.f32 %v3116, %v3122
        %v3131 = vmul.f32 %v3116, %v3123
        %v3132 = vmul.f32 %v3116, %v3124
        %v3133 = vmul.f32 %v3116, %v3125
        %v3134 = vadd.f32 %v3106, %v3126
        %v3135 = vadd.f32 %v3107, %v3127
        %v3136 = vadd.f32 %v3108, %v3128
        %v3137 = vadd.f32 %v3109, %v3129
        %v3138 = vadd.f32 %v3110, %v3130
        %v3139 = vadd.f32 %v3111, %v3131
        %v3140 = vadd.f32 %v3112, %v3132
        %v3141 = vadd.f32 %v3113, %v3133
        %3142 = vset.pattern.permute.xlu0 10
        %3143 = vperm.xlu0 %3142, %v2868
        %v3144 = vpop.permute.xlu0 %3143
        %v3146 = vperm.slane %v2860, 2
        %v3147 = vperm.slane %v2861, 2
        %v3148 = vperm.slane %v2862, 2
        %v3149 = vperm.slane %v2863, 2
        %v3150 = vperm.slane %v2864, 2
        %v3151 = vperm.slane %v2865, 2
        %v3152 = vperm.slane %v2866, 2
        %v3153 = vperm.slane %v2867, 2
        %v3154 = vmul.f32 %v3144, %v3146
        %v3155 = vmul.f32 %v3144, %v3147
        %v3156 = vmul.f32 %v3144, %v3148
        %v3157 = vmul.f32 %v3144, %v3149
        %v3158 = vmul.f32 %v3144, %v3150
        %v3159 = vmul.f32 %v3144, %v3151
        %v3160 = vmul.f32 %v3144, %v3152
        %v3161 = vmul.f32 %v3144, %v3153
        %v3162 = vadd.f32 %v3134, %v3154
        %v3163 = vadd.f32 %v3135, %v3155
        %v3164 = vadd.f32 %v3136, %v3156
        %v3165 = vadd.f32 %v3137, %v3157
        %v3166 = vadd.f32 %v3138, %v3158
        %v3167 = vadd.f32 %v3139, %v3159
        %v3168 = vadd.f32 %v3140, %v3160
        %v3169 = vadd.f32 %v3141, %v3161
        %3170 = vset.pattern.permute.xlu0 11
        %3171 = vperm.xlu0 %3170, %v2868
        %v3172 = vpop.permute.xlu0 %3171
        %v3174 = vperm.slane %v2860, 3
        %v3175 = vperm.slane %v2861, 3
        %v3176 = vperm.slane %v2862, 3
        %v3177 = vperm.slane %v2863, 3
        %v3178 = vperm.slane %v2864, 3
        %v3179 = vperm.slane %v2865, 3
        %v3180 = vperm.slane %v2866, 3
        %v3181 = vperm.slane %v2867, 3
        %v3182 = vmul.f32 %v3172, %v3174
        %v3183 = vmul.f32 %v3172, %v3175
        %v3184 = vmul.f32 %v3172, %v3176
        %v3185 = vmul.f32 %v3172, %v3177
        %v3186 = vmul.f32 %v3172, %v3178
        %v3187 = vmul.f32 %v3172, %v3179
        %v3188 = vmul.f32 %v3172, %v3180
        %v3189 = vmul.f32 %v3172, %v3181
        %v3190 = vadd.f32 %v3162, %v3182
        %v3191 = vadd.f32 %v3163, %v3183
        %v3192 = vadd.f32 %v3164, %v3184
        %v3193 = vadd.f32 %v3165, %v3185
        %v3194 = vadd.f32 %v3166, %v3186
        %v3195 = vadd.f32 %v3167, %v3187
        %v3196 = vadd.f32 %v3168, %v3188
        %v3197 = vadd.f32 %v3169, %v3189
        %3198 = vset.pattern.permute.xlu0 12
        %3199 = vperm.xlu0 %3198, %v2868
        %v3200 = vpop.permute.xlu0 %3199
        %v3202 = vperm.slane %v2860, 4
        %v3203 = vperm.slane %v2861, 4
        %v3204 = vperm.slane %v2862, 4
        %v3205 = vperm.slane %v2863, 4
        %v3206 = vperm.slane %v2864, 4
        %v3207 = vperm.slane %v2865, 4
        %v3208 = vperm.slane %v2866, 4
        %v3209 = vperm.slane %v2867, 4
        %v3210 = vmul.f32 %v3200, %v3202
        %v3211 = vmul.f32 %v3200, %v3203
        %v3212 = vmul.f32 %v3200, %v3204
        %v3213 = vmul.f32 %v3200, %v3205
        %v3214 = vmul.f32 %v3200, %v3206
        %v3215 = vmul.f32 %v3200, %v3207
        %v3216 = vmul.f32 %v3200, %v3208
        %v3217 = vmul.f32 %v3200, %v3209
        %v3218 = vadd.f32 %v3190, %v3210
        %v3219 = vadd.f32 %v3191, %v3211
        %v3220 = vadd.f32 %v3192, %v3212
        %v3221 = vadd.f32 %v3193, %v3213
        %v3222 = vadd.f32 %v3194, %v3214
        %v3223 = vadd.f32 %v3195, %v3215
        %v3224 = vadd.f32 %v3196, %v3216
        %v3225 = vadd.f32 %v3197, %v3217
        %3226 = vset.pattern.permute.xlu0 13
        %3227 = vperm.xlu0 %3226, %v2868
        %v3228 = vpop.permute.xlu0 %3227
        %v3230 = vperm.slane %v2860, 5
        %v3231 = vperm.slane %v2861, 5
        %v3232 = vperm.slane %v2862, 5
        %v3233 = vperm.slane %v2863, 5
        %v3234 = vperm.slane %v2864, 5
        %v3235 = vperm.slane %v2865, 5
        %v3236 = vperm.slane %v2866, 5
        %v3237 = vperm.slane %v2867, 5
        %v3238 = vmul.f32 %v3228, %v3230
        %v3239 = vmul.f32 %v3228, %v3231
        %v3240 = vmul.f32 %v3228, %v3232
        %v3241 = vmul.f32 %v3228, %v3233
        %v3242 = vmul.f32 %v3228, %v3234
        %v3243 = vmul.f32 %v3228, %v3235
        %v3244 = vmul.f32 %v3228, %v3236
        %v3245 = vmul.f32 %v3228, %v3237
        %v3246 = vadd.f32 %v3218, %v3238
        %v3247 = vadd.f32 %v3219, %v3239
        %v3248 = vadd.f32 %v3220, %v3240
        %v3249 = vadd.f32 %v3221, %v3241
        %v3250 = vadd.f32 %v3222, %v3242
        %v3251 = vadd.f32 %v3223, %v3243
        %v3252 = vadd.f32 %v3224, %v3244
        %v3253 = vadd.f32 %v3225, %v3245
        %3254 = vset.pattern.permute.xlu0 14
        %3255 = vperm.xlu0 %3254, %v2868
        %v3256 = vpop.permute.xlu0 %3255
        %v3258 = vperm.slane %v2860, 6
        %v3259 = vperm.slane %v2861, 6
        %v3260 = vperm.slane %v2862, 6
        %v3261 = vperm.slane %v2863, 6
        %v3262 = vperm.slane %v2864, 6
        %v3263 = vperm.slane %v2865, 6
        %v3264 = vperm.slane %v2866, 6
        %v3265 = vperm.slane %v2867, 6
        %v3266 = vmul.f32 %v3256, %v3258
        %v3267 = vmul.f32 %v3256, %v3259
        %v3268 = vmul.f32 %v3256, %v3260
        %v3269 = vmul.f32 %v3256, %v3261
        %v3270 = vmul.f32 %v3256, %v3262
        %v3271 = vmul.f32 %v3256, %v3263
        %v3272 = vmul.f32 %v3256, %v3264
        %v3273 = vmul.f32 %v3256, %v3265
        %v3274 = vadd.f32 %v3246, %v3266
        %v3275 = vadd.f32 %v3247, %v3267
        %v3276 = vadd.f32 %v3248, %v3268
        %v3277 = vadd.f32 %v3249, %v3269
        %v3278 = vadd.f32 %v3250, %v3270
        %v3279 = vadd.f32 %v3251, %v3271
        %v3280 = vadd.f32 %v3252, %v3272
        %v3281 = vadd.f32 %v3253, %v3273
        %3282 = vset.pattern.permute.xlu0 15
        %3283 = vperm.xlu0 %3282, %v2868
        %v3284 = vpop.permute.xlu0 %3283
        %v3286 = vperm.slane %v2860, 7
        %v3287 = vperm.slane %v2861, 7
        %v3288 = vperm.slane %v2862, 7
        %v3289 = vperm.slane %v2863, 7
        %v3290 = vperm.slane %v2864, 7
        %v3291 = vperm.slane %v2865, 7
        %v3292 = vperm.slane %v2866, 7
        %v3293 = vperm.slane %v2867, 7
        %v3294 = vmul.f32 %v3284, %v3286
        %v3295 = vmul.f32 %v3284, %v3287
        %v3296 = vmul.f32 %v3284, %v3288
        %v3297 = vmul.f32 %v3284, %v3289
        %v3298 = vmul.f32 %v3284, %v3290
        %v3299 = vmul.f32 %v3284, %v3291
        %v3300 = vmul.f32 %v3284, %v3292
        %v3301 = vmul.f32 %v3284, %v3293
        %v3302 = vadd.f32 %v3274, %v3294
        %v3303 = vadd.f32 %v3275, %v3295
        %v3304 = vadd.f32 %v3276, %v3296
        %v3305 = vadd.f32 %v3277, %v3297
        %v3306 = vadd.f32 %v3278, %v3298
        %v3307 = vadd.f32 %v3279, %v3299
        %v3308 = vadd.f32 %v3280, %v3300
        %v3309 = vadd.f32 %v3281, %v3301
        %v3310 = vld [vmem:[%s11] sm:$0x7]
        %3312 = vset.pattern.permute.xlu0 0
        %3313 = vperm.xlu0 %3312, %v3310
        %v3314 = vpop.permute.xlu0 %3313
        %v3316 = vadd.f32 %v3302, %v3314
        %v3317 = vadd.f32 %v3303, %v3314
        %v3318 = vadd.f32 %v3304, %v3314
        %v3319 = vadd.f32 %v3305, %v3314
        %v3320 = vadd.f32 %v3306, %v3314
        %v3321 = vadd.f32 %v3307, %v3314
        %v3322 = vadd.f32 %v3308, %v3314
        %v3323 = vadd.f32 %v3309, %v3314
        %v3332 = vrot.slane %v3317, 4
        %v3333 = vrot.slane %v3319, 4
        %v3334 = vrot.slane %v3321, 4
        %v3335 = vrot.slane %v3323, 4
        %v3336 = vsel %vm1879, %v3316, %v3332
        %v3337 = vsel %vm1879, %v3318, %v3333
        %v3338 = vsel %vm1879, %v3320, %v3334
        %v3339 = vsel %vm1879, %v3322, %v3335
        %3344 = vst [vmem:[%s549] sm:$0x77] %v3336
        %3345 = vst [vmem:[%s549 + $0x8] sm:$0x77] %v3337
        %3346 = vst [vmem:[%s549 + $0x10] sm:$0x77] %v3338
        %3347 = vst [vmem:[%s549 + $0x18] sm:$0x77] %v3339
        %s3348 = smul.u32 8, %s33
        %p3349 = scmp.lt.s32.totalorder %s32, 1
        %s3350 = scalar_select %p3349, %s32, 1
        %p3351 = scmp.lt.s32.totalorder %s3348, 15
        %s3352 = scalar_select %p3351, %s3348, 15
        %s3353 = smul.addr %s3350, 16
        %s3354 = sadd.s32 %s3352, %s3353
        %s3355 = smul.addr %s3354, 4
        %s3356 = scalar_lea.vmem %s12, %s3355
        %s3357 = smul.u32 8, %s33
        %p3358 = scmp.lt.s32.totalorder %s32, 1
        %s3359 = scalar_select %p3358, %s32, 1
        %p3360 = scmp.lt.s32.totalorder %s3357, 15
        %s3361 = scalar_select %p3360, %s3357, 15
        %s3362 = smul.addr %s3359, 16
        %s3363 = sadd.s32 %s3361, %s3362
        %s3364 = smul.addr %s3363, 4
        %s3365 = scalar_lea.vmem %s13, %s3364
        // Predicated region
        $region73: #{tpu_custom_call.1} parent=67 // pred_check
          %p3366 = pneg %p327
        $region74: #{tpu_custom_call.1} parent=67 // pred_check_branch
          %3368 = sbr.rel (%p3366) target = $region76
        $region75: #{tpu_custom_call.1} parent=67 // pred_region
          %s3369 = smul.u32 8, %s33
        $region76: #{tpu_custom_call.1} parent=67 // pred_fallthru
          _
        // Predicated region
        $region77: #{tpu_custom_call.1} parent=67 // pred_check
          %p3370 = pneg %p355
        $region78: #{tpu_custom_call.1} parent=67 // pred_check_branch
          %3372 = sbr.rel (%p3370) target = $region80
        $region79: #{tpu_custom_call.1} parent=67 // pred_region
          %s3373 = smul.u32 8, %s33
        $region80: #{tpu_custom_call.1} parent=67 // pred_fallthru
          _
      $region68: #{tpu_custom_call.1} parent=5 // pred_fallthru
        _
      %p3374 = scmp.le.s32.totalorder 2, %s23
      // Predicated region
      $region81: #{tpu_custom_call.1} parent=5 // pred_check
        %p3375 = pneg %p3374
      $region82: #{tpu_custom_call.1} parent=5 // pred_check_branch
        %3377 = sbr.rel (%p3375) target = $region84
      $region83: #{tpu_custom_call.1} parent=5 // pred_region
        %s3378 = ssub.s32 %s23, 2
        // Predicated region
        $region85: #{tpu_custom_call.1} parent=83 // pred_check
          %p3379 = pneg %p333
        $region86: #{tpu_custom_call.1} parent=83 // pred_check_branch
          %3381 = sbr.rel (%p3379) target = $region88
        $region87: #{tpu_custom_call.1} parent=83 // pred_region
          %s3382 = smul.u32 8, %s35
          %p3383 = scmp.lt.s32.totalorder %s34, 1
          %s3384 = scalar_select %p3383, %s34, 1
          %p3385 = scmp.lt.s32.totalorder %s3382, 15
          %s3386 = scalar_select %p3385, %s3382, 15
          %s3387 = smul.addr %s3384, 16
          %s3388 = sadd.s32 %s3386, %s3387
          %s3389 = smul.addr %s3388, 4
          %s3390 = scalar_lea.vmem %s12, %s3389
        $region88: #{tpu_custom_call.1} parent=83 // pred_fallthru
          _
        // Predicated region
        $region89: #{tpu_custom_call.1} parent=83 // pred_check
          %p3391 = pneg %p361
        $region90: #{tpu_custom_call.1} parent=83 // pred_check_branch
          %3393 = sbr.rel (%p3391) target = $region92
        $region91: #{tpu_custom_call.1} parent=83 // pred_region
          %s3394 = smul.u32 8, %s35
          %p3395 = scmp.lt.s32.totalorder %s34, 1
          %s3396 = scalar_select %p3395, %s34, 1
          %p3397 = scmp.lt.s32.totalorder %s3394, 15
          %s3398 = scalar_select %p3397, %s3394, 15
          %s3399 = smul.addr %s3396, 16
          %s3400 = sadd.s32 %s3398, %s3399
          %s3401 = smul.addr %s3400, 4
          %s3402 = scalar_lea.vmem %s13, %s3401
        $region92: #{tpu_custom_call.1} parent=83 // pred_fallthru
          _
      $region84: #{tpu_custom_call.1} parent=5 // pred_fallthru
        _
    $region6: #{tpu_custom_call.1} parent=1 // loop_footer
      %s27 = sadd.s32 1, %s23
    $region7: #{tpu_custom_call.1} parent=1 // loop_footer_branch
      %22 = sbr.rel target = $region3
    $region8: #{tpu_custom_call.1} parent=1 // loop_exit
      _
    %3403 = vsyncpa [#allocation3], 1
    %s3404 = scalar_lea.sflag [#allocation3], 1
    %3405 = vsyncpa %s3404, 1

</llo_original>
